<compile_context>
chip_gen: v5e
topology: v5e:2x2
jax: 0.10.0
libtpu: 0.0.40
codegen_flags: <defaults>
</compile_context>

<pallas_src>
import functools

import jax
import jax.numpy as jnp
from jax import lax
from jax.experimental import pallas as pl
from jax.experimental.pallas import tpu as pltpu


# ---------------------------------------------------------------------------
# Pallas kernel
# ---------------------------------------------------------------------------
def _tile_warping1_kernel(tp_ref, fl_ref, rv_ref, out_ref, *,
                          tile_size, center, xscale, xshift):
    """One grid step = (one batch element) x (one block of tile rows) x (one hypothesis).

    tp_ref : [1, 3, hb, Wt]        tile plane (d, dx, dy) for this row block
    fl_ref : [1, ts*ts, hb, C, Wt] left feature, split per sub-pixel (i, j)
    rv_ref : [1, ts, hb, C, W]     vertically pre-resampled right feature rows
    out_ref: [1, ts*ts, hb, Wt]    final-layout cost block (channels = i*ts + j)
    """
    ts = tile_size
    d_idx = pl.program_id(2)                       # hypothesis index 0,1,2 -> disp_d -1,0,+1
    disp_d = (d_idx - 1).astype(jnp.float32)

    tile_d = tp_ref[0, 0]                          # [hb, Wt]
    tile_dx = tp_ref[0, 1]
    tile_dy = tp_ref[0, 2]
    hb, wt_dim = tile_d.shape
    w_full = rv_ref.shape[-1]

    # DispUpsampleBySlantedPlane: tile_disp * (upscale / 4)
    base = (tile_d + disp_d) * jnp.float32(ts / 4.0)                       # [hb, Wt]
    # full-res column of sub-pixel j inside tile column wt: x = wt*ts + j
    wt_cols = lax.broadcasted_iota(jnp.int32, (hb, wt_dim), 1).astype(jnp.float32) * ts
    # iota along the full right-feature width (contraction axis of the interp matmul)
    w_iota = lax.broadcasted_iota(jnp.int32, (w_full, wt_dim), 0).astype(jnp.float32)
    w_iota = w_iota[None, :, :]                                            # [1, W, Wt]

    for i in range(ts):                            # sub-row inside a tile (static unroll)
        r_i = rv_ref[0, i]                         # [hb, C, W]  rows y = ht*ts + i
        row_term = (i - center) * tile_dx
        for j in range(ts):                        # sub-col inside a tile (static unroll)
            disp = base + row_term + (j - center) * tile_dy                # [hb, Wt]
            # grid_sample x coordinate (align_corners handled by xscale/xshift)
            x_in = (wt_cols + j - disp) * xscale + xshift                  # [hb, Wt]
            x0 = jnp.floor(x_in)
            fx = x_in - x0
            x0b = x0[:, None, :]                                           # [hb, 1, Wt]
            fxb = fx[:, None, :]
            # two-tap interpolation matrix; out-of-range taps simply never match the
            # iota -> contribute 0, which reproduces padding_mode='zeros'.
            a = (jnp.where(w_iota == x0b, 1.0 - fxb, 0.0)
                 + jnp.where(w_iota == x0b + 1.0, fxb, 0.0))               # [hb, W, Wt]
            # MXU: batched (over rows) gather/interp of the right feature.
            warped = jnp.einsum('hcw,hwv->hcv', r_i, a,
                                preferred_element_type=jnp.float32)        # [hb, C, Wt]
            l_ij = fl_ref[0, i * ts + j]                                   # [hb, C, Wt]
            # L1 over channels: C is on sublanes -> cheap sublane reduce (axis=-2).
            cost = jnp.sum(jnp.abs(l_ij - warped), axis=1)                 # [hb, Wt]
            out_ref[0, i * ts + j] = cost.astype(out_ref.dtype)


# ---------------------------------------------------------------------------
# Wrapper
# ---------------------------------------------------------------------------
def _vertical_resample(fea_r, align_corners):
    """Data-independent vertical tap of grid_sample (done once, outside the kernel)."""
    B, C, H, W = fea_r.shape
    h = jnp.arange(H, dtype=jnp.float32)
    if align_corners:
        y_in = h
    else:
        gy = 2.0 * h / max(H - 1, 1) - 1.0
        y_in = ((gy + 1.0) * H - 1.0) * 0.5
    y0 = jnp.floor(y_in)
    wy1 = y_in - y0
    wy0 = 1.0 - wy1
    y0i = y0.astype(jnp.int32)
    y1i = y0i + 1
    w0 = jnp.where((y0i >= 0) & (y0i < H), wy0, 0.0)
    w1 = jnp.where((y1i >= 0) & (y1i < H), wy1, 0.0)
    r0 = jnp.take(fea_r, jnp.clip(y0i, 0, H - 1), axis=2)
    r1 = jnp.take(fea_r, jnp.clip(y1i, 0, H - 1), axis=2)
    return r0 * w0[None, None, :, None] + r1 * w1[None, None, :, None]


@functools.partial(jax.jit, static_argnames=("tile_size", "align_corners"))
def tile_warping1(tile_plane, fea_l, fea_r, *, tile_size, align_corners=False):
    """Pallas implementation of TileWarping1.forward.

    tile_plane: [B, 3, Ht, Wt]  (d, dx, dy)
    fea_l/fea_r: [B, C, H, W] with H = tile_size*Ht, W = tile_size*Wt
    returns: [B, 3*tile_size^2, Ht, Wt]
    """
    ts = int(tile_size)
    B, C, H, W = fea_l.shape
    assert fea_r.shape == (B, C, H, W)
    assert H % ts == 0 and W % ts == 0
    Ht, Wt = H // ts, W // ts
    assert tile_plane.shape == (B, 3, Ht, Wt)

    tile_plane = tile_plane.astype(jnp.float32)
    fea_l = fea_l.astype(jnp.float32)
    fea_r = fea_r.astype(jnp.float32)

    # (1) vertical half of grid_sample (fixed per-row blend) done once in the wrapper.
    fea_r_v = _vertical_resample(fea_r, align_corners)

    # (2) relayouts so the kernel blocks are lane-dense and the output is final-layout.
    # fea_l -> [B, ts*ts, Ht, C, Wt]   (sub-pixel (i,j) split out, C on sublanes, Wt on lanes)
    fl = fea_l.reshape(B, C, Ht, ts, Wt, ts).transpose(0, 3, 5, 2, 1, 4)
    fl = fl.reshape(B, ts * ts, Ht, C, Wt)
    # fea_r_v -> [B, ts, Ht, C, W]     (sub-row i split out, full W kept on lanes)
    rv = fea_r_v.reshape(B, C, Ht, ts, W).transpose(0, 3, 2, 1, 4)

    if align_corners:
        xscale, xshift = 1.0, 0.0
    else:
        xscale, xshift = float(W) / max(W - 1, 1), -0.5

    # H tiling: keep VMEM resolution-independent for large images.
    hb = 8 if (Ht % 8 == 0 and Ht > 8) else Ht
    n_h = Ht // hb
    center = (ts - 1) / 2.0

    kernel = functools.partial(_tile_warping1_kernel, tile_size=ts, center=center,
                               xscale=xscale, xshift=xshift)

    out = pl.pallas_call(
        kernel,
        out_shape=jax.ShapeDtypeStruct((B, 3 * ts * ts, Ht, Wt), jnp.float32),
        grid_spec=pltpu.PrefetchScalarGridSpec(
            num_scalar_prefetch=0,
            grid=(B, n_h, 3),      # hypothesis innermost -> inputs stay resident across it
            in_specs=[
                pl.BlockSpec((1, 3, hb, Wt), lambda b, h, d: (b, 0, h, 0)),
                pl.BlockSpec((1, ts * ts, hb, C, Wt), lambda b, h, d: (b, 0, h, 0, 0)),
                pl.BlockSpec((1, ts, hb, C, W), lambda b, h, d: (b, 0, h, 0, 0)),
            ],
            out_specs=pl.BlockSpec((1, ts * ts, hb, Wt), lambda b, h, d: (b, d, h, 0)),
        ),
        compiler_params=pltpu.CompilerParams(
            dimension_semantics=("parallel", "parallel", "parallel")),
    )(tile_plane, fl, rv)
    return out


# ---------------------------------------------------------------------------
# Pure-JAX reference (mirrors the PyTorch ops) for the self-check
# ---------------------------------------------------------------------------
def _torch_warp_ref(x, disp, align_corners=False):
    """Mirror of the PyTorch `warp` helper (F.grid_sample bilinear, zeros padding)."""
    B, C, H, W = x.shape
    xs = jnp.arange(W, dtype=jnp.float32)[None, None, :]
    ys = jnp.arange(H, dtype=jnp.float32)[None, :, None]
    gx = 2.0 * (xs - disp) / max(W - 1, 1) - 1.0
    gy = jnp.broadcast_to(2.0 * ys / max(H - 1, 1) - 1.0, gx.shape)
    if align_corners:
        ix = (gx + 1.0) * 0.5 * (W - 1)
        iy = (gy + 1.0) * 0.5 * (H - 1)
    else:
        ix = ((gx + 1.0) * W - 1.0) * 0.5
        iy = ((gy + 1.0) * H - 1.0) * 0.5
    x0 = jnp.floor(ix)
    y0 = jnp.floor(iy)

    def tap(xi, yi):
        valid = ((xi >= 0) & (xi <= W - 1) & (yi >= 0) & (yi <= H - 1)).astype(x.dtype)
        xc = jnp.clip(xi.astype(jnp.int32), 0, W - 1)
        yc = jnp.clip(yi.astype(jnp.int32), 0, H - 1)
        idx = (yc * W + xc).reshape(B, 1, H * W)
        g = jnp.take_along_axis(x.reshape(B, C, H * W),
                                jnp.broadcast_to(idx, (B, C, H * W)), axis=2)
        return g.reshape(B, C, H, W) * valid[:, None]

    wx1 = ix - x0
    wx0 = 1.0 - wx1
    wy1 = iy - y0
    wy0 = 1.0 - wy1
    return (tap(x0, y0) * (wx0 * wy0)[:, None]
            + tap(x0 + 1, y0) * (wx1 * wy0)[:, None]
            + tap(x0, y0 + 1) * (wx0 * wy1)[:, None]
            + tap(x0 + 1, y0 + 1) * (wx1 * wy1)[:, None])


def tile_warping1_ref(tile_plane, fea_l, fea_r, tile_size, align_corners=False):
    ts = int(tile_size)
    B, C, H, W = fea_l.shape
    Ht, Wt = H // ts, W // ts
    center = (ts - 1) / 2.0
    tile_d, tile_dx, tile_dy = tile_plane[:, 0], tile_plane[:, 1], tile_plane[:, 2]
    i_off = jnp.arange(ts, dtype=jnp.float32) - center
    j_off = jnp.arange(ts, dtype=jnp.float32) - center
    outs = []
    for disp_d in (-1.0, 0.0, 1.0):
        base = (tile_d + disp_d) * (ts / 4.0)                                  # [B, Ht, Wt]
        disp = (base[:, :, None, :, None]
                + i_off[None, None, :, None, None] * tile_dx[:, :, None, :, None]
                + j_off[None, None, None, None, :] * tile_dy[:, :, None, :, None])
        disp = disp.reshape(B, H, W)
        warped = _torch_warp_ref(fea_r, disp, align_corners=align_corners)
        cv = jnp.sum(jnp.abs(fea_l - warped), axis=1)                          # [B, H, W]
        cv = cv.reshape(B, Ht, ts, Wt, ts).transpose(0, 2, 4, 1, 3).reshape(B, ts * ts, Ht, Wt)
        outs.append(cv)
    return jnp.concatenate(outs, axis=1)


# ---------------------------------------------------------------------------
# Self-check
# ---------------------------------------------------------------------------
if __name__ == "__main__":
    def run_case(ts, B, C, Ht, Wt, key):
        H, W = ts * Ht, ts * Wt
        k1, k2, k3, k4, k5 = jax.random.split(key, 5)
        fea_l = jax.random.normal(k1, (B, C, H, W), dtype=jnp.float32)
        fea_r = jax.random.normal(k2, (B, C, H, W), dtype=jnp.float32)
        tile_d = jax.random.uniform(k3, (B, 1, Ht, Wt), minval=0.0, maxval=8.0,
                                    dtype=jnp.float32)
        tile_dx = 0.5 * jax.random.normal(k4, (B, 1, Ht, Wt), dtype=jnp.float32)
        tile_dy = 0.5 * jax.random.normal(k5, (B, 1, Ht, Wt), dtype=jnp.float32)
        tile_plane = jnp.concatenate([tile_d, tile_dx, tile_dy], axis=1)

        out = jax.block_until_ready(
            tile_warping1(tile_plane, fea_l, fea_r, tile_size=ts))
        ref = jax.block_until_ready(
            tile_warping1_ref(tile_plane, fea_l, fea_r, ts))

        assert out.shape == (B, 3 * ts * ts, Ht, Wt), out.shape
        assert out.dtype == jnp.float32
        err = float(jnp.max(jnp.abs(out - ref)))
        assert jnp.allclose(out, ref, atol=5e-2, rtol=1e-2), err

    key = jax.random.PRNGKey(0)
    k0, k1 = jax.random.split(key)
    run_case(4, 2, 16, 8, 8, k0)   # standard HITNet tile size (ts=4)
    run_case(2, 1, 8, 8, 8, k1)    # variable tile size path (ts=2)
    print("KERNEL_OK")
</pallas_src>

<mosaic_0001>
module attributes {stable_mosaic.version = 11 : i64} {
  func.func @_tile_warping1_kernel(%arg0: i32, %arg1: i32, %arg2: i32, %arg3: memref<1x3x8x8xf32, #tpu.memory_space<vmem>>, %arg4: memref<1x16x8x16x8xf32, #tpu.memory_space<vmem>>, %arg5: memref<1x4x8x16x32xf32, #tpu.memory_space<vmem>>, %arg6: memref<1x16x8x8xf32, #tpu.memory_space<vmem>>) attributes {dimension_semantics = [#tpu.dimension_semantics<parallel>, #tpu.dimension_semantics<parallel>, #tpu.dimension_semantics<parallel>], iteration_bounds = array<i64: 2, 1, 3>, scalar_prefetch = 0 : i64, scratch_operands = 0 : i64, tpu.core_type = #tpu.core_type<tc>, window_params = [{transform_indices = @transform_0, window_bounds = array<i64: 1, 3, 8, 8>}, {transform_indices = @transform_1, window_bounds = array<i64: 1, 16, 8, 16, 8>}, {transform_indices = @transform_2, window_bounds = array<i64: 1, 4, 8, 16, 32>}, {transform_indices = @transform_3, window_bounds = array<i64: 1, 16, 8, 8>}]} {
    %c1_i32 = arith.constant 1 : i32
    %0 = arith.subi %arg2, %c1_i32 : i32
    %1 = arith.sitofp %0 : i32 to f32
    %c0 = arith.constant 0 : index
    %c0_0 = arith.constant 0 : index
    %c0_1 = arith.constant 0 : index
    %c0_2 = arith.constant 0 : index
    %2 = vector.load %arg3[%c0, %c0_0, %c0_1, %c0_2] : memref<1x3x8x8xf32, #tpu.memory_space<vmem>>, vector<1x1x8x8xf32>
    %3 = vector.shape_cast %2 : vector<1x1x8x8xf32> to vector<8x8xf32>
    %c0_3 = arith.constant 0 : index
    %c1 = arith.constant 1 : index
    %c0_4 = arith.constant 0 : index
    %c0_5 = arith.constant 0 : index
    %4 = vector.load %arg3[%c0_3, %c1, %c0_4, %c0_5] : memref<1x3x8x8xf32, #tpu.memory_space<vmem>>, vector<1x1x8x8xf32>
    %5 = vector.shape_cast %4 : vector<1x1x8x8xf32> to vector<8x8xf32>
    %c0_6 = arith.constant 0 : index
    %c2 = arith.constant 2 : index
    %c0_7 = arith.constant 0 : index
    %c0_8 = arith.constant 0 : index
    %6 = vector.load %arg3[%c0_6, %c2, %c0_7, %c0_8] : memref<1x3x8x8xf32, #tpu.memory_space<vmem>>, vector<1x1x8x8xf32>
    %7 = vector.shape_cast %6 : vector<1x1x8x8xf32> to vector<8x8xf32>
    %8 = vector.broadcast %1 : f32 to vector<8x8xf32>
    %9 = arith.addf %3, %8 : vector<8x8xf32>
    %cst = arith.constant 1.000000e+00 : f32
    %10 = vector.broadcast %cst : f32 to vector<8x8xf32>
    %11 = arith.mulf %9, %10 : vector<8x8xf32>
    %12 = tpu.iota {dimensions = array<i32: 1>} : vector<8x8xi32>
    %13 = arith.sitofp %12 : vector<8x8xi32> to vector<8x8xf32>
    %cst_9 = arith.constant 4.000000e+00 : f32
    %14 = vector.broadcast %cst_9 : f32 to vector<8x8xf32>
    %15 = arith.mulf %13, %14 : vector<8x8xf32>
    %16 = tpu.iota {dimensions = array<i32: 0>} : vector<32x8xi32>
    %17 = arith.sitofp %16 : vector<32x8xi32> to vector<32x8xf32>
    %18 = vector.shape_cast %17 : vector<32x8xf32> to vector<1x32x8xf32>
    %c0_10 = arith.constant 0 : index
    %c0_11 = arith.constant 0 : index
    %c0_12 = arith.constant 0 : index
    %c0_13 = arith.constant 0 : index
    %c0_14 = arith.constant 0 : index
    %19 = vector.load %arg5[%c0_10, %c0_11, %c0_12, %c0_13, %c0_14] : memref<1x4x8x16x32xf32, #tpu.memory_space<vmem>>, vector<1x1x8x16x32xf32>
    %20 = vector.shape_cast %19 : vector<1x1x8x16x32xf32> to vector<8x16x32xf32>
    %cst_15 = arith.constant -1.500000e+00 : f32
    %21 = vector.broadcast %cst_15 : f32 to vector<8x8xf32>
    %22 = arith.mulf %21, %5 : vector<8x8xf32>
    %23 = arith.addf %11, %22 : vector<8x8xf32>
    %cst_16 = arith.constant -1.500000e+00 : f32
    %24 = vector.broadcast %cst_16 : f32 to vector<8x8xf32>
    %25 = arith.mulf %24, %7 : vector<8x8xf32>
    %26 = arith.addf %23, %25 : vector<8x8xf32>
    %cst_17 = arith.constant 0.000000e+00 : f32
    %27 = vector.broadcast %cst_17 : f32 to vector<8x8xf32>
    %28 = arith.addf %15, %27 : vector<8x8xf32>
    %29 = arith.subf %28, %26 : vector<8x8xf32>
    %cst_18 = arith.constant 1.03225803 : f32
    %30 = vector.broadcast %cst_18 : f32 to vector<8x8xf32>
    %31 = arith.mulf %29, %30 : vector<8x8xf32>
    %cst_19 = arith.constant -5.000000e-01 : f32
    %32 = vector.broadcast %cst_19 : f32 to vector<8x8xf32>
    %33 = arith.addf %31, %32 : vector<8x8xf32>
    %34 = math.floor %33 : vector<8x8xf32>
    %35 = arith.subf %33, %34 : vector<8x8xf32>
    %36 = vector.shape_cast %34 : vector<8x8xf32> to vector<8x1x8xf32>
    %37 = vector.shape_cast %35 : vector<8x8xf32> to vector<8x1x8xf32>
    %38 = vector.broadcast %18 : vector<1x32x8xf32> to vector<8x32x8xf32>
    %39 = vector.broadcast %36 : vector<8x1x8xf32> to vector<8x32x8xf32>
    %40 = arith.cmpf oeq, %38, %39 : vector<8x32x8xf32>
    %cst_20 = arith.constant 1.000000e+00 : f32
    %41 = vector.broadcast %cst_20 : f32 to vector<8x1x8xf32>
    %42 = arith.subf %41, %37 : vector<8x1x8xf32>
    %cst_21 = arith.constant 0.000000e+00 : f32
    %43 = vector.shape_cast %42 : vector<8x1x8xf32> to vector<8x1x8xf32>
    %44 = vector.broadcast %43 : vector<8x1x8xf32> to vector<8x32x8xf32>
    %45 = vector.broadcast %cst_21 : f32 to vector<8x32x8xf32>
    %46 = arith.select %40, %44, %45 : vector<8x32x8xi1>, vector<8x32x8xf32>
    %cst_22 = arith.constant 1.000000e+00 : f32
    %47 = vector.broadcast %cst_22 : f32 to vector<8x1x8xf32>
    %48 = arith.addf %36, %47 : vector<8x1x8xf32>
    %49 = vector.broadcast %18 : vector<1x32x8xf32> to vector<8x32x8xf32>
    %50 = vector.broadcast %48 : vector<8x1x8xf32> to vector<8x32x8xf32>
    %51 = arith.cmpf oeq, %49, %50 : vector<8x32x8xf32>
    %cst_23 = arith.constant 0.000000e+00 : f32
    %52 = vector.shape_cast %37 : vector<8x1x8xf32> to vector<8x1x8xf32>
    %53 = vector.broadcast %52 : vector<8x1x8xf32> to vector<8x32x8xf32>
    %54 = vector.broadcast %cst_23 : f32 to vector<8x32x8xf32>
    %55 = arith.select %51, %53, %54 : vector<8x32x8xi1>, vector<8x32x8xf32>
    %56 = arith.addf %46, %55 : vector<8x32x8xf32>
    "tpu.trace_start"() <{level = 10 : i32, message = "hcw,hwv->hcv"}> : () -> ()
    %cst_24 = arith.constant dense<0.000000e+00> : vector<8x16x8xf32>
    %57 = tpu.matmul %20, %56, %cst_24 {dimension_numbers = #tpu.dot_dimension_numbers<[2], [1], [1], [2], [0, 0, 0, 1, 1, 2], [0], [0]>} : vector<8x16x32xf32>, vector<8x32x8xf32>, vector<8x16x8xf32> -> vector<8x16x8xf32>
    "tpu.trace_stop"() : () -> ()
    %c0_25 = arith.constant 0 : index
    %c0_26 = arith.constant 0 : index
    %c0_27 = arith.constant 0 : index
    %c0_28 = arith.constant 0 : index
    %c0_29 = arith.constant 0 : index
    %58 = vector.load %arg4[%c0_25, %c0_26, %c0_27, %c0_28, %c0_29] : memref<1x16x8x16x8xf32, #tpu.memory_space<vmem>>, vector<1x1x8x16x8xf32>
    %59 = vector.shape_cast %58 : vector<1x1x8x16x8xf32> to vector<8x16x8xf32>
    %60 = arith.subf %59, %57 : vector<8x16x8xf32>
    %61 = math.absf %60 : vector<8x16x8xf32>
    %cst_30 = arith.constant dense<0.000000e+00> : vector<8x8xf32>
    %62 = vector.multi_reduction <add>, %61, %cst_30 [1] : vector<8x16x8xf32> to vector<8x8xf32>
    %c0_31 = arith.constant 0 : index
    %c0_32 = arith.constant 0 : index
    %c0_33 = arith.constant 0 : index
    %c0_34 = arith.constant 0 : index
    %63 = vector.load %arg6[%c0_31, %c0_32, %c0_33, %c0_34] : memref<1x16x8x8xf32, #tpu.memory_space<vmem>>, vector<1x1x8x8xf32>
    %64 = vector.shape_cast %63 : vector<1x1x8x8xf32> to vector<8x8xf32>
    %65 = vector.shape_cast %62 : vector<8x8xf32> to vector<1x1x8x8xf32>
    tpu.vector_store %arg6[%c0_31, %c0_32, %c0_33, %c0_34], %65 {strides = array<i32>} : memref<1x16x8x8xf32, #tpu.memory_space<vmem>>, vector<1x1x8x8xf32>,
    %66 = arith.addf %11, %22 : vector<8x8xf32>
    %cst_35 = arith.constant -5.000000e-01 : f32
    %67 = vector.broadcast %cst_35 : f32 to vector<8x8xf32>
    %68 = arith.mulf %67, %7 : vector<8x8xf32>
    %69 = arith.addf %66, %68 : vector<8x8xf32>
    %cst_36 = arith.constant 1.000000e+00 : f32
    %70 = vector.broadcast %cst_36 : f32 to vector<8x8xf32>
    %71 = arith.addf %15, %70 : vector<8x8xf32>
    %72 = arith.subf %71, %69 : vector<8x8xf32>
    %cst_37 = arith.constant 1.03225803 : f32
    %73 = vector.broadcast %cst_37 : f32 to vector<8x8xf32>
    %74 = arith.mulf %72, %73 : vector<8x8xf32>
    %cst_38 = arith.constant -5.000000e-01 : f32
    %75 = vector.broadcast %cst_38 : f32 to vector<8x8xf32>
    %76 = arith.addf %74, %75 : vector<8x8xf32>
    %77 = math.floor %76 : vector<8x8xf32>
    %78 = arith.subf %76, %77 : vector<8x8xf32>
    %79 = vector.shape_cast %77 : vector<8x8xf32> to vector<8x1x8xf32>
    %80 = vector.shape_cast %78 : vector<8x8xf32> to vector<8x1x8xf32>
    %81 = vector.broadcast %18 : vector<1x32x8xf32> to vector<8x32x8xf32>
    %82 = vector.broadcast %79 : vector<8x1x8xf32> to vector<8x32x8xf32>
    %83 = arith.cmpf oeq, %81, %82 : vector<8x32x8xf32>
    %cst_39 = arith.constant 1.000000e+00 : f32
    %84 = vector.broadcast %cst_39 : f32 to vector<8x1x8xf32>
    %85 = arith.subf %84, %80 : vector<8x1x8xf32>
    %cst_40 = arith.constant 0.000000e+00 : f32
    %86 = vector.shape_cast %85 : vector<8x1x8xf32> to vector<8x1x8xf32>
    %87 = vector.broadcast %86 : vector<8x1x8xf32> to vector<8x32x8xf32>
    %88 = vector.broadcast %cst_40 : f32 to vector<8x32x8xf32>
    %89 = arith.select %83, %87, %88 : vector<8x32x8xi1>, vector<8x32x8xf32>
    %cst_41 = arith.constant 1.000000e+00 : f32
    %90 = vector.broadcast %cst_41 : f32 to vector<8x1x8xf32>
    %91 = arith.addf %79, %90 : vector<8x1x8xf32>
    %92 = vector.broadcast %18 : vector<1x32x8xf32> to vector<8x32x8xf32>
    %93 = vector.broadcast %91 : vector<8x1x8xf32> to vector<8x32x8xf32>
    %94 = arith.cmpf oeq, %92, %93 : vector<8x32x8xf32>
    %cst_42 = arith.constant 0.000000e+00 : f32
    %95 = vector.shape_cast %80 : vector<8x1x8xf32> to vector<8x1x8xf32>
    %96 = vector.broadcast %95 : vector<8x1x8xf32> to vector<8x32x8xf32>
    %97 = vector.broadcast %cst_42 : f32 to vector<8x32x8xf32>
    %98 = arith.select %94, %96, %97 : vector<8x32x8xi1>, vector<8x32x8xf32>
    %99 = arith.addf %89, %98 : vector<8x32x8xf32>
    "tpu.trace_start"() <{level = 10 : i32, message = "hcw,hwv->hcv"}> : () -> ()
    %cst_43 = arith.constant dense<0.000000e+00> : vector<8x16x8xf32>
    %100 = tpu.matmul %20, %99, %cst_43 {dimension_numbers = #tpu.dot_dimension_numbers<[2], [1], [1], [2], [0, 0, 0, 1, 1, 2], [0], [0]>} : vector<8x16x32xf32>, vector<8x32x8xf32>, vector<8x16x8xf32> -> vector<8x16x8xf32>
    "tpu.trace_stop"() : () -> ()
    %c0_44 = arith.constant 0 : index
    %c1_45 = arith.constant 1 : index
    %c0_46 = arith.constant 0 : index
    %c0_47 = arith.constant 0 : index
    %c0_48 = arith.constant 0 : index
    %101 = vector.load %arg4[%c0_44, %c1_45, %c0_46, %c0_47, %c0_48] : memref<1x16x8x16x8xf32, #tpu.memory_space<vmem>>, vector<1x1x8x16x8xf32>
    %102 = vector.shape_cast %101 : vector<1x1x8x16x8xf32> to vector<8x16x8xf32>
    %103 = arith.subf %102, %100 : vector<8x16x8xf32>
    %104 = math.absf %103 : vector<8x16x8xf32>
    %cst_49 = arith.constant dense<0.000000e+00> : vector<8x8xf32>
    %105 = vector.multi_reduction <add>, %104, %cst_49 [1] : vector<8x16x8xf32> to vector<8x8xf32>
    %c0_50 = arith.constant 0 : index
    %c1_51 = arith.constant 1 : index
    %c0_52 = arith.constant 0 : index
    %c0_53 = arith.constant 0 : index
    %106 = vector.load %arg6[%c0_50, %c1_51, %c0_52, %c0_53] : memref<1x16x8x8xf32, #tpu.memory_space<vmem>>, vector<1x1x8x8xf32>
    %107 = vector.shape_cast %106 : vector<1x1x8x8xf32> to vector<8x8xf32>
    %108 = vector.shape_cast %105 : vector<8x8xf32> to vector<1x1x8x8xf32>
    tpu.vector_store %arg6[%c0_50, %c1_51, %c0_52, %c0_53], %108 {strides = array<i32>} : memref<1x16x8x8xf32, #tpu.memory_space<vmem>>, vector<1x1x8x8xf32>,
    %109 = arith.addf %11, %22 : vector<8x8xf32>
    %cst_54 = arith.constant 5.000000e-01 : f32
    %110 = vector.broadcast %cst_54 : f32 to vector<8x8xf32>
    %111 = arith.mulf %110, %7 : vector<8x8xf32>
    %112 = arith.addf %109, %111 : vector<8x8xf32>
    %cst_55 = arith.constant 2.000000e+00 : f32
    %113 = vector.broadcast %cst_55 : f32 to vector<8x8xf32>
    %114 = arith.addf %15, %113 : vector<8x8xf32>
    %115 = arith.subf %114, %112 : vector<8x8xf32>
    %cst_56 = arith.constant 1.03225803 : f32
    %116 = vector.broadcast %cst_56 : f32 to vector<8x8xf32>
    %117 = arith.mulf %115, %116 : vector<8x8xf32>
    %cst_57 = arith.constant -5.000000e-01 : f32
    %118 = vector.broadcast %cst_57 : f32 to vector<8x8xf32>
    %119 = arith.addf %117, %118 : vector<8x8xf32>
    %120 = math.floor %119 : vector<8x8xf32>
    %121 = arith.subf %119, %120 : vector<8x8xf32>
    %122 = vector.shape_cast %120 : vector<8x8xf32> to vector<8x1x8xf32>
    %123 = vector.shape_cast %121 : vector<8x8xf32> to vector<8x1x8xf32>
    %124 = vector.broadcast %18 : vector<1x32x8xf32> to vector<8x32x8xf32>
    %125 = vector.broadcast %122 : vector<8x1x8xf32> to vector<8x32x8xf32>
    %126 = arith.cmpf oeq, %124, %125 : vector<8x32x8xf32>
    %cst_58 = arith.constant 1.000000e+00 : f32
    %127 = vector.broadcast %cst_58 : f32 to vector<8x1x8xf32>
    %128 = arith.subf %127, %123 : vector<8x1x8xf32>
    %cst_59 = arith.constant 0.000000e+00 : f32
    %129 = vector.shape_cast %128 : vector<8x1x8xf32> to vector<8x1x8xf32>
    %130 = vector.broadcast %129 : vector<8x1x8xf32> to vector<8x32x8xf32>
    %131 = vector.broadcast %cst_59 : f32 to vector<8x32x8xf32>
    %132 = arith.select %126, %130, %131 : vector<8x32x8xi1>, vector<8x32x8xf32>
    %cst_60 = arith.constant 1.000000e+00 : f32
    %133 = vector.broadcast %cst_60 : f32 to vector<8x1x8xf32>
    %134 = arith.addf %122, %133 : vector<8x1x8xf32>
    %135 = vector.broadcast %18 : vector<1x32x8xf32> to vector<8x32x8xf32>
    %136 = vector.broadcast %134 : vector<8x1x8xf32> to vector<8x32x8xf32>
    %137 = arith.cmpf oeq, %135, %136 : vector<8x32x8xf32>
    %cst_61 = arith.constant 0.000000e+00 : f32
    %138 = vector.shape_cast %123 : vector<8x1x8xf32> to vector<8x1x8xf32>
    %139 = vector.broadcast %138 : vector<8x1x8xf32> to vector<8x32x8xf32>
    %140 = vector.broadcast %cst_61 : f32 to vector<8x32x8xf32>
    %141 = arith.select %137, %139, %140 : vector<8x32x8xi1>, vector<8x32x8xf32>
    %142 = arith.addf %132, %141 : vector<8x32x8xf32>
    "tpu.trace_start"() <{level = 10 : i32, message = "hcw,hwv->hcv"}> : () -> ()
    %cst_62 = arith.constant dense<0.000000e+00> : vector<8x16x8xf32>
    %143 = tpu.matmul %20, %142, %cst_62 {dimension_numbers = #tpu.dot_dimension_numbers<[2], [1], [1], [2], [0, 0, 0, 1, 1, 2], [0], [0]>} : vector<8x16x32xf32>, vector<8x32x8xf32>, vector<8x16x8xf32> -> vector<8x16x8xf32>
    "tpu.trace_stop"() : () -> ()
    %c0_63 = arith.constant 0 : index
    %c2_64 = arith.constant 2 : index
    %c0_65 = arith.constant 0 : index
    %c0_66 = arith.constant 0 : index
    %c0_67 = arith.constant 0 : index
    %144 = vector.load %arg4[%c0_63, %c2_64, %c0_65, %c0_66, %c0_67] : memref<1x16x8x16x8xf32, #tpu.memory_space<vmem>>, vector<1x1x8x16x8xf32>
    %145 = vector.shape_cast %144 : vector<1x1x8x16x8xf32> to vector<8x16x8xf32>
    %146 = arith.subf %145, %143 : vector<8x16x8xf32>
    %147 = math.absf %146 : vector<8x16x8xf32>
    %cst_68 = arith.constant dense<0.000000e+00> : vector<8x8xf32>
    %148 = vector.multi_reduction <add>, %147, %cst_68 [1] : vector<8x16x8xf32> to vector<8x8xf32>
    %c0_69 = arith.constant 0 : index
    %c2_70 = arith.constant 2 : index
    %c0_71 = arith.constant 0 : index
    %c0_72 = arith.constant 0 : index
    %149 = vector.load %arg6[%c0_69, %c2_70, %c0_71, %c0_72] : memref<1x16x8x8xf32, #tpu.memory_space<vmem>>, vector<1x1x8x8xf32>
    %150 = vector.shape_cast %149 : vector<1x1x8x8xf32> to vector<8x8xf32>
    %151 = vector.shape_cast %148 : vector<8x8xf32> to vector<1x1x8x8xf32>
    tpu.vector_store %arg6[%c0_69, %c2_70, %c0_71, %c0_72], %151 {strides = array<i32>} : memref<1x16x8x8xf32, #tpu.memory_space<vmem>>, vector<1x1x8x8xf32>,
    %152 = arith.addf %11, %22 : vector<8x8xf32>
    %cst_73 = arith.constant 1.500000e+00 : f32
    %153 = vector.broadcast %cst_73 : f32 to vector<8x8xf32>
    %154 = arith.mulf %153, %7 : vector<8x8xf32>
    %155 = arith.addf %152, %154 : vector<8x8xf32>
    %cst_74 = arith.constant 3.000000e+00 : f32
    %156 = vector.broadcast %cst_74 : f32 to vector<8x8xf32>
    %157 = arith.addf %15, %156 : vector<8x8xf32>
    %158 = arith.subf %157, %155 : vector<8x8xf32>
    %cst_75 = arith.constant 1.03225803 : f32
    %159 = vector.broadcast %cst_75 : f32 to vector<8x8xf32>
    %160 = arith.mulf %158, %159 : vector<8x8xf32>
    %cst_76 = arith.constant -5.000000e-01 : f32
    %161 = vector.broadcast %cst_76 : f32 to vector<8x8xf32>
    %162 = arith.addf %160, %161 : vector<8x8xf32>
    %163 = math.floor %162 : vector<8x8xf32>
    %164 = arith.subf %162, %163 : vector<8x8xf32>
    %165 = vector.shape_cast %163 : vector<8x8xf32> to vector<8x1x8xf32>
    %166 = vector.shape_cast %164 : vector<8x8xf32> to vector<8x1x8xf32>
    %167 = vector.broadcast %18 : vector<1x32x8xf32> to vector<8x32x8xf32>
    %168 = vector.broadcast %165 : vector<8x1x8xf32> to vector<8x32x8xf32>
    %169 = arith.cmpf oeq, %167, %168 : vector<8x32x8xf32>
    %cst_77 = arith.constant 1.000000e+00 : f32
    %170 = vector.broadcast %cst_77 : f32 to vector<8x1x8xf32>
    %171 = arith.subf %170, %166 : vector<8x1x8xf32>
    %cst_78 = arith.constant 0.000000e+00 : f32
    %172 = vector.shape_cast %171 : vector<8x1x8xf32> to vector<8x1x8xf32>
    %173 = vector.broadcast %172 : vector<8x1x8xf32> to vector<8x32x8xf32>
    %174 = vector.broadcast %cst_78 : f32 to vector<8x32x8xf32>
    %175 = arith.select %169, %173, %174 : vector<8x32x8xi1>, vector<8x32x8xf32>
    %cst_79 = arith.constant 1.000000e+00 : f32
    %176 = vector.broadcast %cst_79 : f32 to vector<8x1x8xf32>
    %177 = arith.addf %165, %176 : vector<8x1x8xf32>
    %178 = vector.broadcast %18 : vector<1x32x8xf32> to vector<8x32x8xf32>
    %179 = vector.broadcast %177 : vector<8x1x8xf32> to vector<8x32x8xf32>
    %180 = arith.cmpf oeq, %178, %179 : vector<8x32x8xf32>
    %cst_80 = arith.constant 0.000000e+00 : f32
    %181 = vector.shape_cast %166 : vector<8x1x8xf32> to vector<8x1x8xf32>
    %182 = vector.broadcast %181 : vector<8x1x8xf32> to vector<8x32x8xf32>
    %183 = vector.broadcast %cst_80 : f32 to vector<8x32x8xf32>
    %184 = arith.select %180, %182, %183 : vector<8x32x8xi1>, vector<8x32x8xf32>
    %185 = arith.addf %175, %184 : vector<8x32x8xf32>
    "tpu.trace_start"() <{level = 10 : i32, message = "hcw,hwv->hcv"}> : () -> ()
    %cst_81 = arith.constant dense<0.000000e+00> : vector<8x16x8xf32>
    %186 = tpu.matmul %20, %185, %cst_81 {dimension_numbers = #tpu.dot_dimension_numbers<[2], [1], [1], [2], [0, 0, 0, 1, 1, 2], [0], [0]>} : vector<8x16x32xf32>, vector<8x32x8xf32>, vector<8x16x8xf32> -> vector<8x16x8xf32>
    "tpu.trace_stop"() : () -> ()
    %c0_82 = arith.constant 0 : index
    %c3 = arith.constant 3 : index
    %c0_83 = arith.constant 0 : index
    %c0_84 = arith.constant 0 : index
    %c0_85 = arith.constant 0 : index
    %187 = vector.load %arg4[%c0_82, %c3, %c0_83, %c0_84, %c0_85] : memref<1x16x8x16x8xf32, #tpu.memory_space<vmem>>, vector<1x1x8x16x8xf32>
    %188 = vector.shape_cast %187 : vector<1x1x8x16x8xf32> to vector<8x16x8xf32>
    %189 = arith.subf %188, %186 : vector<8x16x8xf32>
    %190 = math.absf %189 : vector<8x16x8xf32>
    %cst_86 = arith.constant dense<0.000000e+00> : vector<8x8xf32>
    %191 = vector.multi_reduction <add>, %190, %cst_86 [1] : vector<8x16x8xf32> to vector<8x8xf32>
    %c0_87 = arith.constant 0 : index
    %c3_88 = arith.constant 3 : index
    %c0_89 = arith.constant 0 : index
    %c0_90 = arith.constant 0 : index
    %192 = vector.load %arg6[%c0_87, %c3_88, %c0_89, %c0_90] : memref<1x16x8x8xf32, #tpu.memory_space<vmem>>, vector<1x1x8x8xf32>
    %193 = vector.shape_cast %192 : vector<1x1x8x8xf32> to vector<8x8xf32>
    %194 = vector.shape_cast %191 : vector<8x8xf32> to vector<1x1x8x8xf32>
    tpu.vector_store %arg6[%c0_87, %c3_88, %c0_89, %c0_90], %194 {strides = array<i32>} : memref<1x16x8x8xf32, #tpu.memory_space<vmem>>, vector<1x1x8x8xf32>,
    %c0_91 = arith.constant 0 : index
    %c1_92 = arith.constant 1 : index
    %c0_93 = arith.constant 0 : index
    %c0_94 = arith.constant 0 : index
    %c0_95 = arith.constant 0 : index
    %195 = vector.load %arg5[%c0_91, %c1_92, %c0_93, %c0_94, %c0_95] : memref<1x4x8x16x32xf32, #tpu.memory_space<vmem>>, vector<1x1x8x16x32xf32>
    %196 = vector.shape_cast %195 : vector<1x1x8x16x32xf32> to vector<8x16x32xf32>
    %cst_96 = arith.constant -5.000000e-01 : f32
    %197 = vector.broadcast %cst_96 : f32 to vector<8x8xf32>
    %198 = arith.mulf %197, %5 : vector<8x8xf32>
    %199 = arith.addf %11, %198 : vector<8x8xf32>
    %cst_97 = arith.constant -1.500000e+00 : f32
    %200 = vector.broadcast %cst_97 : f32 to vector<8x8xf32>
    %201 = arith.mulf %200, %7 : vector<8x8xf32>
    %202 = arith.addf %199, %201 : vector<8x8xf32>
    %cst_98 = arith.constant 0.000000e+00 : f32
    %203 = vector.broadcast %cst_98 : f32 to vector<8x8xf32>
    %204 = arith.addf %15, %203 : vector<8x8xf32>
    %205 = arith.subf %204, %202 : vector<8x8xf32>
    %cst_99 = arith.constant 1.03225803 : f32
    %206 = vector.broadcast %cst_99 : f32 to vector<8x8xf32>
    %207 = arith.mulf %205, %206 : vector<8x8xf32>
    %cst_100 = arith.constant -5.000000e-01 : f32
    %208 = vector.broadcast %cst_100 : f32 to vector<8x8xf32>
    %209 = arith.addf %207, %208 : vector<8x8xf32>
    %210 = math.floor %209 : vector<8x8xf32>
    %211 = arith.subf %209, %210 : vector<8x8xf32>
    %212 = vector.shape_cast %210 : vector<8x8xf32> to vector<8x1x8xf32>
    %213 = vector.shape_cast %211 : vector<8x8xf32> to vector<8x1x8xf32>
    %214 = vector.broadcast %18 : vector<1x32x8xf32> to vector<8x32x8xf32>
    %215 = vector.broadcast %212 : vector<8x1x8xf32> to vector<8x32x8xf32>
    %216 = arith.cmpf oeq, %214, %215 : vector<8x32x8xf32>
    %cst_101 = arith.constant 1.000000e+00 : f32
    %217 = vector.broadcast %cst_101 : f32 to vector<8x1x8xf32>
    %218 = arith.subf %217, %213 : vector<8x1x8xf32>
    %cst_102 = arith.constant 0.000000e+00 : f32
    %219 = vector.shape_cast %218 : vector<8x1x8xf32> to vector<8x1x8xf32>
    %220 = vector.broadcast %219 : vector<8x1x8xf32> to vector<8x32x8xf32>
    %221 = vector.broadcast %cst_102 : f32 to vector<8x32x8xf32>
    %222 = arith.select %216, %220, %221 : vector<8x32x8xi1>, vector<8x32x8xf32>
    %cst_103 = arith.constant 1.000000e+00 : f32
    %223 = vector.broadcast %cst_103 : f32 to vector<8x1x8xf32>
    %224 = arith.addf %212, %223 : vector<8x1x8xf32>
    %225 = vector.broadcast %18 : vector<1x32x8xf32> to vector<8x32x8xf32>
    %226 = vector.broadcast %224 : vector<8x1x8xf32> to vector<8x32x8xf32>
    %227 = arith.cmpf oeq, %225, %226 : vector<8x32x8xf32>
    %cst_104 = arith.constant 0.000000e+00 : f32
    %228 = vector.shape_cast %213 : vector<8x1x8xf32> to vector<8x1x8xf32>
    %229 = vector.broadcast %228 : vector<8x1x8xf32> to vector<8x32x8xf32>
    %230 = vector.broadcast %cst_104 : f32 to vector<8x32x8xf32>
    %231 = arith.select %227, %229, %230 : vector<8x32x8xi1>, vector<8x32x8xf32>
    %232 = arith.addf %222, %231 : vector<8x32x8xf32>
    "tpu.trace_start"() <{level = 10 : i32, message = "hcw,hwv->hcv"}> : () -> ()
    %cst_105 = arith.constant dense<0.000000e+00> : vector<8x16x8xf32>
    %233 = tpu.matmul %196, %232, %cst_105 {dimension_numbers = #tpu.dot_dimension_numbers<[2], [1], [1], [2], [0, 0, 0, 1, 1, 2], [0], [0]>} : vector<8x16x32xf32>, vector<8x32x8xf32>, vector<8x16x8xf32> -> vector<8x16x8xf32>
    "tpu.trace_stop"() : () -> ()
    %c0_106 = arith.constant 0 : index
    %c4 = arith.constant 4 : index
    %c0_107 = arith.constant 0 : index
    %c0_108 = arith.constant 0 : index
    %c0_109 = arith.constant 0 : index
    %234 = vector.load %arg4[%c0_106, %c4, %c0_107, %c0_108, %c0_109] : memref<1x16x8x16x8xf32, #tpu.memory_space<vmem>>, vector<1x1x8x16x8xf32>
    %235 = vector.shape_cast %234 : vector<1x1x8x16x8xf32> to vector<8x16x8xf32>
    %236 = arith.subf %235, %233 : vector<8x16x8xf32>
    %237 = math.absf %236 : vector<8x16x8xf32>
    %cst_110 = arith.constant dense<0.000000e+00> : vector<8x8xf32>
    %238 = vector.multi_reduction <add>, %237, %cst_110 [1] : vector<8x16x8xf32> to vector<8x8xf32>
    %c0_111 = arith.constant 0 : index
    %c4_112 = arith.constant 4 : index
    %c0_113 = arith.constant 0 : index
    %c0_114 = arith.constant 0 : index
    %239 = vector.load %arg6[%c0_111, %c4_112, %c0_113, %c0_114] : memref<1x16x8x8xf32, #tpu.memory_space<vmem>>, vector<1x1x8x8xf32>
    %240 = vector.shape_cast %239 : vector<1x1x8x8xf32> to vector<8x8xf32>
    %241 = vector.shape_cast %238 : vector<8x8xf32> to vector<1x1x8x8xf32>
    tpu.vector_store %arg6[%c0_111, %c4_112, %c0_113, %c0_114], %241 {strides = array<i32>} : memref<1x16x8x8xf32, #tpu.memory_space<vmem>>, vector<1x1x8x8xf32>,
    %242 = arith.addf %11, %198 : vector<8x8xf32>
    %cst_115 = arith.constant -5.000000e-01 : f32
    %243 = vector.broadcast %cst_115 : f32 to vector<8x8xf32>
    %244 = arith.mulf %243, %7 : vector<8x8xf32>
    %245 = arith.addf %242, %244 : vector<8x8xf32>
    %cst_116 = arith.constant 1.000000e+00 : f32
    %246 = vector.broadcast %cst_116 : f32 to vector<8x8xf32>
    %247 = arith.addf %15, %246 : vector<8x8xf32>
    %248 = arith.subf %247, %245 : vector<8x8xf32>
    %cst_117 = arith.constant 1.03225803 : f32
    %249 = vector.broadcast %cst_117 : f32 to vector<8x8xf32>
    %250 = arith.mulf %248, %249 : vector<8x8xf32>
    %cst_118 = arith.constant -5.000000e-01 : f32
    %251 = vector.broadcast %cst_118 : f32 to vector<8x8xf32>
    %252 = arith.addf %250, %251 : vector<8x8xf32>
    %253 = math.floor %252 : vector<8x8xf32>
    %254 = arith.subf %252, %253 : vector<8x8xf32>
    %255 = vector.shape_cast %253 : vector<8x8xf32> to vector<8x1x8xf32>
    %256 = vector.shape_cast %254 : vector<8x8xf32> to vector<8x1x8xf32>
    %257 = vector.broadcast %18 : vector<1x32x8xf32> to vector<8x32x8xf32>
    %258 = vector.broadcast %255 : vector<8x1x8xf32> to vector<8x32x8xf32>
    %259 = arith.cmpf oeq, %257, %258 : vector<8x32x8xf32>
    %cst_119 = arith.constant 1.000000e+00 : f32
    %260 = vector.broadcast %cst_119 : f32 to vector<8x1x8xf32>
    %261 = arith.subf %260, %256 : vector<8x1x8xf32>
    %cst_120 = arith.constant 0.000000e+00 : f32
    %262 = vector.shape_cast %261 : vector<8x1x8xf32> to vector<8x1x8xf32>
    %263 = vector.broadcast %262 : vector<8x1x8xf32> to vector<8x32x8xf32>
    %264 = vector.broadcast %cst_120 : f32 to vector<8x32x8xf32>
    %265 = arith.select %259, %263, %264 : vector<8x32x8xi1>, vector<8x32x8xf32>
    %cst_121 = arith.constant 1.000000e+00 : f32
    %266 = vector.broadcast %cst_121 : f32 to vector<8x1x8xf32>
    %267 = arith.addf %255, %266 : vector<8x1x8xf32>
    %268 = vector.broadcast %18 : vector<1x32x8xf32> to vector<8x32x8xf32>
    %269 = vector.broadcast %267 : vector<8x1x8xf32> to vector<8x32x8xf32>
    %270 = arith.cmpf oeq, %268, %269 : vector<8x32x8xf32>
    %cst_122 = arith.constant 0.000000e+00 : f32
    %271 = vector.shape_cast %256 : vector<8x1x8xf32> to vector<8x1x8xf32>
    %272 = vector.broadcast %271 : vector<8x1x8xf32> to vector<8x32x8xf32>
    %273 = vector.broadcast %cst_122 : f32 to vector<8x32x8xf32>
    %274 = arith.select %270, %272, %273 : vector<8x32x8xi1>, vector<8x32x8xf32>
    %275 = arith.addf %265, %274 : vector<8x32x8xf32>
    "tpu.trace_start"() <{level = 10 : i32, message = "hcw,hwv->hcv"}> : () -> ()
    %cst_123 = arith.constant dense<0.000000e+00> : vector<8x16x8xf32>
    %276 = tpu.matmul %196, %275, %cst_123 {dimension_numbers = #tpu.dot_dimension_numbers<[2], [1], [1], [2], [0, 0, 0, 1, 1, 2], [0], [0]>} : vector<8x16x32xf32>, vector<8x32x8xf32>, vector<8x16x8xf32> -> vector<8x16x8xf32>
    "tpu.trace_stop"() : () -> ()
    %c0_124 = arith.constant 0 : index
    %c5 = arith.constant 5 : index
    %c0_125 = arith.constant 0 : index
    %c0_126 = arith.constant 0 : index
    %c0_127 = arith.constant 0 : index
    %277 = vector.load %arg4[%c0_124, %c5, %c0_125, %c0_126, %c0_127] : memref<1x16x8x16x8xf32, #tpu.memory_space<vmem>>, vector<1x1x8x16x8xf32>
    %278 = vector.shape_cast %277 : vector<1x1x8x16x8xf32> to vector<8x16x8xf32>
    %279 = arith.subf %278, %276 : vector<8x16x8xf32>
    %280 = math.absf %279 : vector<8x16x8xf32>
    %cst_128 = arith.constant dense<0.000000e+00> : vector<8x8xf32>
    %281 = vector.multi_reduction <add>, %280, %cst_128 [1] : vector<8x16x8xf32> to vector<8x8xf32>
    %c0_129 = arith.constant 0 : index
    %c5_130 = arith.constant 5 : index
    %c0_131 = arith.constant 0 : index
    %c0_132 = arith.constant 0 : index
    %282 = vector.load %arg6[%c0_129, %c5_130, %c0_131, %c0_132] : memref<1x16x8x8xf32, #tpu.memory_space<vmem>>, vector<1x1x8x8xf32>
    %283 = vector.shape_cast %282 : vector<1x1x8x8xf32> to vector<8x8xf32>
    %284 = vector.shape_cast %281 : vector<8x8xf32> to vector<1x1x8x8xf32>
    tpu.vector_store %arg6[%c0_129, %c5_130, %c0_131, %c0_132], %284 {strides = array<i32>} : memref<1x16x8x8xf32, #tpu.memory_space<vmem>>, vector<1x1x8x8xf32>,
    %285 = arith.addf %11, %198 : vector<8x8xf32>
    %cst_133 = arith.constant 5.000000e-01 : f32
    %286 = vector.broadcast %cst_133 : f32 to vector<8x8xf32>
    %287 = arith.mulf %286, %7 : vector<8x8xf32>
    %288 = arith.addf %285, %287 : vector<8x8xf32>
    %cst_134 = arith.constant 2.000000e+00 : f32
    %289 = vector.broadcast %cst_134 : f32 to vector<8x8xf32>
    %290 = arith.addf %15, %289 : vector<8x8xf32>
    %291 = arith.subf %290, %288 : vector<8x8xf32>
    %cst_135 = arith.constant 1.03225803 : f32
    %292 = vector.broadcast %cst_135 : f32 to vector<8x8xf32>
    %293 = arith.mulf %291, %292 : vector<8x8xf32>
    %cst_136 = arith.constant -5.000000e-01 : f32
    %294 = vector.broadcast %cst_136 : f32 to vector<8x8xf32>
    %295 = arith.addf %293, %294 : vector<8x8xf32>
    %296 = math.floor %295 : vector<8x8xf32>
    %297 = arith.subf %295, %296 : vector<8x8xf32>
    %298 = vector.shape_cast %296 : vector<8x8xf32> to vector<8x1x8xf32>
    %299 = vector.shape_cast %297 : vector<8x8xf32> to vector<8x1x8xf32>
    %300 = vector.broadcast %18 : vector<1x32x8xf32> to vector<8x32x8xf32>
    %301 = vector.broadcast %298 : vector<8x1x8xf32> to vector<8x32x8xf32>
    %302 = arith.cmpf oeq, %300, %301 : vector<8x32x8xf32>
    %cst_137 = arith.constant 1.000000e+00 : f32
    %303 = vector.broadcast %cst_137 : f32 to vector<8x1x8xf32>
    %304 = arith.subf %303, %299 : vector<8x1x8xf32>
    %cst_138 = arith.constant 0.000000e+00 : f32
    %305 = vector.shape_cast %304 : vector<8x1x8xf32> to vector<8x1x8xf32>
    %306 = vector.broadcast %305 : vector<8x1x8xf32> to vector<8x32x8xf32>
    %307 = vector.broadcast %cst_138 : f32 to vector<8x32x8xf32>
    %308 = arith.select %302, %306, %307 : vector<8x32x8xi1>, vector<8x32x8xf32>
    %cst_139 = arith.constant 1.000000e+00 : f32
    %309 = vector.broadcast %cst_139 : f32 to vector<8x1x8xf32>
    %310 = arith.addf %298, %309 : vector<8x1x8xf32>
    %311 = vector.broadcast %18 : vector<1x32x8xf32> to vector<8x32x8xf32>
    %312 = vector.broadcast %310 : vector<8x1x8xf32> to vector<8x32x8xf32>
    %313 = arith.cmpf oeq, %311, %312 : vector<8x32x8xf32>
    %cst_140 = arith.constant 0.000000e+00 : f32
    %314 = vector.shape_cast %299 : vector<8x1x8xf32> to vector<8x1x8xf32>
    %315 = vector.broadcast %314 : vector<8x1x8xf32> to vector<8x32x8xf32>
    %316 = vector.broadcast %cst_140 : f32 to vector<8x32x8xf32>
    %317 = arith.select %313, %315, %316 : vector<8x32x8xi1>, vector<8x32x8xf32>
    %318 = arith.addf %308, %317 : vector<8x32x8xf32>
    "tpu.trace_start"() <{level = 10 : i32, message = "hcw,hwv->hcv"}> : () -> ()
    %cst_141 = arith.constant dense<0.000000e+00> : vector<8x16x8xf32>
    %319 = tpu.matmul %196, %318, %cst_141 {dimension_numbers = #tpu.dot_dimension_numbers<[2], [1], [1], [2], [0, 0, 0, 1, 1, 2], [0], [0]>} : vector<8x16x32xf32>, vector<8x32x8xf32>, vector<8x16x8xf32> -> vector<8x16x8xf32>
    "tpu.trace_stop"() : () -> ()
    %c0_142 = arith.constant 0 : index
    %c6 = arith.constant 6 : index
    %c0_143 = arith.constant 0 : index
    %c0_144 = arith.constant 0 : index
    %c0_145 = arith.constant 0 : index
    %320 = vector.load %arg4[%c0_142, %c6, %c0_143, %c0_144, %c0_145] : memref<1x16x8x16x8xf32, #tpu.memory_space<vmem>>, vector<1x1x8x16x8xf32>
    %321 = vector.shape_cast %320 : vector<1x1x8x16x8xf32> to vector<8x16x8xf32>
    %322 = arith.subf %321, %319 : vector<8x16x8xf32>
    %323 = math.absf %322 : vector<8x16x8xf32>
    %cst_146 = arith.constant dense<0.000000e+00> : vector<8x8xf32>
    %324 = vector.multi_reduction <add>, %323, %cst_146 [1] : vector<8x16x8xf32> to vector<8x8xf32>
    %c0_147 = arith.constant 0 : index
    %c6_148 = arith.constant 6 : index
    %c0_149 = arith.constant 0 : index
    %c0_150 = arith.constant 0 : index
    %325 = vector.load %arg6[%c0_147, %c6_148, %c0_149, %c0_150] : memref<1x16x8x8xf32, #tpu.memory_space<vmem>>, vector<1x1x8x8xf32>
    %326 = vector.shape_cast %325 : vector<1x1x8x8xf32> to vector<8x8xf32>
    %327 = vector.shape_cast %324 : vector<8x8xf32> to vector<1x1x8x8xf32>
    tpu.vector_store %arg6[%c0_147, %c6_148, %c0_149, %c0_150], %327 {strides = array<i32>} : memref<1x16x8x8xf32, #tpu.memory_space<vmem>>, vector<1x1x8x8xf32>,
    %328 = arith.addf %11, %198 : vector<8x8xf32>
    %cst_151 = arith.constant 1.500000e+00 : f32
    %329 = vector.broadcast %cst_151 : f32 to vector<8x8xf32>
    %330 = arith.mulf %329, %7 : vector<8x8xf32>
    %331 = arith.addf %328, %330 : vector<8x8xf32>
    %cst_152 = arith.constant 3.000000e+00 : f32
    %332 = vector.broadcast %cst_152 : f32 to vector<8x8xf32>
    %333 = arith.addf %15, %332 : vector<8x8xf32>
    %334 = arith.subf %333, %331 : vector<8x8xf32>
    %cst_153 = arith.constant 1.03225803 : f32
    %335 = vector.broadcast %cst_153 : f32 to vector<8x8xf32>
    %336 = arith.mulf %334, %335 : vector<8x8xf32>
    %cst_154 = arith.constant -5.000000e-01 : f32
    %337 = vector.broadcast %cst_154 : f32 to vector<8x8xf32>
    %338 = arith.addf %336, %337 : vector<8x8xf32>
    %339 = math.floor %338 : vector<8x8xf32>
    %340 = arith.subf %338, %339 : vector<8x8xf32>
    %341 = vector.shape_cast %339 : vector<8x8xf32> to vector<8x1x8xf32>
    %342 = vector.shape_cast %340 : vector<8x8xf32> to vector<8x1x8xf32>
    %343 = vector.broadcast %18 : vector<1x32x8xf32> to vector<8x32x8xf32>
    %344 = vector.broadcast %341 : vector<8x1x8xf32> to vector<8x32x8xf32>
    %345 = arith.cmpf oeq, %343, %344 : vector<8x32x8xf32>
    %cst_155 = arith.constant 1.000000e+00 : f32
    %346 = vector.broadcast %cst_155 : f32 to vector<8x1x8xf32>
    %347 = arith.subf %346, %342 : vector<8x1x8xf32>
    %cst_156 = arith.constant 0.000000e+00 : f32
    %348 = vector.shape_cast %347 : vector<8x1x8xf32> to vector<8x1x8xf32>
    %349 = vector.broadcast %348 : vector<8x1x8xf32> to vector<8x32x8xf32>
    %350 = vector.broadcast %cst_156 : f32 to vector<8x32x8xf32>
    %351 = arith.select %345, %349, %350 : vector<8x32x8xi1>, vector<8x32x8xf32>
    %cst_157 = arith.constant 1.000000e+00 : f32
    %352 = vector.broadcast %cst_157 : f32 to vector<8x1x8xf32>
    %353 = arith.addf %341, %352 : vector<8x1x8xf32>
    %354 = vector.broadcast %18 : vector<1x32x8xf32> to vector<8x32x8xf32>
    %355 = vector.broadcast %353 : vector<8x1x8xf32> to vector<8x32x8xf32>
    %356 = arith.cmpf oeq, %354, %355 : vector<8x32x8xf32>
    %cst_158 = arith.constant 0.000000e+00 : f32
    %357 = vector.shape_cast %342 : vector<8x1x8xf32> to vector<8x1x8xf32>
    %358 = vector.broadcast %357 : vector<8x1x8xf32> to vector<8x32x8xf32>
    %359 = vector.broadcast %cst_158 : f32 to vector<8x32x8xf32>
    %360 = arith.select %356, %358, %359 : vector<8x32x8xi1>, vector<8x32x8xf32>
    %361 = arith.addf %351, %360 : vector<8x32x8xf32>
    "tpu.trace_start"() <{level = 10 : i32, message = "hcw,hwv->hcv"}> : () -> ()
    %cst_159 = arith.constant dense<0.000000e+00> : vector<8x16x8xf32>
    %362 = tpu.matmul %196, %361, %cst_159 {dimension_numbers = #tpu.dot_dimension_numbers<[2], [1], [1], [2], [0, 0, 0, 1, 1, 2], [0], [0]>} : vector<8x16x32xf32>, vector<8x32x8xf32>, vector<8x16x8xf32> -> vector<8x16x8xf32>
    "tpu.trace_stop"() : () -> ()
    %c0_160 = arith.constant 0 : index
    %c7 = arith.constant 7 : index
    %c0_161 = arith.constant 0 : index
    %c0_162 = arith.constant 0 : index
    %c0_163 = arith.constant 0 : index
    %363 = vector.load %arg4[%c0_160, %c7, %c0_161, %c0_162, %c0_163] : memref<1x16x8x16x8xf32, #tpu.memory_space<vmem>>, vector<1x1x8x16x8xf32>
    %364 = vector.shape_cast %363 : vector<1x1x8x16x8xf32> to vector<8x16x8xf32>
    %365 = arith.subf %364, %362 : vector<8x16x8xf32>
    %366 = math.absf %365 : vector<8x16x8xf32>
    %cst_164 = arith.constant dense<0.000000e+00> : vector<8x8xf32>
    %367 = vector.multi_reduction <add>, %366, %cst_164 [1] : vector<8x16x8xf32> to vector<8x8xf32>
    %c0_165 = arith.constant 0 : index
    %c7_166 = arith.constant 7 : index
    %c0_167 = arith.constant 0 : index
    %c0_168 = arith.constant 0 : index
    %368 = vector.load %arg6[%c0_165, %c7_166, %c0_167, %c0_168] : memref<1x16x8x8xf32, #tpu.memory_space<vmem>>, vector<1x1x8x8xf32>
    %369 = vector.shape_cast %368 : vector<1x1x8x8xf32> to vector<8x8xf32>
    %370 = vector.shape_cast %367 : vector<8x8xf32> to vector<1x1x8x8xf32>
    tpu.vector_store %arg6[%c0_165, %c7_166, %c0_167, %c0_168], %370 {strides = array<i32>} : memref<1x16x8x8xf32, #tpu.memory_space<vmem>>, vector<1x1x8x8xf32>,
    %c0_169 = arith.constant 0 : index
    %c2_170 = arith.constant 2 : index
    %c0_171 = arith.constant 0 : index
    %c0_172 = arith.constant 0 : index
    %c0_173 = arith.constant 0 : index
    %371 = vector.load %arg5[%c0_169, %c2_170, %c0_171, %c0_172, %c0_173] : memref<1x4x8x16x32xf32, #tpu.memory_space<vmem>>, vector<1x1x8x16x32xf32>
    %372 = vector.shape_cast %371 : vector<1x1x8x16x32xf32> to vector<8x16x32xf32>
    %cst_174 = arith.constant 5.000000e-01 : f32
    %373 = vector.broadcast %cst_174 : f32 to vector<8x8xf32>
    %374 = arith.mulf %373, %5 : vector<8x8xf32>
    %375 = arith.addf %11, %374 : vector<8x8xf32>
    %cst_175 = arith.constant -1.500000e+00 : f32
    %376 = vector.broadcast %cst_175 : f32 to vector<8x8xf32>
    %377 = arith.mulf %376, %7 : vector<8x8xf32>
    %378 = arith.addf %375, %377 : vector<8x8xf32>
    %cst_176 = arith.constant 0.000000e+00 : f32
    %379 = vector.broadcast %cst_176 : f32 to vector<8x8xf32>
    %380 = arith.addf %15, %379 : vector<8x8xf32>
    %381 = arith.subf %380, %378 : vector<8x8xf32>
    %cst_177 = arith.constant 1.03225803 : f32
    %382 = vector.broadcast %cst_177 : f32 to vector<8x8xf32>
    %383 = arith.mulf %381, %382 : vector<8x8xf32>
    %cst_178 = arith.constant -5.000000e-01 : f32
    %384 = vector.broadcast %cst_178 : f32 to vector<8x8xf32>
    %385 = arith.addf %383, %384 : vector<8x8xf32>
    %386 = math.floor %385 : vector<8x8xf32>
    %387 = arith.subf %385, %386 : vector<8x8xf32>
    %388 = vector.shape_cast %386 : vector<8x8xf32> to vector<8x1x8xf32>
    %389 = vector.shape_cast %387 : vector<8x8xf32> to vector<8x1x8xf32>
    %390 = vector.broadcast %18 : vector<1x32x8xf32> to vector<8x32x8xf32>
    %391 = vector.broadcast %388 : vector<8x1x8xf32> to vector<8x32x8xf32>
    %392 = arith.cmpf oeq, %390, %391 : vector<8x32x8xf32>
    %cst_179 = arith.constant 1.000000e+00 : f32
    %393 = vector.broadcast %cst_179 : f32 to vector<8x1x8xf32>
    %394 = arith.subf %393, %389 : vector<8x1x8xf32>
    %cst_180 = arith.constant 0.000000e+00 : f32
    %395 = vector.shape_cast %394 : vector<8x1x8xf32> to vector<8x1x8xf32>
    %396 = vector.broadcast %395 : vector<8x1x8xf32> to vector<8x32x8xf32>
    %397 = vector.broadcast %cst_180 : f32 to vector<8x32x8xf32>
    %398 = arith.select %392, %396, %397 : vector<8x32x8xi1>, vector<8x32x8xf32>
    %cst_181 = arith.constant 1.000000e+00 : f32
    %399 = vector.broadcast %cst_181 : f32 to vector<8x1x8xf32>
    %400 = arith.addf %388, %399 : vector<8x1x8xf32>
    %401 = vector.broadcast %18 : vector<1x32x8xf32> to vector<8x32x8xf32>
    %402 = vector.broadcast %400 : vector<8x1x8xf32> to vector<8x32x8xf32>
    %403 = arith.cmpf oeq, %401, %402 : vector<8x32x8xf32>
    %cst_182 = arith.constant 0.000000e+00 : f32
    %404 = vector.shape_cast %389 : vector<8x1x8xf32> to vector<8x1x8xf32>
    %405 = vector.broadcast %404 : vector<8x1x8xf32> to vector<8x32x8xf32>
    %406 = vector.broadcast %cst_182 : f32 to vector<8x32x8xf32>
    %407 = arith.select %403, %405, %406 : vector<8x32x8xi1>, vector<8x32x8xf32>
    %408 = arith.addf %398, %407 : vector<8x32x8xf32>
    "tpu.trace_start"() <{level = 10 : i32, message = "hcw,hwv->hcv"}> : () -> ()
    %cst_183 = arith.constant dense<0.000000e+00> : vector<8x16x8xf32>
    %409 = tpu.matmul %372, %408, %cst_183 {dimension_numbers = #tpu.dot_dimension_numbers<[2], [1], [1], [2], [0, 0, 0, 1, 1, 2], [0], [0]>} : vector<8x16x32xf32>, vector<8x32x8xf32>, vector<8x16x8xf32> -> vector<8x16x8xf32>
    "tpu.trace_stop"() : () -> ()
    %c0_184 = arith.constant 0 : index
    %c8 = arith.constant 8 : index
    %c0_185 = arith.constant 0 : index
    %c0_186 = arith.constant 0 : index
    %c0_187 = arith.constant 0 : index
    %410 = vector.load %arg4[%c0_184, %c8, %c0_185, %c0_186, %c0_187] : memref<1x16x8x16x8xf32, #tpu.memory_space<vmem>>, vector<1x1x8x16x8xf32>
    %411 = vector.shape_cast %410 : vector<1x1x8x16x8xf32> to vector<8x16x8xf32>
    %412 = arith.subf %411, %409 : vector<8x16x8xf32>
    %413 = math.absf %412 : vector<8x16x8xf32>
    %cst_188 = arith.constant dense<0.000000e+00> : vector<8x8xf32>
    %414 = vector.multi_reduction <add>, %413, %cst_188 [1] : vector<8x16x8xf32> to vector<8x8xf32>
    %c0_189 = arith.constant 0 : index
    %c8_190 = arith.constant 8 : index
    %c0_191 = arith.constant 0 : index
    %c0_192 = arith.constant 0 : index
    %415 = vector.load %arg6[%c0_189, %c8_190, %c0_191, %c0_192] : memref<1x16x8x8xf32, #tpu.memory_space<vmem>>, vector<1x1x8x8xf32>
    %416 = vector.shape_cast %415 : vector<1x1x8x8xf32> to vector<8x8xf32>
    %417 = vector.shape_cast %414 : vector<8x8xf32> to vector<1x1x8x8xf32>
    tpu.vector_store %arg6[%c0_189, %c8_190, %c0_191, %c0_192], %417 {strides = array<i32>} : memref<1x16x8x8xf32, #tpu.memory_space<vmem>>, vector<1x1x8x8xf32>,
    %418 = arith.addf %11, %374 : vector<8x8xf32>
    %cst_193 = arith.constant -5.000000e-01 : f32
    %419 = vector.broadcast %cst_193 : f32 to vector<8x8xf32>
    %420 = arith.mulf %419, %7 : vector<8x8xf32>
    %421 = arith.addf %418, %420 : vector<8x8xf32>
    %cst_194 = arith.constant 1.000000e+00 : f32
    %422 = vector.broadcast %cst_194 : f32 to vector<8x8xf32>
    %423 = arith.addf %15, %422 : vector<8x8xf32>
    %424 = arith.subf %423, %421 : vector<8x8xf32>
    %cst_195 = arith.constant 1.03225803 : f32
    %425 = vector.broadcast %cst_195 : f32 to vector<8x8xf32>
    %426 = arith.mulf %424, %425 : vector<8x8xf32>
    %cst_196 = arith.constant -5.000000e-01 : f32
    %427 = vector.broadcast %cst_196 : f32 to vector<8x8xf32>
    %428 = arith.addf %426, %427 : vector<8x8xf32>
    %429 = math.floor %428 : vector<8x8xf32>
    %430 = arith.subf %428, %429 : vector<8x8xf32>
    %431 = vector.shape_cast %429 : vector<8x8xf32> to vector<8x1x8xf32>
    %432 = vector.shape_cast %430 : vector<8x8xf32> to vector<8x1x8xf32>
    %433 = vector.broadcast %18 : vector<1x32x8xf32> to vector<8x32x8xf32>
    %434 = vector.broadcast %431 : vector<8x1x8xf32> to vector<8x32x8xf32>
    %435 = arith.cmpf oeq, %433, %434 : vector<8x32x8xf32>
    %cst_197 = arith.constant 1.000000e+00 : f32
    %436 = vector.broadcast %cst_197 : f32 to vector<8x1x8xf32>
    %437 = arith.subf %436, %432 : vector<8x1x8xf32>
    %cst_198 = arith.constant 0.000000e+00 : f32
    %438 = vector.shape_cast %437 : vector<8x1x8xf32> to vector<8x1x8xf32>
    %439 = vector.broadcast %438 : vector<8x1x8xf32> to vector<8x32x8xf32>
    %440 = vector.broadcast %cst_198 : f32 to vector<8x32x8xf32>
    %441 = arith.select %435, %439, %440 : vector<8x32x8xi1>, vector<8x32x8xf32>
    %cst_199 = arith.constant 1.000000e+00 : f32
    %442 = vector.broadcast %cst_199 : f32 to vector<8x1x8xf32>
    %443 = arith.addf %431, %442 : vector<8x1x8xf32>
    %444 = vector.broadcast %18 : vector<1x32x8xf32> to vector<8x32x8xf32>
    %445 = vector.broadcast %443 : vector<8x1x8xf32> to vector<8x32x8xf32>
    %446 = arith.cmpf oeq, %444, %445 : vector<8x32x8xf32>
    %cst_200 = arith.constant 0.000000e+00 : f32
    %447 = vector.shape_cast %432 : vector<8x1x8xf32> to vector<8x1x8xf32>
    %448 = vector.broadcast %447 : vector<8x1x8xf32> to vector<8x32x8xf32>
    %449 = vector.broadcast %cst_200 : f32 to vector<8x32x8xf32>
    %450 = arith.select %446, %448, %449 : vector<8x32x8xi1>, vector<8x32x8xf32>
    %451 = arith.addf %441, %450 : vector<8x32x8xf32>
    "tpu.trace_start"() <{level = 10 : i32, message = "hcw,hwv->hcv"}> : () -> ()
    %cst_201 = arith.constant dense<0.000000e+00> : vector<8x16x8xf32>
    %452 = tpu.matmul %372, %451, %cst_201 {dimension_numbers = #tpu.dot_dimension_numbers<[2], [1], [1], [2], [0, 0, 0, 1, 1, 2], [0], [0]>} : vector<8x16x32xf32>, vector<8x32x8xf32>, vector<8x16x8xf32> -> vector<8x16x8xf32>
    "tpu.trace_stop"() : () -> ()
    %c0_202 = arith.constant 0 : index
    %c9 = arith.constant 9 : index
    %c0_203 = arith.constant 0 : index
    %c0_204 = arith.constant 0 : index
    %c0_205 = arith.constant 0 : index
    %453 = vector.load %arg4[%c0_202, %c9, %c0_203, %c0_204, %c0_205] : memref<1x16x8x16x8xf32, #tpu.memory_space<vmem>>, vector<1x1x8x16x8xf32>
    %454 = vector.shape_cast %453 : vector<1x1x8x16x8xf32> to vector<8x16x8xf32>
    %455 = arith.subf %454, %452 : vector<8x16x8xf32>
    %456 = math.absf %455 : vector<8x16x8xf32>
    %cst_206 = arith.constant dense<0.000000e+00> : vector<8x8xf32>
    %457 = vector.multi_reduction <add>, %456, %cst_206 [1] : vector<8x16x8xf32> to vector<8x8xf32>
    %c0_207 = arith.constant 0 : index
    %c9_208 = arith.constant 9 : index
    %c0_209 = arith.constant 0 : index
    %c0_210 = arith.constant 0 : index
    %458 = vector.load %arg6[%c0_207, %c9_208, %c0_209, %c0_210] : memref<1x16x8x8xf32, #tpu.memory_space<vmem>>, vector<1x1x8x8xf32>
    %459 = vector.shape_cast %458 : vector<1x1x8x8xf32> to vector<8x8xf32>
    %460 = vector.shape_cast %457 : vector<8x8xf32> to vector<1x1x8x8xf32>
    tpu.vector_store %arg6[%c0_207, %c9_208, %c0_209, %c0_210], %460 {strides = array<i32>} : memref<1x16x8x8xf32, #tpu.memory_space<vmem>>, vector<1x1x8x8xf32>,
    %461 = arith.addf %11, %374 : vector<8x8xf32>
    %cst_211 = arith.constant 5.000000e-01 : f32
    %462 = vector.broadcast %cst_211 : f32 to vector<8x8xf32>
    %463 = arith.mulf %462, %7 : vector<8x8xf32>
    %464 = arith.addf %461, %463 : vector<8x8xf32>
    %cst_212 = arith.constant 2.000000e+00 : f32
    %465 = vector.broadcast %cst_212 : f32 to vector<8x8xf32>
    %466 = arith.addf %15, %465 : vector<8x8xf32>
    %467 = arith.subf %466, %464 : vector<8x8xf32>
    %cst_213 = arith.constant 1.03225803 : f32
    %468 = vector.broadcast %cst_213 : f32 to vector<8x8xf32>
    %469 = arith.mulf %467, %468 : vector<8x8xf32>
    %cst_214 = arith.constant -5.000000e-01 : f32
    %470 = vector.broadcast %cst_214 : f32 to vector<8x8xf32>
    %471 = arith.addf %469, %470 : vector<8x8xf32>
    %472 = math.floor %471 : vector<8x8xf32>
    %473 = arith.subf %471, %472 : vector<8x8xf32>
    %474 = vector.shape_cast %472 : vector<8x8xf32> to vector<8x1x8xf32>
    %475 = vector.shape_cast %473 : vector<8x8xf32> to vector<8x1x8xf32>
    %476 = vector.broadcast %18 : vector<1x32x8xf32> to vector<8x32x8xf32>
    %477 = vector.broadcast %474 : vector<8x1x8xf32> to vector<8x32x8xf32>
    %478 = arith.cmpf oeq, %476, %477 : vector<8x32x8xf32>
    %cst_215 = arith.constant 1.000000e+00 : f32
    %479 = vector.broadcast %cst_215 : f32 to vector<8x1x8xf32>
    %480 = arith.subf %479, %475 : vector<8x1x8xf32>
    %cst_216 = arith.constant 0.000000e+00 : f32
    %481 = vector.shape_cast %480 : vector<8x1x8xf32> to vector<8x1x8xf32>
    %482 = vector.broadcast %481 : vector<8x1x8xf32> to vector<8x32x8xf32>
    %483 = vector.broadcast %cst_216 : f32 to vector<8x32x8xf32>
    %484 = arith.select %478, %482, %483 : vector<8x32x8xi1>, vector<8x32x8xf32>
    %cst_217 = arith.constant 1.000000e+00 : f32
    %485 = vector.broadcast %cst_217 : f32 to vector<8x1x8xf32>
    %486 = arith.addf %474, %485 : vector<8x1x8xf32>
    %487 = vector.broadcast %18 : vector<1x32x8xf32> to vector<8x32x8xf32>
    %488 = vector.broadcast %486 : vector<8x1x8xf32> to vector<8x32x8xf32>
    %489 = arith.cmpf oeq, %487, %488 : vector<8x32x8xf32>
    %cst_218 = arith.constant 0.000000e+00 : f32
    %490 = vector.shape_cast %475 : vector<8x1x8xf32> to vector<8x1x8xf32>
    %491 = vector.broadcast %490 : vector<8x1x8xf32> to vector<8x32x8xf32>
    %492 = vector.broadcast %cst_218 : f32 to vector<8x32x8xf32>
    %493 = arith.select %489, %491, %492 : vector<8x32x8xi1>, vector<8x32x8xf32>
    %494 = arith.addf %484, %493 : vector<8x32x8xf32>
    "tpu.trace_start"() <{level = 10 : i32, message = "hcw,hwv->hcv"}> : () -> ()
    %cst_219 = arith.constant dense<0.000000e+00> : vector<8x16x8xf32>
    %495 = tpu.matmul %372, %494, %cst_219 {dimension_numbers = #tpu.dot_dimension_numbers<[2], [1], [1], [2], [0, 0, 0, 1, 1, 2], [0], [0]>} : vector<8x16x32xf32>, vector<8x32x8xf32>, vector<8x16x8xf32> -> vector<8x16x8xf32>
    "tpu.trace_stop"() : () -> ()
    %c0_220 = arith.constant 0 : index
    %c10 = arith.constant 10 : index
    %c0_221 = arith.constant 0 : index
    %c0_222 = arith.constant 0 : index
    %c0_223 = arith.constant 0 : index
    %496 = vector.load %arg4[%c0_220, %c10, %c0_221, %c0_222, %c0_223] : memref<1x16x8x16x8xf32, #tpu.memory_space<vmem>>, vector<1x1x8x16x8xf32>
    %497 = vector.shape_cast %496 : vector<1x1x8x16x8xf32> to vector<8x16x8xf32>
    %498 = arith.subf %497, %495 : vector<8x16x8xf32>
    %499 = math.absf %498 : vector<8x16x8xf32>
    %cst_224 = arith.constant dense<0.000000e+00> : vector<8x8xf32>
    %500 = vector.multi_reduction <add>, %499, %cst_224 [1] : vector<8x16x8xf32> to vector<8x8xf32>
    %c0_225 = arith.constant 0 : index
    %c10_226 = arith.constant 10 : index
    %c0_227 = arith.constant 0 : index
    %c0_228 = arith.constant 0 : index
    %501 = vector.load %arg6[%c0_225, %c10_226, %c0_227, %c0_228] : memref<1x16x8x8xf32, #tpu.memory_space<vmem>>, vector<1x1x8x8xf32>
    %502 = vector.shape_cast %501 : vector<1x1x8x8xf32> to vector<8x8xf32>
    %503 = vector.shape_cast %500 : vector<8x8xf32> to vector<1x1x8x8xf32>
    tpu.vector_store %arg6[%c0_225, %c10_226, %c0_227, %c0_228], %503 {strides = array<i32>} : memref<1x16x8x8xf32, #tpu.memory_space<vmem>>, vector<1x1x8x8xf32>,
    %504 = arith.addf %11, %374 : vector<8x8xf32>
    %cst_229 = arith.constant 1.500000e+00 : f32
    %505 = vector.broadcast %cst_229 : f32 to vector<8x8xf32>
    %506 = arith.mulf %505, %7 : vector<8x8xf32>
    %507 = arith.addf %504, %506 : vector<8x8xf32>
    %cst_230 = arith.constant 3.000000e+00 : f32
    %508 = vector.broadcast %cst_230 : f32 to vector<8x8xf32>
    %509 = arith.addf %15, %508 : vector<8x8xf32>
    %510 = arith.subf %509, %507 : vector<8x8xf32>
    %cst_231 = arith.constant 1.03225803 : f32
    %511 = vector.broadcast %cst_231 : f32 to vector<8x8xf32>
    %512 = arith.mulf %510, %511 : vector<8x8xf32>
    %cst_232 = arith.constant -5.000000e-01 : f32
    %513 = vector.broadcast %cst_232 : f32 to vector<8x8xf32>
    %514 = arith.addf %512, %513 : vector<8x8xf32>
    %515 = math.floor %514 : vector<8x8xf32>
    %516 = arith.subf %514, %515 : vector<8x8xf32>
    %517 = vector.shape_cast %515 : vector<8x8xf32> to vector<8x1x8xf32>
    %518 = vector.shape_cast %516 : vector<8x8xf32> to vector<8x1x8xf32>
    %519 = vector.broadcast %18 : vector<1x32x8xf32> to vector<8x32x8xf32>
    %520 = vector.broadcast %517 : vector<8x1x8xf32> to vector<8x32x8xf32>
    %521 = arith.cmpf oeq, %519, %520 : vector<8x32x8xf32>
    %cst_233 = arith.constant 1.000000e+00 : f32
    %522 = vector.broadcast %cst_233 : f32 to vector<8x1x8xf32>
    %523 = arith.subf %522, %518 : vector<8x1x8xf32>
    %cst_234 = arith.constant 0.000000e+00 : f32
    %524 = vector.shape_cast %523 : vector<8x1x8xf32> to vector<8x1x8xf32>
    %525 = vector.broadcast %524 : vector<8x1x8xf32> to vector<8x32x8xf32>
    %526 = vector.broadcast %cst_234 : f32 to vector<8x32x8xf32>
    %527 = arith.select %521, %525, %526 : vector<8x32x8xi1>, vector<8x32x8xf32>
    %cst_235 = arith.constant 1.000000e+00 : f32
    %528 = vector.broadcast %cst_235 : f32 to vector<8x1x8xf32>
    %529 = arith.addf %517, %528 : vector<8x1x8xf32>
    %530 = vector.broadcast %18 : vector<1x32x8xf32> to vector<8x32x8xf32>
    %531 = vector.broadcast %529 : vector<8x1x8xf32> to vector<8x32x8xf32>
    %532 = arith.cmpf oeq, %530, %531 : vector<8x32x8xf32>
    %cst_236 = arith.constant 0.000000e+00 : f32
    %533 = vector.shape_cast %518 : vector<8x1x8xf32> to vector<8x1x8xf32>
    %534 = vector.broadcast %533 : vector<8x1x8xf32> to vector<8x32x8xf32>
    %535 = vector.broadcast %cst_236 : f32 to vector<8x32x8xf32>
    %536 = arith.select %532, %534, %535 : vector<8x32x8xi1>, vector<8x32x8xf32>
    %537 = arith.addf %527, %536 : vector<8x32x8xf32>
    "tpu.trace_start"() <{level = 10 : i32, message = "hcw,hwv->hcv"}> : () -> ()
    %cst_237 = arith.constant dense<0.000000e+00> : vector<8x16x8xf32>
    %538 = tpu.matmul %372, %537, %cst_237 {dimension_numbers = #tpu.dot_dimension_numbers<[2], [1], [1], [2], [0, 0, 0, 1, 1, 2], [0], [0]>} : vector<8x16x32xf32>, vector<8x32x8xf32>, vector<8x16x8xf32> -> vector<8x16x8xf32>
    "tpu.trace_stop"() : () -> ()
    %c0_238 = arith.constant 0 : index
    %c11 = arith.constant 11 : index
    %c0_239 = arith.constant 0 : index
    %c0_240 = arith.constant 0 : index
    %c0_241 = arith.constant 0 : index
    %539 = vector.load %arg4[%c0_238, %c11, %c0_239, %c0_240, %c0_241] : memref<1x16x8x16x8xf32, #tpu.memory_space<vmem>>, vector<1x1x8x16x8xf32>
    %540 = vector.shape_cast %539 : vector<1x1x8x16x8xf32> to vector<8x16x8xf32>
    %541 = arith.subf %540, %538 : vector<8x16x8xf32>
    %542 = math.absf %541 : vector<8x16x8xf32>
    %cst_242 = arith.constant dense<0.000000e+00> : vector<8x8xf32>
    %543 = vector.multi_reduction <add>, %542, %cst_242 [1] : vector<8x16x8xf32> to vector<8x8xf32>
    %c0_243 = arith.constant 0 : index
    %c11_244 = arith.constant 11 : index
    %c0_245 = arith.constant 0 : index
    %c0_246 = arith.constant 0 : index
    %544 = vector.load %arg6[%c0_243, %c11_244, %c0_245, %c0_246] : memref<1x16x8x8xf32, #tpu.memory_space<vmem>>, vector<1x1x8x8xf32>
    %545 = vector.shape_cast %544 : vector<1x1x8x8xf32> to vector<8x8xf32>
    %546 = vector.shape_cast %543 : vector<8x8xf32> to vector<1x1x8x8xf32>
    tpu.vector_store %arg6[%c0_243, %c11_244, %c0_245, %c0_246], %546 {strides = array<i32>} : memref<1x16x8x8xf32, #tpu.memory_space<vmem>>, vector<1x1x8x8xf32>,
    %c0_247 = arith.constant 0 : index
    %c3_248 = arith.constant 3 : index
    %c0_249 = arith.constant 0 : index
    %c0_250 = arith.constant 0 : index
    %c0_251 = arith.constant 0 : index
    %547 = vector.load %arg5[%c0_247, %c3_248, %c0_249, %c0_250, %c0_251] : memref<1x4x8x16x32xf32, #tpu.memory_space<vmem>>, vector<1x1x8x16x32xf32>
    %548 = vector.shape_cast %547 : vector<1x1x8x16x32xf32> to vector<8x16x32xf32>
    %cst_252 = arith.constant 1.500000e+00 : f32
    %549 = vector.broadcast %cst_252 : f32 to vector<8x8xf32>
    %550 = arith.mulf %549, %5 : vector<8x8xf32>
    %551 = arith.addf %11, %550 : vector<8x8xf32>
    %cst_253 = arith.constant -1.500000e+00 : f32
    %552 = vector.broadcast %cst_253 : f32 to vector<8x8xf32>
    %553 = arith.mulf %552, %7 : vector<8x8xf32>
    %554 = arith.addf %551, %553 : vector<8x8xf32>
    %cst_254 = arith.constant 0.000000e+00 : f32
    %555 = vector.broadcast %cst_254 : f32 to vector<8x8xf32>
    %556 = arith.addf %15, %555 : vector<8x8xf32>
    %557 = arith.subf %556, %554 : vector<8x8xf32>
    %cst_255 = arith.constant 1.03225803 : f32
    %558 = vector.broadcast %cst_255 : f32 to vector<8x8xf32>
    %559 = arith.mulf %557, %558 : vector<8x8xf32>
    %cst_256 = arith.constant -5.000000e-01 : f32
    %560 = vector.broadcast %cst_256 : f32 to vector<8x8xf32>
    %561 = arith.addf %559, %560 : vector<8x8xf32>
    %562 = math.floor %561 : vector<8x8xf32>
    %563 = arith.subf %561, %562 : vector<8x8xf32>
    %564 = vector.shape_cast %562 : vector<8x8xf32> to vector<8x1x8xf32>
    %565 = vector.shape_cast %563 : vector<8x8xf32> to vector<8x1x8xf32>
    %566 = vector.broadcast %18 : vector<1x32x8xf32> to vector<8x32x8xf32>
    %567 = vector.broadcast %564 : vector<8x1x8xf32> to vector<8x32x8xf32>
    %568 = arith.cmpf oeq, %566, %567 : vector<8x32x8xf32>
    %cst_257 = arith.constant 1.000000e+00 : f32
    %569 = vector.broadcast %cst_257 : f32 to vector<8x1x8xf32>
    %570 = arith.subf %569, %565 : vector<8x1x8xf32>
    %cst_258 = arith.constant 0.000000e+00 : f32
    %571 = vector.shape_cast %570 : vector<8x1x8xf32> to vector<8x1x8xf32>
    %572 = vector.broadcast %571 : vector<8x1x8xf32> to vector<8x32x8xf32>
    %573 = vector.broadcast %cst_258 : f32 to vector<8x32x8xf32>
    %574 = arith.select %568, %572, %573 : vector<8x32x8xi1>, vector<8x32x8xf32>
    %cst_259 = arith.constant 1.000000e+00 : f32
    %575 = vector.broadcast %cst_259 : f32 to vector<8x1x8xf32>
    %576 = arith.addf %564, %575 : vector<8x1x8xf32>
    %577 = vector.broadcast %18 : vector<1x32x8xf32> to vector<8x32x8xf32>
    %578 = vector.broadcast %576 : vector<8x1x8xf32> to vector<8x32x8xf32>
    %579 = arith.cmpf oeq, %577, %578 : vector<8x32x8xf32>
    %cst_260 = arith.constant 0.000000e+00 : f32
    %580 = vector.shape_cast %565 : vector<8x1x8xf32> to vector<8x1x8xf32>
    %581 = vector.broadcast %580 : vector<8x1x8xf32> to vector<8x32x8xf32>
    %582 = vector.broadcast %cst_260 : f32 to vector<8x32x8xf32>
    %583 = arith.select %579, %581, %582 : vector<8x32x8xi1>, vector<8x32x8xf32>
    %584 = arith.addf %574, %583 : vector<8x32x8xf32>
    "tpu.trace_start"() <{level = 10 : i32, message = "hcw,hwv->hcv"}> : () -> ()
    %cst_261 = arith.constant dense<0.000000e+00> : vector<8x16x8xf32>
    %585 = tpu.matmul %548, %584, %cst_261 {dimension_numbers = #tpu.dot_dimension_numbers<[2], [1], [1], [2], [0, 0, 0, 1, 1, 2], [0], [0]>} : vector<8x16x32xf32>, vector<8x32x8xf32>, vector<8x16x8xf32> -> vector<8x16x8xf32>
    "tpu.trace_stop"() : () -> ()
    %c0_262 = arith.constant 0 : index
    %c12 = arith.constant 12 : index
    %c0_263 = arith.constant 0 : index
    %c0_264 = arith.constant 0 : index
    %c0_265 = arith.constant 0 : index
    %586 = vector.load %arg4[%c0_262, %c12, %c0_263, %c0_264, %c0_265] : memref<1x16x8x16x8xf32, #tpu.memory_space<vmem>>, vector<1x1x8x16x8xf32>
    %587 = vector.shape_cast %586 : vector<1x1x8x16x8xf32> to vector<8x16x8xf32>
    %588 = arith.subf %587, %585 : vector<8x16x8xf32>
    %589 = math.absf %588 : vector<8x16x8xf32>
    %cst_266 = arith.constant dense<0.000000e+00> : vector<8x8xf32>
    %590 = vector.multi_reduction <add>, %589, %cst_266 [1] : vector<8x16x8xf32> to vector<8x8xf32>
    %c0_267 = arith.constant 0 : index
    %c12_268 = arith.constant 12 : index
    %c0_269 = arith.constant 0 : index
    %c0_270 = arith.constant 0 : index
    %591 = vector.load %arg6[%c0_267, %c12_268, %c0_269, %c0_270] : memref<1x16x8x8xf32, #tpu.memory_space<vmem>>, vector<1x1x8x8xf32>
    %592 = vector.shape_cast %591 : vector<1x1x8x8xf32> to vector<8x8xf32>
    %593 = vector.shape_cast %590 : vector<8x8xf32> to vector<1x1x8x8xf32>
    tpu.vector_store %arg6[%c0_267, %c12_268, %c0_269, %c0_270], %593 {strides = array<i32>} : memref<1x16x8x8xf32, #tpu.memory_space<vmem>>, vector<1x1x8x8xf32>,
    %594 = arith.addf %11, %550 : vector<8x8xf32>
    %cst_271 = arith.constant -5.000000e-01 : f32
    %595 = vector.broadcast %cst_271 : f32 to vector<8x8xf32>
    %596 = arith.mulf %595, %7 : vector<8x8xf32>
    %597 = arith.addf %594, %596 : vector<8x8xf32>
    %cst_272 = arith.constant 1.000000e+00 : f32
    %598 = vector.broadcast %cst_272 : f32 to vector<8x8xf32>
    %599 = arith.addf %15, %598 : vector<8x8xf32>
    %600 = arith.subf %599, %597 : vector<8x8xf32>
    %cst_273 = arith.constant 1.03225803 : f32
    %601 = vector.broadcast %cst_273 : f32 to vector<8x8xf32>
    %602 = arith.mulf %600, %601 : vector<8x8xf32>
    %cst_274 = arith.constant -5.000000e-01 : f32
    %603 = vector.broadcast %cst_274 : f32 to vector<8x8xf32>
    %604 = arith.addf %602, %603 : vector<8x8xf32>
    %605 = math.floor %604 : vector<8x8xf32>
    %606 = arith.subf %604, %605 : vector<8x8xf32>
    %607 = vector.shape_cast %605 : vector<8x8xf32> to vector<8x1x8xf32>
    %608 = vector.shape_cast %606 : vector<8x8xf32> to vector<8x1x8xf32>
    %609 = vector.broadcast %18 : vector<1x32x8xf32> to vector<8x32x8xf32>
    %610 = vector.broadcast %607 : vector<8x1x8xf32> to vector<8x32x8xf32>
    %611 = arith.cmpf oeq, %609, %610 : vector<8x32x8xf32>
    %cst_275 = arith.constant 1.000000e+00 : f32
    %612 = vector.broadcast %cst_275 : f32 to vector<8x1x8xf32>
    %613 = arith.subf %612, %608 : vector<8x1x8xf32>
    %cst_276 = arith.constant 0.000000e+00 : f32
    %614 = vector.shape_cast %613 : vector<8x1x8xf32> to vector<8x1x8xf32>
    %615 = vector.broadcast %614 : vector<8x1x8xf32> to vector<8x32x8xf32>
    %616 = vector.broadcast %cst_276 : f32 to vector<8x32x8xf32>
    %617 = arith.select %611, %615, %616 : vector<8x32x8xi1>, vector<8x32x8xf32>
    %cst_277 = arith.constant 1.000000e+00 : f32
    %618 = vector.broadcast %cst_277 : f32 to vector<8x1x8xf32>
    %619 = arith.addf %607, %618 : vector<8x1x8xf32>
    %620 = vector.broadcast %18 : vector<1x32x8xf32> to vector<8x32x8xf32>
    %621 = vector.broadcast %619 : vector<8x1x8xf32> to vector<8x32x8xf32>
    %622 = arith.cmpf oeq, %620, %621 : vector<8x32x8xf32>
    %cst_278 = arith.constant 0.000000e+00 : f32
    %623 = vector.shape_cast %608 : vector<8x1x8xf32> to vector<8x1x8xf32>
    %624 = vector.broadcast %623 : vector<8x1x8xf32> to vector<8x32x8xf32>
    %625 = vector.broadcast %cst_278 : f32 to vector<8x32x8xf32>
    %626 = arith.select %622, %624, %625 : vector<8x32x8xi1>, vector<8x32x8xf32>
    %627 = arith.addf %617, %626 : vector<8x32x8xf32>
    "tpu.trace_start"() <{level = 10 : i32, message = "hcw,hwv->hcv"}> : () -> ()
    %cst_279 = arith.constant dense<0.000000e+00> : vector<8x16x8xf32>
    %628 = tpu.matmul %548, %627, %cst_279 {dimension_numbers = #tpu.dot_dimension_numbers<[2], [1], [1], [2], [0, 0, 0, 1, 1, 2], [0], [0]>} : vector<8x16x32xf32>, vector<8x32x8xf32>, vector<8x16x8xf32> -> vector<8x16x8xf32>
    "tpu.trace_stop"() : () -> ()
    %c0_280 = arith.constant 0 : index
    %c13 = arith.constant 13 : index
    %c0_281 = arith.constant 0 : index
    %c0_282 = arith.constant 0 : index
    %c0_283 = arith.constant 0 : index
    %629 = vector.load %arg4[%c0_280, %c13, %c0_281, %c0_282, %c0_283] : memref<1x16x8x16x8xf32, #tpu.memory_space<vmem>>, vector<1x1x8x16x8xf32>
    %630 = vector.shape_cast %629 : vector<1x1x8x16x8xf32> to vector<8x16x8xf32>
    %631 = arith.subf %630, %628 : vector<8x16x8xf32>
    %632 = math.absf %631 : vector<8x16x8xf32>
    %cst_284 = arith.constant dense<0.000000e+00> : vector<8x8xf32>
    %633 = vector.multi_reduction <add>, %632, %cst_284 [1] : vector<8x16x8xf32> to vector<8x8xf32>
    %c0_285 = arith.constant 0 : index
    %c13_286 = arith.constant 13 : index
    %c0_287 = arith.constant 0 : index
    %c0_288 = arith.constant 0 : index
    %634 = vector.load %arg6[%c0_285, %c13_286, %c0_287, %c0_288] : memref<1x16x8x8xf32, #tpu.memory_space<vmem>>, vector<1x1x8x8xf32>
    %635 = vector.shape_cast %634 : vector<1x1x8x8xf32> to vector<8x8xf32>
    %636 = vector.shape_cast %633 : vector<8x8xf32> to vector<1x1x8x8xf32>
    tpu.vector_store %arg6[%c0_285, %c13_286, %c0_287, %c0_288], %636 {strides = array<i32>} : memref<1x16x8x8xf32, #tpu.memory_space<vmem>>, vector<1x1x8x8xf32>,
    %637 = arith.addf %11, %550 : vector<8x8xf32>
    %cst_289 = arith.constant 5.000000e-01 : f32
    %638 = vector.broadcast %cst_289 : f32 to vector<8x8xf32>
    %639 = arith.mulf %638, %7 : vector<8x8xf32>
    %640 = arith.addf %637, %639 : vector<8x8xf32>
    %cst_290 = arith.constant 2.000000e+00 : f32
    %641 = vector.broadcast %cst_290 : f32 to vector<8x8xf32>
    %642 = arith.addf %15, %641 : vector<8x8xf32>
    %643 = arith.subf %642, %640 : vector<8x8xf32>
    %cst_291 = arith.constant 1.03225803 : f32
    %644 = vector.broadcast %cst_291 : f32 to vector<8x8xf32>
    %645 = arith.mulf %643, %644 : vector<8x8xf32>
    %cst_292 = arith.constant -5.000000e-01 : f32
    %646 = vector.broadcast %cst_292 : f32 to vector<8x8xf32>
    %647 = arith.addf %645, %646 : vector<8x8xf32>
    %648 = math.floor %647 : vector<8x8xf32>
    %649 = arith.subf %647, %648 : vector<8x8xf32>
    %650 = vector.shape_cast %648 : vector<8x8xf32> to vector<8x1x8xf32>
    %651 = vector.shape_cast %649 : vector<8x8xf32> to vector<8x1x8xf32>
    %652 = vector.broadcast %18 : vector<1x32x8xf32> to vector<8x32x8xf32>
    %653 = vector.broadcast %650 : vector<8x1x8xf32> to vector<8x32x8xf32>
    %654 = arith.cmpf oeq, %652, %653 : vector<8x32x8xf32>
    %cst_293 = arith.constant 1.000000e+00 : f32
    %655 = vector.broadcast %cst_293 : f32 to vector<8x1x8xf32>
    %656 = arith.subf %655, %651 : vector<8x1x8xf32>
    %cst_294 = arith.constant 0.000000e+00 : f32
    %657 = vector.shape_cast %656 : vector<8x1x8xf32> to vector<8x1x8xf32>
    %658 = vector.broadcast %657 : vector<8x1x8xf32> to vector<8x32x8xf32>
    %659 = vector.broadcast %cst_294 : f32 to vector<8x32x8xf32>
    %660 = arith.select %654, %658, %659 : vector<8x32x8xi1>, vector<8x32x8xf32>
    %cst_295 = arith.constant 1.000000e+00 : f32
    %661 = vector.broadcast %cst_295 : f32 to vector<8x1x8xf32>
    %662 = arith.addf %650, %661 : vector<8x1x8xf32>
    %663 = vector.broadcast %18 : vector<1x32x8xf32> to vector<8x32x8xf32>
    %664 = vector.broadcast %662 : vector<8x1x8xf32> to vector<8x32x8xf32>
    %665 = arith.cmpf oeq, %663, %664 : vector<8x32x8xf32>
    %cst_296 = arith.constant 0.000000e+00 : f32
    %666 = vector.shape_cast %651 : vector<8x1x8xf32> to vector<8x1x8xf32>
    %667 = vector.broadcast %666 : vector<8x1x8xf32> to vector<8x32x8xf32>
    %668 = vector.broadcast %cst_296 : f32 to vector<8x32x8xf32>
    %669 = arith.select %665, %667, %668 : vector<8x32x8xi1>, vector<8x32x8xf32>
    %670 = arith.addf %660, %669 : vector<8x32x8xf32>
    "tpu.trace_start"() <{level = 10 : i32, message = "hcw,hwv->hcv"}> : () -> ()
    %cst_297 = arith.constant dense<0.000000e+00> : vector<8x16x8xf32>
    %671 = tpu.matmul %548, %670, %cst_297 {dimension_numbers = #tpu.dot_dimension_numbers<[2], [1], [1], [2], [0, 0, 0, 1, 1, 2], [0], [0]>} : vector<8x16x32xf32>, vector<8x32x8xf32>, vector<8x16x8xf32> -> vector<8x16x8xf32>
    "tpu.trace_stop"() : () -> ()
    %c0_298 = arith.constant 0 : index
    %c14 = arith.constant 14 : index
    %c0_299 = arith.constant 0 : index
    %c0_300 = arith.constant 0 : index
    %c0_301 = arith.constant 0 : index
    %672 = vector.load %arg4[%c0_298, %c14, %c0_299, %c0_300, %c0_301] : memref<1x16x8x16x8xf32, #tpu.memory_space<vmem>>, vector<1x1x8x16x8xf32>
    %673 = vector.shape_cast %672 : vector<1x1x8x16x8xf32> to vector<8x16x8xf32>
    %674 = arith.subf %673, %671 : vector<8x16x8xf32>
    %675 = math.absf %674 : vector<8x16x8xf32>
    %cst_302 = arith.constant dense<0.000000e+00> : vector<8x8xf32>
    %676 = vector.multi_reduction <add>, %675, %cst_302 [1] : vector<8x16x8xf32> to vector<8x8xf32>
    %c0_303 = arith.constant 0 : index
    %c14_304 = arith.constant 14 : index
    %c0_305 = arith.constant 0 : index
    %c0_306 = arith.constant 0 : index
    %677 = vector.load %arg6[%c0_303, %c14_304, %c0_305, %c0_306] : memref<1x16x8x8xf32, #tpu.memory_space<vmem>>, vector<1x1x8x8xf32>
    %678 = vector.shape_cast %677 : vector<1x1x8x8xf32> to vector<8x8xf32>
    %679 = vector.shape_cast %676 : vector<8x8xf32> to vector<1x1x8x8xf32>
    tpu.vector_store %arg6[%c0_303, %c14_304, %c0_305, %c0_306], %679 {strides = array<i32>} : memref<1x16x8x8xf32, #tpu.memory_space<vmem>>, vector<1x1x8x8xf32>,
    %680 = arith.addf %11, %550 : vector<8x8xf32>
    %cst_307 = arith.constant 1.500000e+00 : f32
    %681 = vector.broadcast %cst_307 : f32 to vector<8x8xf32>
    %682 = arith.mulf %681, %7 : vector<8x8xf32>
    %683 = arith.addf %680, %682 : vector<8x8xf32>
    %cst_308 = arith.constant 3.000000e+00 : f32
    %684 = vector.broadcast %cst_308 : f32 to vector<8x8xf32>
    %685 = arith.addf %15, %684 : vector<8x8xf32>
    %686 = arith.subf %685, %683 : vector<8x8xf32>
    %cst_309 = arith.constant 1.03225803 : f32
    %687 = vector.broadcast %cst_309 : f32 to vector<8x8xf32>
    %688 = arith.mulf %686, %687 : vector<8x8xf32>
    %cst_310 = arith.constant -5.000000e-01 : f32
    %689 = vector.broadcast %cst_310 : f32 to vector<8x8xf32>
    %690 = arith.addf %688, %689 : vector<8x8xf32>
    %691 = math.floor %690 : vector<8x8xf32>
    %692 = arith.subf %690, %691 : vector<8x8xf32>
    %693 = vector.shape_cast %691 : vector<8x8xf32> to vector<8x1x8xf32>
    %694 = vector.shape_cast %692 : vector<8x8xf32> to vector<8x1x8xf32>
    %695 = vector.broadcast %18 : vector<1x32x8xf32> to vector<8x32x8xf32>
    %696 = vector.broadcast %693 : vector<8x1x8xf32> to vector<8x32x8xf32>
    %697 = arith.cmpf oeq, %695, %696 : vector<8x32x8xf32>
    %cst_311 = arith.constant 1.000000e+00 : f32
    %698 = vector.broadcast %cst_311 : f32 to vector<8x1x8xf32>
    %699 = arith.subf %698, %694 : vector<8x1x8xf32>
    %cst_312 = arith.constant 0.000000e+00 : f32
    %700 = vector.shape_cast %699 : vector<8x1x8xf32> to vector<8x1x8xf32>
    %701 = vector.broadcast %700 : vector<8x1x8xf32> to vector<8x32x8xf32>
    %702 = vector.broadcast %cst_312 : f32 to vector<8x32x8xf32>
    %703 = arith.select %697, %701, %702 : vector<8x32x8xi1>, vector<8x32x8xf32>
    %cst_313 = arith.constant 1.000000e+00 : f32
    %704 = vector.broadcast %cst_313 : f32 to vector<8x1x8xf32>
    %705 = arith.addf %693, %704 : vector<8x1x8xf32>
    %706 = vector.broadcast %18 : vector<1x32x8xf32> to vector<8x32x8xf32>
    %707 = vector.broadcast %705 : vector<8x1x8xf32> to vector<8x32x8xf32>
    %708 = arith.cmpf oeq, %706, %707 : vector<8x32x8xf32>
    %cst_314 = arith.constant 0.000000e+00 : f32
    %709 = vector.shape_cast %694 : vector<8x1x8xf32> to vector<8x1x8xf32>
    %710 = vector.broadcast %709 : vector<8x1x8xf32> to vector<8x32x8xf32>
    %711 = vector.broadcast %cst_314 : f32 to vector<8x32x8xf32>
    %712 = arith.select %708, %710, %711 : vector<8x32x8xi1>, vector<8x32x8xf32>
    %713 = arith.addf %703, %712 : vector<8x32x8xf32>
    "tpu.trace_start"() <{level = 10 : i32, message = "hcw,hwv->hcv"}> : () -> ()
    %cst_315 = arith.constant dense<0.000000e+00> : vector<8x16x8xf32>
    %714 = tpu.matmul %548, %713, %cst_315 {dimension_numbers = #tpu.dot_dimension_numbers<[2], [1], [1], [2], [0, 0, 0, 1, 1, 2], [0], [0]>} : vector<8x16x32xf32>, vector<8x32x8xf32>, vector<8x16x8xf32> -> vector<8x16x8xf32>
    "tpu.trace_stop"() : () -> ()
    %c0_316 = arith.constant 0 : index
    %c15 = arith.constant 15 : index
    %c0_317 = arith.constant 0 : index
    %c0_318 = arith.constant 0 : index
    %c0_319 = arith.constant 0 : index
    %715 = vector.load %arg4[%c0_316, %c15, %c0_317, %c0_318, %c0_319] : memref<1x16x8x16x8xf32, #tpu.memory_space<vmem>>, vector<1x1x8x16x8xf32>
    %716 = vector.shape_cast %715 : vector<1x1x8x16x8xf32> to vector<8x16x8xf32>
    %717 = arith.subf %716, %714 : vector<8x16x8xf32>
    %718 = math.absf %717 : vector<8x16x8xf32>
    %cst_320 = arith.constant dense<0.000000e+00> : vector<8x8xf32>
    %719 = vector.multi_reduction <add>, %718, %cst_320 [1] : vector<8x16x8xf32> to vector<8x8xf32>
    %c0_321 = arith.constant 0 : index
    %c15_322 = arith.constant 15 : index
    %c0_323 = arith.constant 0 : index
    %c0_324 = arith.constant 0 : index
    %720 = vector.load %arg6[%c0_321, %c15_322, %c0_323, %c0_324] : memref<1x16x8x8xf32, #tpu.memory_space<vmem>>, vector<1x1x8x8xf32>
    %721 = vector.shape_cast %720 : vector<1x1x8x8xf32> to vector<8x8xf32>
    %722 = vector.shape_cast %719 : vector<8x8xf32> to vector<1x1x8x8xf32>
    tpu.vector_store %arg6[%c0_321, %c15_322, %c0_323, %c0_324], %722 {strides = array<i32>} : memref<1x16x8x8xf32, #tpu.memory_space<vmem>>, vector<1x1x8x8xf32>,
    return
  }
  func.func @transform_0(%arg0: i32, %arg1: i32, %arg2: i32) -> (i32, i32, i32, i32) {
    %c0_i32 = arith.constant 0 : i32
    %c0_i32_0 = arith.constant 0 : i32
    %c0_i32_1 = arith.constant 0 : i32
    return %arg0, %c0_i32, %arg1, %c0_i32_0 : i32, i32, i32, i32
  }
  func.func @transform_1(%arg0: i32, %arg1: i32, %arg2: i32) -> (i32, i32, i32, i32, i32) {
    %c0_i32 = arith.constant 0 : i32
    %c0_i32_0 = arith.constant 0 : i32
    %c0_i32_1 = arith.constant 0 : i32
    %c0_i32_2 = arith.constant 0 : i32
    return %arg0, %c0_i32, %arg1, %c0_i32_0, %c0_i32_1 : i32, i32, i32, i32, i32
  }
  func.func @transform_2(%arg0: i32, %arg1: i32, %arg2: i32) -> (i32, i32, i32, i32, i32) {
    %c0_i32 = arith.constant 0 : i32
    %c0_i32_0 = arith.constant 0 : i32
    %c0_i32_1 = arith.constant 0 : i32
    %c0_i32_2 = arith.constant 0 : i32
    return %arg0, %c0_i32, %arg1, %c0_i32_0, %c0_i32_1 : i32, i32, i32, i32, i32
  }
  func.func @transform_3(%arg0: i32, %arg1: i32, %arg2: i32) -> (i32, i32, i32, i32) {
    %c0_i32 = arith.constant 0 : i32
    %c0_i32_0 = arith.constant 0 : i32
    return %arg0, %arg2, %arg1, %c0_i32 : i32, i32, i32, i32
  }
}

</mosaic_0001>

<llo_original>
// kernel: tile_warping1.1
$region0: #{tile_warping1.1}
  #allocation0 [shape = 'u32[]', space=smem, size = 0x4, offset = 0x4, fixed_abs, tag = 'smem constant byte address 0x4 - core index']
  #allocation1 [shape = 'u32[72,128]{1,0:T(1,128)}', space=vmem, size = 0x9000, scoped, tag = 'internal scratch']
  %s0 = inlined_call_operand.vmem [shape: f32[2,3,8,8], index: 0, kind: input, shape index: {}]
  %s1 = inlined_call_operand.vmem [shape: f32[2,16,8,16,8], index: 1, kind: input, shape index: {}]
  %s2 = inlined_call_operand.vmem [shape: f32[2,4,8,16,32], index: 2, kind: input, shape index: {}]
  %s3 = inlined_call_operand.vmem [shape: f32[2,48,8,8], index: 3, kind: output, shape index: {}]
  %s4 = sld [smem:[#allocation0]]
  $region45: #{tile_warping1.1} parent=0
    _
  %s6 = ssub.s32 1, %s4
  %s7 = scalar_select 0, %s6, %s4
  loop: start=0, step=1, limit=8
  $region2: #{tile_warping1.1} parent=0 // loop_pre_header
    _
  $region3: #{tile_warping1.1} parent=0 // loop_header
    %s9 = sphi 0, %s13
    %p10 = scmp.ge.s32.totalorder %s9, 8
    %s16 = sphi 0, %s35
    %s17 = sphi 0, %s31
    %s18 = sphi 0, %s27
    %s19 = sphi 0, %s16
    %s20 = sphi 0, %s17
    %s21 = sphi 0, %s18
    %s22 = sphi 0, %s19
    %s23 = sphi 0, %s20
    %s24 = sphi 0, %s21
    %s40 = sphi 0, %s42
    %s43 = sphi 0, %s40
    %s44 = sphi 0, %s43
    %s60 = sphi 0, %s44
    %s68 = sphi 0, %s70
    %s71 = sphi 0, %s68
    %s72 = sphi 0, %s71
    %s88 = sphi 0, %s72
    %s96 = sphi 0, %s98
    %s99 = sphi 0, %s96
    %s100 = sphi 0, %s99
    %s116 = sphi 0, %s100
    %s126 = sphi 0, %s128
    %s129 = sphi 0, %s126
    %s130 = sphi 0, %s129
    %s146 = sphi 0, %s130
  $region4: #{tile_warping1.1} parent=0 // loop_header_branch
    %12 = sbr.rel (%p10) target = $region8
  $region5: #{tile_warping1.1} parent=0 // loop_body
    %s14 = ssub.s32 %s9, 1
    %s15 = ssub.s32 %s9, 2
    %s25 = sadd.s32 1, %s18
    %p26 = scmp.ge.s32.totalorder %s25, 3
    %s27 = scalar_select %p26, 0, %s25
    %s28 = sadd.s32 1, %s17
    %s29 = scalar_select %p26, %s28, %s17
    %p30 = scmp.ge.s32.totalorder %s29, 1
    %s31 = scalar_select %p30, 0, %s29
    %s32 = sadd.s32 1, %s16
    %s33 = scalar_select %p30, %s32, %s16
    %p34 = scmp.ge.s32.totalorder %s33, 2
    %s35 = scalar_select %p34, 0, %s33
    %s36 = ssub.s32 %s16, %s35
    %s37 = ssub.s32 %s17, %s31
    %s38 = sor.u32 %s36, %s37
    %p39 = scmp.eq.s32.totalorder %s38, 0
    %s41 = sadd.s32 %s40, 1
    %s42 = scalar_select %p39, %s40, %s41
    %p45 = pneg %p39
    %p46 = scmp.eq.s32.totalorder %s9, 5
    %p47 = por %p45, %p46
    %p48 = scmp.ne.s32.totalorder %s40, %s43
    %p49 = scmp.eq.s32.totalorder %s9, 0
    %p50 = por %p48, %p49
    %p51 = scmp.ne.s32.totalorder %s40, %s43
    %p52 = scmp.eq.s32.totalorder %s14, 5
    %p53 = por %p51, %p52
    %p54 = scmp.ne.s32.totalorder %s43, %s44
    %p55 = scmp.eq.s32.totalorder %s14, 0
    %p56 = por %p54, %p55
    %p57 = scmp.ne.s32.totalorder %s43, %s44
    %p58 = scmp.eq.s32.totalorder %s15, 5
    %p59 = por %p57, %p58
    %p61 = scmp.ne.s32.totalorder %s44, %s60
    %p62 = scmp.eq.s32.totalorder %s15, 0
    %p63 = por %p61, %p62
    %s64 = ssub.s32 %s16, %s35
    %s65 = ssub.s32 %s17, %s31
    %s66 = sor.u32 %s64, %s65
    %p67 = scmp.eq.s32.totalorder %s66, 0
    %s69 = sadd.s32 %s68, 1
    %s70 = scalar_select %p67, %s68, %s69
    %p73 = pneg %p67
    %p74 = scmp.eq.s32.totalorder %s9, 5
    %p75 = por %p73, %p74
    %p76 = scmp.ne.s32.totalorder %s68, %s71
    %p77 = scmp.eq.s32.totalorder %s9, 0
    %p78 = por %p76, %p77
    %p79 = scmp.ne.s32.totalorder %s68, %s71
    %p80 = scmp.eq.s32.totalorder %s14, 5
    %p81 = por %p79, %p80
    %p82 = scmp.ne.s32.totalorder %s71, %s72
    %p83 = scmp.eq.s32.totalorder %s14, 0
    %p84 = por %p82, %p83
    %p85 = scmp.ne.s32.totalorder %s71, %s72
    %p86 = scmp.eq.s32.totalorder %s15, 5
    %p87 = por %p85, %p86
    %p89 = scmp.ne.s32.totalorder %s72, %s88
    %p90 = scmp.eq.s32.totalorder %s15, 0
    %p91 = por %p89, %p90
    %s92 = ssub.s32 %s16, %s35
    %s93 = ssub.s32 %s17, %s31
    %s94 = sor.u32 %s92, %s93
    %p95 = scmp.eq.s32.totalorder %s94, 0
    %s97 = sadd.s32 %s96, 1
    %s98 = scalar_select %p95, %s96, %s97
    %p101 = pneg %p95
    %p102 = scmp.eq.s32.totalorder %s9, 5
    %p103 = por %p101, %p102
    %p104 = scmp.ne.s32.totalorder %s96, %s99
    %p105 = scmp.eq.s32.totalorder %s9, 0
    %p106 = por %p104, %p105
    %p107 = scmp.ne.s32.totalorder %s96, %s99
    %p108 = scmp.eq.s32.totalorder %s14, 5
    %p109 = por %p107, %p108
    %p110 = scmp.ne.s32.totalorder %s99, %s100
    %p111 = scmp.eq.s32.totalorder %s14, 0
    %p112 = por %p110, %p111
    %p113 = scmp.ne.s32.totalorder %s99, %s100
    %p114 = scmp.eq.s32.totalorder %s15, 5
    %p115 = por %p113, %p114
    %p117 = scmp.ne.s32.totalorder %s100, %s116
    %p118 = scmp.eq.s32.totalorder %s15, 0
    %p119 = por %p117, %p118
    %s120 = ssub.s32 %s16, %s35
    %s121 = ssub.s32 %s18, %s27
    %s122 = sor.u32 %s120, %s121
    %s123 = ssub.s32 %s17, %s31
    %s124 = sor.u32 %s122, %s123
    %p125 = scmp.eq.s32.totalorder %s124, 0
    %s127 = sadd.s32 %s126, 1
    %s128 = scalar_select %p125, %s126, %s127
    %p131 = pneg %p125
    %p132 = scmp.eq.s32.totalorder %s9, 5
    %p133 = por %p131, %p132
    %p134 = scmp.ne.s32.totalorder %s126, %s129
    %p135 = scmp.eq.s32.totalorder %s9, 0
    %p136 = por %p134, %p135
    %p137 = scmp.ne.s32.totalorder %s126, %s129
    %p138 = scmp.eq.s32.totalorder %s14, 5
    %p139 = por %p137, %p138
    %p140 = scmp.ne.s32.totalorder %s129, %s130
    %p141 = scmp.eq.s32.totalorder %s14, 0
    %p142 = por %p140, %p141
    %p143 = scmp.ne.s32.totalorder %s129, %s130
    %p144 = scmp.eq.s32.totalorder %s15, 5
    %p145 = por %p143, %p144
    %p147 = scmp.ne.s32.totalorder %s130, %s146
    %p148 = scmp.eq.s32.totalorder %s15, 0
    %p149 = por %p147, %p148
    %p150 = scmp.le.s32.totalorder 1, %s9
    %p151 = scmp.lt.s32.totalorder %s9, 7
    %p152 = pnand %p150, %p151
    %p153 = pneg %p152
    // Predicated region
    $region9: #{tile_warping1.1} parent=5 // pred_check
      _
    $region10: #{tile_warping1.1} parent=5 // pred_check_branch
      %155 = sbr.rel (%p152) target = $region12
    $region11: #{tile_warping1.1} parent=5 // pred_region
      %s156 = ssub.s32 %s9, 1
    $region12: #{tile_warping1.1} parent=5 // pred_fallthru
      _
    %p157 = scmp.lt.s32.totalorder %s9, 6
    // Predicated region
    $region13: #{tile_warping1.1} parent=5 // pred_check
      %p158 = pneg %p157
    $region14: #{tile_warping1.1} parent=5 // pred_check_branch
      %160 = sbr.rel (%p158) target = $region16
    $region15: #{tile_warping1.1} parent=5 // pred_region
      // Predicated region
      $region17: #{tile_warping1.1} parent=15 // pred_check
        %p161 = pneg %p50
      $region18: #{tile_warping1.1} parent=15 // pred_check_branch
        %163 = sbr.rel (%p161) target = $region20
      $region19: #{tile_warping1.1} parent=15 // pred_region
        %p164 = scmp.lt.s32.totalorder %s16, 1
        %s165 = scalar_select %p164, %s16, 1
        %p166 = scmp.lt.s32.totalorder %s17, 0
        %s167 = scalar_select %p166, %s17, 0
        %s168 = smul.addr %s165, 3
        %s169 = sadd.s32 %s167, %s168
        %s170 = smul.addr %s169, 8
        %s171 = scalar_lea.vmem %s0, %s170
      $region20: #{tile_warping1.1} parent=15 // pred_fallthru
        _
      // Predicated region
      $region21: #{tile_warping1.1} parent=15 // pred_check
        %p172 = pneg %p78
      $region22: #{tile_warping1.1} parent=15 // pred_check_branch
        %174 = sbr.rel (%p172) target = $region24
      $region23: #{tile_warping1.1} parent=15 // pred_region
        %s175 = smul.u32 8, %s17
        %p176 = scmp.lt.s32.totalorder %s16, 1
        %s177 = scalar_select %p176, %s16, 1
        %p178 = scmp.lt.s32.totalorder %s175, 7
        %s179 = scalar_select %p178, %s175, 7
        %s180 = smul.addr %s179, 2
        %s181 = smul.addr %s177, 256
        %s182 = sadd.s32 %s180, %s181
        %s183 = smul.addr %s182, 8
        %s184 = scalar_lea.vmem %s1, %s183
        %s185 = smul.u32 8, %s17
      $region24: #{tile_warping1.1} parent=15 // pred_fallthru
        _
      // Predicated region
      $region25: #{tile_warping1.1} parent=15 // pred_check
        %p186 = pneg %p106
      $region26: #{tile_warping1.1} parent=15 // pred_check_branch
        %188 = sbr.rel (%p186) target = $region28
      $region27: #{tile_warping1.1} parent=15 // pred_region
        %s189 = smul.u32 8, %s17
        %p190 = scmp.lt.s32.totalorder %s16, 1
        %s191 = scalar_select %p190, %s16, 1
        %p192 = scmp.lt.s32.totalorder %s189, 7
        %s193 = scalar_select %p192, %s189, 7
        %s194 = smul.addr %s193, 2
        %s195 = smul.addr %s191, 64
        %s196 = sadd.s32 %s194, %s195
        %s197 = smul.addr %s196, 8
        %s198 = scalar_lea.vmem %s2, %s197
        %s199 = smul.u32 8, %s17
      $region28: #{tile_warping1.1} parent=15 // pred_fallthru
        _
    $region16: #{tile_warping1.1} parent=5 // pred_fallthru
      _
    %p200 = scmp.le.s32.totalorder 1, %s9
    %p201 = scmp.lt.s32.totalorder %s9, 7
    %p202 = pnand %p200, %p201
    %p203 = pneg %p202
    // Predicated region
    $region29: #{tile_warping1.1} parent=5 // pred_check
      _
    $region30: #{tile_warping1.1} parent=5 // pred_check_branch
      %205 = sbr.rel (%p202) target = $region32
    $region31: #{tile_warping1.1} parent=5 // pred_region
      %s206 = ssub.s32 %s9, 1
      %p207 = scmp.lt.s32.totalorder %s19, 1
      %s208 = scalar_select %p207, %s19, 1
      %p209 = scmp.lt.s32.totalorder %s20, 0
      %s210 = scalar_select %p209, %s20, 0
      %s211 = smul.addr %s208, 3
      %s212 = sadd.s32 %s210, %s211
      %s213 = smul.addr %s212, 8
      %s214 = scalar_lea.vmem %s0, %s213
      %p215 = pneg %p56
      %p216 = pneg %p53
      %s217 = smul.u32 8, %s20
      %p218 = scmp.lt.s32.totalorder %s19, 1
      %s219 = scalar_select %p218, %s19, 1
      %p220 = scmp.lt.s32.totalorder %s217, 7
      %s221 = scalar_select %p220, %s217, 7
      %s222 = smul.addr %s221, 2
      %s223 = smul.addr %s219, 256
      %s224 = sadd.s32 %s222, %s223
      %s225 = smul.addr %s224, 8
      %s226 = scalar_lea.vmem %s1, %s225
      %p227 = pneg %p84
      %p228 = pneg %p81
      %s229 = smul.u32 8, %s20
      %p230 = scmp.lt.s32.totalorder %s19, 1
      %s231 = scalar_select %p230, %s19, 1
      %p232 = scmp.lt.s32.totalorder %s229, 7
      %s233 = scalar_select %p232, %s229, 7
      %s234 = smul.addr %s233, 2
      %s235 = smul.addr %s231, 64
      %s236 = sadd.s32 %s234, %s235
      %s237 = smul.addr %s236, 8
      %s238 = scalar_lea.vmem %s2, %s237
      %p239 = pneg %p112
      %p240 = pneg %p109
      %p241 = pneg %p142
      %p242 = pneg %p139
      %s243 = smul.u32 16, %s21
      %p244 = scmp.lt.s32.totalorder %s19, 1
      %s245 = scalar_select %p244, %s19, 1
      %p246 = scmp.lt.s32.totalorder %s243, 47
      %s247 = scalar_select %p246, %s243, 47
      %p248 = scmp.lt.s32.totalorder %s20, 0
      %s249 = scalar_select %p248, %s20, 0
      %s250 = sadd.s32 %s249, %s247
      %s251 = smul.addr %s245, 48
      %s252 = sadd.s32 %s250, %s251
      %s253 = smul.addr %s252, 8
      %s254 = scalar_lea.vmem %s3, %s253
      %p255 = scmp.lt.s32.totalorder %s19, 1
      %s256 = scalar_select %p255, %s19, 1
      %p257 = scmp.lt.s32.totalorder %s20, 0
      %s258 = scalar_select %p257, %s20, 0
      %s259 = smul.addr %s256, 3
      %s260 = sadd.s32 %s258, %s259
      %s261 = smul.addr %s260, 8
      %s262 = scalar_lea.vmem %s0, %s261
      %s263 = smul.u32 8, %s20
      %p264 = scmp.lt.s32.totalorder %s19, 1
      %s265 = scalar_select %p264, %s19, 1
      %p266 = scmp.lt.s32.totalorder %s263, 7
      %s267 = scalar_select %p266, %s263, 7
      %s268 = smul.addr %s267, 2
      %s269 = smul.addr %s265, 256
      %s270 = sadd.s32 %s268, %s269
      %s271 = smul.addr %s270, 8
      %s272 = scalar_lea.vmem %s1, %s271
      %s273 = smul.u32 8, %s20
      %s274 = smul.u32 8, %s20
      %p275 = scmp.lt.s32.totalorder %s19, 1
      %s276 = scalar_select %p275, %s19, 1
      %p277 = scmp.lt.s32.totalorder %s274, 7
      %s278 = scalar_select %p277, %s274, 7
      %s279 = smul.addr %s278, 2
      %s280 = smul.addr %s276, 64
      %s281 = sadd.s32 %s279, %s280
      %s282 = smul.addr %s281, 8
      %s283 = scalar_lea.vmem %s2, %s282
      %s284 = smul.u32 8, %s20
      %s285 = smul.u32 16, %s21
      %p286 = scmp.lt.s32.totalorder %s19, 1
      %s287 = scalar_select %p286, %s19, 1
      %p288 = scmp.lt.s32.totalorder %s285, 47
      %s289 = scalar_select %p288, %s285, 47
      %p290 = scmp.lt.s32.totalorder %s20, 0
      %s291 = scalar_select %p290, %s20, 0
      %s292 = sadd.s32 %s291, %s289
      %s293 = smul.addr %s287, 48
      %s294 = sadd.s32 %s292, %s293
      %s295 = smul.addr %s294, 8
      %s296 = scalar_lea.vmem %s3, %s295
      %s297 = smul.u32 16, %s21
      %s298 = ssub.s32 %s21, 1
      %s299 = scvt.s32.f32 %s298
      %v300 = vld [vmem:[%s262] sm:$0xff]
      %s301 = scalar_lea.vmem %s262, 8
      %v302 = vld [vmem:[%s301] sm:$0xff]
      %s303 = scalar_lea.vmem %s262, 16
      %v304 = vld [vmem:[%s303] sm:$0xff]
      %v305 = vstv %s299
      %v306 = vadd.f32 %v300, %v305
      %v307 = vlaneseq
      %v308 = vand.u32 %v307, 127
      %v309 = vcvt.s32.f32 %v308
      %v310 = vmul.f32 %v309, 4.0
      %v311 = vlaneseq
      %v312 = vshrl.u32 %v311, 7
      %v313 = vadd.s32 %v312, 8
      %v314 = vadd.s32 %v312, 16
      %v315 = vadd.s32 %v312, 24
      %v316 = vcvt.s32.f32 %v312
      %v317 = vcvt.s32.f32 %v313
      %v318 = vcvt.s32.f32 %v314
      %v319 = vcvt.s32.f32 %v315
      %v320 = vld [vmem:[%s283] sm:$0xff]
      %v321 = vld [vmem:[%s283 + $0x8] sm:$0xff]
      %v322 = vld [vmem:[%s283 + $0x10] sm:$0xff]
      %v323 = vld [vmem:[%s283 + $0x18] sm:$0xff]
      %v324 = vld [vmem:[%s283 + $0x20] sm:$0xff]
      %v325 = vld [vmem:[%s283 + $0x28] sm:$0xff]
      %v326 = vld [vmem:[%s283 + $0x30] sm:$0xff]
      %v327 = vld [vmem:[%s283 + $0x38] sm:$0xff]
      %v328 = vld [vmem:[%s283 + $0x40] sm:$0xff]
      %v329 = vld [vmem:[%s283 + $0x48] sm:$0xff]
      %v330 = vld [vmem:[%s283 + $0x50] sm:$0xff]
      %v331 = vld [vmem:[%s283 + $0x58] sm:$0xff]
      %v332 = vld [vmem:[%s283 + $0x60] sm:$0xff]
      %v333 = vld [vmem:[%s283 + $0x68] sm:$0xff]
      %v334 = vld [vmem:[%s283 + $0x70] sm:$0xff]
      %v335 = vld [vmem:[%s283 + $0x78] sm:$0xff]
      %v336 = vmul.f32 %v302, -1.5
      %v337 = vadd.f32 %v306, %v336
      %v338 = vmul.f32 %v304, -1.5
      %v339 = vadd.f32 %v337, %v338
      %v340 = vadd.f32 %v310, 0.0
      %v341 = vsub.f32 %v340, %v339
      %v342 = vmul.f32 %v341, 1.032258
      %v343 = vadd.f32 %v342, -0.5
      %v344 = vfloor.f32 %v343
      %v345 = vsub.f32 %v343, %v344
      %v347 = vrot.slane %v344, 1
      %v348 = vrot.slane %v344, 2
      %v349 = vrot.slane %v344, 3
      %v350 = vrot.slane %v344, 4
      %v351 = vrot.slane %v344, 5
      %v352 = vrot.slane %v344, 6
      %v353 = vrot.slane %v344, 7
      %v362 = vrot.slane %v345, 1
      %v363 = vrot.slane %v345, 2
      %v364 = vrot.slane %v345, 3
      %v365 = vrot.slane %v345, 4
      %v366 = vrot.slane %v345, 5
      %v367 = vrot.slane %v345, 6
      %v368 = vrot.slane %v345, 7
      %v376 = vperm.slane %v344, 0
      %v377 = vperm.slane %v347, 0
      %v378 = vperm.slane %v348, 0
      %v379 = vperm.slane %v349, 0
      %v380 = vperm.slane %v350, 0
      %v381 = vperm.slane %v351, 0
      %v382 = vperm.slane %v352, 0
      %v383 = vperm.slane %v353, 0
      %vm392 = vcmp.eq.f32.partialorder %v316, %v376
      %vm393 = vcmp.eq.f32.partialorder %v317, %v376
      %vm394 = vcmp.eq.f32.partialorder %v318, %v376
      %vm395 = vcmp.eq.f32.partialorder %v319, %v376
      %vm396 = vcmp.eq.f32.partialorder %v316, %v377
      %vm397 = vcmp.eq.f32.partialorder %v317, %v377
      %vm398 = vcmp.eq.f32.partialorder %v318, %v377
      %vm399 = vcmp.eq.f32.partialorder %v319, %v377
      %vm400 = vcmp.eq.f32.partialorder %v316, %v378
      %vm401 = vcmp.eq.f32.partialorder %v317, %v378
      %vm402 = vcmp.eq.f32.partialorder %v318, %v378
      %vm403 = vcmp.eq.f32.partialorder %v319, %v378
      %vm404 = vcmp.eq.f32.partialorder %v316, %v379
      %vm405 = vcmp.eq.f32.partialorder %v317, %v379
      %vm406 = vcmp.eq.f32.partialorder %v318, %v379
      %vm407 = vcmp.eq.f32.partialorder %v319, %v379
      %vm408 = vcmp.eq.f32.partialorder %v316, %v380
      %vm409 = vcmp.eq.f32.partialorder %v317, %v380
      %vm410 = vcmp.eq.f32.partialorder %v318, %v380
      %vm411 = vcmp.eq.f32.partialorder %v319, %v380
      %vm412 = vcmp.eq.f32.partialorder %v316, %v381
      %vm413 = vcmp.eq.f32.partialorder %v317, %v381
      %vm414 = vcmp.eq.f32.partialorder %v318, %v381
      %vm415 = vcmp.eq.f32.partialorder %v319, %v381
      %vm416 = vcmp.eq.f32.partialorder %v316, %v382
      %vm417 = vcmp.eq.f32.partialorder %v317, %v382
      %vm418 = vcmp.eq.f32.partialorder %v318, %v382
      %vm419 = vcmp.eq.f32.partialorder %v319, %v382
      %vm420 = vcmp.eq.f32.partialorder %v316, %v383
      %vm421 = vcmp.eq.f32.partialorder %v317, %v383
      %vm422 = vcmp.eq.f32.partialorder %v318, %v383
      %vm423 = vcmp.eq.f32.partialorder %v319, %v383
      %v424 = vsub.f32 1.0, %v345
      %v425 = vsub.f32 1.0, %v362
      %v426 = vsub.f32 1.0, %v363
      %v427 = vsub.f32 1.0, %v364
      %v428 = vsub.f32 1.0, %v365
      %v429 = vsub.f32 1.0, %v366
      %v430 = vsub.f32 1.0, %v367
      %v431 = vsub.f32 1.0, %v368
      %v440 = vperm.slane %v424, 0
      %v441 = vperm.slane %v425, 0
      %v442 = vperm.slane %v426, 0
      %v443 = vperm.slane %v427, 0
      %v444 = vperm.slane %v428, 0
      %v445 = vperm.slane %v429, 0
      %v446 = vperm.slane %v430, 0
      %v447 = vperm.slane %v431, 0
      %v456 = vsel %vm392, %v440, 0.0
      %v457 = vsel %vm393, %v440, 0.0
      %v458 = vsel %vm394, %v440, 0.0
      %v459 = vsel %vm395, %v440, 0.0
      %v460 = vsel %vm396, %v441, 0.0
      %v461 = vsel %vm397, %v441, 0.0
      %v462 = vsel %vm398, %v441, 0.0
      %v463 = vsel %vm399, %v441, 0.0
      %v464 = vsel %vm400, %v442, 0.0
      %v465 = vsel %vm401, %v442, 0.0
      %v466 = vsel %vm402, %v442, 0.0
      %v467 = vsel %vm403, %v442, 0.0
      %v468 = vsel %vm404, %v443, 0.0
      %v469 = vsel %vm405, %v443, 0.0
      %v470 = vsel %vm406, %v443, 0.0
      %v471 = vsel %vm407, %v443, 0.0
      %v472 = vsel %vm408, %v444, 0.0
      %v473 = vsel %vm409, %v444, 0.0
      %v474 = vsel %vm410, %v444, 0.0
      %v475 = vsel %vm411, %v444, 0.0
      %v476 = vsel %vm412, %v445, 0.0
      %v477 = vsel %vm413, %v445, 0.0
      %v478 = vsel %vm414, %v445, 0.0
      %v479 = vsel %vm415, %v445, 0.0
      %v480 = vsel %vm416, %v446, 0.0
      %v481 = vsel %vm417, %v446, 0.0
      %v482 = vsel %vm418, %v446, 0.0
      %v483 = vsel %vm419, %v446, 0.0
      %v484 = vsel %vm420, %v447, 0.0
      %v485 = vsel %vm421, %v447, 0.0
      %v486 = vsel %vm422, %v447, 0.0
      %v487 = vsel %vm423, %v447, 0.0
      %v488 = vadd.f32 %v344, 1.0
      %v489 = vadd.f32 %v347, 1.0
      %v490 = vadd.f32 %v348, 1.0
      %v491 = vadd.f32 %v349, 1.0
      %v492 = vadd.f32 %v350, 1.0
      %v493 = vadd.f32 %v351, 1.0
      %v494 = vadd.f32 %v352, 1.0
      %v495 = vadd.f32 %v353, 1.0
      %v504 = vperm.slane %v488, 0
      %v505 = vperm.slane %v489, 0
      %v506 = vperm.slane %v490, 0
      %v507 = vperm.slane %v491, 0
      %v508 = vperm.slane %v492, 0
      %v509 = vperm.slane %v493, 0
      %v510 = vperm.slane %v494, 0
      %v511 = vperm.slane %v495, 0
      %vm520 = vcmp.eq.f32.partialorder %v316, %v504
      %vm521 = vcmp.eq.f32.partialorder %v317, %v504
      %vm522 = vcmp.eq.f32.partialorder %v318, %v504
      %vm523 = vcmp.eq.f32.partialorder %v319, %v504
      %vm524 = vcmp.eq.f32.partialorder %v316, %v505
      %vm525 = vcmp.eq.f32.partialorder %v317, %v505
      %vm526 = vcmp.eq.f32.partialorder %v318, %v505
      %vm527 = vcmp.eq.f32.partialorder %v319, %v505
      %vm528 = vcmp.eq.f32.partialorder %v316, %v506
      %vm529 = vcmp.eq.f32.partialorder %v317, %v506
      %vm530 = vcmp.eq.f32.partialorder %v318, %v506
      %vm531 = vcmp.eq.f32.partialorder %v319, %v506
      %vm532 = vcmp.eq.f32.partialorder %v316, %v507
      %vm533 = vcmp.eq.f32.partialorder %v317, %v507
      %vm534 = vcmp.eq.f32.partialorder %v318, %v507
      %vm535 = vcmp.eq.f32.partialorder %v319, %v507
      %vm536 = vcmp.eq.f32.partialorder %v316, %v508
      %vm537 = vcmp.eq.f32.partialorder %v317, %v508
      %vm538 = vcmp.eq.f32.partialorder %v318, %v508
      %vm539 = vcmp.eq.f32.partialorder %v319, %v508
      %vm540 = vcmp.eq.f32.partialorder %v316, %v509
      %vm541 = vcmp.eq.f32.partialorder %v317, %v509
      %vm542 = vcmp.eq.f32.partialorder %v318, %v509
      %vm543 = vcmp.eq.f32.partialorder %v319, %v509
      %vm544 = vcmp.eq.f32.partialorder %v316, %v510
      %vm545 = vcmp.eq.f32.partialorder %v317, %v510
      %vm546 = vcmp.eq.f32.partialorder %v318, %v510
      %vm547 = vcmp.eq.f32.partialorder %v319, %v510
      %vm548 = vcmp.eq.f32.partialorder %v316, %v511
      %vm549 = vcmp.eq.f32.partialorder %v317, %v511
      %vm550 = vcmp.eq.f32.partialorder %v318, %v511
      %vm551 = vcmp.eq.f32.partialorder %v319, %v511
      %v552 = vperm.slane %v345, 0
      %v553 = vperm.slane %v362, 0
      %v554 = vperm.slane %v363, 0
      %v555 = vperm.slane %v364, 0
      %v556 = vperm.slane %v365, 0
      %v557 = vperm.slane %v366, 0
      %v558 = vperm.slane %v367, 0
      %v559 = vperm.slane %v368, 0
      %v568 = vsel %vm520, %v552, 0.0
      %v569 = vsel %vm521, %v552, 0.0
      %v570 = vsel %vm522, %v552, 0.0
      %v571 = vsel %vm523, %v552, 0.0
      %v572 = vsel %vm524, %v553, 0.0
      %v573 = vsel %vm525, %v553, 0.0
      %v574 = vsel %vm526, %v553, 0.0
      %v575 = vsel %vm527, %v553, 0.0
      %v576 = vsel %vm528, %v554, 0.0
      %v577 = vsel %vm529, %v554, 0.0
      %v578 = vsel %vm530, %v554, 0.0
      %v579 = vsel %vm531, %v554, 0.0
      %v580 = vsel %vm532, %v555, 0.0
      %v581 = vsel %vm533, %v555, 0.0
      %v582 = vsel %vm534, %v555, 0.0
      %v583 = vsel %vm535, %v555, 0.0
      %v584 = vsel %vm536, %v556, 0.0
      %v585 = vsel %vm537, %v556, 0.0
      %v586 = vsel %vm538, %v556, 0.0
      %v587 = vsel %vm539, %v556, 0.0
      %v588 = vsel %vm540, %v557, 0.0
      %v589 = vsel %vm541, %v557, 0.0
      %v590 = vsel %vm542, %v557, 0.0
      %v591 = vsel %vm543, %v557, 0.0
      %v592 = vsel %vm544, %v558, 0.0
      %v593 = vsel %vm545, %v558, 0.0
      %v594 = vsel %vm546, %v558, 0.0
      %v595 = vsel %vm547, %v558, 0.0
      %v596 = vsel %vm548, %v559, 0.0
      %v597 = vsel %vm549, %v559, 0.0
      %v598 = vsel %vm550, %v559, 0.0
      %v599 = vsel %vm551, %v559, 0.0
      %v600 = vadd.f32 %v456, %v568
      %v601 = vadd.f32 %v457, %v569
      %v602 = vadd.f32 %v458, %v570
      %v603 = vadd.f32 %v459, %v571
      %v604 = vadd.f32 %v460, %v572
      %v605 = vadd.f32 %v461, %v573
      %v606 = vadd.f32 %v462, %v574
      %v607 = vadd.f32 %v463, %v575
      %v608 = vadd.f32 %v464, %v576
      %v609 = vadd.f32 %v465, %v577
      %v610 = vadd.f32 %v466, %v578
      %v611 = vadd.f32 %v467, %v579
      %v612 = vadd.f32 %v468, %v580
      %v613 = vadd.f32 %v469, %v581
      %v614 = vadd.f32 %v470, %v582
      %v615 = vadd.f32 %v471, %v583
      %v616 = vadd.f32 %v472, %v584
      %v617 = vadd.f32 %v473, %v585
      %v618 = vadd.f32 %v474, %v586
      %v619 = vadd.f32 %v475, %v587
      %v620 = vadd.f32 %v476, %v588
      %v621 = vadd.f32 %v477, %v589
      %v622 = vadd.f32 %v478, %v590
      %v623 = vadd.f32 %v479, %v591
      %v624 = vadd.f32 %v480, %v592
      %v625 = vadd.f32 %v481, %v593
      %v626 = vadd.f32 %v482, %v594
      %v627 = vadd.f32 %v483, %v595
      %v628 = vadd.f32 %v484, %v596
      %v629 = vadd.f32 %v485, %v597
      %v630 = vadd.f32 %v486, %v598
      %v631 = vadd.f32 %v487, %v599
      %vm632 = vcmask 261120
      %v634 = vsel %vm632, %v320, 0
      %v637 = vsel %vm632, %v321, 0
      %639 = vmatpush.msra.mxu0 0.0
      %640 = vmatpush.msra.mxu0 0.0
      %641 = vmatpush.msra.mxu0 0.0
      %642 = vmatpush.msra.mxu0 0.0
      %643 = vmatpush.msra.mxu0 0.0
      %644 = vmatpush.msra.mxu0 0.0
      %645 = vmatpush.msra.mxu0 0.0
      %646 = vmatpush.msra.mxu0 0.0
      %647 = vmatpush.msra.mxu0 0.0
      %648 = vmatpush.msra.mxu0 0.0
      %649 = vmatpush.msra.mxu0 0.0
      %650 = vmatpush.msra.mxu0 0.0
      %651 = vmatpush.msra.mxu0 %v603
      %652 = vmatpush.msra.mxu0 %v602
      %653 = vmatpush.msra.mxu0 %v601
      %654 = vmatpush.msra.mxu0 %v600
      %655 = vmatmul.f32.gmra.mxu0 %v634
      %v656 = vpop.f32.mrf.mxu0
      %v657 = vadd.f32 0.0, %v656
      %658 = vmatmul.f32.gmra.mxu0 %v637
      %v659 = vpop.f32.mrf.mxu0
      %v660 = vadd.f32 0.0, %v659
      %661 = vdwg.mxu0
      %v663 = vsel %vm632, %v322, 0
      %v666 = vsel %vm632, %v323, 0
      %668 = vmatpush.msra.mxu0 0.0
      %669 = vmatpush.msra.mxu0 0.0
      %670 = vmatpush.msra.mxu0 0.0
      %671 = vmatpush.msra.mxu0 0.0
      %672 = vmatpush.msra.mxu0 0.0
      %673 = vmatpush.msra.mxu0 0.0
      %674 = vmatpush.msra.mxu0 0.0
      %675 = vmatpush.msra.mxu0 0.0
      %676 = vmatpush.msra.mxu0 0.0
      %677 = vmatpush.msra.mxu0 0.0
      %678 = vmatpush.msra.mxu0 0.0
      %679 = vmatpush.msra.mxu0 0.0
      %680 = vmatpush.msra.mxu0 %v607
      %681 = vmatpush.msra.mxu0 %v606
      %682 = vmatpush.msra.mxu0 %v605
      %683 = vmatpush.msra.mxu0 %v604
      %684 = vmatmul.f32.gmra.mxu0 %v663
      %v685 = vpop.f32.mrf.mxu0
      %v686 = vadd.f32 0.0, %v685
      %687 = vmatmul.f32.gmra.mxu0 %v666
      %v688 = vpop.f32.mrf.mxu0
      %v689 = vadd.f32 0.0, %v688
      %690 = vdwg.mxu0
      %v692 = vsel %vm632, %v324, 0
      %v695 = vsel %vm632, %v325, 0
      %697 = vmatpush.msra.mxu0 0.0
      %698 = vmatpush.msra.mxu0 0.0
      %699 = vmatpush.msra.mxu0 0.0
      %700 = vmatpush.msra.mxu0 0.0
      %701 = vmatpush.msra.mxu0 0.0
      %702 = vmatpush.msra.mxu0 0.0
      %703 = vmatpush.msra.mxu0 0.0
      %704 = vmatpush.msra.mxu0 0.0
      %705 = vmatpush.msra.mxu0 0.0
      %706 = vmatpush.msra.mxu0 0.0
      %707 = vmatpush.msra.mxu0 0.0
      %708 = vmatpush.msra.mxu0 0.0
      %709 = vmatpush.msra.mxu0 %v611
      %710 = vmatpush.msra.mxu0 %v610
      %711 = vmatpush.msra.mxu0 %v609
      %712 = vmatpush.msra.mxu0 %v608
      %713 = vmatmul.f32.gmra.mxu0 %v692
      %v714 = vpop.f32.mrf.mxu0
      %v715 = vadd.f32 0.0, %v714
      %716 = vmatmul.f32.gmra.mxu0 %v695
      %v717 = vpop.f32.mrf.mxu0
      %v718 = vadd.f32 0.0, %v717
      %719 = vdwg.mxu0
      %v721 = vsel %vm632, %v326, 0
      %v724 = vsel %vm632, %v327, 0
      %726 = vmatpush.msra.mxu0 0.0
      %727 = vmatpush.msra.mxu0 0.0
      %728 = vmatpush.msra.mxu0 0.0
      %729 = vmatpush.msra.mxu0 0.0
      %730 = vmatpush.msra.mxu0 0.0
      %731 = vmatpush.msra.mxu0 0.0
      %732 = vmatpush.msra.mxu0 0.0
      %733 = vmatpush.msra.mxu0 0.0
      %734 = vmatpush.msra.mxu0 0.0
      %735 = vmatpush.msra.mxu0 0.0
      %736 = vmatpush.msra.mxu0 0.0
      %737 = vmatpush.msra.mxu0 0.0
      %738 = vmatpush.msra.mxu0 %v615
      %739 = vmatpush.msra.mxu0 %v614
      %740 = vmatpush.msra.mxu0 %v613
      %741 = vmatpush.msra.mxu0 %v612
      %742 = vmatmul.f32.gmra.mxu0 %v721
      %v743 = vpop.f32.mrf.mxu0
      %v744 = vadd.f32 0.0, %v743
      %745 = vmatmul.f32.gmra.mxu0 %v724
      %v746 = vpop.f32.mrf.mxu0
      %v747 = vadd.f32 0.0, %v746
      %748 = vdwg.mxu0
      %v750 = vsel %vm632, %v328, 0
      %v753 = vsel %vm632, %v329, 0
      %755 = vmatpush.msra.mxu0 0.0
      %756 = vmatpush.msra.mxu0 0.0
      %757 = vmatpush.msra.mxu0 0.0
      %758 = vmatpush.msra.mxu0 0.0
      %759 = vmatpush.msra.mxu0 0.0
      %760 = vmatpush.msra.mxu0 0.0
      %761 = vmatpush.msra.mxu0 0.0
      %762 = vmatpush.msra.mxu0 0.0
      %763 = vmatpush.msra.mxu0 0.0
      %764 = vmatpush.msra.mxu0 0.0
      %765 = vmatpush.msra.mxu0 0.0
      %766 = vmatpush.msra.mxu0 0.0
      %767 = vmatpush.msra.mxu0 %v619
      %768 = vmatpush.msra.mxu0 %v618
      %769 = vmatpush.msra.mxu0 %v617
      %770 = vmatpush.msra.mxu0 %v616
      %771 = vmatmul.f32.gmra.mxu0 %v750
      %v772 = vpop.f32.mrf.mxu0
      %v773 = vadd.f32 0.0, %v772
      %774 = vmatmul.f32.gmra.mxu0 %v753
      %v775 = vpop.f32.mrf.mxu0
      %v776 = vadd.f32 0.0, %v775
      %777 = vdwg.mxu0
      %v779 = vsel %vm632, %v330, 0
      %v782 = vsel %vm632, %v331, 0
      %784 = vmatpush.msra.mxu0 0.0
      %785 = vmatpush.msra.mxu0 0.0
      %786 = vmatpush.msra.mxu0 0.0
      %787 = vmatpush.msra.mxu0 0.0
      %788 = vmatpush.msra.mxu0 0.0
      %789 = vmatpush.msra.mxu0 0.0
      %790 = vmatpush.msra.mxu0 0.0
      %791 = vmatpush.msra.mxu0 0.0
      %792 = vmatpush.msra.mxu0 0.0
      %793 = vmatpush.msra.mxu0 0.0
      %794 = vmatpush.msra.mxu0 0.0
      %795 = vmatpush.msra.mxu0 0.0
      %796 = vmatpush.msra.mxu0 %v623
      %797 = vmatpush.msra.mxu0 %v622
      %798 = vmatpush.msra.mxu0 %v621
      %799 = vmatpush.msra.mxu0 %v620
      %800 = vmatmul.f32.gmra.mxu0 %v779
      %v801 = vpop.f32.mrf.mxu0
      %v802 = vadd.f32 0.0, %v801
      %803 = vmatmul.f32.gmra.mxu0 %v782
      %v804 = vpop.f32.mrf.mxu0
      %v805 = vadd.f32 0.0, %v804
      %806 = vdwg.mxu0
      %v808 = vsel %vm632, %v332, 0
      %v811 = vsel %vm632, %v333, 0
      %813 = vmatpush.msra.mxu0 0.0
      %814 = vmatpush.msra.mxu0 0.0
      %815 = vmatpush.msra.mxu0 0.0
      %816 = vmatpush.msra.mxu0 0.0
      %817 = vmatpush.msra.mxu0 0.0
      %818 = vmatpush.msra.mxu0 0.0
      %819 = vmatpush.msra.mxu0 0.0
      %820 = vmatpush.msra.mxu0 0.0
      %821 = vmatpush.msra.mxu0 0.0
      %822 = vmatpush.msra.mxu0 0.0
      %823 = vmatpush.msra.mxu0 0.0
      %824 = vmatpush.msra.mxu0 0.0
      %825 = vmatpush.msra.mxu0 %v627
      %826 = vmatpush.msra.mxu0 %v626
      %827 = vmatpush.msra.mxu0 %v625
      %828 = vmatpush.msra.mxu0 %v624
      %829 = vmatmul.f32.gmra.mxu0 %v808
      %v830 = vpop.f32.mrf.mxu0
      %v831 = vadd.f32 0.0, %v830
      %832 = vmatmul.f32.gmra.mxu0 %v811
      %v833 = vpop.f32.mrf.mxu0
      %v834 = vadd.f32 0.0, %v833
      %835 = vdwg.mxu0
      %v837 = vsel %vm632, %v334, 0
      %v840 = vsel %vm632, %v335, 0
      %842 = vmatpush.msra.mxu0 0.0
      %843 = vmatpush.msra.mxu0 0.0
      %844 = vmatpush.msra.mxu0 0.0
      %845 = vmatpush.msra.mxu0 0.0
      %846 = vmatpush.msra.mxu0 0.0
      %847 = vmatpush.msra.mxu0 0.0
      %848 = vmatpush.msra.mxu0 0.0
      %849 = vmatpush.msra.mxu0 0.0
      %850 = vmatpush.msra.mxu0 0.0
      %851 = vmatpush.msra.mxu0 0.0
      %852 = vmatpush.msra.mxu0 0.0
      %853 = vmatpush.msra.mxu0 0.0
      %854 = vmatpush.msra.mxu0 %v631
      %855 = vmatpush.msra.mxu0 %v630
      %856 = vmatpush.msra.mxu0 %v629
      %857 = vmatpush.msra.mxu0 %v628
      %858 = vmatmul.f32.gmra.mxu0 %v837
      %v859 = vpop.f32.mrf.mxu0
      %v860 = vadd.f32 0.0, %v859
      %861 = vmatmul.f32.gmra.mxu0 %v840
      %v862 = vpop.f32.mrf.mxu0
      %v863 = vadd.f32 0.0, %v862
      %864 = vdwg.mxu0
      %v865 = vld [vmem:[%s272] sm:$0xff]
      %v866 = vld [vmem:[%s272 + $0x8] sm:$0xff]
      %v867 = vld [vmem:[%s272 + $0x10] sm:$0xff]
      %v868 = vld [vmem:[%s272 + $0x18] sm:$0xff]
      %v869 = vld [vmem:[%s272 + $0x20] sm:$0xff]
      %v870 = vld [vmem:[%s272 + $0x28] sm:$0xff]
      %v871 = vld [vmem:[%s272 + $0x30] sm:$0xff]
      %v872 = vld [vmem:[%s272 + $0x38] sm:$0xff]
      %v873 = vld [vmem:[%s272 + $0x40] sm:$0xff]
      %v874 = vld [vmem:[%s272 + $0x48] sm:$0xff]
      %v875 = vld [vmem:[%s272 + $0x50] sm:$0xff]
      %v876 = vld [vmem:[%s272 + $0x58] sm:$0xff]
      %v877 = vld [vmem:[%s272 + $0x60] sm:$0xff]
      %v878 = vld [vmem:[%s272 + $0x68] sm:$0xff]
      %v879 = vld [vmem:[%s272 + $0x70] sm:$0xff]
      %v880 = vld [vmem:[%s272 + $0x78] sm:$0xff]
      %v881 = vsub.f32 %v865, %v657
      %v882 = vsub.f32 %v866, %v660
      %v883 = vsub.f32 %v867, %v686
      %v884 = vsub.f32 %v868, %v689
      %v885 = vsub.f32 %v869, %v715
      %v886 = vsub.f32 %v870, %v718
      %v887 = vsub.f32 %v871, %v744
      %v888 = vsub.f32 %v872, %v747
      %v889 = vsub.f32 %v873, %v773
      %v890 = vsub.f32 %v874, %v776
      %v891 = vsub.f32 %v875, %v802
      %v892 = vsub.f32 %v876, %v805
      %v893 = vsub.f32 %v877, %v831
      %v894 = vsub.f32 %v878, %v834
      %v895 = vsub.f32 %v879, %v860
      %v896 = vsub.f32 %v880, %v863
      %v897 = vand.u32 2147483647, %v881
      %v898 = vand.u32 2147483647, %v882
      %v899 = vand.u32 2147483647, %v883
      %v900 = vand.u32 2147483647, %v884
      %v901 = vand.u32 2147483647, %v885
      %v902 = vand.u32 2147483647, %v886
      %v903 = vand.u32 2147483647, %v887
      %v904 = vand.u32 2147483647, %v888
      %v905 = vand.u32 2147483647, %v889
      %v906 = vand.u32 2147483647, %v890
      %v907 = vand.u32 2147483647, %v891
      %v908 = vand.u32 2147483647, %v892
      %v909 = vand.u32 2147483647, %v893
      %v910 = vand.u32 2147483647, %v894
      %v911 = vand.u32 2147483647, %v895
      %v912 = vand.u32 2147483647, %v896
      %vm913 = vcmask 64512
      %v914 = vsel %vm913, %v897, 0.0
      %v915 = vsel %vm913, %v898, 0.0
      %v916 = vadd.f32 %v914, %v915
      %v917 = vrot.slane %v916, 4
      %v918 = vadd.f32 %v916, %v917
      %v919 = vrot.slane %v918, 2
      %v920 = vadd.f32 %v918, %v919
      %v921 = vrot.slane %v920, 1
      %v922 = vadd.f32 %v920, %v921
      %v923 = vsel %vm913, %v899, 0.0
      %v924 = vsel %vm913, %v900, 0.0
      %v925 = vadd.f32 %v923, %v924
      %v926 = vrot.slane %v925, 4
      %v927 = vadd.f32 %v925, %v926
      %v928 = vrot.slane %v927, 2
      %v929 = vadd.f32 %v927, %v928
      %v930 = vrot.slane %v929, 1
      %v931 = vadd.f32 %v929, %v930
      %v932 = vsel %vm913, %v901, 0.0
      %v933 = vsel %vm913, %v902, 0.0
      %v934 = vadd.f32 %v932, %v933
      %v935 = vrot.slane %v934, 4
      %v936 = vadd.f32 %v934, %v935
      %v937 = vrot.slane %v936, 2
      %v938 = vadd.f32 %v936, %v937
      %v939 = vrot.slane %v938, 1
      %v940 = vadd.f32 %v938, %v939
      %v941 = vsel %vm913, %v903, 0.0
      %v942 = vsel %vm913, %v904, 0.0
      %v943 = vadd.f32 %v941, %v942
      %v944 = vrot.slane %v943, 4
      %v945 = vadd.f32 %v943, %v944
      %v946 = vrot.slane %v945, 2
      %v947 = vadd.f32 %v945, %v946
      %v948 = vrot.slane %v947, 1
      %v949 = vadd.f32 %v947, %v948
      %v950 = vsel %vm913, %v905, 0.0
      %v951 = vsel %vm913, %v906, 0.0
      %v952 = vadd.f32 %v950, %v951
      %v953 = vrot.slane %v952, 4
      %v954 = vadd.f32 %v952, %v953
      %v955 = vrot.slane %v954, 2
      %v956 = vadd.f32 %v954, %v955
      %v957 = vrot.slane %v956, 1
      %v958 = vadd.f32 %v956, %v957
      %v959 = vsel %vm913, %v907, 0.0
      %v960 = vsel %vm913, %v908, 0.0
      %v961 = vadd.f32 %v959, %v960
      %v962 = vrot.slane %v961, 4
      %v963 = vadd.f32 %v961, %v962
      %v964 = vrot.slane %v963, 2
      %v965 = vadd.f32 %v963, %v964
      %v966 = vrot.slane %v965, 1
      %v967 = vadd.f32 %v965, %v966
      %v968 = vsel %vm913, %v909, 0.0
      %v969 = vsel %vm913, %v910, 0.0
      %v970 = vadd.f32 %v968, %v969
      %v971 = vrot.slane %v970, 4
      %v972 = vadd.f32 %v970, %v971
      %v973 = vrot.slane %v972, 2
      %v974 = vadd.f32 %v972, %v973
      %v975 = vrot.slane %v974, 1
      %v976 = vadd.f32 %v974, %v975
      %v977 = vsel %vm913, %v911, 0.0
      %v978 = vsel %vm913, %v912, 0.0
      %v979 = vadd.f32 %v977, %v978
      %v980 = vrot.slane %v979, 4
      %v981 = vadd.f32 %v979, %v980
      %v982 = vrot.slane %v981, 2
      %v983 = vadd.f32 %v981, %v982
      %v984 = vrot.slane %v983, 1
      %v985 = vadd.f32 %v983, %v984
      %vm994 = vcmask 1041409
      %v995 = vsel %vm994, %v931, %v922
      %vm996 = vcmask 1042434
      %v997 = vsel %vm996, %v940, %v995
      %vm998 = vcmask 1043459
      %v999 = vsel %vm998, %v949, %v997
      %vm1000 = vcmask 1044484
      %v1001 = vsel %vm1000, %v958, %v999
      %vm1002 = vcmask 1045509
      %v1003 = vsel %vm1002, %v967, %v1001
      %vm1004 = vcmask 1046534
      %v1005 = vsel %vm1004, %v976, %v1003
      %vm1006 = vcmask 1047559
      %v1007 = vsel %vm1006, %v985, %v1005
      %1009 = vst.msk [vmem:[%s296] sm:$0xff] %vm913, %v1007
      %v1010 = vmul.f32 %v304, -0.5
      %v1011 = vadd.f32 %v337, %v1010
      %v1012 = vadd.f32 %v310, 1.0
      %v1013 = vsub.f32 %v1012, %v1011
      %v1014 = vmul.f32 %v1013, 1.032258
      %v1015 = vadd.f32 %v1014, -0.5
      %v1016 = vfloor.f32 %v1015
      %v1017 = vsub.f32 %v1015, %v1016
      %v1019 = vrot.slane %v1016, 1
      %v1020 = vrot.slane %v1016, 2
      %v1021 = vrot.slane %v1016, 3
      %v1022 = vrot.slane %v1016, 4
      %v1023 = vrot.slane %v1016, 5
      %v1024 = vrot.slane %v1016, 6
      %v1025 = vrot.slane %v1016, 7
      %v1034 = vrot.slane %v1017, 1
      %v1035 = vrot.slane %v1017, 2
      %v1036 = vrot.slane %v1017, 3
      %v1037 = vrot.slane %v1017, 4
      %v1038 = vrot.slane %v1017, 5
      %v1039 = vrot.slane %v1017, 6
      %v1040 = vrot.slane %v1017, 7
      %v1048 = vperm.slane %v1016, 0
      %v1049 = vperm.slane %v1019, 0
      %v1050 = vperm.slane %v1020, 0
      %v1051 = vperm.slane %v1021, 0
      %v1052 = vperm.slane %v1022, 0
      %v1053 = vperm.slane %v1023, 0
      %v1054 = vperm.slane %v1024, 0
      %v1055 = vperm.slane %v1025, 0
      %vm1064 = vcmp.eq.f32.partialorder %v316, %v1048
      %vm1065 = vcmp.eq.f32.partialorder %v317, %v1048
      %vm1066 = vcmp.eq.f32.partialorder %v318, %v1048
      %vm1067 = vcmp.eq.f32.partialorder %v319, %v1048
      %vm1068 = vcmp.eq.f32.partialorder %v316, %v1049
      %vm1069 = vcmp.eq.f32.partialorder %v317, %v1049
      %vm1070 = vcmp.eq.f32.partialorder %v318, %v1049
      %vm1071 = vcmp.eq.f32.partialorder %v319, %v1049
      %vm1072 = vcmp.eq.f32.partialorder %v316, %v1050
      %vm1073 = vcmp.eq.f32.partialorder %v317, %v1050
      %vm1074 = vcmp.eq.f32.partialorder %v318, %v1050
      %vm1075 = vcmp.eq.f32.partialorder %v319, %v1050
      %vm1076 = vcmp.eq.f32.partialorder %v316, %v1051
      %vm1077 = vcmp.eq.f32.partialorder %v317, %v1051
      %vm1078 = vcmp.eq.f32.partialorder %v318, %v1051
      %vm1079 = vcmp.eq.f32.partialorder %v319, %v1051
      %vm1080 = vcmp.eq.f32.partialorder %v316, %v1052
      %vm1081 = vcmp.eq.f32.partialorder %v317, %v1052
      %vm1082 = vcmp.eq.f32.partialorder %v318, %v1052
      %vm1083 = vcmp.eq.f32.partialorder %v319, %v1052
      %vm1084 = vcmp.eq.f32.partialorder %v316, %v1053
      %vm1085 = vcmp.eq.f32.partialorder %v317, %v1053
      %vm1086 = vcmp.eq.f32.partialorder %v318, %v1053
      %vm1087 = vcmp.eq.f32.partialorder %v319, %v1053
      %vm1088 = vcmp.eq.f32.partialorder %v316, %v1054
      %vm1089 = vcmp.eq.f32.partialorder %v317, %v1054
      %vm1090 = vcmp.eq.f32.partialorder %v318, %v1054
      %vm1091 = vcmp.eq.f32.partialorder %v319, %v1054
      %vm1092 = vcmp.eq.f32.partialorder %v316, %v1055
      %vm1093 = vcmp.eq.f32.partialorder %v317, %v1055
      %vm1094 = vcmp.eq.f32.partialorder %v318, %v1055
      %vm1095 = vcmp.eq.f32.partialorder %v319, %v1055
      %v1096 = vsub.f32 1.0, %v1017
      %v1097 = vsub.f32 1.0, %v1034
      %v1098 = vsub.f32 1.0, %v1035
      %v1099 = vsub.f32 1.0, %v1036
      %v1100 = vsub.f32 1.0, %v1037
      %v1101 = vsub.f32 1.0, %v1038
      %v1102 = vsub.f32 1.0, %v1039
      %v1103 = vsub.f32 1.0, %v1040
      %v1112 = vperm.slane %v1096, 0
      %v1113 = vperm.slane %v1097, 0
      %v1114 = vperm.slane %v1098, 0
      %v1115 = vperm.slane %v1099, 0
      %v1116 = vperm.slane %v1100, 0
      %v1117 = vperm.slane %v1101, 0
      %v1118 = vperm.slane %v1102, 0
      %v1119 = vperm.slane %v1103, 0
      %v1128 = vsel %vm1064, %v1112, 0.0
      %v1129 = vsel %vm1065, %v1112, 0.0
      %v1130 = vsel %vm1066, %v1112, 0.0
      %v1131 = vsel %vm1067, %v1112, 0.0
      %v1132 = vsel %vm1068, %v1113, 0.0
      %v1133 = vsel %vm1069, %v1113, 0.0
      %v1134 = vsel %vm1070, %v1113, 0.0
      %v1135 = vsel %vm1071, %v1113, 0.0
      %v1136 = vsel %vm1072, %v1114, 0.0
      %v1137 = vsel %vm1073, %v1114, 0.0
      %v1138 = vsel %vm1074, %v1114, 0.0
      %v1139 = vsel %vm1075, %v1114, 0.0
      %v1140 = vsel %vm1076, %v1115, 0.0
      %v1141 = vsel %vm1077, %v1115, 0.0
      %v1142 = vsel %vm1078, %v1115, 0.0
      %v1143 = vsel %vm1079, %v1115, 0.0
      %v1144 = vsel %vm1080, %v1116, 0.0
      %v1145 = vsel %vm1081, %v1116, 0.0
      %v1146 = vsel %vm1082, %v1116, 0.0
      %v1147 = vsel %vm1083, %v1116, 0.0
      %v1148 = vsel %vm1084, %v1117, 0.0
      %v1149 = vsel %vm1085, %v1117, 0.0
      %v1150 = vsel %vm1086, %v1117, 0.0
      %v1151 = vsel %vm1087, %v1117, 0.0
      %v1152 = vsel %vm1088, %v1118, 0.0
      %v1153 = vsel %vm1089, %v1118, 0.0
      %v1154 = vsel %vm1090, %v1118, 0.0
      %v1155 = vsel %vm1091, %v1118, 0.0
      %v1156 = vsel %vm1092, %v1119, 0.0
      %v1157 = vsel %vm1093, %v1119, 0.0
      %v1158 = vsel %vm1094, %v1119, 0.0
      %v1159 = vsel %vm1095, %v1119, 0.0
      %v1160 = vadd.f32 %v1016, 1.0
      %v1161 = vadd.f32 %v1019, 1.0
      %v1162 = vadd.f32 %v1020, 1.0
      %v1163 = vadd.f32 %v1021, 1.0
      %v1164 = vadd.f32 %v1022, 1.0
      %v1165 = vadd.f32 %v1023, 1.0
      %v1166 = vadd.f32 %v1024, 1.0
      %v1167 = vadd.f32 %v1025, 1.0
      %v1176 = vperm.slane %v1160, 0
      %v1177 = vperm.slane %v1161, 0
      %v1178 = vperm.slane %v1162, 0
      %v1179 = vperm.slane %v1163, 0
      %v1180 = vperm.slane %v1164, 0
      %v1181 = vperm.slane %v1165, 0
      %v1182 = vperm.slane %v1166, 0
      %v1183 = vperm.slane %v1167, 0
      %vm1192 = vcmp.eq.f32.partialorder %v316, %v1176
      %vm1193 = vcmp.eq.f32.partialorder %v317, %v1176
      %vm1194 = vcmp.eq.f32.partialorder %v318, %v1176
      %vm1195 = vcmp.eq.f32.partialorder %v319, %v1176
      %vm1196 = vcmp.eq.f32.partialorder %v316, %v1177
      %vm1197 = vcmp.eq.f32.partialorder %v317, %v1177
      %vm1198 = vcmp.eq.f32.partialorder %v318, %v1177
      %vm1199 = vcmp.eq.f32.partialorder %v319, %v1177
      %vm1200 = vcmp.eq.f32.partialorder %v316, %v1178
      %vm1201 = vcmp.eq.f32.partialorder %v317, %v1178
      %vm1202 = vcmp.eq.f32.partialorder %v318, %v1178
      %vm1203 = vcmp.eq.f32.partialorder %v319, %v1178
      %vm1204 = vcmp.eq.f32.partialorder %v316, %v1179
      %vm1205 = vcmp.eq.f32.partialorder %v317, %v1179
      %vm1206 = vcmp.eq.f32.partialorder %v318, %v1179
      %vm1207 = vcmp.eq.f32.partialorder %v319, %v1179
      %vm1208 = vcmp.eq.f32.partialorder %v316, %v1180
      %vm1209 = vcmp.eq.f32.partialorder %v317, %v1180
      %vm1210 = vcmp.eq.f32.partialorder %v318, %v1180
      %vm1211 = vcmp.eq.f32.partialorder %v319, %v1180
      %vm1212 = vcmp.eq.f32.partialorder %v316, %v1181
      %vm1213 = vcmp.eq.f32.partialorder %v317, %v1181
      %vm1214 = vcmp.eq.f32.partialorder %v318, %v1181
      %vm1215 = vcmp.eq.f32.partialorder %v319, %v1181
      %vm1216 = vcmp.eq.f32.partialorder %v316, %v1182
      %vm1217 = vcmp.eq.f32.partialorder %v317, %v1182
      %vm1218 = vcmp.eq.f32.partialorder %v318, %v1182
      %vm1219 = vcmp.eq.f32.partialorder %v319, %v1182
      %vm1220 = vcmp.eq.f32.partialorder %v316, %v1183
      %vm1221 = vcmp.eq.f32.partialorder %v317, %v1183
      %vm1222 = vcmp.eq.f32.partialorder %v318, %v1183
      %vm1223 = vcmp.eq.f32.partialorder %v319, %v1183
      %v1224 = vperm.slane %v1017, 0
      %v1225 = vperm.slane %v1034, 0
      %v1226 = vperm.slane %v1035, 0
      %v1227 = vperm.slane %v1036, 0
      %v1228 = vperm.slane %v1037, 0
      %v1229 = vperm.slane %v1038, 0
      %v1230 = vperm.slane %v1039, 0
      %v1231 = vperm.slane %v1040, 0
      %v1240 = vsel %vm1192, %v1224, 0.0
      %v1241 = vsel %vm1193, %v1224, 0.0
      %v1242 = vsel %vm1194, %v1224, 0.0
      %v1243 = vsel %vm1195, %v1224, 0.0
      %v1244 = vsel %vm1196, %v1225, 0.0
      %v1245 = vsel %vm1197, %v1225, 0.0
      %v1246 = vsel %vm1198, %v1225, 0.0
      %v1247 = vsel %vm1199, %v1225, 0.0
      %v1248 = vsel %vm1200, %v1226, 0.0
      %v1249 = vsel %vm1201, %v1226, 0.0
      %v1250 = vsel %vm1202, %v1226, 0.0
      %v1251 = vsel %vm1203, %v1226, 0.0
      %v1252 = vsel %vm1204, %v1227, 0.0
      %v1253 = vsel %vm1205, %v1227, 0.0
      %v1254 = vsel %vm1206, %v1227, 0.0
      %v1255 = vsel %vm1207, %v1227, 0.0
      %v1256 = vsel %vm1208, %v1228, 0.0
      %v1257 = vsel %vm1209, %v1228, 0.0
      %v1258 = vsel %vm1210, %v1228, 0.0
      %v1259 = vsel %vm1211, %v1228, 0.0
      %v1260 = vsel %vm1212, %v1229, 0.0
      %v1261 = vsel %vm1213, %v1229, 0.0
      %v1262 = vsel %vm1214, %v1229, 0.0
      %v1263 = vsel %vm1215, %v1229, 0.0
      %v1264 = vsel %vm1216, %v1230, 0.0
      %v1265 = vsel %vm1217, %v1230, 0.0
      %v1266 = vsel %vm1218, %v1230, 0.0
      %v1267 = vsel %vm1219, %v1230, 0.0
      %v1268 = vsel %vm1220, %v1231, 0.0
      %v1269 = vsel %vm1221, %v1231, 0.0
      %v1270 = vsel %vm1222, %v1231, 0.0
      %v1271 = vsel %vm1223, %v1231, 0.0
      %v1272 = vadd.f32 %v1128, %v1240
      %v1273 = vadd.f32 %v1129, %v1241
      %v1274 = vadd.f32 %v1130, %v1242
      %v1275 = vadd.f32 %v1131, %v1243
      %v1276 = vadd.f32 %v1132, %v1244
      %v1277 = vadd.f32 %v1133, %v1245
      %v1278 = vadd.f32 %v1134, %v1246
      %v1279 = vadd.f32 %v1135, %v1247
      %v1280 = vadd.f32 %v1136, %v1248
      %v1281 = vadd.f32 %v1137, %v1249
      %v1282 = vadd.f32 %v1138, %v1250
      %v1283 = vadd.f32 %v1139, %v1251
      %v1284 = vadd.f32 %v1140, %v1252
      %v1285 = vadd.f32 %v1141, %v1253
      %v1286 = vadd.f32 %v1142, %v1254
      %v1287 = vadd.f32 %v1143, %v1255
      %v1288 = vadd.f32 %v1144, %v1256
      %v1289 = vadd.f32 %v1145, %v1257
      %v1290 = vadd.f32 %v1146, %v1258
      %v1291 = vadd.f32 %v1147, %v1259
      %v1292 = vadd.f32 %v1148, %v1260
      %v1293 = vadd.f32 %v1149, %v1261
      %v1294 = vadd.f32 %v1150, %v1262
      %v1295 = vadd.f32 %v1151, %v1263
      %v1296 = vadd.f32 %v1152, %v1264
      %v1297 = vadd.f32 %v1153, %v1265
      %v1298 = vadd.f32 %v1154, %v1266
      %v1299 = vadd.f32 %v1155, %v1267
      %v1300 = vadd.f32 %v1156, %v1268
      %v1301 = vadd.f32 %v1157, %v1269
      %v1302 = vadd.f32 %v1158, %v1270
      %v1303 = vadd.f32 %v1159, %v1271
      %1304 = vmatpush.msra.mxu0 0.0
      %1305 = vmatpush.msra.mxu0 0.0
      %1306 = vmatpush.msra.mxu0 0.0
      %1307 = vmatpush.msra.mxu0 0.0
      %1308 = vmatpush.msra.mxu0 0.0
      %1309 = vmatpush.msra.mxu0 0.0
      %1310 = vmatpush.msra.mxu0 0.0
      %1311 = vmatpush.msra.mxu0 0.0
      %1312 = vmatpush.msra.mxu0 0.0
      %1313 = vmatpush.msra.mxu0 0.0
      %1314 = vmatpush.msra.mxu0 0.0
      %1315 = vmatpush.msra.mxu0 0.0
      %1316 = vmatpush.msra.mxu0 %v1275
      %1317 = vmatpush.msra.mxu0 %v1274
      %1318 = vmatpush.msra.mxu0 %v1273
      %1319 = vmatpush.msra.mxu0 %v1272
      %1320 = vmatmul.f32.gmra.mxu0 %v634
      %v1321 = vpop.f32.mrf.mxu0
      %v1322 = vadd.f32 0.0, %v1321
      %1323 = vmatmul.f32.gmra.mxu0 %v637
      %v1324 = vpop.f32.mrf.mxu0
      %v1325 = vadd.f32 0.0, %v1324
      %1326 = vdwg.mxu0
      %1327 = vmatpush.msra.mxu0 0.0
      %1328 = vmatpush.msra.mxu0 0.0
      %1329 = vmatpush.msra.mxu0 0.0
      %1330 = vmatpush.msra.mxu0 0.0
      %1331 = vmatpush.msra.mxu0 0.0
      %1332 = vmatpush.msra.mxu0 0.0
      %1333 = vmatpush.msra.mxu0 0.0
      %1334 = vmatpush.msra.mxu0 0.0
      %1335 = vmatpush.msra.mxu0 0.0
      %1336 = vmatpush.msra.mxu0 0.0
      %1337 = vmatpush.msra.mxu0 0.0
      %1338 = vmatpush.msra.mxu0 0.0
      %1339 = vmatpush.msra.mxu0 %v1279
      %1340 = vmatpush.msra.mxu0 %v1278
      %1341 = vmatpush.msra.mxu0 %v1277
      %1342 = vmatpush.msra.mxu0 %v1276
      %1343 = vmatmul.f32.gmra.mxu0 %v663
      %v1344 = vpop.f32.mrf.mxu0
      %v1345 = vadd.f32 0.0, %v1344
      %1346 = vmatmul.f32.gmra.mxu0 %v666
      %v1347 = vpop.f32.mrf.mxu0
      %v1348 = vadd.f32 0.0, %v1347
      %1349 = vdwg.mxu0
      %1350 = vmatpush.msra.mxu0 0.0
      %1351 = vmatpush.msra.mxu0 0.0
      %1352 = vmatpush.msra.mxu0 0.0
      %1353 = vmatpush.msra.mxu0 0.0
      %1354 = vmatpush.msra.mxu0 0.0
      %1355 = vmatpush.msra.mxu0 0.0
      %1356 = vmatpush.msra.mxu0 0.0
      %1357 = vmatpush.msra.mxu0 0.0
      %1358 = vmatpush.msra.mxu0 0.0
      %1359 = vmatpush.msra.mxu0 0.0
      %1360 = vmatpush.msra.mxu0 0.0
      %1361 = vmatpush.msra.mxu0 0.0
      %1362 = vmatpush.msra.mxu0 %v1283
      %1363 = vmatpush.msra.mxu0 %v1282
      %1364 = vmatpush.msra.mxu0 %v1281
      %1365 = vmatpush.msra.mxu0 %v1280
      %1366 = vmatmul.f32.gmra.mxu0 %v692
      %v1367 = vpop.f32.mrf.mxu0
      %v1368 = vadd.f32 0.0, %v1367
      %1369 = vmatmul.f32.gmra.mxu0 %v695
      %v1370 = vpop.f32.mrf.mxu0
      %v1371 = vadd.f32 0.0, %v1370
      %1372 = vdwg.mxu0
      %1373 = vmatpush.msra.mxu0 0.0
      %1374 = vmatpush.msra.mxu0 0.0
      %1375 = vmatpush.msra.mxu0 0.0
      %1376 = vmatpush.msra.mxu0 0.0
      %1377 = vmatpush.msra.mxu0 0.0
      %1378 = vmatpush.msra.mxu0 0.0
      %1379 = vmatpush.msra.mxu0 0.0
      %1380 = vmatpush.msra.mxu0 0.0
      %1381 = vmatpush.msra.mxu0 0.0
      %1382 = vmatpush.msra.mxu0 0.0
      %1383 = vmatpush.msra.mxu0 0.0
      %1384 = vmatpush.msra.mxu0 0.0
      %1385 = vmatpush.msra.mxu0 %v1287
      %1386 = vmatpush.msra.mxu0 %v1286
      %1387 = vmatpush.msra.mxu0 %v1285
      %1388 = vmatpush.msra.mxu0 %v1284
      %1389 = vmatmul.f32.gmra.mxu0 %v721
      %v1390 = vpop.f32.mrf.mxu0
      %v1391 = vadd.f32 0.0, %v1390
      %1392 = vmatmul.f32.gmra.mxu0 %v724
      %v1393 = vpop.f32.mrf.mxu0
      %v1394 = vadd.f32 0.0, %v1393
      %1395 = vdwg.mxu0
      %1396 = vmatpush.msra.mxu0 0.0
      %1397 = vmatpush.msra.mxu0 0.0
      %1398 = vmatpush.msra.mxu0 0.0
      %1399 = vmatpush.msra.mxu0 0.0
      %1400 = vmatpush.msra.mxu0 0.0
      %1401 = vmatpush.msra.mxu0 0.0
      %1402 = vmatpush.msra.mxu0 0.0
      %1403 = vmatpush.msra.mxu0 0.0
      %1404 = vmatpush.msra.mxu0 0.0
      %1405 = vmatpush.msra.mxu0 0.0
      %1406 = vmatpush.msra.mxu0 0.0
      %1407 = vmatpush.msra.mxu0 0.0
      %1408 = vmatpush.msra.mxu0 %v1291
      %1409 = vmatpush.msra.mxu0 %v1290
      %1410 = vmatpush.msra.mxu0 %v1289
      %1411 = vmatpush.msra.mxu0 %v1288
      %1412 = vmatmul.f32.gmra.mxu0 %v750
      %v1413 = vpop.f32.mrf.mxu0
      %v1414 = vadd.f32 0.0, %v1413
      %1415 = vmatmul.f32.gmra.mxu0 %v753
      %v1416 = vpop.f32.mrf.mxu0
      %v1417 = vadd.f32 0.0, %v1416
      %1418 = vdwg.mxu0
      %1419 = vmatpush.msra.mxu0 0.0
      %1420 = vmatpush.msra.mxu0 0.0
      %1421 = vmatpush.msra.mxu0 0.0
      %1422 = vmatpush.msra.mxu0 0.0
      %1423 = vmatpush.msra.mxu0 0.0
      %1424 = vmatpush.msra.mxu0 0.0
      %1425 = vmatpush.msra.mxu0 0.0
      %1426 = vmatpush.msra.mxu0 0.0
      %1427 = vmatpush.msra.mxu0 0.0
      %1428 = vmatpush.msra.mxu0 0.0
      %1429 = vmatpush.msra.mxu0 0.0
      %1430 = vmatpush.msra.mxu0 0.0
      %1431 = vmatpush.msra.mxu0 %v1295
      %1432 = vmatpush.msra.mxu0 %v1294
      %1433 = vmatpush.msra.mxu0 %v1293
      %1434 = vmatpush.msra.mxu0 %v1292
      %1435 = vmatmul.f32.gmra.mxu0 %v779
      %v1436 = vpop.f32.mrf.mxu0
      %v1437 = vadd.f32 0.0, %v1436
      %1438 = vmatmul.f32.gmra.mxu0 %v782
      %v1439 = vpop.f32.mrf.mxu0
      %v1440 = vadd.f32 0.0, %v1439
      %1441 = vdwg.mxu0
      %1442 = vmatpush.msra.mxu0 0.0
      %1443 = vmatpush.msra.mxu0 0.0
      %1444 = vmatpush.msra.mxu0 0.0
      %1445 = vmatpush.msra.mxu0 0.0
      %1446 = vmatpush.msra.mxu0 0.0
      %1447 = vmatpush.msra.mxu0 0.0
      %1448 = vmatpush.msra.mxu0 0.0
      %1449 = vmatpush.msra.mxu0 0.0
      %1450 = vmatpush.msra.mxu0 0.0
      %1451 = vmatpush.msra.mxu0 0.0
      %1452 = vmatpush.msra.mxu0 0.0
      %1453 = vmatpush.msra.mxu0 0.0
      %1454 = vmatpush.msra.mxu0 %v1299
      %1455 = vmatpush.msra.mxu0 %v1298
      %1456 = vmatpush.msra.mxu0 %v1297
      %1457 = vmatpush.msra.mxu0 %v1296
      %1458 = vmatmul.f32.gmra.mxu0 %v808
      %v1459 = vpop.f32.mrf.mxu0
      %v1460 = vadd.f32 0.0, %v1459
      %1461 = vmatmul.f32.gmra.mxu0 %v811
      %v1462 = vpop.f32.mrf.mxu0
      %v1463 = vadd.f32 0.0, %v1462
      %1464 = vdwg.mxu0
      %1465 = vmatpush.msra.mxu0 0.0
      %1466 = vmatpush.msra.mxu0 0.0
      %1467 = vmatpush.msra.mxu0 0.0
      %1468 = vmatpush.msra.mxu0 0.0
      %1469 = vmatpush.msra.mxu0 0.0
      %1470 = vmatpush.msra.mxu0 0.0
      %1471 = vmatpush.msra.mxu0 0.0
      %1472 = vmatpush.msra.mxu0 0.0
      %1473 = vmatpush.msra.mxu0 0.0
      %1474 = vmatpush.msra.mxu0 0.0
      %1475 = vmatpush.msra.mxu0 0.0
      %1476 = vmatpush.msra.mxu0 0.0
      %1477 = vmatpush.msra.mxu0 %v1303
      %1478 = vmatpush.msra.mxu0 %v1302
      %1479 = vmatpush.msra.mxu0 %v1301
      %1480 = vmatpush.msra.mxu0 %v1300
      %1481 = vmatmul.f32.gmra.mxu0 %v837
      %v1482 = vpop.f32.mrf.mxu0
      %v1483 = vadd.f32 0.0, %v1482
      %1484 = vmatmul.f32.gmra.mxu0 %v840
      %v1485 = vpop.f32.mrf.mxu0
      %v1486 = vadd.f32 0.0, %v1485
      %1487 = vdwg.mxu0
      %s1488 = scalar_lea.vmem %s272, 128
      %v1489 = vld [vmem:[%s1488] sm:$0xff]
      %v1490 = vld [vmem:[%s1488 + $0x8] sm:$0xff]
      %v1491 = vld [vmem:[%s1488 + $0x10] sm:$0xff]
      %v1492 = vld [vmem:[%s1488 + $0x18] sm:$0xff]
      %v1493 = vld [vmem:[%s1488 + $0x20] sm:$0xff]
      %v1494 = vld [vmem:[%s1488 + $0x28] sm:$0xff]
      %v1495 = vld [vmem:[%s1488 + $0x30] sm:$0xff]
      %v1496 = vld [vmem:[%s1488 + $0x38] sm:$0xff]
      %v1497 = vld [vmem:[%s1488 + $0x40] sm:$0xff]
      %v1498 = vld [vmem:[%s1488 + $0x48] sm:$0xff]
      %v1499 = vld [vmem:[%s1488 + $0x50] sm:$0xff]
      %v1500 = vld [vmem:[%s1488 + $0x58] sm:$0xff]
      %v1501 = vld [vmem:[%s1488 + $0x60] sm:$0xff]
      %v1502 = vld [vmem:[%s1488 + $0x68] sm:$0xff]
      %v1503 = vld [vmem:[%s1488 + $0x70] sm:$0xff]
      %v1504 = vld [vmem:[%s1488 + $0x78] sm:$0xff]
      %v1505 = vsub.f32 %v1489, %v1322
      %v1506 = vsub.f32 %v1490, %v1325
      %v1507 = vsub.f32 %v1491, %v1345
      %v1508 = vsub.f32 %v1492, %v1348
      %v1509 = vsub.f32 %v1493, %v1368
      %v1510 = vsub.f32 %v1494, %v1371
      %v1511 = vsub.f32 %v1495, %v1391
      %v1512 = vsub.f32 %v1496, %v1394
      %v1513 = vsub.f32 %v1497, %v1414
      %v1514 = vsub.f32 %v1498, %v1417
      %v1515 = vsub.f32 %v1499, %v1437
      %v1516 = vsub.f32 %v1500, %v1440
      %v1517 = vsub.f32 %v1501, %v1460
      %v1518 = vsub.f32 %v1502, %v1463
      %v1519 = vsub.f32 %v1503, %v1483
      %v1520 = vsub.f32 %v1504, %v1486
      %v1521 = vand.u32 2147483647, %v1505
      %v1522 = vand.u32 2147483647, %v1506
      %v1523 = vand.u32 2147483647, %v1507
      %v1524 = vand.u32 2147483647, %v1508
      %v1525 = vand.u32 2147483647, %v1509
      %v1526 = vand.u32 2147483647, %v1510
      %v1527 = vand.u32 2147483647, %v1511
      %v1528 = vand.u32 2147483647, %v1512
      %v1529 = vand.u32 2147483647, %v1513
      %v1530 = vand.u32 2147483647, %v1514
      %v1531 = vand.u32 2147483647, %v1515
      %v1532 = vand.u32 2147483647, %v1516
      %v1533 = vand.u32 2147483647, %v1517
      %v1534 = vand.u32 2147483647, %v1518
      %v1535 = vand.u32 2147483647, %v1519
      %v1536 = vand.u32 2147483647, %v1520
      %v1537 = vsel %vm913, %v1521, 0.0
      %v1538 = vsel %vm913, %v1522, 0.0
      %v1539 = vadd.f32 %v1537, %v1538
      %v1540 = vrot.slane %v1539, 4
      %v1541 = vadd.f32 %v1539, %v1540
      %v1542 = vrot.slane %v1541, 2
      %v1543 = vadd.f32 %v1541, %v1542
      %v1544 = vrot.slane %v1543, 1
      %v1545 = vadd.f32 %v1543, %v1544
      %v1546 = vsel %vm913, %v1523, 0.0
      %v1547 = vsel %vm913, %v1524, 0.0
      %v1548 = vadd.f32 %v1546, %v1547
      %v1549 = vrot.slane %v1548, 4
      %v1550 = vadd.f32 %v1548, %v1549
      %v1551 = vrot.slane %v1550, 2
      %v1552 = vadd.f32 %v1550, %v1551
      %v1553 = vrot.slane %v1552, 1
      %v1554 = vadd.f32 %v1552, %v1553
      %v1555 = vsel %vm913, %v1525, 0.0
      %v1556 = vsel %vm913, %v1526, 0.0
      %v1557 = vadd.f32 %v1555, %v1556
      %v1558 = vrot.slane %v1557, 4
      %v1559 = vadd.f32 %v1557, %v1558
      %v1560 = vrot.slane %v1559, 2
      %v1561 = vadd.f32 %v1559, %v1560
      %v1562 = vrot.slane %v1561, 1
      %v1563 = vadd.f32 %v1561, %v1562
      %v1564 = vsel %vm913, %v1527, 0.0
      %v1565 = vsel %vm913, %v1528, 0.0
      %v1566 = vadd.f32 %v1564, %v1565
      %v1567 = vrot.slane %v1566, 4
      %v1568 = vadd.f32 %v1566, %v1567
      %v1569 = vrot.slane %v1568, 2
      %v1570 = vadd.f32 %v1568, %v1569
      %v1571 = vrot.slane %v1570, 1
      %v1572 = vadd.f32 %v1570, %v1571
      %v1573 = vsel %vm913, %v1529, 0.0
      %v1574 = vsel %vm913, %v1530, 0.0
      %v1575 = vadd.f32 %v1573, %v1574
      %v1576 = vrot.slane %v1575, 4
      %v1577 = vadd.f32 %v1575, %v1576
      %v1578 = vrot.slane %v1577, 2
      %v1579 = vadd.f32 %v1577, %v1578
      %v1580 = vrot.slane %v1579, 1
      %v1581 = vadd.f32 %v1579, %v1580
      %v1582 = vsel %vm913, %v1531, 0.0
      %v1583 = vsel %vm913, %v1532, 0.0
      %v1584 = vadd.f32 %v1582, %v1583
      %v1585 = vrot.slane %v1584, 4
      %v1586 = vadd.f32 %v1584, %v1585
      %v1587 = vrot.slane %v1586, 2
      %v1588 = vadd.f32 %v1586, %v1587
      %v1589 = vrot.slane %v1588, 1
      %v1590 = vadd.f32 %v1588, %v1589
      %v1591 = vsel %vm913, %v1533, 0.0
      %v1592 = vsel %vm913, %v1534, 0.0
      %v1593 = vadd.f32 %v1591, %v1592
      %v1594 = vrot.slane %v1593, 4
      %v1595 = vadd.f32 %v1593, %v1594
      %v1596 = vrot.slane %v1595, 2
      %v1597 = vadd.f32 %v1595, %v1596
      %v1598 = vrot.slane %v1597, 1
      %v1599 = vadd.f32 %v1597, %v1598
      %v1600 = vsel %vm913, %v1535, 0.0
      %v1601 = vsel %vm913, %v1536, 0.0
      %v1602 = vadd.f32 %v1600, %v1601
      %v1603 = vrot.slane %v1602, 4
      %v1604 = vadd.f32 %v1602, %v1603
      %v1605 = vrot.slane %v1604, 2
      %v1606 = vadd.f32 %v1604, %v1605
      %v1607 = vrot.slane %v1606, 1
      %v1608 = vadd.f32 %v1606, %v1607
      %v1617 = vsel %vm994, %v1554, %v1545
      %v1618 = vsel %vm996, %v1563, %v1617
      %v1619 = vsel %vm998, %v1572, %v1618
      %v1620 = vsel %vm1000, %v1581, %v1619
      %v1621 = vsel %vm1002, %v1590, %v1620
      %v1622 = vsel %vm1004, %v1599, %v1621
      %v1623 = vsel %vm1006, %v1608, %v1622
      %s1625 = scalar_lea.vmem %s296, 8
      %1626 = vst.msk [vmem:[%s1625] sm:$0xff] %vm913, %v1623
      %v1627 = vmul.f32 %v304, 0.5
      %v1628 = vadd.f32 %v337, %v1627
      %v1629 = vadd.f32 %v310, 2.0
      %v1630 = vsub.f32 %v1629, %v1628
      %v1631 = vmul.f32 %v1630, 1.032258
      %v1632 = vadd.f32 %v1631, -0.5
      %v1633 = vfloor.f32 %v1632
      %v1634 = vsub.f32 %v1632, %v1633
      %v1636 = vrot.slane %v1633, 1
      %v1637 = vrot.slane %v1633, 2
      %v1638 = vrot.slane %v1633, 3
      %v1639 = vrot.slane %v1633, 4
      %v1640 = vrot.slane %v1633, 5
      %v1641 = vrot.slane %v1633, 6
      %v1642 = vrot.slane %v1633, 7
      %v1651 = vrot.slane %v1634, 1
      %v1652 = vrot.slane %v1634, 2
      %v1653 = vrot.slane %v1634, 3
      %v1654 = vrot.slane %v1634, 4
      %v1655 = vrot.slane %v1634, 5
      %v1656 = vrot.slane %v1634, 6
      %v1657 = vrot.slane %v1634, 7
      %v1665 = vperm.slane %v1633, 0
      %v1666 = vperm.slane %v1636, 0
      %v1667 = vperm.slane %v1637, 0
      %v1668 = vperm.slane %v1638, 0
      %v1669 = vperm.slane %v1639, 0
      %v1670 = vperm.slane %v1640, 0
      %v1671 = vperm.slane %v1641, 0
      %v1672 = vperm.slane %v1642, 0
      %vm1681 = vcmp.eq.f32.partialorder %v316, %v1665
      %vm1682 = vcmp.eq.f32.partialorder %v317, %v1665
      %vm1683 = vcmp.eq.f32.partialorder %v318, %v1665
      %vm1684 = vcmp.eq.f32.partialorder %v319, %v1665
      %vm1685 = vcmp.eq.f32.partialorder %v316, %v1666
      %vm1686 = vcmp.eq.f32.partialorder %v317, %v1666
      %vm1687 = vcmp.eq.f32.partialorder %v318, %v1666
      %vm1688 = vcmp.eq.f32.partialorder %v319, %v1666
      %vm1689 = vcmp.eq.f32.partialorder %v316, %v1667
      %vm1690 = vcmp.eq.f32.partialorder %v317, %v1667
      %vm1691 = vcmp.eq.f32.partialorder %v318, %v1667
      %vm1692 = vcmp.eq.f32.partialorder %v319, %v1667
      %vm1693 = vcmp.eq.f32.partialorder %v316, %v1668
      %vm1694 = vcmp.eq.f32.partialorder %v317, %v1668
      %vm1695 = vcmp.eq.f32.partialorder %v318, %v1668
      %vm1696 = vcmp.eq.f32.partialorder %v319, %v1668
      %vm1697 = vcmp.eq.f32.partialorder %v316, %v1669
      %vm1698 = vcmp.eq.f32.partialorder %v317, %v1669
      %vm1699 = vcmp.eq.f32.partialorder %v318, %v1669
      %vm1700 = vcmp.eq.f32.partialorder %v319, %v1669
      %vm1701 = vcmp.eq.f32.partialorder %v316, %v1670
      %vm1702 = vcmp.eq.f32.partialorder %v317, %v1670
      %vm1703 = vcmp.eq.f32.partialorder %v318, %v1670
      %vm1704 = vcmp.eq.f32.partialorder %v319, %v1670
      %vm1705 = vcmp.eq.f32.partialorder %v316, %v1671
      %vm1706 = vcmp.eq.f32.partialorder %v317, %v1671
      %vm1707 = vcmp.eq.f32.partialorder %v318, %v1671
      %vm1708 = vcmp.eq.f32.partialorder %v319, %v1671
      %vm1709 = vcmp.eq.f32.partialorder %v316, %v1672
      %vm1710 = vcmp.eq.f32.partialorder %v317, %v1672
      %vm1711 = vcmp.eq.f32.partialorder %v318, %v1672
      %vm1712 = vcmp.eq.f32.partialorder %v319, %v1672
      %v1713 = vsub.f32 1.0, %v1634
      %v1714 = vsub.f32 1.0, %v1651
      %v1715 = vsub.f32 1.0, %v1652
      %v1716 = vsub.f32 1.0, %v1653
      %v1717 = vsub.f32 1.0, %v1654
      %v1718 = vsub.f32 1.0, %v1655
      %v1719 = vsub.f32 1.0, %v1656
      %v1720 = vsub.f32 1.0, %v1657
      %v1729 = vperm.slane %v1713, 0
      %v1730 = vperm.slane %v1714, 0
      %v1731 = vperm.slane %v1715, 0
      %v1732 = vperm.slane %v1716, 0
      %v1733 = vperm.slane %v1717, 0
      %v1734 = vperm.slane %v1718, 0
      %v1735 = vperm.slane %v1719, 0
      %v1736 = vperm.slane %v1720, 0
      %v1745 = vsel %vm1681, %v1729, 0.0
      %v1746 = vsel %vm1682, %v1729, 0.0
      %v1747 = vsel %vm1683, %v1729, 0.0
      %v1748 = vsel %vm1684, %v1729, 0.0
      %v1749 = vsel %vm1685, %v1730, 0.0
      %v1750 = vsel %vm1686, %v1730, 0.0
      %v1751 = vsel %vm1687, %v1730, 0.0
      %v1752 = vsel %vm1688, %v1730, 0.0
      %v1753 = vsel %vm1689, %v1731, 0.0
      %v1754 = vsel %vm1690, %v1731, 0.0
      %v1755 = vsel %vm1691, %v1731, 0.0
      %v1756 = vsel %vm1692, %v1731, 0.0
      %v1757 = vsel %vm1693, %v1732, 0.0
      %v1758 = vsel %vm1694, %v1732, 0.0
      %v1759 = vsel %vm1695, %v1732, 0.0
      %v1760 = vsel %vm1696, %v1732, 0.0
      %v1761 = vsel %vm1697, %v1733, 0.0
      %v1762 = vsel %vm1698, %v1733, 0.0
      %v1763 = vsel %vm1699, %v1733, 0.0
      %v1764 = vsel %vm1700, %v1733, 0.0
      %v1765 = vsel %vm1701, %v1734, 0.0
      %v1766 = vsel %vm1702, %v1734, 0.0
      %v1767 = vsel %vm1703, %v1734, 0.0
      %v1768 = vsel %vm1704, %v1734, 0.0
      %v1769 = vsel %vm1705, %v1735, 0.0
      %v1770 = vsel %vm1706, %v1735, 0.0
      %v1771 = vsel %vm1707, %v1735, 0.0
      %v1772 = vsel %vm1708, %v1735, 0.0
      %v1773 = vsel %vm1709, %v1736, 0.0
      %v1774 = vsel %vm1710, %v1736, 0.0
      %v1775 = vsel %vm1711, %v1736, 0.0
      %v1776 = vsel %vm1712, %v1736, 0.0
      %v1777 = vadd.f32 %v1633, 1.0
      %v1778 = vadd.f32 %v1636, 1.0
      %v1779 = vadd.f32 %v1637, 1.0
      %v1780 = vadd.f32 %v1638, 1.0
      %v1781 = vadd.f32 %v1639, 1.0
      %v1782 = vadd.f32 %v1640, 1.0
      %v1783 = vadd.f32 %v1641, 1.0
      %v1784 = vadd.f32 %v1642, 1.0
      %v1793 = vperm.slane %v1777, 0
      %v1794 = vperm.slane %v1778, 0
      %v1795 = vperm.slane %v1779, 0
      %v1796 = vperm.slane %v1780, 0
      %v1797 = vperm.slane %v1781, 0
      %v1798 = vperm.slane %v1782, 0
      %v1799 = vperm.slane %v1783, 0
      %v1800 = vperm.slane %v1784, 0
      %vm1809 = vcmp.eq.f32.partialorder %v316, %v1793
      %vm1810 = vcmp.eq.f32.partialorder %v317, %v1793
      %vm1811 = vcmp.eq.f32.partialorder %v318, %v1793
      %vm1812 = vcmp.eq.f32.partialorder %v319, %v1793
      %vm1813 = vcmp.eq.f32.partialorder %v316, %v1794
      %vm1814 = vcmp.eq.f32.partialorder %v317, %v1794
      %vm1815 = vcmp.eq.f32.partialorder %v318, %v1794
      %vm1816 = vcmp.eq.f32.partialorder %v319, %v1794
      %vm1817 = vcmp.eq.f32.partialorder %v316, %v1795
      %vm1818 = vcmp.eq.f32.partialorder %v317, %v1795
      %vm1819 = vcmp.eq.f32.partialorder %v318, %v1795
      %vm1820 = vcmp.eq.f32.partialorder %v319, %v1795
      %vm1821 = vcmp.eq.f32.partialorder %v316, %v1796
      %vm1822 = vcmp.eq.f32.partialorder %v317, %v1796
      %vm1823 = vcmp.eq.f32.partialorder %v318, %v1796
      %vm1824 = vcmp.eq.f32.partialorder %v319, %v1796
      %vm1825 = vcmp.eq.f32.partialorder %v316, %v1797
      %vm1826 = vcmp.eq.f32.partialorder %v317, %v1797
      %vm1827 = vcmp.eq.f32.partialorder %v318, %v1797
      %vm1828 = vcmp.eq.f32.partialorder %v319, %v1797
      %vm1829 = vcmp.eq.f32.partialorder %v316, %v1798
      %vm1830 = vcmp.eq.f32.partialorder %v317, %v1798
      %vm1831 = vcmp.eq.f32.partialorder %v318, %v1798
      %vm1832 = vcmp.eq.f32.partialorder %v319, %v1798
      %vm1833 = vcmp.eq.f32.partialorder %v316, %v1799
      %vm1834 = vcmp.eq.f32.partialorder %v317, %v1799
      %vm1835 = vcmp.eq.f32.partialorder %v318, %v1799
      %vm1836 = vcmp.eq.f32.partialorder %v319, %v1799
      %vm1837 = vcmp.eq.f32.partialorder %v316, %v1800
      %vm1838 = vcmp.eq.f32.partialorder %v317, %v1800
      %vm1839 = vcmp.eq.f32.partialorder %v318, %v1800
      %vm1840 = vcmp.eq.f32.partialorder %v319, %v1800
      %v1841 = vperm.slane %v1634, 0
      %v1842 = vperm.slane %v1651, 0
      %v1843 = vperm.slane %v1652, 0
      %v1844 = vperm.slane %v1653, 0
      %v1845 = vperm.slane %v1654, 0
      %v1846 = vperm.slane %v1655, 0
      %v1847 = vperm.slane %v1656, 0
      %v1848 = vperm.slane %v1657, 0
      %v1857 = vsel %vm1809, %v1841, 0.0
      %v1858 = vsel %vm1810, %v1841, 0.0
      %v1859 = vsel %vm1811, %v1841, 0.0
      %v1860 = vsel %vm1812, %v1841, 0.0
      %v1861 = vsel %vm1813, %v1842, 0.0
      %v1862 = vsel %vm1814, %v1842, 0.0
      %v1863 = vsel %vm1815, %v1842, 0.0
      %v1864 = vsel %vm1816, %v1842, 0.0
      %v1865 = vsel %vm1817, %v1843, 0.0
      %v1866 = vsel %vm1818, %v1843, 0.0
      %v1867 = vsel %vm1819, %v1843, 0.0
      %v1868 = vsel %vm1820, %v1843, 0.0
      %v1869 = vsel %vm1821, %v1844, 0.0
      %v1870 = vsel %vm1822, %v1844, 0.0
      %v1871 = vsel %vm1823, %v1844, 0.0
      %v1872 = vsel %vm1824, %v1844, 0.0
      %v1873 = vsel %vm1825, %v1845, 0.0
      %v1874 = vsel %vm1826, %v1845, 0.0
      %v1875 = vsel %vm1827, %v1845, 0.0
      %v1876 = vsel %vm1828, %v1845, 0.0
      %v1877 = vsel %vm1829, %v1846, 0.0
      %v1878 = vsel %vm1830, %v1846, 0.0
      %v1879 = vsel %vm1831, %v1846, 0.0
      %v1880 = vsel %vm1832, %v1846, 0.0
      %v1881 = vsel %vm1833, %v1847, 0.0
      %v1882 = vsel %vm1834, %v1847, 0.0
      %v1883 = vsel %vm1835, %v1847, 0.0
      %v1884 = vsel %vm1836, %v1847, 0.0
      %v1885 = vsel %vm1837, %v1848, 0.0
      %v1886 = vsel %vm1838, %v1848, 0.0
      %v1887 = vsel %vm1839, %v1848, 0.0
      %v1888 = vsel %vm1840, %v1848, 0.0
      %v1889 = vadd.f32 %v1745, %v1857
      %v1890 = vadd.f32 %v1746, %v1858
      %v1891 = vadd.f32 %v1747, %v1859
      %v1892 = vadd.f32 %v1748, %v1860
      %v1893 = vadd.f32 %v1749, %v1861
      %v1894 = vadd.f32 %v1750, %v1862
      %v1895 = vadd.f32 %v1751, %v1863
      %v1896 = vadd.f32 %v1752, %v1864
      %v1897 = vadd.f32 %v1753, %v1865
      %v1898 = vadd.f32 %v1754, %v1866
      %v1899 = vadd.f32 %v1755, %v1867
      %v1900 = vadd.f32 %v1756, %v1868
      %v1901 = vadd.f32 %v1757, %v1869
      %v1902 = vadd.f32 %v1758, %v1870
      %v1903 = vadd.f32 %v1759, %v1871
      %v1904 = vadd.f32 %v1760, %v1872
      %v1905 = vadd.f32 %v1761, %v1873
      %v1906 = vadd.f32 %v1762, %v1874
      %v1907 = vadd.f32 %v1763, %v1875
      %v1908 = vadd.f32 %v1764, %v1876
      %v1909 = vadd.f32 %v1765, %v1877
      %v1910 = vadd.f32 %v1766, %v1878
      %v1911 = vadd.f32 %v1767, %v1879
      %v1912 = vadd.f32 %v1768, %v1880
      %v1913 = vadd.f32 %v1769, %v1881
      %v1914 = vadd.f32 %v1770, %v1882
      %v1915 = vadd.f32 %v1771, %v1883
      %v1916 = vadd.f32 %v1772, %v1884
      %v1917 = vadd.f32 %v1773, %v1885
      %v1918 = vadd.f32 %v1774, %v1886
      %v1919 = vadd.f32 %v1775, %v1887
      %v1920 = vadd.f32 %v1776, %v1888
      %1921 = vmatpush.msra.mxu0 0.0
      %1922 = vmatpush.msra.mxu0 0.0
      %1923 = vmatpush.msra.mxu0 0.0
      %1924 = vmatpush.msra.mxu0 0.0
      %1925 = vmatpush.msra.mxu0 0.0
      %1926 = vmatpush.msra.mxu0 0.0
      %1927 = vmatpush.msra.mxu0 0.0
      %1928 = vmatpush.msra.mxu0 0.0
      %1929 = vmatpush.msra.mxu0 0.0
      %1930 = vmatpush.msra.mxu0 0.0
      %1931 = vmatpush.msra.mxu0 0.0
      %1932 = vmatpush.msra.mxu0 0.0
      %1933 = vmatpush.msra.mxu0 %v1892
      %1934 = vmatpush.msra.mxu0 %v1891
      %1935 = vmatpush.msra.mxu0 %v1890
      %1936 = vmatpush.msra.mxu0 %v1889
      %1937 = vmatmul.f32.gmra.mxu0 %v634
      %v1938 = vpop.f32.mrf.mxu0
      %v1939 = vadd.f32 0.0, %v1938
      %1940 = vmatmul.f32.gmra.mxu0 %v637
      %v1941 = vpop.f32.mrf.mxu0
      %v1942 = vadd.f32 0.0, %v1941
      %1943 = vdwg.mxu0
      %1944 = vmatpush.msra.mxu0 0.0
      %1945 = vmatpush.msra.mxu0 0.0
      %1946 = vmatpush.msra.mxu0 0.0
      %1947 = vmatpush.msra.mxu0 0.0
      %1948 = vmatpush.msra.mxu0 0.0
      %1949 = vmatpush.msra.mxu0 0.0
      %1950 = vmatpush.msra.mxu0 0.0
      %1951 = vmatpush.msra.mxu0 0.0
      %1952 = vmatpush.msra.mxu0 0.0
      %1953 = vmatpush.msra.mxu0 0.0
      %1954 = vmatpush.msra.mxu0 0.0
      %1955 = vmatpush.msra.mxu0 0.0
      %1956 = vmatpush.msra.mxu0 %v1896
      %1957 = vmatpush.msra.mxu0 %v1895
      %1958 = vmatpush.msra.mxu0 %v1894
      %1959 = vmatpush.msra.mxu0 %v1893
      %1960 = vmatmul.f32.gmra.mxu0 %v663
      %v1961 = vpop.f32.mrf.mxu0
      %v1962 = vadd.f32 0.0, %v1961
      %1963 = vmatmul.f32.gmra.mxu0 %v666
      %v1964 = vpop.f32.mrf.mxu0
      %v1965 = vadd.f32 0.0, %v1964
      %1966 = vdwg.mxu0
      %1967 = vmatpush.msra.mxu0 0.0
      %1968 = vmatpush.msra.mxu0 0.0
      %1969 = vmatpush.msra.mxu0 0.0
      %1970 = vmatpush.msra.mxu0 0.0
      %1971 = vmatpush.msra.mxu0 0.0
      %1972 = vmatpush.msra.mxu0 0.0
      %1973 = vmatpush.msra.mxu0 0.0
      %1974 = vmatpush.msra.mxu0 0.0
      %1975 = vmatpush.msra.mxu0 0.0
      %1976 = vmatpush.msra.mxu0 0.0
      %1977 = vmatpush.msra.mxu0 0.0
      %1978 = vmatpush.msra.mxu0 0.0
      %1979 = vmatpush.msra.mxu0 %v1900
      %1980 = vmatpush.msra.mxu0 %v1899
      %1981 = vmatpush.msra.mxu0 %v1898
      %1982 = vmatpush.msra.mxu0 %v1897
      %1983 = vmatmul.f32.gmra.mxu0 %v692
      %v1984 = vpop.f32.mrf.mxu0
      %v1985 = vadd.f32 0.0, %v1984
      %1986 = vmatmul.f32.gmra.mxu0 %v695
      %v1987 = vpop.f32.mrf.mxu0
      %v1988 = vadd.f32 0.0, %v1987
      %1989 = vdwg.mxu0
      %1990 = vmatpush.msra.mxu0 0.0
      %1991 = vmatpush.msra.mxu0 0.0
      %1992 = vmatpush.msra.mxu0 0.0
      %1993 = vmatpush.msra.mxu0 0.0
      %1994 = vmatpush.msra.mxu0 0.0
      %1995 = vmatpush.msra.mxu0 0.0
      %1996 = vmatpush.msra.mxu0 0.0
      %1997 = vmatpush.msra.mxu0 0.0
      %1998 = vmatpush.msra.mxu0 0.0
      %1999 = vmatpush.msra.mxu0 0.0
      %2000 = vmatpush.msra.mxu0 0.0
      %2001 = vmatpush.msra.mxu0 0.0
      %2002 = vmatpush.msra.mxu0 %v1904
      %2003 = vmatpush.msra.mxu0 %v1903
      %2004 = vmatpush.msra.mxu0 %v1902
      %2005 = vmatpush.msra.mxu0 %v1901
      %2006 = vmatmul.f32.gmra.mxu0 %v721
      %v2007 = vpop.f32.mrf.mxu0
      %v2008 = vadd.f32 0.0, %v2007
      %2009 = vmatmul.f32.gmra.mxu0 %v724
      %v2010 = vpop.f32.mrf.mxu0
      %v2011 = vadd.f32 0.0, %v2010
      %2012 = vdwg.mxu0
      %2013 = vmatpush.msra.mxu0 0.0
      %2014 = vmatpush.msra.mxu0 0.0
      %2015 = vmatpush.msra.mxu0 0.0
      %2016 = vmatpush.msra.mxu0 0.0
      %2017 = vmatpush.msra.mxu0 0.0
      %2018 = vmatpush.msra.mxu0 0.0
      %2019 = vmatpush.msra.mxu0 0.0
      %2020 = vmatpush.msra.mxu0 0.0
      %2021 = vmatpush.msra.mxu0 0.0
      %2022 = vmatpush.msra.mxu0 0.0
      %2023 = vmatpush.msra.mxu0 0.0
      %2024 = vmatpush.msra.mxu0 0.0
      %2025 = vmatpush.msra.mxu0 %v1908
      %2026 = vmatpush.msra.mxu0 %v1907
      %2027 = vmatpush.msra.mxu0 %v1906
      %2028 = vmatpush.msra.mxu0 %v1905
      %2029 = vmatmul.f32.gmra.mxu0 %v750
      %v2030 = vpop.f32.mrf.mxu0
      %v2031 = vadd.f32 0.0, %v2030
      %2032 = vmatmul.f32.gmra.mxu0 %v753
      %v2033 = vpop.f32.mrf.mxu0
      %v2034 = vadd.f32 0.0, %v2033
      %2035 = vdwg.mxu0
      %2036 = vmatpush.msra.mxu0 0.0
      %2037 = vmatpush.msra.mxu0 0.0
      %2038 = vmatpush.msra.mxu0 0.0
      %2039 = vmatpush.msra.mxu0 0.0
      %2040 = vmatpush.msra.mxu0 0.0
      %2041 = vmatpush.msra.mxu0 0.0
      %2042 = vmatpush.msra.mxu0 0.0
      %2043 = vmatpush.msra.mxu0 0.0
      %2044 = vmatpush.msra.mxu0 0.0
      %2045 = vmatpush.msra.mxu0 0.0
      %2046 = vmatpush.msra.mxu0 0.0
      %2047 = vmatpush.msra.mxu0 0.0
      %2048 = vmatpush.msra.mxu0 %v1912
      %2049 = vmatpush.msra.mxu0 %v1911
      %2050 = vmatpush.msra.mxu0 %v1910
      %2051 = vmatpush.msra.mxu0 %v1909
      %2052 = vmatmul.f32.gmra.mxu0 %v779
      %v2053 = vpop.f32.mrf.mxu0
      %v2054 = vadd.f32 0.0, %v2053
      %2055 = vmatmul.f32.gmra.mxu0 %v782
      %v2056 = vpop.f32.mrf.mxu0
      %v2057 = vadd.f32 0.0, %v2056
      %2058 = vdwg.mxu0
      %2059 = vmatpush.msra.mxu0 0.0
      %2060 = vmatpush.msra.mxu0 0.0
      %2061 = vmatpush.msra.mxu0 0.0
      %2062 = vmatpush.msra.mxu0 0.0
      %2063 = vmatpush.msra.mxu0 0.0
      %2064 = vmatpush.msra.mxu0 0.0
      %2065 = vmatpush.msra.mxu0 0.0
      %2066 = vmatpush.msra.mxu0 0.0
      %2067 = vmatpush.msra.mxu0 0.0
      %2068 = vmatpush.msra.mxu0 0.0
      %2069 = vmatpush.msra.mxu0 0.0
      %2070 = vmatpush.msra.mxu0 0.0
      %2071 = vmatpush.msra.mxu0 %v1916
      %2072 = vmatpush.msra.mxu0 %v1915
      %2073 = vmatpush.msra.mxu0 %v1914
      %2074 = vmatpush.msra.mxu0 %v1913
      %2075 = vmatmul.f32.gmra.mxu0 %v808
      %v2076 = vpop.f32.mrf.mxu0
      %v2077 = vadd.f32 0.0, %v2076
      %2078 = vmatmul.f32.gmra.mxu0 %v811
      %v2079 = vpop.f32.mrf.mxu0
      %v2080 = vadd.f32 0.0, %v2079
      %2081 = vdwg.mxu0
      %2082 = vmatpush.msra.mxu0 0.0
      %2083 = vmatpush.msra.mxu0 0.0
      %2084 = vmatpush.msra.mxu0 0.0
      %2085 = vmatpush.msra.mxu0 0.0
      %2086 = vmatpush.msra.mxu0 0.0
      %2087 = vmatpush.msra.mxu0 0.0
      %2088 = vmatpush.msra.mxu0 0.0
      %2089 = vmatpush.msra.mxu0 0.0
      %2090 = vmatpush.msra.mxu0 0.0
      %2091 = vmatpush.msra.mxu0 0.0
      %2092 = vmatpush.msra.mxu0 0.0
      %2093 = vmatpush.msra.mxu0 0.0
      %2094 = vmatpush.msra.mxu0 %v1920
      %2095 = vmatpush.msra.mxu0 %v1919
      %2096 = vmatpush.msra.mxu0 %v1918
      %2097 = vmatpush.msra.mxu0 %v1917
      %2098 = vmatmul.f32.gmra.mxu0 %v837
      %v2099 = vpop.f32.mrf.mxu0
      %v2100 = vadd.f32 0.0, %v2099
      %2101 = vmatmul.f32.gmra.mxu0 %v840
      %v2102 = vpop.f32.mrf.mxu0
      %v2103 = vadd.f32 0.0, %v2102
      %2104 = vdwg.mxu0
      %s2105 = scalar_lea.vmem %s272, 256
      %v2106 = vld [vmem:[%s2105] sm:$0xff]
      %v2107 = vld [vmem:[%s2105 + $0x8] sm:$0xff]
      %v2108 = vld [vmem:[%s2105 + $0x10] sm:$0xff]
      %v2109 = vld [vmem:[%s2105 + $0x18] sm:$0xff]
      %v2110 = vld [vmem:[%s2105 + $0x20] sm:$0xff]
      %v2111 = vld [vmem:[%s2105 + $0x28] sm:$0xff]
      %v2112 = vld [vmem:[%s2105 + $0x30] sm:$0xff]
      %v2113 = vld [vmem:[%s2105 + $0x38] sm:$0xff]
      %v2114 = vld [vmem:[%s2105 + $0x40] sm:$0xff]
      %v2115 = vld [vmem:[%s2105 + $0x48] sm:$0xff]
      %v2116 = vld [vmem:[%s2105 + $0x50] sm:$0xff]
      %v2117 = vld [vmem:[%s2105 + $0x58] sm:$0xff]
      %v2118 = vld [vmem:[%s2105 + $0x60] sm:$0xff]
      %v2119 = vld [vmem:[%s2105 + $0x68] sm:$0xff]
      %v2120 = vld [vmem:[%s2105 + $0x70] sm:$0xff]
      %v2121 = vld [vmem:[%s2105 + $0x78] sm:$0xff]
      %v2122 = vsub.f32 %v2106, %v1939
      %v2123 = vsub.f32 %v2107, %v1942
      %v2124 = vsub.f32 %v2108, %v1962
      %v2125 = vsub.f32 %v2109, %v1965
      %v2126 = vsub.f32 %v2110, %v1985
      %v2127 = vsub.f32 %v2111, %v1988
      %v2128 = vsub.f32 %v2112, %v2008
      %v2129 = vsub.f32 %v2113, %v2011
      %v2130 = vsub.f32 %v2114, %v2031
      %v2131 = vsub.f32 %v2115, %v2034
      %v2132 = vsub.f32 %v2116, %v2054
      %v2133 = vsub.f32 %v2117, %v2057
      %v2134 = vsub.f32 %v2118, %v2077
      %v2135 = vsub.f32 %v2119, %v2080
      %v2136 = vsub.f32 %v2120, %v2100
      %v2137 = vsub.f32 %v2121, %v2103
      %v2138 = vand.u32 2147483647, %v2122
      %v2139 = vand.u32 2147483647, %v2123
      %v2140 = vand.u32 2147483647, %v2124
      %v2141 = vand.u32 2147483647, %v2125
      %v2142 = vand.u32 2147483647, %v2126
      %v2143 = vand.u32 2147483647, %v2127
      %v2144 = vand.u32 2147483647, %v2128
      %v2145 = vand.u32 2147483647, %v2129
      %v2146 = vand.u32 2147483647, %v2130
      %v2147 = vand.u32 2147483647, %v2131
      %v2148 = vand.u32 2147483647, %v2132
      %v2149 = vand.u32 2147483647, %v2133
      %v2150 = vand.u32 2147483647, %v2134
      %v2151 = vand.u32 2147483647, %v2135
      %v2152 = vand.u32 2147483647, %v2136
      %v2153 = vand.u32 2147483647, %v2137
      %v2154 = vsel %vm913, %v2138, 0.0
      %v2155 = vsel %vm913, %v2139, 0.0
      %v2156 = vadd.f32 %v2154, %v2155
      %v2157 = vrot.slane %v2156, 4
      %v2158 = vadd.f32 %v2156, %v2157
      %v2159 = vrot.slane %v2158, 2
      %v2160 = vadd.f32 %v2158, %v2159
      %v2161 = vrot.slane %v2160, 1
      %v2162 = vadd.f32 %v2160, %v2161
      %v2163 = vsel %vm913, %v2140, 0.0
      %v2164 = vsel %vm913, %v2141, 0.0
      %v2165 = vadd.f32 %v2163, %v2164
      %v2166 = vrot.slane %v2165, 4
      %v2167 = vadd.f32 %v2165, %v2166
      %v2168 = vrot.slane %v2167, 2
      %v2169 = vadd.f32 %v2167, %v2168
      %v2170 = vrot.slane %v2169, 1
      %v2171 = vadd.f32 %v2169, %v2170
      %v2172 = vsel %vm913, %v2142, 0.0
      %v2173 = vsel %vm913, %v2143, 0.0
      %v2174 = vadd.f32 %v2172, %v2173
      %v2175 = vrot.slane %v2174, 4
      %v2176 = vadd.f32 %v2174, %v2175
      %v2177 = vrot.slane %v2176, 2
      %v2178 = vadd.f32 %v2176, %v2177
      %v2179 = vrot.slane %v2178, 1
      %v2180 = vadd.f32 %v2178, %v2179
      %v2181 = vsel %vm913, %v2144, 0.0
      %v2182 = vsel %vm913, %v2145, 0.0
      %v2183 = vadd.f32 %v2181, %v2182
      %v2184 = vrot.slane %v2183, 4
      %v2185 = vadd.f32 %v2183, %v2184
      %v2186 = vrot.slane %v2185, 2
      %v2187 = vadd.f32 %v2185, %v2186
      %v2188 = vrot.slane %v2187, 1
      %v2189 = vadd.f32 %v2187, %v2188
      %v2190 = vsel %vm913, %v2146, 0.0
      %v2191 = vsel %vm913, %v2147, 0.0
      %v2192 = vadd.f32 %v2190, %v2191
      %v2193 = vrot.slane %v2192, 4
      %v2194 = vadd.f32 %v2192, %v2193
      %v2195 = vrot.slane %v2194, 2
      %v2196 = vadd.f32 %v2194, %v2195
      %v2197 = vrot.slane %v2196, 1
      %v2198 = vadd.f32 %v2196, %v2197
      %v2199 = vsel %vm913, %v2148, 0.0
      %v2200 = vsel %vm913, %v2149, 0.0
      %v2201 = vadd.f32 %v2199, %v2200
      %v2202 = vrot.slane %v2201, 4
      %v2203 = vadd.f32 %v2201, %v2202
      %v2204 = vrot.slane %v2203, 2
      %v2205 = vadd.f32 %v2203, %v2204
      %v2206 = vrot.slane %v2205, 1
      %v2207 = vadd.f32 %v2205, %v2206
      %v2208 = vsel %vm913, %v2150, 0.0
      %v2209 = vsel %vm913, %v2151, 0.0
      %v2210 = vadd.f32 %v2208, %v2209
      %v2211 = vrot.slane %v2210, 4
      %v2212 = vadd.f32 %v2210, %v2211
      %v2213 = vrot.slane %v2212, 2
      %v2214 = vadd.f32 %v2212, %v2213
      %v2215 = vrot.slane %v2214, 1
      %v2216 = vadd.f32 %v2214, %v2215
      %v2217 = vsel %vm913, %v2152, 0.0
      %v2218 = vsel %vm913, %v2153, 0.0
      %v2219 = vadd.f32 %v2217, %v2218
      %v2220 = vrot.slane %v2219, 4
      %v2221 = vadd.f32 %v2219, %v2220
      %v2222 = vrot.slane %v2221, 2
      %v2223 = vadd.f32 %v2221, %v2222
      %v2224 = vrot.slane %v2223, 1
      %v2225 = vadd.f32 %v2223, %v2224
      %v2234 = vsel %vm994, %v2171, %v2162
      %v2235 = vsel %vm996, %v2180, %v2234
      %v2236 = vsel %vm998, %v2189, %v2235
      %v2237 = vsel %vm1000, %v2198, %v2236
      %v2238 = vsel %vm1002, %v2207, %v2237
      %v2239 = vsel %vm1004, %v2216, %v2238
      %v2240 = vsel %vm1006, %v2225, %v2239
      %s2242 = scalar_lea.vmem %s296, 16
      %2243 = vst.msk [vmem:[%s2242] sm:$0xff] %vm913, %v2240
      %v2244 = vmul.f32 %v304, 1.5
      %v2245 = vadd.f32 %v337, %v2244
      %v2246 = vadd.f32 %v310, 3.0
      %v2247 = vsub.f32 %v2246, %v2245
      %v2248 = vmul.f32 %v2247, 1.032258
      %v2249 = vadd.f32 %v2248, -0.5
      %v2250 = vfloor.f32 %v2249
      %v2251 = vsub.f32 %v2249, %v2250
      %v2253 = vrot.slane %v2250, 1
      %v2254 = vrot.slane %v2250, 2
      %v2255 = vrot.slane %v2250, 3
      %v2256 = vrot.slane %v2250, 4
      %v2257 = vrot.slane %v2250, 5
      %v2258 = vrot.slane %v2250, 6
      %v2259 = vrot.slane %v2250, 7
      %v2268 = vrot.slane %v2251, 1
      %v2269 = vrot.slane %v2251, 2
      %v2270 = vrot.slane %v2251, 3
      %v2271 = vrot.slane %v2251, 4
      %v2272 = vrot.slane %v2251, 5
      %v2273 = vrot.slane %v2251, 6
      %v2274 = vrot.slane %v2251, 7
      %v2282 = vperm.slane %v2250, 0
      %v2283 = vperm.slane %v2253, 0
      %v2284 = vperm.slane %v2254, 0
      %v2285 = vperm.slane %v2255, 0
      %v2286 = vperm.slane %v2256, 0
      %v2287 = vperm.slane %v2257, 0
      %v2288 = vperm.slane %v2258, 0
      %v2289 = vperm.slane %v2259, 0
      %vm2298 = vcmp.eq.f32.partialorder %v316, %v2282
      %vm2299 = vcmp.eq.f32.partialorder %v317, %v2282
      %vm2300 = vcmp.eq.f32.partialorder %v318, %v2282
      %vm2301 = vcmp.eq.f32.partialorder %v319, %v2282
      %vm2302 = vcmp.eq.f32.partialorder %v316, %v2283
      %vm2303 = vcmp.eq.f32.partialorder %v317, %v2283
      %vm2304 = vcmp.eq.f32.partialorder %v318, %v2283
      %vm2305 = vcmp.eq.f32.partialorder %v319, %v2283
      %vm2306 = vcmp.eq.f32.partialorder %v316, %v2284
      %vm2307 = vcmp.eq.f32.partialorder %v317, %v2284
      %vm2308 = vcmp.eq.f32.partialorder %v318, %v2284
      %vm2309 = vcmp.eq.f32.partialorder %v319, %v2284
      %vm2310 = vcmp.eq.f32.partialorder %v316, %v2285
      %vm2311 = vcmp.eq.f32.partialorder %v317, %v2285
      %vm2312 = vcmp.eq.f32.partialorder %v318, %v2285
      %vm2313 = vcmp.eq.f32.partialorder %v319, %v2285
      %vm2314 = vcmp.eq.f32.partialorder %v316, %v2286
      %vm2315 = vcmp.eq.f32.partialorder %v317, %v2286
      %vm2316 = vcmp.eq.f32.partialorder %v318, %v2286
      %vm2317 = vcmp.eq.f32.partialorder %v319, %v2286
      %vm2318 = vcmp.eq.f32.partialorder %v316, %v2287
      %vm2319 = vcmp.eq.f32.partialorder %v317, %v2287
      %vm2320 = vcmp.eq.f32.partialorder %v318, %v2287
      %vm2321 = vcmp.eq.f32.partialorder %v319, %v2287
      %vm2322 = vcmp.eq.f32.partialorder %v316, %v2288
      %vm2323 = vcmp.eq.f32.partialorder %v317, %v2288
      %vm2324 = vcmp.eq.f32.partialorder %v318, %v2288
      %vm2325 = vcmp.eq.f32.partialorder %v319, %v2288
      %vm2326 = vcmp.eq.f32.partialorder %v316, %v2289
      %vm2327 = vcmp.eq.f32.partialorder %v317, %v2289
      %vm2328 = vcmp.eq.f32.partialorder %v318, %v2289
      %vm2329 = vcmp.eq.f32.partialorder %v319, %v2289
      %v2330 = vsub.f32 1.0, %v2251
      %v2331 = vsub.f32 1.0, %v2268
      %v2332 = vsub.f32 1.0, %v2269
      %v2333 = vsub.f32 1.0, %v2270
      %v2334 = vsub.f32 1.0, %v2271
      %v2335 = vsub.f32 1.0, %v2272
      %v2336 = vsub.f32 1.0, %v2273
      %v2337 = vsub.f32 1.0, %v2274
      %v2346 = vperm.slane %v2330, 0
      %v2347 = vperm.slane %v2331, 0
      %v2348 = vperm.slane %v2332, 0
      %v2349 = vperm.slane %v2333, 0
      %v2350 = vperm.slane %v2334, 0
      %v2351 = vperm.slane %v2335, 0
      %v2352 = vperm.slane %v2336, 0
      %v2353 = vperm.slane %v2337, 0
      %v2362 = vsel %vm2298, %v2346, 0.0
      %v2363 = vsel %vm2299, %v2346, 0.0
      %v2364 = vsel %vm2300, %v2346, 0.0
      %v2365 = vsel %vm2301, %v2346, 0.0
      %v2366 = vsel %vm2302, %v2347, 0.0
      %v2367 = vsel %vm2303, %v2347, 0.0
      %v2368 = vsel %vm2304, %v2347, 0.0
      %v2369 = vsel %vm2305, %v2347, 0.0
      %v2370 = vsel %vm2306, %v2348, 0.0
      %v2371 = vsel %vm2307, %v2348, 0.0
      %v2372 = vsel %vm2308, %v2348, 0.0
      %v2373 = vsel %vm2309, %v2348, 0.0
      %v2374 = vsel %vm2310, %v2349, 0.0
      %v2375 = vsel %vm2311, %v2349, 0.0
      %v2376 = vsel %vm2312, %v2349, 0.0
      %v2377 = vsel %vm2313, %v2349, 0.0
      %v2378 = vsel %vm2314, %v2350, 0.0
      %v2379 = vsel %vm2315, %v2350, 0.0
      %v2380 = vsel %vm2316, %v2350, 0.0
      %v2381 = vsel %vm2317, %v2350, 0.0
      %v2382 = vsel %vm2318, %v2351, 0.0
      %v2383 = vsel %vm2319, %v2351, 0.0
      %v2384 = vsel %vm2320, %v2351, 0.0
      %v2385 = vsel %vm2321, %v2351, 0.0
      %v2386 = vsel %vm2322, %v2352, 0.0
      %v2387 = vsel %vm2323, %v2352, 0.0
      %v2388 = vsel %vm2324, %v2352, 0.0
      %v2389 = vsel %vm2325, %v2352, 0.0
      %v2390 = vsel %vm2326, %v2353, 0.0
      %v2391 = vsel %vm2327, %v2353, 0.0
      %v2392 = vsel %vm2328, %v2353, 0.0
      %v2393 = vsel %vm2329, %v2353, 0.0
      %v2394 = vadd.f32 %v2250, 1.0
      %v2395 = vadd.f32 %v2253, 1.0
      %v2396 = vadd.f32 %v2254, 1.0
      %v2397 = vadd.f32 %v2255, 1.0
      %v2398 = vadd.f32 %v2256, 1.0
      %v2399 = vadd.f32 %v2257, 1.0
      %v2400 = vadd.f32 %v2258, 1.0
      %v2401 = vadd.f32 %v2259, 1.0
      %v2410 = vperm.slane %v2394, 0
      %v2411 = vperm.slane %v2395, 0
      %v2412 = vperm.slane %v2396, 0
      %v2413 = vperm.slane %v2397, 0
      %v2414 = vperm.slane %v2398, 0
      %v2415 = vperm.slane %v2399, 0
      %v2416 = vperm.slane %v2400, 0
      %v2417 = vperm.slane %v2401, 0
      %vm2426 = vcmp.eq.f32.partialorder %v316, %v2410
      %vm2427 = vcmp.eq.f32.partialorder %v317, %v2410
      %vm2428 = vcmp.eq.f32.partialorder %v318, %v2410
      %vm2429 = vcmp.eq.f32.partialorder %v319, %v2410
      %vm2430 = vcmp.eq.f32.partialorder %v316, %v2411
      %vm2431 = vcmp.eq.f32.partialorder %v317, %v2411
      %vm2432 = vcmp.eq.f32.partialorder %v318, %v2411
      %vm2433 = vcmp.eq.f32.partialorder %v319, %v2411
      %vm2434 = vcmp.eq.f32.partialorder %v316, %v2412
      %vm2435 = vcmp.eq.f32.partialorder %v317, %v2412
      %vm2436 = vcmp.eq.f32.partialorder %v318, %v2412
      %vm2437 = vcmp.eq.f32.partialorder %v319, %v2412
      %vm2438 = vcmp.eq.f32.partialorder %v316, %v2413
      %vm2439 = vcmp.eq.f32.partialorder %v317, %v2413
      %vm2440 = vcmp.eq.f32.partialorder %v318, %v2413
      %vm2441 = vcmp.eq.f32.partialorder %v319, %v2413
      %vm2442 = vcmp.eq.f32.partialorder %v316, %v2414
      %vm2443 = vcmp.eq.f32.partialorder %v317, %v2414
      %vm2444 = vcmp.eq.f32.partialorder %v318, %v2414
      %vm2445 = vcmp.eq.f32.partialorder %v319, %v2414
      %vm2446 = vcmp.eq.f32.partialorder %v316, %v2415
      %vm2447 = vcmp.eq.f32.partialorder %v317, %v2415
      %vm2448 = vcmp.eq.f32.partialorder %v318, %v2415
      %vm2449 = vcmp.eq.f32.partialorder %v319, %v2415
      %vm2450 = vcmp.eq.f32.partialorder %v316, %v2416
      %vm2451 = vcmp.eq.f32.partialorder %v317, %v2416
      %vm2452 = vcmp.eq.f32.partialorder %v318, %v2416
      %vm2453 = vcmp.eq.f32.partialorder %v319, %v2416
      %vm2454 = vcmp.eq.f32.partialorder %v316, %v2417
      %vm2455 = vcmp.eq.f32.partialorder %v317, %v2417
      %vm2456 = vcmp.eq.f32.partialorder %v318, %v2417
      %vm2457 = vcmp.eq.f32.partialorder %v319, %v2417
      %v2458 = vperm.slane %v2251, 0
      %v2459 = vperm.slane %v2268, 0
      %v2460 = vperm.slane %v2269, 0
      %v2461 = vperm.slane %v2270, 0
      %v2462 = vperm.slane %v2271, 0
      %v2463 = vperm.slane %v2272, 0
      %v2464 = vperm.slane %v2273, 0
      %v2465 = vperm.slane %v2274, 0
      %v2474 = vsel %vm2426, %v2458, 0.0
      %v2475 = vsel %vm2427, %v2458, 0.0
      %v2476 = vsel %vm2428, %v2458, 0.0
      %v2477 = vsel %vm2429, %v2458, 0.0
      %v2478 = vsel %vm2430, %v2459, 0.0
      %v2479 = vsel %vm2431, %v2459, 0.0
      %v2480 = vsel %vm2432, %v2459, 0.0
      %v2481 = vsel %vm2433, %v2459, 0.0
      %v2482 = vsel %vm2434, %v2460, 0.0
      %v2483 = vsel %vm2435, %v2460, 0.0
      %v2484 = vsel %vm2436, %v2460, 0.0
      %v2485 = vsel %vm2437, %v2460, 0.0
      %v2486 = vsel %vm2438, %v2461, 0.0
      %v2487 = vsel %vm2439, %v2461, 0.0
      %v2488 = vsel %vm2440, %v2461, 0.0
      %v2489 = vsel %vm2441, %v2461, 0.0
      %v2490 = vsel %vm2442, %v2462, 0.0
      %v2491 = vsel %vm2443, %v2462, 0.0
      %v2492 = vsel %vm2444, %v2462, 0.0
      %v2493 = vsel %vm2445, %v2462, 0.0
      %v2494 = vsel %vm2446, %v2463, 0.0
      %v2495 = vsel %vm2447, %v2463, 0.0
      %v2496 = vsel %vm2448, %v2463, 0.0
      %v2497 = vsel %vm2449, %v2463, 0.0
      %v2498 = vsel %vm2450, %v2464, 0.0
      %v2499 = vsel %vm2451, %v2464, 0.0
      %v2500 = vsel %vm2452, %v2464, 0.0
      %v2501 = vsel %vm2453, %v2464, 0.0
      %v2502 = vsel %vm2454, %v2465, 0.0
      %v2503 = vsel %vm2455, %v2465, 0.0
      %v2504 = vsel %vm2456, %v2465, 0.0
      %v2505 = vsel %vm2457, %v2465, 0.0
      %v2506 = vadd.f32 %v2362, %v2474
      %v2507 = vadd.f32 %v2363, %v2475
      %v2508 = vadd.f32 %v2364, %v2476
      %v2509 = vadd.f32 %v2365, %v2477
      %v2510 = vadd.f32 %v2366, %v2478
      %v2511 = vadd.f32 %v2367, %v2479
      %v2512 = vadd.f32 %v2368, %v2480
      %v2513 = vadd.f32 %v2369, %v2481
      %v2514 = vadd.f32 %v2370, %v2482
      %v2515 = vadd.f32 %v2371, %v2483
      %v2516 = vadd.f32 %v2372, %v2484
      %v2517 = vadd.f32 %v2373, %v2485
      %v2518 = vadd.f32 %v2374, %v2486
      %v2519 = vadd.f32 %v2375, %v2487
      %v2520 = vadd.f32 %v2376, %v2488
      %v2521 = vadd.f32 %v2377, %v2489
      %v2522 = vadd.f32 %v2378, %v2490
      %v2523 = vadd.f32 %v2379, %v2491
      %v2524 = vadd.f32 %v2380, %v2492
      %v2525 = vadd.f32 %v2381, %v2493
      %v2526 = vadd.f32 %v2382, %v2494
      %v2527 = vadd.f32 %v2383, %v2495
      %v2528 = vadd.f32 %v2384, %v2496
      %v2529 = vadd.f32 %v2385, %v2497
      %v2530 = vadd.f32 %v2386, %v2498
      %v2531 = vadd.f32 %v2387, %v2499
      %v2532 = vadd.f32 %v2388, %v2500
      %v2533 = vadd.f32 %v2389, %v2501
      %v2534 = vadd.f32 %v2390, %v2502
      %v2535 = vadd.f32 %v2391, %v2503
      %v2536 = vadd.f32 %v2392, %v2504
      %v2537 = vadd.f32 %v2393, %v2505
      %2538 = vmatpush.msra.mxu0 0.0
      %2539 = vmatpush.msra.mxu0 0.0
      %2540 = vmatpush.msra.mxu0 0.0
      %2541 = vmatpush.msra.mxu0 0.0
      %2542 = vmatpush.msra.mxu0 0.0
      %2543 = vmatpush.msra.mxu0 0.0
      %2544 = vmatpush.msra.mxu0 0.0
      %2545 = vmatpush.msra.mxu0 0.0
      %2546 = vmatpush.msra.mxu0 0.0
      %2547 = vmatpush.msra.mxu0 0.0
      %2548 = vmatpush.msra.mxu0 0.0
      %2549 = vmatpush.msra.mxu0 0.0
      %2550 = vmatpush.msra.mxu0 %v2509
      %2551 = vmatpush.msra.mxu0 %v2508
      %2552 = vmatpush.msra.mxu0 %v2507
      %2553 = vmatpush.msra.mxu0 %v2506
      %2554 = vmatmul.f32.gmra.mxu0 %v634
      %v2555 = vpop.f32.mrf.mxu0
      %v2556 = vadd.f32 0.0, %v2555
      %2557 = vmatmul.f32.gmra.mxu0 %v637
      %v2558 = vpop.f32.mrf.mxu0
      %v2559 = vadd.f32 0.0, %v2558
      %2560 = vdwg.mxu0
      %2561 = vmatpush.msra.mxu0 0.0
      %2562 = vmatpush.msra.mxu0 0.0
      %2563 = vmatpush.msra.mxu0 0.0
      %2564 = vmatpush.msra.mxu0 0.0
      %2565 = vmatpush.msra.mxu0 0.0
      %2566 = vmatpush.msra.mxu0 0.0
      %2567 = vmatpush.msra.mxu0 0.0
      %2568 = vmatpush.msra.mxu0 0.0
      %2569 = vmatpush.msra.mxu0 0.0
      %2570 = vmatpush.msra.mxu0 0.0
      %2571 = vmatpush.msra.mxu0 0.0
      %2572 = vmatpush.msra.mxu0 0.0
      %2573 = vmatpush.msra.mxu0 %v2513
      %2574 = vmatpush.msra.mxu0 %v2512
      %2575 = vmatpush.msra.mxu0 %v2511
      %2576 = vmatpush.msra.mxu0 %v2510
      %2577 = vmatmul.f32.gmra.mxu0 %v663
      %v2578 = vpop.f32.mrf.mxu0
      %v2579 = vadd.f32 0.0, %v2578
      %2580 = vmatmul.f32.gmra.mxu0 %v666
      %v2581 = vpop.f32.mrf.mxu0
      %v2582 = vadd.f32 0.0, %v2581
      %2583 = vdwg.mxu0
      %2584 = vmatpush.msra.mxu0 0.0
      %2585 = vmatpush.msra.mxu0 0.0
      %2586 = vmatpush.msra.mxu0 0.0
      %2587 = vmatpush.msra.mxu0 0.0
      %2588 = vmatpush.msra.mxu0 0.0
      %2589 = vmatpush.msra.mxu0 0.0
      %2590 = vmatpush.msra.mxu0 0.0
      %2591 = vmatpush.msra.mxu0 0.0
      %2592 = vmatpush.msra.mxu0 0.0
      %2593 = vmatpush.msra.mxu0 0.0
      %2594 = vmatpush.msra.mxu0 0.0
      %2595 = vmatpush.msra.mxu0 0.0
      %2596 = vmatpush.msra.mxu0 %v2517
      %2597 = vmatpush.msra.mxu0 %v2516
      %2598 = vmatpush.msra.mxu0 %v2515
      %2599 = vmatpush.msra.mxu0 %v2514
      %2600 = vmatmul.f32.gmra.mxu0 %v692
      %v2601 = vpop.f32.mrf.mxu0
      %v2602 = vadd.f32 0.0, %v2601
      %2603 = vmatmul.f32.gmra.mxu0 %v695
      %v2604 = vpop.f32.mrf.mxu0
      %v2605 = vadd.f32 0.0, %v2604
      %2606 = vdwg.mxu0
      %2607 = vmatpush.msra.mxu0 0.0
      %2608 = vmatpush.msra.mxu0 0.0
      %2609 = vmatpush.msra.mxu0 0.0
      %2610 = vmatpush.msra.mxu0 0.0
      %2611 = vmatpush.msra.mxu0 0.0
      %2612 = vmatpush.msra.mxu0 0.0
      %2613 = vmatpush.msra.mxu0 0.0
      %2614 = vmatpush.msra.mxu0 0.0
      %2615 = vmatpush.msra.mxu0 0.0
      %2616 = vmatpush.msra.mxu0 0.0
      %2617 = vmatpush.msra.mxu0 0.0
      %2618 = vmatpush.msra.mxu0 0.0
      %2619 = vmatpush.msra.mxu0 %v2521
      %2620 = vmatpush.msra.mxu0 %v2520
      %2621 = vmatpush.msra.mxu0 %v2519
      %2622 = vmatpush.msra.mxu0 %v2518
      %2623 = vmatmul.f32.gmra.mxu0 %v721
      %v2624 = vpop.f32.mrf.mxu0
      %v2625 = vadd.f32 0.0, %v2624
      %2626 = vmatmul.f32.gmra.mxu0 %v724
      %v2627 = vpop.f32.mrf.mxu0
      %v2628 = vadd.f32 0.0, %v2627
      %2629 = vdwg.mxu0
      %2630 = vmatpush.msra.mxu0 0.0
      %2631 = vmatpush.msra.mxu0 0.0
      %2632 = vmatpush.msra.mxu0 0.0
      %2633 = vmatpush.msra.mxu0 0.0
      %2634 = vmatpush.msra.mxu0 0.0
      %2635 = vmatpush.msra.mxu0 0.0
      %2636 = vmatpush.msra.mxu0 0.0
      %2637 = vmatpush.msra.mxu0 0.0
      %2638 = vmatpush.msra.mxu0 0.0
      %2639 = vmatpush.msra.mxu0 0.0
      %2640 = vmatpush.msra.mxu0 0.0
      %2641 = vmatpush.msra.mxu0 0.0
      %2642 = vmatpush.msra.mxu0 %v2525
      %2643 = vmatpush.msra.mxu0 %v2524
      %2644 = vmatpush.msra.mxu0 %v2523
      %2645 = vmatpush.msra.mxu0 %v2522
      %2646 = vmatmul.f32.gmra.mxu0 %v750
      %v2647 = vpop.f32.mrf.mxu0
      %v2648 = vadd.f32 0.0, %v2647
      %2649 = vmatmul.f32.gmra.mxu0 %v753
      %v2650 = vpop.f32.mrf.mxu0
      %v2651 = vadd.f32 0.0, %v2650
      %2652 = vdwg.mxu0
      %2653 = vmatpush.msra.mxu0 0.0
      %2654 = vmatpush.msra.mxu0 0.0
      %2655 = vmatpush.msra.mxu0 0.0
      %2656 = vmatpush.msra.mxu0 0.0
      %2657 = vmatpush.msra.mxu0 0.0
      %2658 = vmatpush.msra.mxu0 0.0
      %2659 = vmatpush.msra.mxu0 0.0
      %2660 = vmatpush.msra.mxu0 0.0
      %2661 = vmatpush.msra.mxu0 0.0
      %2662 = vmatpush.msra.mxu0 0.0
      %2663 = vmatpush.msra.mxu0 0.0
      %2664 = vmatpush.msra.mxu0 0.0
      %2665 = vmatpush.msra.mxu0 %v2529
      %2666 = vmatpush.msra.mxu0 %v2528
      %2667 = vmatpush.msra.mxu0 %v2527
      %2668 = vmatpush.msra.mxu0 %v2526
      %2669 = vmatmul.f32.gmra.mxu0 %v779
      %v2670 = vpop.f32.mrf.mxu0
      %v2671 = vadd.f32 0.0, %v2670
      %2672 = vmatmul.f32.gmra.mxu0 %v782
      %v2673 = vpop.f32.mrf.mxu0
      %v2674 = vadd.f32 0.0, %v2673
      %2675 = vdwg.mxu0
      %2676 = vmatpush.msra.mxu0 0.0
      %2677 = vmatpush.msra.mxu0 0.0
      %2678 = vmatpush.msra.mxu0 0.0
      %2679 = vmatpush.msra.mxu0 0.0
      %2680 = vmatpush.msra.mxu0 0.0
      %2681 = vmatpush.msra.mxu0 0.0
      %2682 = vmatpush.msra.mxu0 0.0
      %2683 = vmatpush.msra.mxu0 0.0
      %2684 = vmatpush.msra.mxu0 0.0
      %2685 = vmatpush.msra.mxu0 0.0
      %2686 = vmatpush.msra.mxu0 0.0
      %2687 = vmatpush.msra.mxu0 0.0
      %2688 = vmatpush.msra.mxu0 %v2533
      %2689 = vmatpush.msra.mxu0 %v2532
      %2690 = vmatpush.msra.mxu0 %v2531
      %2691 = vmatpush.msra.mxu0 %v2530
      %2692 = vmatmul.f32.gmra.mxu0 %v808
      %v2693 = vpop.f32.mrf.mxu0
      %v2694 = vadd.f32 0.0, %v2693
      %2695 = vmatmul.f32.gmra.mxu0 %v811
      %v2696 = vpop.f32.mrf.mxu0
      %v2697 = vadd.f32 0.0, %v2696
      %2698 = vdwg.mxu0
      %2699 = vmatpush.msra.mxu0 0.0
      %2700 = vmatpush.msra.mxu0 0.0
      %2701 = vmatpush.msra.mxu0 0.0
      %2702 = vmatpush.msra.mxu0 0.0
      %2703 = vmatpush.msra.mxu0 0.0
      %2704 = vmatpush.msra.mxu0 0.0
      %2705 = vmatpush.msra.mxu0 0.0
      %2706 = vmatpush.msra.mxu0 0.0
      %2707 = vmatpush.msra.mxu0 0.0
      %2708 = vmatpush.msra.mxu0 0.0
      %2709 = vmatpush.msra.mxu0 0.0
      %2710 = vmatpush.msra.mxu0 0.0
      %2711 = vmatpush.msra.mxu0 %v2537
      %2712 = vmatpush.msra.mxu0 %v2536
      %2713 = vmatpush.msra.mxu0 %v2535
      %2714 = vmatpush.msra.mxu0 %v2534
      %2715 = vmatmul.f32.gmra.mxu0 %v837
      %v2716 = vpop.f32.mrf.mxu0
      %v2717 = vadd.f32 0.0, %v2716
      %2718 = vmatmul.f32.gmra.mxu0 %v840
      %v2719 = vpop.f32.mrf.mxu0
      %v2720 = vadd.f32 0.0, %v2719
      %2721 = vdwg.mxu0
      %s2722 = scalar_lea.vmem %s272, 384
      %v2723 = vld [vmem:[%s2722] sm:$0xff]
      %v2724 = vld [vmem:[%s2722 + $0x8] sm:$0xff]
      %v2725 = vld [vmem:[%s2722 + $0x10] sm:$0xff]
      %v2726 = vld [vmem:[%s2722 + $0x18] sm:$0xff]
      %v2727 = vld [vmem:[%s2722 + $0x20] sm:$0xff]
      %v2728 = vld [vmem:[%s2722 + $0x28] sm:$0xff]
      %v2729 = vld [vmem:[%s2722 + $0x30] sm:$0xff]
      %v2730 = vld [vmem:[%s2722 + $0x38] sm:$0xff]
      %v2731 = vld [vmem:[%s2722 + $0x40] sm:$0xff]
      %v2732 = vld [vmem:[%s2722 + $0x48] sm:$0xff]
      %v2733 = vld [vmem:[%s2722 + $0x50] sm:$0xff]
      %v2734 = vld [vmem:[%s2722 + $0x58] sm:$0xff]
      %v2735 = vld [vmem:[%s2722 + $0x60] sm:$0xff]
      %v2736 = vld [vmem:[%s2722 + $0x68] sm:$0xff]
      %v2737 = vld [vmem:[%s2722 + $0x70] sm:$0xff]
      %v2738 = vld [vmem:[%s2722 + $0x78] sm:$0xff]
      %v2739 = vsub.f32 %v2723, %v2556
      %v2740 = vsub.f32 %v2724, %v2559
      %v2741 = vsub.f32 %v2725, %v2579
      %v2742 = vsub.f32 %v2726, %v2582
      %v2743 = vsub.f32 %v2727, %v2602
      %v2744 = vsub.f32 %v2728, %v2605
      %v2745 = vsub.f32 %v2729, %v2625
      %v2746 = vsub.f32 %v2730, %v2628
      %v2747 = vsub.f32 %v2731, %v2648
      %v2748 = vsub.f32 %v2732, %v2651
      %v2749 = vsub.f32 %v2733, %v2671
      %v2750 = vsub.f32 %v2734, %v2674
      %v2751 = vsub.f32 %v2735, %v2694
      %v2752 = vsub.f32 %v2736, %v2697
      %v2753 = vsub.f32 %v2737, %v2717
      %v2754 = vsub.f32 %v2738, %v2720
      %v2755 = vand.u32 2147483647, %v2739
      %v2756 = vand.u32 2147483647, %v2740
      %v2757 = vand.u32 2147483647, %v2741
      %v2758 = vand.u32 2147483647, %v2742
      %v2759 = vand.u32 2147483647, %v2743
      %v2760 = vand.u32 2147483647, %v2744
      %v2761 = vand.u32 2147483647, %v2745
      %v2762 = vand.u32 2147483647, %v2746
      %v2763 = vand.u32 2147483647, %v2747
      %v2764 = vand.u32 2147483647, %v2748
      %v2765 = vand.u32 2147483647, %v2749
      %v2766 = vand.u32 2147483647, %v2750
      %v2767 = vand.u32 2147483647, %v2751
      %v2768 = vand.u32 2147483647, %v2752
      %v2769 = vand.u32 2147483647, %v2753
      %v2770 = vand.u32 2147483647, %v2754
      %v2771 = vsel %vm913, %v2755, 0.0
      %v2772 = vsel %vm913, %v2756, 0.0
      %v2773 = vadd.f32 %v2771, %v2772
      %v2774 = vrot.slane %v2773, 4
      %v2775 = vadd.f32 %v2773, %v2774
      %v2776 = vrot.slane %v2775, 2
      %v2777 = vadd.f32 %v2775, %v2776
      %v2778 = vrot.slane %v2777, 1
      %v2779 = vadd.f32 %v2777, %v2778
      %v2780 = vsel %vm913, %v2757, 0.0
      %v2781 = vsel %vm913, %v2758, 0.0
      %v2782 = vadd.f32 %v2780, %v2781
      %v2783 = vrot.slane %v2782, 4
      %v2784 = vadd.f32 %v2782, %v2783
      %v2785 = vrot.slane %v2784, 2
      %v2786 = vadd.f32 %v2784, %v2785
      %v2787 = vrot.slane %v2786, 1
      %v2788 = vadd.f32 %v2786, %v2787
      %v2789 = vsel %vm913, %v2759, 0.0
      %v2790 = vsel %vm913, %v2760, 0.0
      %v2791 = vadd.f32 %v2789, %v2790
      %v2792 = vrot.slane %v2791, 4
      %v2793 = vadd.f32 %v2791, %v2792
      %v2794 = vrot.slane %v2793, 2
      %v2795 = vadd.f32 %v2793, %v2794
      %v2796 = vrot.slane %v2795, 1
      %v2797 = vadd.f32 %v2795, %v2796
      %v2798 = vsel %vm913, %v2761, 0.0
      %v2799 = vsel %vm913, %v2762, 0.0
      %v2800 = vadd.f32 %v2798, %v2799
      %v2801 = vrot.slane %v2800, 4
      %v2802 = vadd.f32 %v2800, %v2801
      %v2803 = vrot.slane %v2802, 2
      %v2804 = vadd.f32 %v2802, %v2803
      %v2805 = vrot.slane %v2804, 1
      %v2806 = vadd.f32 %v2804, %v2805
      %v2807 = vsel %vm913, %v2763, 0.0
      %v2808 = vsel %vm913, %v2764, 0.0
      %v2809 = vadd.f32 %v2807, %v2808
      %v2810 = vrot.slane %v2809, 4
      %v2811 = vadd.f32 %v2809, %v2810
      %v2812 = vrot.slane %v2811, 2
      %v2813 = vadd.f32 %v2811, %v2812
      %v2814 = vrot.slane %v2813, 1
      %v2815 = vadd.f32 %v2813, %v2814
      %v2816 = vsel %vm913, %v2765, 0.0
      %v2817 = vsel %vm913, %v2766, 0.0
      %v2818 = vadd.f32 %v2816, %v2817
      %v2819 = vrot.slane %v2818, 4
      %v2820 = vadd.f32 %v2818, %v2819
      %v2821 = vrot.slane %v2820, 2
      %v2822 = vadd.f32 %v2820, %v2821
      %v2823 = vrot.slane %v2822, 1
      %v2824 = vadd.f32 %v2822, %v2823
      %v2825 = vsel %vm913, %v2767, 0.0
      %v2826 = vsel %vm913, %v2768, 0.0
      %v2827 = vadd.f32 %v2825, %v2826
      %v2828 = vrot.slane %v2827, 4
      %v2829 = vadd.f32 %v2827, %v2828
      %v2830 = vrot.slane %v2829, 2
      %v2831 = vadd.f32 %v2829, %v2830
      %v2832 = vrot.slane %v2831, 1
      %v2833 = vadd.f32 %v2831, %v2832
      %v2834 = vsel %vm913, %v2769, 0.0
      %v2835 = vsel %vm913, %v2770, 0.0
      %v2836 = vadd.f32 %v2834, %v2835
      %v2837 = vrot.slane %v2836, 4
      %v2838 = vadd.f32 %v2836, %v2837
      %v2839 = vrot.slane %v2838, 2
      %v2840 = vadd.f32 %v2838, %v2839
      %v2841 = vrot.slane %v2840, 1
      %v2842 = vadd.f32 %v2840, %v2841
      %v2851 = vsel %vm994, %v2788, %v2779
      %v2852 = vsel %vm996, %v2797, %v2851
      %v2853 = vsel %vm998, %v2806, %v2852
      %v2854 = vsel %vm1000, %v2815, %v2853
      %v2855 = vsel %vm1002, %v2824, %v2854
      %v2856 = vsel %vm1004, %v2833, %v2855
      %v2857 = vsel %vm1006, %v2842, %v2856
      %s2859 = scalar_lea.vmem %s296, 24
      %2860 = vst.msk [vmem:[%s2859] sm:$0xff] %vm913, %v2857
      %s2861 = scalar_lea.vmem %s283, 128
      %v2862 = vld [vmem:[%s2861] sm:$0xff]
      %v2863 = vld [vmem:[%s2861 + $0x8] sm:$0xff]
      %v2864 = vld [vmem:[%s2861 + $0x10] sm:$0xff]
      %v2865 = vld [vmem:[%s2861 + $0x18] sm:$0xff]
      %v2866 = vld [vmem:[%s2861 + $0x20] sm:$0xff]
      %v2867 = vld [vmem:[%s2861 + $0x28] sm:$0xff]
      %v2868 = vld [vmem:[%s2861 + $0x30] sm:$0xff]
      %v2869 = vld [vmem:[%s2861 + $0x38] sm:$0xff]
      %v2870 = vld [vmem:[%s2861 + $0x40] sm:$0xff]
      %v2871 = vld [vmem:[%s2861 + $0x48] sm:$0xff]
      %v2872 = vld [vmem:[%s2861 + $0x50] sm:$0xff]
      %v2873 = vld [vmem:[%s2861 + $0x58] sm:$0xff]
      %v2874 = vld [vmem:[%s2861 + $0x60] sm:$0xff]
      %v2875 = vld [vmem:[%s2861 + $0x68] sm:$0xff]
      %v2876 = vld [vmem:[%s2861 + $0x70] sm:$0xff]
      %v2877 = vld [vmem:[%s2861 + $0x78] sm:$0xff]
      %v2878 = vmul.f32 %v302, -0.5
      %v2879 = vadd.f32 %v306, %v2878
      %v2880 = vadd.f32 %v2879, %v338
      %v2881 = vsub.f32 %v340, %v2880
      %v2882 = vmul.f32 %v2881, 1.032258
      %v2883 = vadd.f32 %v2882, -0.5
      %v2884 = vfloor.f32 %v2883
      %v2885 = vsub.f32 %v2883, %v2884
      %v2887 = vrot.slane %v2884, 1
      %v2888 = vrot.slane %v2884, 2
      %v2889 = vrot.slane %v2884, 3
      %v2890 = vrot.slane %v2884, 4
      %v2891 = vrot.slane %v2884, 5
      %v2892 = vrot.slane %v2884, 6
      %v2893 = vrot.slane %v2884, 7
      %v2902 = vrot.slane %v2885, 1
      %v2903 = vrot.slane %v2885, 2
      %v2904 = vrot.slane %v2885, 3
      %v2905 = vrot.slane %v2885, 4
      %v2906 = vrot.slane %v2885, 5
      %v2907 = vrot.slane %v2885, 6
      %v2908 = vrot.slane %v2885, 7
      %v2916 = vperm.slane %v2884, 0
      %v2917 = vperm.slane %v2887, 0
      %v2918 = vperm.slane %v2888, 0
      %v2919 = vperm.slane %v2889, 0
      %v2920 = vperm.slane %v2890, 0
      %v2921 = vperm.slane %v2891, 0
      %v2922 = vperm.slane %v2892, 0
      %v2923 = vperm.slane %v2893, 0
      %vm2932 = vcmp.eq.f32.partialorder %v316, %v2916
      %vm2933 = vcmp.eq.f32.partialorder %v317, %v2916
      %vm2934 = vcmp.eq.f32.partialorder %v318, %v2916
      %vm2935 = vcmp.eq.f32.partialorder %v319, %v2916
      %vm2936 = vcmp.eq.f32.partialorder %v316, %v2917
      %vm2937 = vcmp.eq.f32.partialorder %v317, %v2917
      %vm2938 = vcmp.eq.f32.partialorder %v318, %v2917
      %vm2939 = vcmp.eq.f32.partialorder %v319, %v2917
      %vm2940 = vcmp.eq.f32.partialorder %v316, %v2918
      %vm2941 = vcmp.eq.f32.partialorder %v317, %v2918
      %vm2942 = vcmp.eq.f32.partialorder %v318, %v2918
      %vm2943 = vcmp.eq.f32.partialorder %v319, %v2918
      %vm2944 = vcmp.eq.f32.partialorder %v316, %v2919
      %vm2945 = vcmp.eq.f32.partialorder %v317, %v2919
      %vm2946 = vcmp.eq.f32.partialorder %v318, %v2919
      %vm2947 = vcmp.eq.f32.partialorder %v319, %v2919
      %vm2948 = vcmp.eq.f32.partialorder %v316, %v2920
      %vm2949 = vcmp.eq.f32.partialorder %v317, %v2920
      %vm2950 = vcmp.eq.f32.partialorder %v318, %v2920
      %vm2951 = vcmp.eq.f32.partialorder %v319, %v2920
      %vm2952 = vcmp.eq.f32.partialorder %v316, %v2921
      %vm2953 = vcmp.eq.f32.partialorder %v317, %v2921
      %vm2954 = vcmp.eq.f32.partialorder %v318, %v2921
      %vm2955 = vcmp.eq.f32.partialorder %v319, %v2921
      %vm2956 = vcmp.eq.f32.partialorder %v316, %v2922
      %vm2957 = vcmp.eq.f32.partialorder %v317, %v2922
      %vm2958 = vcmp.eq.f32.partialorder %v318, %v2922
      %vm2959 = vcmp.eq.f32.partialorder %v319, %v2922
      %vm2960 = vcmp.eq.f32.partialorder %v316, %v2923
      %vm2961 = vcmp.eq.f32.partialorder %v317, %v2923
      %vm2962 = vcmp.eq.f32.partialorder %v318, %v2923
      %vm2963 = vcmp.eq.f32.partialorder %v319, %v2923
      %v2964 = vsub.f32 1.0, %v2885
      %v2965 = vsub.f32 1.0, %v2902
      %v2966 = vsub.f32 1.0, %v2903
      %v2967 = vsub.f32 1.0, %v2904
      %v2968 = vsub.f32 1.0, %v2905
      %v2969 = vsub.f32 1.0, %v2906
      %v2970 = vsub.f32 1.0, %v2907
      %v2971 = vsub.f32 1.0, %v2908
      %v2980 = vperm.slane %v2964, 0
      %v2981 = vperm.slane %v2965, 0
      %v2982 = vperm.slane %v2966, 0
      %v2983 = vperm.slane %v2967, 0
      %v2984 = vperm.slane %v2968, 0
      %v2985 = vperm.slane %v2969, 0
      %v2986 = vperm.slane %v2970, 0
      %v2987 = vperm.slane %v2971, 0
      %v2996 = vsel %vm2932, %v2980, 0.0
      %v2997 = vsel %vm2933, %v2980, 0.0
      %v2998 = vsel %vm2934, %v2980, 0.0
      %v2999 = vsel %vm2935, %v2980, 0.0
      %v3000 = vsel %vm2936, %v2981, 0.0
      %v3001 = vsel %vm2937, %v2981, 0.0
      %v3002 = vsel %vm2938, %v2981, 0.0
      %v3003 = vsel %vm2939, %v2981, 0.0
      %v3004 = vsel %vm2940, %v2982, 0.0
      %v3005 = vsel %vm2941, %v2982, 0.0
      %v3006 = vsel %vm2942, %v2982, 0.0
      %v3007 = vsel %vm2943, %v2982, 0.0
      %v3008 = vsel %vm2944, %v2983, 0.0
      %v3009 = vsel %vm2945, %v2983, 0.0
      %v3010 = vsel %vm2946, %v2983, 0.0
      %v3011 = vsel %vm2947, %v2983, 0.0
      %v3012 = vsel %vm2948, %v2984, 0.0
      %v3013 = vsel %vm2949, %v2984, 0.0
      %v3014 = vsel %vm2950, %v2984, 0.0
      %v3015 = vsel %vm2951, %v2984, 0.0
      %v3016 = vsel %vm2952, %v2985, 0.0
      %v3017 = vsel %vm2953, %v2985, 0.0
      %v3018 = vsel %vm2954, %v2985, 0.0
      %v3019 = vsel %vm2955, %v2985, 0.0
      %v3020 = vsel %vm2956, %v2986, 0.0
      %v3021 = vsel %vm2957, %v2986, 0.0
      %v3022 = vsel %vm2958, %v2986, 0.0
      %v3023 = vsel %vm2959, %v2986, 0.0
      %v3024 = vsel %vm2960, %v2987, 0.0
      %v3025 = vsel %vm2961, %v2987, 0.0
      %v3026 = vsel %vm2962, %v2987, 0.0
      %v3027 = vsel %vm2963, %v2987, 0.0
      %v3028 = vadd.f32 %v2884, 1.0
      %v3029 = vadd.f32 %v2887, 1.0
      %v3030 = vadd.f32 %v2888, 1.0
      %v3031 = vadd.f32 %v2889, 1.0
      %v3032 = vadd.f32 %v2890, 1.0
      %v3033 = vadd.f32 %v2891, 1.0
      %v3034 = vadd.f32 %v2892, 1.0
      %v3035 = vadd.f32 %v2893, 1.0
      %v3044 = vperm.slane %v3028, 0
      %v3045 = vperm.slane %v3029, 0
      %v3046 = vperm.slane %v3030, 0
      %v3047 = vperm.slane %v3031, 0
      %v3048 = vperm.slane %v3032, 0
      %v3049 = vperm.slane %v3033, 0
      %v3050 = vperm.slane %v3034, 0
      %v3051 = vperm.slane %v3035, 0
      %vm3060 = vcmp.eq.f32.partialorder %v316, %v3044
      %vm3061 = vcmp.eq.f32.partialorder %v317, %v3044
      %vm3062 = vcmp.eq.f32.partialorder %v318, %v3044
      %vm3063 = vcmp.eq.f32.partialorder %v319, %v3044
      %vm3064 = vcmp.eq.f32.partialorder %v316, %v3045
      %vm3065 = vcmp.eq.f32.partialorder %v317, %v3045
      %vm3066 = vcmp.eq.f32.partialorder %v318, %v3045
      %vm3067 = vcmp.eq.f32.partialorder %v319, %v3045
      %vm3068 = vcmp.eq.f32.partialorder %v316, %v3046
      %vm3069 = vcmp.eq.f32.partialorder %v317, %v3046
      %vm3070 = vcmp.eq.f32.partialorder %v318, %v3046
      %vm3071 = vcmp.eq.f32.partialorder %v319, %v3046
      %vm3072 = vcmp.eq.f32.partialorder %v316, %v3047
      %vm3073 = vcmp.eq.f32.partialorder %v317, %v3047
      %vm3074 = vcmp.eq.f32.partialorder %v318, %v3047
      %vm3075 = vcmp.eq.f32.partialorder %v319, %v3047
      %vm3076 = vcmp.eq.f32.partialorder %v316, %v3048
      %vm3077 = vcmp.eq.f32.partialorder %v317, %v3048
      %vm3078 = vcmp.eq.f32.partialorder %v318, %v3048
      %vm3079 = vcmp.eq.f32.partialorder %v319, %v3048
      %vm3080 = vcmp.eq.f32.partialorder %v316, %v3049
      %vm3081 = vcmp.eq.f32.partialorder %v317, %v3049
      %vm3082 = vcmp.eq.f32.partialorder %v318, %v3049
      %vm3083 = vcmp.eq.f32.partialorder %v319, %v3049
      %vm3084 = vcmp.eq.f32.partialorder %v316, %v3050
      %vm3085 = vcmp.eq.f32.partialorder %v317, %v3050
      %vm3086 = vcmp.eq.f32.partialorder %v318, %v3050
      %vm3087 = vcmp.eq.f32.partialorder %v319, %v3050
      %vm3088 = vcmp.eq.f32.partialorder %v316, %v3051
      %vm3089 = vcmp.eq.f32.partialorder %v317, %v3051
      %vm3090 = vcmp.eq.f32.partialorder %v318, %v3051
      %vm3091 = vcmp.eq.f32.partialorder %v319, %v3051
      %v3092 = vperm.slane %v2885, 0
      %v3093 = vperm.slane %v2902, 0
      %v3094 = vperm.slane %v2903, 0
      %v3095 = vperm.slane %v2904, 0
      %v3096 = vperm.slane %v2905, 0
      %v3097 = vperm.slane %v2906, 0
      %v3098 = vperm.slane %v2907, 0
      %v3099 = vperm.slane %v2908, 0
      %v3108 = vsel %vm3060, %v3092, 0.0
      %v3109 = vsel %vm3061, %v3092, 0.0
      %v3110 = vsel %vm3062, %v3092, 0.0
      %v3111 = vsel %vm3063, %v3092, 0.0
      %v3112 = vsel %vm3064, %v3093, 0.0
      %v3113 = vsel %vm3065, %v3093, 0.0
      %v3114 = vsel %vm3066, %v3093, 0.0
      %v3115 = vsel %vm3067, %v3093, 0.0
      %v3116 = vsel %vm3068, %v3094, 0.0
      %v3117 = vsel %vm3069, %v3094, 0.0
      %v3118 = vsel %vm3070, %v3094, 0.0
      %v3119 = vsel %vm3071, %v3094, 0.0
      %v3120 = vsel %vm3072, %v3095, 0.0
      %v3121 = vsel %vm3073, %v3095, 0.0
      %v3122 = vsel %vm3074, %v3095, 0.0
      %v3123 = vsel %vm3075, %v3095, 0.0
      %v3124 = vsel %vm3076, %v3096, 0.0
      %v3125 = vsel %vm3077, %v3096, 0.0
      %v3126 = vsel %vm3078, %v3096, 0.0
      %v3127 = vsel %vm3079, %v3096, 0.0
      %v3128 = vsel %vm3080, %v3097, 0.0
      %v3129 = vsel %vm3081, %v3097, 0.0
      %v3130 = vsel %vm3082, %v3097, 0.0
      %v3131 = vsel %vm3083, %v3097, 0.0
      %v3132 = vsel %vm3084, %v3098, 0.0
      %v3133 = vsel %vm3085, %v3098, 0.0
      %v3134 = vsel %vm3086, %v3098, 0.0
      %v3135 = vsel %vm3087, %v3098, 0.0
      %v3136 = vsel %vm3088, %v3099, 0.0
      %v3137 = vsel %vm3089, %v3099, 0.0
      %v3138 = vsel %vm3090, %v3099, 0.0
      %v3139 = vsel %vm3091, %v3099, 0.0
      %v3140 = vadd.f32 %v2996, %v3108
      %v3141 = vadd.f32 %v2997, %v3109
      %v3142 = vadd.f32 %v2998, %v3110
      %v3143 = vadd.f32 %v2999, %v3111
      %v3144 = vadd.f32 %v3000, %v3112
      %v3145 = vadd.f32 %v3001, %v3113
      %v3146 = vadd.f32 %v3002, %v3114
      %v3147 = vadd.f32 %v3003, %v3115
      %v3148 = vadd.f32 %v3004, %v3116
      %v3149 = vadd.f32 %v3005, %v3117
      %v3150 = vadd.f32 %v3006, %v3118
      %v3151 = vadd.f32 %v3007, %v3119
      %v3152 = vadd.f32 %v3008, %v3120
      %v3153 = vadd.f32 %v3009, %v3121
      %v3154 = vadd.f32 %v3010, %v3122
      %v3155 = vadd.f32 %v3011, %v3123
      %v3156 = vadd.f32 %v3012, %v3124
      %v3157 = vadd.f32 %v3013, %v3125
      %v3158 = vadd.f32 %v3014, %v3126
      %v3159 = vadd.f32 %v3015, %v3127
      %v3160 = vadd.f32 %v3016, %v3128
      %v3161 = vadd.f32 %v3017, %v3129
      %v3162 = vadd.f32 %v3018, %v3130
      %v3163 = vadd.f32 %v3019, %v3131
      %v3164 = vadd.f32 %v3020, %v3132
      %v3165 = vadd.f32 %v3021, %v3133
      %v3166 = vadd.f32 %v3022, %v3134
      %v3167 = vadd.f32 %v3023, %v3135
      %v3168 = vadd.f32 %v3024, %v3136
      %v3169 = vadd.f32 %v3025, %v3137
      %v3170 = vadd.f32 %v3026, %v3138
      %v3171 = vadd.f32 %v3027, %v3139
      %v3173 = vsel %vm632, %v2862, 0
      %v3176 = vsel %vm632, %v2863, 0
      %3178 = vmatpush.msra.mxu0 0.0
      %3179 = vmatpush.msra.mxu0 0.0
      %3180 = vmatpush.msra.mxu0 0.0
      %3181 = vmatpush.msra.mxu0 0.0
      %3182 = vmatpush.msra.mxu0 0.0
      %3183 = vmatpush.msra.mxu0 0.0
      %3184 = vmatpush.msra.mxu0 0.0
      %3185 = vmatpush.msra.mxu0 0.0
      %3186 = vmatpush.msra.mxu0 0.0
      %3187 = vmatpush.msra.mxu0 0.0
      %3188 = vmatpush.msra.mxu0 0.0
      %3189 = vmatpush.msra.mxu0 0.0
      %3190 = vmatpush.msra.mxu0 %v3143
      %3191 = vmatpush.msra.mxu0 %v3142
      %3192 = vmatpush.msra.mxu0 %v3141
      %3193 = vmatpush.msra.mxu0 %v3140
      %3194 = vmatmul.f32.gmra.mxu0 %v3173
      %v3195 = vpop.f32.mrf.mxu0
      %v3196 = vadd.f32 0.0, %v3195
      %3197 = vmatmul.f32.gmra.mxu0 %v3176
      %v3198 = vpop.f32.mrf.mxu0
      %v3199 = vadd.f32 0.0, %v3198
      %3200 = vdwg.mxu0
      %v3202 = vsel %vm632, %v2864, 0
      %v3205 = vsel %vm632, %v2865, 0
      %3207 = vmatpush.msra.mxu0 0.0
      %3208 = vmatpush.msra.mxu0 0.0
      %3209 = vmatpush.msra.mxu0 0.0
      %3210 = vmatpush.msra.mxu0 0.0
      %3211 = vmatpush.msra.mxu0 0.0
      %3212 = vmatpush.msra.mxu0 0.0
      %3213 = vmatpush.msra.mxu0 0.0
      %3214 = vmatpush.msra.mxu0 0.0
      %3215 = vmatpush.msra.mxu0 0.0
      %3216 = vmatpush.msra.mxu0 0.0
      %3217 = vmatpush.msra.mxu0 0.0
      %3218 = vmatpush.msra.mxu0 0.0
      %3219 = vmatpush.msra.mxu0 %v3147
      %3220 = vmatpush.msra.mxu0 %v3146
      %3221 = vmatpush.msra.mxu0 %v3145
      %3222 = vmatpush.msra.mxu0 %v3144
      %3223 = vmatmul.f32.gmra.mxu0 %v3202
      %v3224 = vpop.f32.mrf.mxu0
      %v3225 = vadd.f32 0.0, %v3224
      %3226 = vmatmul.f32.gmra.mxu0 %v3205
      %v3227 = vpop.f32.mrf.mxu0
      %v3228 = vadd.f32 0.0, %v3227
      %3229 = vdwg.mxu0
      %v3231 = vsel %vm632, %v2866, 0
      %v3234 = vsel %vm632, %v2867, 0
      %3236 = vmatpush.msra.mxu0 0.0
      %3237 = vmatpush.msra.mxu0 0.0
      %3238 = vmatpush.msra.mxu0 0.0
      %3239 = vmatpush.msra.mxu0 0.0
      %3240 = vmatpush.msra.mxu0 0.0
      %3241 = vmatpush.msra.mxu0 0.0
      %3242 = vmatpush.msra.mxu0 0.0
      %3243 = vmatpush.msra.mxu0 0.0
      %3244 = vmatpush.msra.mxu0 0.0
      %3245 = vmatpush.msra.mxu0 0.0
      %3246 = vmatpush.msra.mxu0 0.0
      %3247 = vmatpush.msra.mxu0 0.0
      %3248 = vmatpush.msra.mxu0 %v3151
      %3249 = vmatpush.msra.mxu0 %v3150
      %3250 = vmatpush.msra.mxu0 %v3149
      %3251 = vmatpush.msra.mxu0 %v3148
      %3252 = vmatmul.f32.gmra.mxu0 %v3231
      %v3253 = vpop.f32.mrf.mxu0
      %v3254 = vadd.f32 0.0, %v3253
      %3255 = vmatmul.f32.gmra.mxu0 %v3234
      %v3256 = vpop.f32.mrf.mxu0
      %v3257 = vadd.f32 0.0, %v3256
      %3258 = vdwg.mxu0
      %v3260 = vsel %vm632, %v2868, 0
      %v3263 = vsel %vm632, %v2869, 0
      %3265 = vmatpush.msra.mxu0 0.0
      %3266 = vmatpush.msra.mxu0 0.0
      %3267 = vmatpush.msra.mxu0 0.0
      %3268 = vmatpush.msra.mxu0 0.0
      %3269 = vmatpush.msra.mxu0 0.0
      %3270 = vmatpush.msra.mxu0 0.0
      %3271 = vmatpush.msra.mxu0 0.0
      %3272 = vmatpush.msra.mxu0 0.0
      %3273 = vmatpush.msra.mxu0 0.0
      %3274 = vmatpush.msra.mxu0 0.0
      %3275 = vmatpush.msra.mxu0 0.0
      %3276 = vmatpush.msra.mxu0 0.0
      %3277 = vmatpush.msra.mxu0 %v3155
      %3278 = vmatpush.msra.mxu0 %v3154
      %3279 = vmatpush.msra.mxu0 %v3153
      %3280 = vmatpush.msra.mxu0 %v3152
      %3281 = vmatmul.f32.gmra.mxu0 %v3260
      %v3282 = vpop.f32.mrf.mxu0
      %v3283 = vadd.f32 0.0, %v3282
      %3284 = vmatmul.f32.gmra.mxu0 %v3263
      %v3285 = vpop.f32.mrf.mxu0
      %v3286 = vadd.f32 0.0, %v3285
      %3287 = vdwg.mxu0
      %v3289 = vsel %vm632, %v2870, 0
      %v3292 = vsel %vm632, %v2871, 0
      %3294 = vmatpush.msra.mxu0 0.0
      %3295 = vmatpush.msra.mxu0 0.0
      %3296 = vmatpush.msra.mxu0 0.0
      %3297 = vmatpush.msra.mxu0 0.0
      %3298 = vmatpush.msra.mxu0 0.0
      %3299 = vmatpush.msra.mxu0 0.0
      %3300 = vmatpush.msra.mxu0 0.0
      %3301 = vmatpush.msra.mxu0 0.0
      %3302 = vmatpush.msra.mxu0 0.0
      %3303 = vmatpush.msra.mxu0 0.0
      %3304 = vmatpush.msra.mxu0 0.0
      %3305 = vmatpush.msra.mxu0 0.0
      %3306 = vmatpush.msra.mxu0 %v3159
      %3307 = vmatpush.msra.mxu0 %v3158
      %3308 = vmatpush.msra.mxu0 %v3157
      %3309 = vmatpush.msra.mxu0 %v3156
      %3310 = vmatmul.f32.gmra.mxu0 %v3289
      %v3311 = vpop.f32.mrf.mxu0
      %v3312 = vadd.f32 0.0, %v3311
      %3313 = vmatmul.f32.gmra.mxu0 %v3292
      %v3314 = vpop.f32.mrf.mxu0
      %v3315 = vadd.f32 0.0, %v3314
      %3316 = vdwg.mxu0
      %v3318 = vsel %vm632, %v2872, 0
      %v3321 = vsel %vm632, %v2873, 0
      %3323 = vmatpush.msra.mxu0 0.0
      %3324 = vmatpush.msra.mxu0 0.0
      %3325 = vmatpush.msra.mxu0 0.0
      %3326 = vmatpush.msra.mxu0 0.0
      %3327 = vmatpush.msra.mxu0 0.0
      %3328 = vmatpush.msra.mxu0 0.0
      %3329 = vmatpush.msra.mxu0 0.0
      %3330 = vmatpush.msra.mxu0 0.0
      %3331 = vmatpush.msra.mxu0 0.0
      %3332 = vmatpush.msra.mxu0 0.0
      %3333 = vmatpush.msra.mxu0 0.0
      %3334 = vmatpush.msra.mxu0 0.0
      %3335 = vmatpush.msra.mxu0 %v3163
      %3336 = vmatpush.msra.mxu0 %v3162
      %3337 = vmatpush.msra.mxu0 %v3161
      %3338 = vmatpush.msra.mxu0 %v3160
      %3339 = vmatmul.f32.gmra.mxu0 %v3318
      %v3340 = vpop.f32.mrf.mxu0
      %v3341 = vadd.f32 0.0, %v3340
      %3342 = vmatmul.f32.gmra.mxu0 %v3321
      %v3343 = vpop.f32.mrf.mxu0
      %v3344 = vadd.f32 0.0, %v3343
      %3345 = vdwg.mxu0
      %v3347 = vsel %vm632, %v2874, 0
      %v3350 = vsel %vm632, %v2875, 0
      %3352 = vmatpush.msra.mxu0 0.0
      %3353 = vmatpush.msra.mxu0 0.0
      %3354 = vmatpush.msra.mxu0 0.0
      %3355 = vmatpush.msra.mxu0 0.0
      %3356 = vmatpush.msra.mxu0 0.0
      %3357 = vmatpush.msra.mxu0 0.0
      %3358 = vmatpush.msra.mxu0 0.0
      %3359 = vmatpush.msra.mxu0 0.0
      %3360 = vmatpush.msra.mxu0 0.0
      %3361 = vmatpush.msra.mxu0 0.0
      %3362 = vmatpush.msra.mxu0 0.0
      %3363 = vmatpush.msra.mxu0 0.0
      %3364 = vmatpush.msra.mxu0 %v3167
      %3365 = vmatpush.msra.mxu0 %v3166
      %3366 = vmatpush.msra.mxu0 %v3165
      %3367 = vmatpush.msra.mxu0 %v3164
      %3368 = vmatmul.f32.gmra.mxu0 %v3347
      %v3369 = vpop.f32.mrf.mxu0
      %v3370 = vadd.f32 0.0, %v3369
      %3371 = vmatmul.f32.gmra.mxu0 %v3350
      %v3372 = vpop.f32.mrf.mxu0
      %v3373 = vadd.f32 0.0, %v3372
      %3374 = vdwg.mxu0
      %v3376 = vsel %vm632, %v2876, 0
      %v3379 = vsel %vm632, %v2877, 0
      %3381 = vmatpush.msra.mxu0 0.0
      %3382 = vmatpush.msra.mxu0 0.0
      %3383 = vmatpush.msra.mxu0 0.0
      %3384 = vmatpush.msra.mxu0 0.0
      %3385 = vmatpush.msra.mxu0 0.0
      %3386 = vmatpush.msra.mxu0 0.0
      %3387 = vmatpush.msra.mxu0 0.0
      %3388 = vmatpush.msra.mxu0 0.0
      %3389 = vmatpush.msra.mxu0 0.0
      %3390 = vmatpush.msra.mxu0 0.0
      %3391 = vmatpush.msra.mxu0 0.0
      %3392 = vmatpush.msra.mxu0 0.0
      %3393 = vmatpush.msra.mxu0 %v3171
      %3394 = vmatpush.msra.mxu0 %v3170
      %3395 = vmatpush.msra.mxu0 %v3169
      %3396 = vmatpush.msra.mxu0 %v3168
      %3397 = vmatmul.f32.gmra.mxu0 %v3376
      %v3398 = vpop.f32.mrf.mxu0
      %v3399 = vadd.f32 0.0, %v3398
      %3400 = vmatmul.f32.gmra.mxu0 %v3379
      %v3401 = vpop.f32.mrf.mxu0
      %v3402 = vadd.f32 0.0, %v3401
      %3403 = vdwg.mxu0
      %s3404 = scalar_lea.vmem %s272, 512
      %v3405 = vld [vmem:[%s3404] sm:$0xff]
      %v3406 = vld [vmem:[%s3404 + $0x8] sm:$0xff]
      %v3407 = vld [vmem:[%s3404 + $0x10] sm:$0xff]
      %v3408 = vld [vmem:[%s3404 + $0x18] sm:$0xff]
      %v3409 = vld [vmem:[%s3404 + $0x20] sm:$0xff]
      %v3410 = vld [vmem:[%s3404 + $0x28] sm:$0xff]
      %v3411 = vld [vmem:[%s3404 + $0x30] sm:$0xff]
      %v3412 = vld [vmem:[%s3404 + $0x38] sm:$0xff]
      %v3413 = vld [vmem:[%s3404 + $0x40] sm:$0xff]
      %v3414 = vld [vmem:[%s3404 + $0x48] sm:$0xff]
      %v3415 = vld [vmem:[%s3404 + $0x50] sm:$0xff]
      %v3416 = vld [vmem:[%s3404 + $0x58] sm:$0xff]
      %v3417 = vld [vmem:[%s3404 + $0x60] sm:$0xff]
      %v3418 = vld [vmem:[%s3404 + $0x68] sm:$0xff]
      %v3419 = vld [vmem:[%s3404 + $0x70] sm:$0xff]
      %v3420 = vld [vmem:[%s3404 + $0x78] sm:$0xff]
      %v3421 = vsub.f32 %v3405, %v3196
      %v3422 = vsub.f32 %v3406, %v3199
      %v3423 = vsub.f32 %v3407, %v3225
      %v3424 = vsub.f32 %v3408, %v3228
      %v3425 = vsub.f32 %v3409, %v3254
      %v3426 = vsub.f32 %v3410, %v3257
      %v3427 = vsub.f32 %v3411, %v3283
      %v3428 = vsub.f32 %v3412, %v3286
      %v3429 = vsub.f32 %v3413, %v3312
      %v3430 = vsub.f32 %v3414, %v3315
      %v3431 = vsub.f32 %v3415, %v3341
      %v3432 = vsub.f32 %v3416, %v3344
      %v3433 = vsub.f32 %v3417, %v3370
      %v3434 = vsub.f32 %v3418, %v3373
      %v3435 = vsub.f32 %v3419, %v3399
      %v3436 = vsub.f32 %v3420, %v3402
      %v3437 = vand.u32 2147483647, %v3421
      %v3438 = vand.u32 2147483647, %v3422
      %v3439 = vand.u32 2147483647, %v3423
      %v3440 = vand.u32 2147483647, %v3424
      %v3441 = vand.u32 2147483647, %v3425
      %v3442 = vand.u32 2147483647, %v3426
      %v3443 = vand.u32 2147483647, %v3427
      %v3444 = vand.u32 2147483647, %v3428
      %v3445 = vand.u32 2147483647, %v3429
      %v3446 = vand.u32 2147483647, %v3430
      %v3447 = vand.u32 2147483647, %v3431
      %v3448 = vand.u32 2147483647, %v3432
      %v3449 = vand.u32 2147483647, %v3433
      %v3450 = vand.u32 2147483647, %v3434
      %v3451 = vand.u32 2147483647, %v3435
      %v3452 = vand.u32 2147483647, %v3436
      %v3453 = vsel %vm913, %v3437, 0.0
      %v3454 = vsel %vm913, %v3438, 0.0
      %v3455 = vadd.f32 %v3453, %v3454
      %v3456 = vrot.slane %v3455, 4
      %v3457 = vadd.f32 %v3455, %v3456
      %v3458 = vrot.slane %v3457, 2
      %v3459 = vadd.f32 %v3457, %v3458
      %v3460 = vrot.slane %v3459, 1
      %v3461 = vadd.f32 %v3459, %v3460
      %v3462 = vsel %vm913, %v3439, 0.0
      %v3463 = vsel %vm913, %v3440, 0.0
      %v3464 = vadd.f32 %v3462, %v3463
      %v3465 = vrot.slane %v3464, 4
      %v3466 = vadd.f32 %v3464, %v3465
      %v3467 = vrot.slane %v3466, 2
      %v3468 = vadd.f32 %v3466, %v3467
      %v3469 = vrot.slane %v3468, 1
      %v3470 = vadd.f32 %v3468, %v3469
      %v3471 = vsel %vm913, %v3441, 0.0
      %v3472 = vsel %vm913, %v3442, 0.0
      %v3473 = vadd.f32 %v3471, %v3472
      %v3474 = vrot.slane %v3473, 4
      %v3475 = vadd.f32 %v3473, %v3474
      %v3476 = vrot.slane %v3475, 2
      %v3477 = vadd.f32 %v3475, %v3476
      %v3478 = vrot.slane %v3477, 1
      %v3479 = vadd.f32 %v3477, %v3478
      %v3480 = vsel %vm913, %v3443, 0.0
      %v3481 = vsel %vm913, %v3444, 0.0
      %v3482 = vadd.f32 %v3480, %v3481
      %v3483 = vrot.slane %v3482, 4
      %v3484 = vadd.f32 %v3482, %v3483
      %v3485 = vrot.slane %v3484, 2
      %v3486 = vadd.f32 %v3484, %v3485
      %v3487 = vrot.slane %v3486, 1
      %v3488 = vadd.f32 %v3486, %v3487
      %v3489 = vsel %vm913, %v3445, 0.0
      %v3490 = vsel %vm913, %v3446, 0.0
      %v3491 = vadd.f32 %v3489, %v3490
      %v3492 = vrot.slane %v3491, 4
      %v3493 = vadd.f32 %v3491, %v3492
      %v3494 = vrot.slane %v3493, 2
      %v3495 = vadd.f32 %v3493, %v3494
      %v3496 = vrot.slane %v3495, 1
      %v3497 = vadd.f32 %v3495, %v3496
      %v3498 = vsel %vm913, %v3447, 0.0
      %v3499 = vsel %vm913, %v3448, 0.0
      %v3500 = vadd.f32 %v3498, %v3499
      %v3501 = vrot.slane %v3500, 4
      %v3502 = vadd.f32 %v3500, %v3501
      %v3503 = vrot.slane %v3502, 2
      %v3504 = vadd.f32 %v3502, %v3503
      %v3505 = vrot.slane %v3504, 1
      %v3506 = vadd.f32 %v3504, %v3505
      %v3507 = vsel %vm913, %v3449, 0.0
      %v3508 = vsel %vm913, %v3450, 0.0
      %v3509 = vadd.f32 %v3507, %v3508
      %v3510 = vrot.slane %v3509, 4
      %v3511 = vadd.f32 %v3509, %v3510
      %v3512 = vrot.slane %v3511, 2
      %v3513 = vadd.f32 %v3511, %v3512
      %v3514 = vrot.slane %v3513, 1
      %v3515 = vadd.f32 %v3513, %v3514
      %v3516 = vsel %vm913, %v3451, 0.0
      %v3517 = vsel %vm913, %v3452, 0.0
      %v3518 = vadd.f32 %v3516, %v3517
      %v3519 = vrot.slane %v3518, 4
      %v3520 = vadd.f32 %v3518, %v3519
      %v3521 = vrot.slane %v3520, 2
      %v3522 = vadd.f32 %v3520, %v3521
      %v3523 = vrot.slane %v3522, 1
      %v3524 = vadd.f32 %v3522, %v3523
      %v3533 = vsel %vm994, %v3470, %v3461
      %v3534 = vsel %vm996, %v3479, %v3533
      %v3535 = vsel %vm998, %v3488, %v3534
      %v3536 = vsel %vm1000, %v3497, %v3535
      %v3537 = vsel %vm1002, %v3506, %v3536
      %v3538 = vsel %vm1004, %v3515, %v3537
      %v3539 = vsel %vm1006, %v3524, %v3538
      %s3541 = scalar_lea.vmem %s296, 32
      %3542 = vst.msk [vmem:[%s3541] sm:$0xff] %vm913, %v3539
      %v3543 = vadd.f32 %v2879, %v1010
      %v3544 = vsub.f32 %v1012, %v3543
      %v3545 = vmul.f32 %v3544, 1.032258
      %v3546 = vadd.f32 %v3545, -0.5
      %v3547 = vfloor.f32 %v3546
      %v3548 = vsub.f32 %v3546, %v3547
      %v3550 = vrot.slane %v3547, 1
      %v3551 = vrot.slane %v3547, 2
      %v3552 = vrot.slane %v3547, 3
      %v3553 = vrot.slane %v3547, 4
      %v3554 = vrot.slane %v3547, 5
      %v3555 = vrot.slane %v3547, 6
      %v3556 = vrot.slane %v3547, 7
      %v3565 = vrot.slane %v3548, 1
      %v3566 = vrot.slane %v3548, 2
      %v3567 = vrot.slane %v3548, 3
      %v3568 = vrot.slane %v3548, 4
      %v3569 = vrot.slane %v3548, 5
      %v3570 = vrot.slane %v3548, 6
      %v3571 = vrot.slane %v3548, 7
      %v3579 = vperm.slane %v3547, 0
      %v3580 = vperm.slane %v3550, 0
      %v3581 = vperm.slane %v3551, 0
      %v3582 = vperm.slane %v3552, 0
      %v3583 = vperm.slane %v3553, 0
      %v3584 = vperm.slane %v3554, 0
      %v3585 = vperm.slane %v3555, 0
      %v3586 = vperm.slane %v3556, 0
      %vm3595 = vcmp.eq.f32.partialorder %v316, %v3579
      %vm3596 = vcmp.eq.f32.partialorder %v317, %v3579
      %vm3597 = vcmp.eq.f32.partialorder %v318, %v3579
      %vm3598 = vcmp.eq.f32.partialorder %v319, %v3579
      %vm3599 = vcmp.eq.f32.partialorder %v316, %v3580
      %vm3600 = vcmp.eq.f32.partialorder %v317, %v3580
      %vm3601 = vcmp.eq.f32.partialorder %v318, %v3580
      %vm3602 = vcmp.eq.f32.partialorder %v319, %v3580
      %vm3603 = vcmp.eq.f32.partialorder %v316, %v3581
      %vm3604 = vcmp.eq.f32.partialorder %v317, %v3581
      %vm3605 = vcmp.eq.f32.partialorder %v318, %v3581
      %vm3606 = vcmp.eq.f32.partialorder %v319, %v3581
      %vm3607 = vcmp.eq.f32.partialorder %v316, %v3582
      %vm3608 = vcmp.eq.f32.partialorder %v317, %v3582
      %vm3609 = vcmp.eq.f32.partialorder %v318, %v3582
      %vm3610 = vcmp.eq.f32.partialorder %v319, %v3582
      %vm3611 = vcmp.eq.f32.partialorder %v316, %v3583
      %vm3612 = vcmp.eq.f32.partialorder %v317, %v3583
      %vm3613 = vcmp.eq.f32.partialorder %v318, %v3583
      %vm3614 = vcmp.eq.f32.partialorder %v319, %v3583
      %vm3615 = vcmp.eq.f32.partialorder %v316, %v3584
      %vm3616 = vcmp.eq.f32.partialorder %v317, %v3584
      %vm3617 = vcmp.eq.f32.partialorder %v318, %v3584
      %vm3618 = vcmp.eq.f32.partialorder %v319, %v3584
      %vm3619 = vcmp.eq.f32.partialorder %v316, %v3585
      %vm3620 = vcmp.eq.f32.partialorder %v317, %v3585
      %vm3621 = vcmp.eq.f32.partialorder %v318, %v3585
      %vm3622 = vcmp.eq.f32.partialorder %v319, %v3585
      %vm3623 = vcmp.eq.f32.partialorder %v316, %v3586
      %vm3624 = vcmp.eq.f32.partialorder %v317, %v3586
      %vm3625 = vcmp.eq.f32.partialorder %v318, %v3586
      %vm3626 = vcmp.eq.f32.partialorder %v319, %v3586
      %v3627 = vsub.f32 1.0, %v3548
      %v3628 = vsub.f32 1.0, %v3565
      %v3629 = vsub.f32 1.0, %v3566
      %v3630 = vsub.f32 1.0, %v3567
      %v3631 = vsub.f32 1.0, %v3568
      %v3632 = vsub.f32 1.0, %v3569
      %v3633 = vsub.f32 1.0, %v3570
      %v3634 = vsub.f32 1.0, %v3571
      %v3643 = vperm.slane %v3627, 0
      %v3644 = vperm.slane %v3628, 0
      %v3645 = vperm.slane %v3629, 0
      %v3646 = vperm.slane %v3630, 0
      %v3647 = vperm.slane %v3631, 0
      %v3648 = vperm.slane %v3632, 0
      %v3649 = vperm.slane %v3633, 0
      %v3650 = vperm.slane %v3634, 0
      %v3659 = vsel %vm3595, %v3643, 0.0
      %v3660 = vsel %vm3596, %v3643, 0.0
      %v3661 = vsel %vm3597, %v3643, 0.0
      %v3662 = vsel %vm3598, %v3643, 0.0
      %v3663 = vsel %vm3599, %v3644, 0.0
      %v3664 = vsel %vm3600, %v3644, 0.0
      %v3665 = vsel %vm3601, %v3644, 0.0
      %v3666 = vsel %vm3602, %v3644, 0.0
      %v3667 = vsel %vm3603, %v3645, 0.0
      %v3668 = vsel %vm3604, %v3645, 0.0
      %v3669 = vsel %vm3605, %v3645, 0.0
      %v3670 = vsel %vm3606, %v3645, 0.0
      %v3671 = vsel %vm3607, %v3646, 0.0
      %v3672 = vsel %vm3608, %v3646, 0.0
      %v3673 = vsel %vm3609, %v3646, 0.0
      %v3674 = vsel %vm3610, %v3646, 0.0
      %v3675 = vsel %vm3611, %v3647, 0.0
      %v3676 = vsel %vm3612, %v3647, 0.0
      %v3677 = vsel %vm3613, %v3647, 0.0
      %v3678 = vsel %vm3614, %v3647, 0.0
      %v3679 = vsel %vm3615, %v3648, 0.0
      %v3680 = vsel %vm3616, %v3648, 0.0
      %v3681 = vsel %vm3617, %v3648, 0.0
      %v3682 = vsel %vm3618, %v3648, 0.0
      %v3683 = vsel %vm3619, %v3649, 0.0
      %v3684 = vsel %vm3620, %v3649, 0.0
      %v3685 = vsel %vm3621, %v3649, 0.0
      %v3686 = vsel %vm3622, %v3649, 0.0
      %v3687 = vsel %vm3623, %v3650, 0.0
      %v3688 = vsel %vm3624, %v3650, 0.0
      %v3689 = vsel %vm3625, %v3650, 0.0
      %v3690 = vsel %vm3626, %v3650, 0.0
      %v3691 = vadd.f32 %v3547, 1.0
      %v3692 = vadd.f32 %v3550, 1.0
      %v3693 = vadd.f32 %v3551, 1.0
      %v3694 = vadd.f32 %v3552, 1.0
      %v3695 = vadd.f32 %v3553, 1.0
      %v3696 = vadd.f32 %v3554, 1.0
      %v3697 = vadd.f32 %v3555, 1.0
      %v3698 = vadd.f32 %v3556, 1.0
      %v3707 = vperm.slane %v3691, 0
      %v3708 = vperm.slane %v3692, 0
      %v3709 = vperm.slane %v3693, 0
      %v3710 = vperm.slane %v3694, 0
      %v3711 = vperm.slane %v3695, 0
      %v3712 = vperm.slane %v3696, 0
      %v3713 = vperm.slane %v3697, 0
      %v3714 = vperm.slane %v3698, 0
      %vm3723 = vcmp.eq.f32.partialorder %v316, %v3707
      %vm3724 = vcmp.eq.f32.partialorder %v317, %v3707
      %vm3725 = vcmp.eq.f32.partialorder %v318, %v3707
      %vm3726 = vcmp.eq.f32.partialorder %v319, %v3707
      %vm3727 = vcmp.eq.f32.partialorder %v316, %v3708
      %vm3728 = vcmp.eq.f32.partialorder %v317, %v3708
      %vm3729 = vcmp.eq.f32.partialorder %v318, %v3708
      %vm3730 = vcmp.eq.f32.partialorder %v319, %v3708
      %vm3731 = vcmp.eq.f32.partialorder %v316, %v3709
      %vm3732 = vcmp.eq.f32.partialorder %v317, %v3709
      %vm3733 = vcmp.eq.f32.partialorder %v318, %v3709
      %vm3734 = vcmp.eq.f32.partialorder %v319, %v3709
      %vm3735 = vcmp.eq.f32.partialorder %v316, %v3710
      %vm3736 = vcmp.eq.f32.partialorder %v317, %v3710
      %vm3737 = vcmp.eq.f32.partialorder %v318, %v3710
      %vm3738 = vcmp.eq.f32.partialorder %v319, %v3710
      %vm3739 = vcmp.eq.f32.partialorder %v316, %v3711
      %vm3740 = vcmp.eq.f32.partialorder %v317, %v3711
      %vm3741 = vcmp.eq.f32.partialorder %v318, %v3711
      %vm3742 = vcmp.eq.f32.partialorder %v319, %v3711
      %vm3743 = vcmp.eq.f32.partialorder %v316, %v3712
      %vm3744 = vcmp.eq.f32.partialorder %v317, %v3712
      %vm3745 = vcmp.eq.f32.partialorder %v318, %v3712
      %vm3746 = vcmp.eq.f32.partialorder %v319, %v3712
      %vm3747 = vcmp.eq.f32.partialorder %v316, %v3713
      %vm3748 = vcmp.eq.f32.partialorder %v317, %v3713
      %vm3749 = vcmp.eq.f32.partialorder %v318, %v3713
      %vm3750 = vcmp.eq.f32.partialorder %v319, %v3713
      %vm3751 = vcmp.eq.f32.partialorder %v316, %v3714
      %vm3752 = vcmp.eq.f32.partialorder %v317, %v3714
      %vm3753 = vcmp.eq.f32.partialorder %v318, %v3714
      %vm3754 = vcmp.eq.f32.partialorder %v319, %v3714
      %v3755 = vperm.slane %v3548, 0
      %v3756 = vperm.slane %v3565, 0
      %v3757 = vperm.slane %v3566, 0
      %v3758 = vperm.slane %v3567, 0
      %v3759 = vperm.slane %v3568, 0
      %v3760 = vperm.slane %v3569, 0
      %v3761 = vperm.slane %v3570, 0
      %v3762 = vperm.slane %v3571, 0
      %v3771 = vsel %vm3723, %v3755, 0.0
      %v3772 = vsel %vm3724, %v3755, 0.0
      %v3773 = vsel %vm3725, %v3755, 0.0
      %v3774 = vsel %vm3726, %v3755, 0.0
      %v3775 = vsel %vm3727, %v3756, 0.0
      %v3776 = vsel %vm3728, %v3756, 0.0
      %v3777 = vsel %vm3729, %v3756, 0.0
      %v3778 = vsel %vm3730, %v3756, 0.0
      %v3779 = vsel %vm3731, %v3757, 0.0
      %v3780 = vsel %vm3732, %v3757, 0.0
      %v3781 = vsel %vm3733, %v3757, 0.0
      %v3782 = vsel %vm3734, %v3757, 0.0
      %v3783 = vsel %vm3735, %v3758, 0.0
      %v3784 = vsel %vm3736, %v3758, 0.0
      %v3785 = vsel %vm3737, %v3758, 0.0
      %v3786 = vsel %vm3738, %v3758, 0.0
      %v3787 = vsel %vm3739, %v3759, 0.0
      %v3788 = vsel %vm3740, %v3759, 0.0
      %v3789 = vsel %vm3741, %v3759, 0.0
      %v3790 = vsel %vm3742, %v3759, 0.0
      %v3791 = vsel %vm3743, %v3760, 0.0
      %v3792 = vsel %vm3744, %v3760, 0.0
      %v3793 = vsel %vm3745, %v3760, 0.0
      %v3794 = vsel %vm3746, %v3760, 0.0
      %v3795 = vsel %vm3747, %v3761, 0.0
      %v3796 = vsel %vm3748, %v3761, 0.0
      %v3797 = vsel %vm3749, %v3761, 0.0
      %v3798 = vsel %vm3750, %v3761, 0.0
      %v3799 = vsel %vm3751, %v3762, 0.0
      %v3800 = vsel %vm3752, %v3762, 0.0
      %v3801 = vsel %vm3753, %v3762, 0.0
      %v3802 = vsel %vm3754, %v3762, 0.0
      %v3803 = vadd.f32 %v3659, %v3771
      %v3804 = vadd.f32 %v3660, %v3772
      %v3805 = vadd.f32 %v3661, %v3773
      %v3806 = vadd.f32 %v3662, %v3774
      %v3807 = vadd.f32 %v3663, %v3775
      %v3808 = vadd.f32 %v3664, %v3776
      %v3809 = vadd.f32 %v3665, %v3777
      %v3810 = vadd.f32 %v3666, %v3778
      %v3811 = vadd.f32 %v3667, %v3779
      %v3812 = vadd.f32 %v3668, %v3780
      %v3813 = vadd.f32 %v3669, %v3781
      %v3814 = vadd.f32 %v3670, %v3782
      %v3815 = vadd.f32 %v3671, %v3783
      %v3816 = vadd.f32 %v3672, %v3784
      %v3817 = vadd.f32 %v3673, %v3785
      %v3818 = vadd.f32 %v3674, %v3786
      %v3819 = vadd.f32 %v3675, %v3787
      %v3820 = vadd.f32 %v3676, %v3788
      %v3821 = vadd.f32 %v3677, %v3789
      %v3822 = vadd.f32 %v3678, %v3790
      %v3823 = vadd.f32 %v3679, %v3791
      %v3824 = vadd.f32 %v3680, %v3792
      %v3825 = vadd.f32 %v3681, %v3793
      %v3826 = vadd.f32 %v3682, %v3794
      %v3827 = vadd.f32 %v3683, %v3795
      %v3828 = vadd.f32 %v3684, %v3796
      %v3829 = vadd.f32 %v3685, %v3797
      %v3830 = vadd.f32 %v3686, %v3798
      %v3831 = vadd.f32 %v3687, %v3799
      %v3832 = vadd.f32 %v3688, %v3800
      %v3833 = vadd.f32 %v3689, %v3801
      %v3834 = vadd.f32 %v3690, %v3802
      %3835 = vmatpush.msra.mxu0 0.0
      %3836 = vmatpush.msra.mxu0 0.0
      %3837 = vmatpush.msra.mxu0 0.0
      %3838 = vmatpush.msra.mxu0 0.0
      %3839 = vmatpush.msra.mxu0 0.0
      %3840 = vmatpush.msra.mxu0 0.0
      %3841 = vmatpush.msra.mxu0 0.0
      %3842 = vmatpush.msra.mxu0 0.0
      %3843 = vmatpush.msra.mxu0 0.0
      %3844 = vmatpush.msra.mxu0 0.0
      %3845 = vmatpush.msra.mxu0 0.0
      %3846 = vmatpush.msra.mxu0 0.0
      %3847 = vmatpush.msra.mxu0 %v3806
      %3848 = vmatpush.msra.mxu0 %v3805
      %3849 = vmatpush.msra.mxu0 %v3804
      %3850 = vmatpush.msra.mxu0 %v3803
      %3851 = vmatmul.f32.gmra.mxu0 %v3173
      %v3852 = vpop.f32.mrf.mxu0
      %v3853 = vadd.f32 0.0, %v3852
      %3854 = vmatmul.f32.gmra.mxu0 %v3176
      %v3855 = vpop.f32.mrf.mxu0
      %v3856 = vadd.f32 0.0, %v3855
      %3857 = vdwg.mxu0
      %3858 = vmatpush.msra.mxu0 0.0
      %3859 = vmatpush.msra.mxu0 0.0
      %3860 = vmatpush.msra.mxu0 0.0
      %3861 = vmatpush.msra.mxu0 0.0
      %3862 = vmatpush.msra.mxu0 0.0
      %3863 = vmatpush.msra.mxu0 0.0
      %3864 = vmatpush.msra.mxu0 0.0
      %3865 = vmatpush.msra.mxu0 0.0
      %3866 = vmatpush.msra.mxu0 0.0
      %3867 = vmatpush.msra.mxu0 0.0
      %3868 = vmatpush.msra.mxu0 0.0
      %3869 = vmatpush.msra.mxu0 0.0
      %3870 = vmatpush.msra.mxu0 %v3810
      %3871 = vmatpush.msra.mxu0 %v3809
      %3872 = vmatpush.msra.mxu0 %v3808
      %3873 = vmatpush.msra.mxu0 %v3807
      %3874 = vmatmul.f32.gmra.mxu0 %v3202
      %v3875 = vpop.f32.mrf.mxu0
      %v3876 = vadd.f32 0.0, %v3875
      %3877 = vmatmul.f32.gmra.mxu0 %v3205
      %v3878 = vpop.f32.mrf.mxu0
      %v3879 = vadd.f32 0.0, %v3878
      %3880 = vdwg.mxu0
      %3881 = vmatpush.msra.mxu0 0.0
      %3882 = vmatpush.msra.mxu0 0.0
      %3883 = vmatpush.msra.mxu0 0.0
      %3884 = vmatpush.msra.mxu0 0.0
      %3885 = vmatpush.msra.mxu0 0.0
      %3886 = vmatpush.msra.mxu0 0.0
      %3887 = vmatpush.msra.mxu0 0.0
      %3888 = vmatpush.msra.mxu0 0.0
      %3889 = vmatpush.msra.mxu0 0.0
      %3890 = vmatpush.msra.mxu0 0.0
      %3891 = vmatpush.msra.mxu0 0.0
      %3892 = vmatpush.msra.mxu0 0.0
      %3893 = vmatpush.msra.mxu0 %v3814
      %3894 = vmatpush.msra.mxu0 %v3813
      %3895 = vmatpush.msra.mxu0 %v3812
      %3896 = vmatpush.msra.mxu0 %v3811
      %3897 = vmatmul.f32.gmra.mxu0 %v3231
      %v3898 = vpop.f32.mrf.mxu0
      %v3899 = vadd.f32 0.0, %v3898
      %3900 = vmatmul.f32.gmra.mxu0 %v3234
      %v3901 = vpop.f32.mrf.mxu0
      %v3902 = vadd.f32 0.0, %v3901
      %3903 = vdwg.mxu0
      %3904 = vmatpush.msra.mxu0 0.0
      %3905 = vmatpush.msra.mxu0 0.0
      %3906 = vmatpush.msra.mxu0 0.0
      %3907 = vmatpush.msra.mxu0 0.0
      %3908 = vmatpush.msra.mxu0 0.0
      %3909 = vmatpush.msra.mxu0 0.0
      %3910 = vmatpush.msra.mxu0 0.0
      %3911 = vmatpush.msra.mxu0 0.0
      %3912 = vmatpush.msra.mxu0 0.0
      %3913 = vmatpush.msra.mxu0 0.0
      %3914 = vmatpush.msra.mxu0 0.0
      %3915 = vmatpush.msra.mxu0 0.0
      %3916 = vmatpush.msra.mxu0 %v3818
      %3917 = vmatpush.msra.mxu0 %v3817
      %3918 = vmatpush.msra.mxu0 %v3816
      %3919 = vmatpush.msra.mxu0 %v3815
      %3920 = vmatmul.f32.gmra.mxu0 %v3260
      %v3921 = vpop.f32.mrf.mxu0
      %v3922 = vadd.f32 0.0, %v3921
      %3923 = vmatmul.f32.gmra.mxu0 %v3263
      %v3924 = vpop.f32.mrf.mxu0
      %v3925 = vadd.f32 0.0, %v3924
      %3926 = vdwg.mxu0
      %3927 = vmatpush.msra.mxu0 0.0
      %3928 = vmatpush.msra.mxu0 0.0
      %3929 = vmatpush.msra.mxu0 0.0
      %3930 = vmatpush.msra.mxu0 0.0
      %3931 = vmatpush.msra.mxu0 0.0
      %3932 = vmatpush.msra.mxu0 0.0
      %3933 = vmatpush.msra.mxu0 0.0
      %3934 = vmatpush.msra.mxu0 0.0
      %3935 = vmatpush.msra.mxu0 0.0
      %3936 = vmatpush.msra.mxu0 0.0
      %3937 = vmatpush.msra.mxu0 0.0
      %3938 = vmatpush.msra.mxu0 0.0
      %3939 = vmatpush.msra.mxu0 %v3822
      %3940 = vmatpush.msra.mxu0 %v3821
      %3941 = vmatpush.msra.mxu0 %v3820
      %3942 = vmatpush.msra.mxu0 %v3819
      %3943 = vmatmul.f32.gmra.mxu0 %v3289
      %v3944 = vpop.f32.mrf.mxu0
      %v3945 = vadd.f32 0.0, %v3944
      %3946 = vmatmul.f32.gmra.mxu0 %v3292
      %v3947 = vpop.f32.mrf.mxu0
      %v3948 = vadd.f32 0.0, %v3947
      %3949 = vdwg.mxu0
      %3950 = vmatpush.msra.mxu0 0.0
      %3951 = vmatpush.msra.mxu0 0.0
      %3952 = vmatpush.msra.mxu0 0.0
      %3953 = vmatpush.msra.mxu0 0.0
      %3954 = vmatpush.msra.mxu0 0.0
      %3955 = vmatpush.msra.mxu0 0.0
      %3956 = vmatpush.msra.mxu0 0.0
      %3957 = vmatpush.msra.mxu0 0.0
      %3958 = vmatpush.msra.mxu0 0.0
      %3959 = vmatpush.msra.mxu0 0.0
      %3960 = vmatpush.msra.mxu0 0.0
      %3961 = vmatpush.msra.mxu0 0.0
      %3962 = vmatpush.msra.mxu0 %v3826
      %3963 = vmatpush.msra.mxu0 %v3825
      %3964 = vmatpush.msra.mxu0 %v3824
      %3965 = vmatpush.msra.mxu0 %v3823
      %3966 = vmatmul.f32.gmra.mxu0 %v3318
      %v3967 = vpop.f32.mrf.mxu0
      %v3968 = vadd.f32 0.0, %v3967
      %3969 = vmatmul.f32.gmra.mxu0 %v3321
      %v3970 = vpop.f32.mrf.mxu0
      %v3971 = vadd.f32 0.0, %v3970
      %3972 = vdwg.mxu0
      %3973 = vmatpush.msra.mxu0 0.0
      %3974 = vmatpush.msra.mxu0 0.0
      %3975 = vmatpush.msra.mxu0 0.0
      %3976 = vmatpush.msra.mxu0 0.0
      %3977 = vmatpush.msra.mxu0 0.0
      %3978 = vmatpush.msra.mxu0 0.0
      %3979 = vmatpush.msra.mxu0 0.0
      %3980 = vmatpush.msra.mxu0 0.0
      %3981 = vmatpush.msra.mxu0 0.0
      %3982 = vmatpush.msra.mxu0 0.0
      %3983 = vmatpush.msra.mxu0 0.0
      %3984 = vmatpush.msra.mxu0 0.0
      %3985 = vmatpush.msra.mxu0 %v3830
      %3986 = vmatpush.msra.mxu0 %v3829
      %3987 = vmatpush.msra.mxu0 %v3828
      %3988 = vmatpush.msra.mxu0 %v3827
      %3989 = vmatmul.f32.gmra.mxu0 %v3347
      %v3990 = vpop.f32.mrf.mxu0
      %v3991 = vadd.f32 0.0, %v3990
      %3992 = vmatmul.f32.gmra.mxu0 %v3350
      %v3993 = vpop.f32.mrf.mxu0
      %v3994 = vadd.f32 0.0, %v3993
      %3995 = vdwg.mxu0
      %3996 = vmatpush.msra.mxu0 0.0
      %3997 = vmatpush.msra.mxu0 0.0
      %3998 = vmatpush.msra.mxu0 0.0
      %3999 = vmatpush.msra.mxu0 0.0
      %4000 = vmatpush.msra.mxu0 0.0
      %4001 = vmatpush.msra.mxu0 0.0
      %4002 = vmatpush.msra.mxu0 0.0
      %4003 = vmatpush.msra.mxu0 0.0
      %4004 = vmatpush.msra.mxu0 0.0
      %4005 = vmatpush.msra.mxu0 0.0
      %4006 = vmatpush.msra.mxu0 0.0
      %4007 = vmatpush.msra.mxu0 0.0
      %4008 = vmatpush.msra.mxu0 %v3834
      %4009 = vmatpush.msra.mxu0 %v3833
      %4010 = vmatpush.msra.mxu0 %v3832
      %4011 = vmatpush.msra.mxu0 %v3831
      %4012 = vmatmul.f32.gmra.mxu0 %v3376
      %v4013 = vpop.f32.mrf.mxu0
      %v4014 = vadd.f32 0.0, %v4013
      %4015 = vmatmul.f32.gmra.mxu0 %v3379
      %v4016 = vpop.f32.mrf.mxu0
      %v4017 = vadd.f32 0.0, %v4016
      %4018 = vdwg.mxu0
      %s4019 = scalar_lea.vmem %s272, 640
      %v4020 = vld [vmem:[%s4019] sm:$0xff]
      %v4021 = vld [vmem:[%s4019 + $0x8] sm:$0xff]
      %v4022 = vld [vmem:[%s4019 + $0x10] sm:$0xff]
      %v4023 = vld [vmem:[%s4019 + $0x18] sm:$0xff]
      %v4024 = vld [vmem:[%s4019 + $0x20] sm:$0xff]
      %v4025 = vld [vmem:[%s4019 + $0x28] sm:$0xff]
      %v4026 = vld [vmem:[%s4019 + $0x30] sm:$0xff]
      %v4027 = vld [vmem:[%s4019 + $0x38] sm:$0xff]
      %v4028 = vld [vmem:[%s4019 + $0x40] sm:$0xff]
      %v4029 = vld [vmem:[%s4019 + $0x48] sm:$0xff]
      %v4030 = vld [vmem:[%s4019 + $0x50] sm:$0xff]
      %v4031 = vld [vmem:[%s4019 + $0x58] sm:$0xff]
      %v4032 = vld [vmem:[%s4019 + $0x60] sm:$0xff]
      %v4033 = vld [vmem:[%s4019 + $0x68] sm:$0xff]
      %v4034 = vld [vmem:[%s4019 + $0x70] sm:$0xff]
      %v4035 = vld [vmem:[%s4019 + $0x78] sm:$0xff]
      %v4036 = vsub.f32 %v4020, %v3853
      %v4037 = vsub.f32 %v4021, %v3856
      %v4038 = vsub.f32 %v4022, %v3876
      %v4039 = vsub.f32 %v4023, %v3879
      %v4040 = vsub.f32 %v4024, %v3899
      %v4041 = vsub.f32 %v4025, %v3902
      %v4042 = vsub.f32 %v4026, %v3922
      %v4043 = vsub.f32 %v4027, %v3925
      %v4044 = vsub.f32 %v4028, %v3945
      %v4045 = vsub.f32 %v4029, %v3948
      %v4046 = vsub.f32 %v4030, %v3968
      %v4047 = vsub.f32 %v4031, %v3971
      %v4048 = vsub.f32 %v4032, %v3991
      %v4049 = vsub.f32 %v4033, %v3994
      %v4050 = vsub.f32 %v4034, %v4014
      %v4051 = vsub.f32 %v4035, %v4017
      %v4052 = vand.u32 2147483647, %v4036
      %v4053 = vand.u32 2147483647, %v4037
      %v4054 = vand.u32 2147483647, %v4038
      %v4055 = vand.u32 2147483647, %v4039
      %v4056 = vand.u32 2147483647, %v4040
      %v4057 = vand.u32 2147483647, %v4041
      %v4058 = vand.u32 2147483647, %v4042
      %v4059 = vand.u32 2147483647, %v4043
      %v4060 = vand.u32 2147483647, %v4044
      %v4061 = vand.u32 2147483647, %v4045
      %v4062 = vand.u32 2147483647, %v4046
      %v4063 = vand.u32 2147483647, %v4047
      %v4064 = vand.u32 2147483647, %v4048
      %v4065 = vand.u32 2147483647, %v4049
      %v4066 = vand.u32 2147483647, %v4050
      %v4067 = vand.u32 2147483647, %v4051
      %v4068 = vsel %vm913, %v4052, 0.0
      %v4069 = vsel %vm913, %v4053, 0.0
      %v4070 = vadd.f32 %v4068, %v4069
      %v4071 = vrot.slane %v4070, 4
      %v4072 = vadd.f32 %v4070, %v4071
      %v4073 = vrot.slane %v4072, 2
      %v4074 = vadd.f32 %v4072, %v4073
      %v4075 = vrot.slane %v4074, 1
      %v4076 = vadd.f32 %v4074, %v4075
      %v4077 = vsel %vm913, %v4054, 0.0
      %v4078 = vsel %vm913, %v4055, 0.0
      %v4079 = vadd.f32 %v4077, %v4078
      %v4080 = vrot.slane %v4079, 4
      %v4081 = vadd.f32 %v4079, %v4080
      %v4082 = vrot.slane %v4081, 2
      %v4083 = vadd.f32 %v4081, %v4082
      %v4084 = vrot.slane %v4083, 1
      %v4085 = vadd.f32 %v4083, %v4084
      %v4086 = vsel %vm913, %v4056, 0.0
      %v4087 = vsel %vm913, %v4057, 0.0
      %v4088 = vadd.f32 %v4086, %v4087
      %v4089 = vrot.slane %v4088, 4
      %v4090 = vadd.f32 %v4088, %v4089
      %v4091 = vrot.slane %v4090, 2
      %v4092 = vadd.f32 %v4090, %v4091
      %v4093 = vrot.slane %v4092, 1
      %v4094 = vadd.f32 %v4092, %v4093
      %v4095 = vsel %vm913, %v4058, 0.0
      %v4096 = vsel %vm913, %v4059, 0.0
      %v4097 = vadd.f32 %v4095, %v4096
      %v4098 = vrot.slane %v4097, 4
      %v4099 = vadd.f32 %v4097, %v4098
      %v4100 = vrot.slane %v4099, 2
      %v4101 = vadd.f32 %v4099, %v4100
      %v4102 = vrot.slane %v4101, 1
      %v4103 = vadd.f32 %v4101, %v4102
      %v4104 = vsel %vm913, %v4060, 0.0
      %v4105 = vsel %vm913, %v4061, 0.0
      %v4106 = vadd.f32 %v4104, %v4105
      %v4107 = vrot.slane %v4106, 4
      %v4108 = vadd.f32 %v4106, %v4107
      %v4109 = vrot.slane %v4108, 2
      %v4110 = vadd.f32 %v4108, %v4109
      %v4111 = vrot.slane %v4110, 1
      %v4112 = vadd.f32 %v4110, %v4111
      %v4113 = vsel %vm913, %v4062, 0.0
      %v4114 = vsel %vm913, %v4063, 0.0
      %v4115 = vadd.f32 %v4113, %v4114
      %v4116 = vrot.slane %v4115, 4
      %v4117 = vadd.f32 %v4115, %v4116
      %v4118 = vrot.slane %v4117, 2
      %v4119 = vadd.f32 %v4117, %v4118
      %v4120 = vrot.slane %v4119, 1
      %v4121 = vadd.f32 %v4119, %v4120
      %v4122 = vsel %vm913, %v4064, 0.0
      %v4123 = vsel %vm913, %v4065, 0.0
      %v4124 = vadd.f32 %v4122, %v4123
      %v4125 = vrot.slane %v4124, 4
      %v4126 = vadd.f32 %v4124, %v4125
      %v4127 = vrot.slane %v4126, 2
      %v4128 = vadd.f32 %v4126, %v4127
      %v4129 = vrot.slane %v4128, 1
      %v4130 = vadd.f32 %v4128, %v4129
      %v4131 = vsel %vm913, %v4066, 0.0
      %v4132 = vsel %vm913, %v4067, 0.0
      %v4133 = vadd.f32 %v4131, %v4132
      %v4134 = vrot.slane %v4133, 4
      %v4135 = vadd.f32 %v4133, %v4134
      %v4136 = vrot.slane %v4135, 2
      %v4137 = vadd.f32 %v4135, %v4136
      %v4138 = vrot.slane %v4137, 1
      %v4139 = vadd.f32 %v4137, %v4138
      %v4148 = vsel %vm994, %v4085, %v4076
      %v4149 = vsel %vm996, %v4094, %v4148
      %v4150 = vsel %vm998, %v4103, %v4149
      %v4151 = vsel %vm1000, %v4112, %v4150
      %v4152 = vsel %vm1002, %v4121, %v4151
      %v4153 = vsel %vm1004, %v4130, %v4152
      %v4154 = vsel %vm1006, %v4139, %v4153
      %s4156 = scalar_lea.vmem %s296, 40
      %4157 = vst.msk [vmem:[%s4156] sm:$0xff] %vm913, %v4154
      %v4158 = vadd.f32 %v2879, %v1627
      %v4159 = vsub.f32 %v1629, %v4158
      %v4160 = vmul.f32 %v4159, 1.032258
      %v4161 = vadd.f32 %v4160, -0.5
      %v4162 = vfloor.f32 %v4161
      %v4163 = vsub.f32 %v4161, %v4162
      %v4165 = vrot.slane %v4162, 1
      %v4166 = vrot.slane %v4162, 2
      %v4167 = vrot.slane %v4162, 3
      %v4168 = vrot.slane %v4162, 4
      %v4169 = vrot.slane %v4162, 5
      %v4170 = vrot.slane %v4162, 6
      %v4171 = vrot.slane %v4162, 7
      %v4180 = vrot.slane %v4163, 1
      %v4181 = vrot.slane %v4163, 2
      %v4182 = vrot.slane %v4163, 3
      %v4183 = vrot.slane %v4163, 4
      %v4184 = vrot.slane %v4163, 5
      %v4185 = vrot.slane %v4163, 6
      %v4186 = vrot.slane %v4163, 7
      %v4194 = vperm.slane %v4162, 0
      %v4195 = vperm.slane %v4165, 0
      %v4196 = vperm.slane %v4166, 0
      %v4197 = vperm.slane %v4167, 0
      %v4198 = vperm.slane %v4168, 0
      %v4199 = vperm.slane %v4169, 0
      %v4200 = vperm.slane %v4170, 0
      %v4201 = vperm.slane %v4171, 0
      %vm4210 = vcmp.eq.f32.partialorder %v316, %v4194
      %vm4211 = vcmp.eq.f32.partialorder %v317, %v4194
      %vm4212 = vcmp.eq.f32.partialorder %v318, %v4194
      %vm4213 = vcmp.eq.f32.partialorder %v319, %v4194
      %vm4214 = vcmp.eq.f32.partialorder %v316, %v4195
      %vm4215 = vcmp.eq.f32.partialorder %v317, %v4195
      %vm4216 = vcmp.eq.f32.partialorder %v318, %v4195
      %vm4217 = vcmp.eq.f32.partialorder %v319, %v4195
      %vm4218 = vcmp.eq.f32.partialorder %v316, %v4196
      %vm4219 = vcmp.eq.f32.partialorder %v317, %v4196
      %vm4220 = vcmp.eq.f32.partialorder %v318, %v4196
      %vm4221 = vcmp.eq.f32.partialorder %v319, %v4196
      %vm4222 = vcmp.eq.f32.partialorder %v316, %v4197
      %vm4223 = vcmp.eq.f32.partialorder %v317, %v4197
      %vm4224 = vcmp.eq.f32.partialorder %v318, %v4197
      %vm4225 = vcmp.eq.f32.partialorder %v319, %v4197
      %vm4226 = vcmp.eq.f32.partialorder %v316, %v4198
      %vm4227 = vcmp.eq.f32.partialorder %v317, %v4198
      %vm4228 = vcmp.eq.f32.partialorder %v318, %v4198
      %vm4229 = vcmp.eq.f32.partialorder %v319, %v4198
      %vm4230 = vcmp.eq.f32.partialorder %v316, %v4199
      %vm4231 = vcmp.eq.f32.partialorder %v317, %v4199
      %vm4232 = vcmp.eq.f32.partialorder %v318, %v4199
      %vm4233 = vcmp.eq.f32.partialorder %v319, %v4199
      %vm4234 = vcmp.eq.f32.partialorder %v316, %v4200
      %vm4235 = vcmp.eq.f32.partialorder %v317, %v4200
      %vm4236 = vcmp.eq.f32.partialorder %v318, %v4200
      %vm4237 = vcmp.eq.f32.partialorder %v319, %v4200
      %vm4238 = vcmp.eq.f32.partialorder %v316, %v4201
      %vm4239 = vcmp.eq.f32.partialorder %v317, %v4201
      %vm4240 = vcmp.eq.f32.partialorder %v318, %v4201
      %vm4241 = vcmp.eq.f32.partialorder %v319, %v4201
      %v4242 = vsub.f32 1.0, %v4163
      %v4243 = vsub.f32 1.0, %v4180
      %v4244 = vsub.f32 1.0, %v4181
      %v4245 = vsub.f32 1.0, %v4182
      %v4246 = vsub.f32 1.0, %v4183
      %v4247 = vsub.f32 1.0, %v4184
      %v4248 = vsub.f32 1.0, %v4185
      %v4249 = vsub.f32 1.0, %v4186
      %v4258 = vperm.slane %v4242, 0
      %v4259 = vperm.slane %v4243, 0
      %v4260 = vperm.slane %v4244, 0
      %v4261 = vperm.slane %v4245, 0
      %v4262 = vperm.slane %v4246, 0
      %v4263 = vperm.slane %v4247, 0
      %v4264 = vperm.slane %v4248, 0
      %v4265 = vperm.slane %v4249, 0
      %v4274 = vsel %vm4210, %v4258, 0.0
      %v4275 = vsel %vm4211, %v4258, 0.0
      %v4276 = vsel %vm4212, %v4258, 0.0
      %v4277 = vsel %vm4213, %v4258, 0.0
      %v4278 = vsel %vm4214, %v4259, 0.0
      %v4279 = vsel %vm4215, %v4259, 0.0
      %v4280 = vsel %vm4216, %v4259, 0.0
      %v4281 = vsel %vm4217, %v4259, 0.0
      %v4282 = vsel %vm4218, %v4260, 0.0
      %v4283 = vsel %vm4219, %v4260, 0.0
      %v4284 = vsel %vm4220, %v4260, 0.0
      %v4285 = vsel %vm4221, %v4260, 0.0
      %v4286 = vsel %vm4222, %v4261, 0.0
      %v4287 = vsel %vm4223, %v4261, 0.0
      %v4288 = vsel %vm4224, %v4261, 0.0
      %v4289 = vsel %vm4225, %v4261, 0.0
      %v4290 = vsel %vm4226, %v4262, 0.0
      %v4291 = vsel %vm4227, %v4262, 0.0
      %v4292 = vsel %vm4228, %v4262, 0.0
      %v4293 = vsel %vm4229, %v4262, 0.0
      %v4294 = vsel %vm4230, %v4263, 0.0
      %v4295 = vsel %vm4231, %v4263, 0.0
      %v4296 = vsel %vm4232, %v4263, 0.0
      %v4297 = vsel %vm4233, %v4263, 0.0
      %v4298 = vsel %vm4234, %v4264, 0.0
      %v4299 = vsel %vm4235, %v4264, 0.0
      %v4300 = vsel %vm4236, %v4264, 0.0
      %v4301 = vsel %vm4237, %v4264, 0.0
      %v4302 = vsel %vm4238, %v4265, 0.0
      %v4303 = vsel %vm4239, %v4265, 0.0
      %v4304 = vsel %vm4240, %v4265, 0.0
      %v4305 = vsel %vm4241, %v4265, 0.0
      %v4306 = vadd.f32 %v4162, 1.0
      %v4307 = vadd.f32 %v4165, 1.0
      %v4308 = vadd.f32 %v4166, 1.0
      %v4309 = vadd.f32 %v4167, 1.0
      %v4310 = vadd.f32 %v4168, 1.0
      %v4311 = vadd.f32 %v4169, 1.0
      %v4312 = vadd.f32 %v4170, 1.0
      %v4313 = vadd.f32 %v4171, 1.0
      %v4322 = vperm.slane %v4306, 0
      %v4323 = vperm.slane %v4307, 0
      %v4324 = vperm.slane %v4308, 0
      %v4325 = vperm.slane %v4309, 0
      %v4326 = vperm.slane %v4310, 0
      %v4327 = vperm.slane %v4311, 0
      %v4328 = vperm.slane %v4312, 0
      %v4329 = vperm.slane %v4313, 0
      %vm4338 = vcmp.eq.f32.partialorder %v316, %v4322
      %vm4339 = vcmp.eq.f32.partialorder %v317, %v4322
      %vm4340 = vcmp.eq.f32.partialorder %v318, %v4322
      %vm4341 = vcmp.eq.f32.partialorder %v319, %v4322
      %vm4342 = vcmp.eq.f32.partialorder %v316, %v4323
      %vm4343 = vcmp.eq.f32.partialorder %v317, %v4323
      %vm4344 = vcmp.eq.f32.partialorder %v318, %v4323
      %vm4345 = vcmp.eq.f32.partialorder %v319, %v4323
      %vm4346 = vcmp.eq.f32.partialorder %v316, %v4324
      %vm4347 = vcmp.eq.f32.partialorder %v317, %v4324
      %vm4348 = vcmp.eq.f32.partialorder %v318, %v4324
      %vm4349 = vcmp.eq.f32.partialorder %v319, %v4324
      %vm4350 = vcmp.eq.f32.partialorder %v316, %v4325
      %vm4351 = vcmp.eq.f32.partialorder %v317, %v4325
      %vm4352 = vcmp.eq.f32.partialorder %v318, %v4325
      %vm4353 = vcmp.eq.f32.partialorder %v319, %v4325
      %vm4354 = vcmp.eq.f32.partialorder %v316, %v4326
      %vm4355 = vcmp.eq.f32.partialorder %v317, %v4326
      %vm4356 = vcmp.eq.f32.partialorder %v318, %v4326
      %vm4357 = vcmp.eq.f32.partialorder %v319, %v4326
      %vm4358 = vcmp.eq.f32.partialorder %v316, %v4327
      %vm4359 = vcmp.eq.f32.partialorder %v317, %v4327
      %vm4360 = vcmp.eq.f32.partialorder %v318, %v4327
      %vm4361 = vcmp.eq.f32.partialorder %v319, %v4327
      %vm4362 = vcmp.eq.f32.partialorder %v316, %v4328
      %vm4363 = vcmp.eq.f32.partialorder %v317, %v4328
      %vm4364 = vcmp.eq.f32.partialorder %v318, %v4328
      %vm4365 = vcmp.eq.f32.partialorder %v319, %v4328
      %vm4366 = vcmp.eq.f32.partialorder %v316, %v4329
      %vm4367 = vcmp.eq.f32.partialorder %v317, %v4329
      %vm4368 = vcmp.eq.f32.partialorder %v318, %v4329
      %vm4369 = vcmp.eq.f32.partialorder %v319, %v4329
      %v4370 = vperm.slane %v4163, 0
      %v4371 = vperm.slane %v4180, 0
      %v4372 = vperm.slane %v4181, 0
      %v4373 = vperm.slane %v4182, 0
      %v4374 = vperm.slane %v4183, 0
      %v4375 = vperm.slane %v4184, 0
      %v4376 = vperm.slane %v4185, 0
      %v4377 = vperm.slane %v4186, 0
      %v4386 = vsel %vm4338, %v4370, 0.0
      %v4387 = vsel %vm4339, %v4370, 0.0
      %v4388 = vsel %vm4340, %v4370, 0.0
      %v4389 = vsel %vm4341, %v4370, 0.0
      %v4390 = vsel %vm4342, %v4371, 0.0
      %v4391 = vsel %vm4343, %v4371, 0.0
      %v4392 = vsel %vm4344, %v4371, 0.0
      %v4393 = vsel %vm4345, %v4371, 0.0
      %v4394 = vsel %vm4346, %v4372, 0.0
      %v4395 = vsel %vm4347, %v4372, 0.0
      %v4396 = vsel %vm4348, %v4372, 0.0
      %v4397 = vsel %vm4349, %v4372, 0.0
      %v4398 = vsel %vm4350, %v4373, 0.0
      %v4399 = vsel %vm4351, %v4373, 0.0
      %v4400 = vsel %vm4352, %v4373, 0.0
      %v4401 = vsel %vm4353, %v4373, 0.0
      %v4402 = vsel %vm4354, %v4374, 0.0
      %v4403 = vsel %vm4355, %v4374, 0.0
      %v4404 = vsel %vm4356, %v4374, 0.0
      %v4405 = vsel %vm4357, %v4374, 0.0
      %v4406 = vsel %vm4358, %v4375, 0.0
      %v4407 = vsel %vm4359, %v4375, 0.0
      %v4408 = vsel %vm4360, %v4375, 0.0
      %v4409 = vsel %vm4361, %v4375, 0.0
      %v4410 = vsel %vm4362, %v4376, 0.0
      %v4411 = vsel %vm4363, %v4376, 0.0
      %v4412 = vsel %vm4364, %v4376, 0.0
      %v4413 = vsel %vm4365, %v4376, 0.0
      %v4414 = vsel %vm4366, %v4377, 0.0
      %v4415 = vsel %vm4367, %v4377, 0.0
      %v4416 = vsel %vm4368, %v4377, 0.0
      %v4417 = vsel %vm4369, %v4377, 0.0
      %v4418 = vadd.f32 %v4274, %v4386
      %v4419 = vadd.f32 %v4275, %v4387
      %v4420 = vadd.f32 %v4276, %v4388
      %v4421 = vadd.f32 %v4277, %v4389
      %v4422 = vadd.f32 %v4278, %v4390
      %v4423 = vadd.f32 %v4279, %v4391
      %v4424 = vadd.f32 %v4280, %v4392
      %v4425 = vadd.f32 %v4281, %v4393
      %v4426 = vadd.f32 %v4282, %v4394
      %v4427 = vadd.f32 %v4283, %v4395
      %v4428 = vadd.f32 %v4284, %v4396
      %v4429 = vadd.f32 %v4285, %v4397
      %v4430 = vadd.f32 %v4286, %v4398
      %v4431 = vadd.f32 %v4287, %v4399
      %v4432 = vadd.f32 %v4288, %v4400
      %v4433 = vadd.f32 %v4289, %v4401
      %v4434 = vadd.f32 %v4290, %v4402
      %v4435 = vadd.f32 %v4291, %v4403
      %v4436 = vadd.f32 %v4292, %v4404
      %v4437 = vadd.f32 %v4293, %v4405
      %v4438 = vadd.f32 %v4294, %v4406
      %v4439 = vadd.f32 %v4295, %v4407
      %v4440 = vadd.f32 %v4296, %v4408
      %v4441 = vadd.f32 %v4297, %v4409
      %v4442 = vadd.f32 %v4298, %v4410
      %v4443 = vadd.f32 %v4299, %v4411
      %v4444 = vadd.f32 %v4300, %v4412
      %v4445 = vadd.f32 %v4301, %v4413
      %v4446 = vadd.f32 %v4302, %v4414
      %v4447 = vadd.f32 %v4303, %v4415
      %v4448 = vadd.f32 %v4304, %v4416
      %v4449 = vadd.f32 %v4305, %v4417
      %4450 = vmatpush.msra.mxu0 0.0
      %4451 = vmatpush.msra.mxu0 0.0
      %4452 = vmatpush.msra.mxu0 0.0
      %4453 = vmatpush.msra.mxu0 0.0
      %4454 = vmatpush.msra.mxu0 0.0
      %4455 = vmatpush.msra.mxu0 0.0
      %4456 = vmatpush.msra.mxu0 0.0
      %4457 = vmatpush.msra.mxu0 0.0
      %4458 = vmatpush.msra.mxu0 0.0
      %4459 = vmatpush.msra.mxu0 0.0
      %4460 = vmatpush.msra.mxu0 0.0
      %4461 = vmatpush.msra.mxu0 0.0
      %4462 = vmatpush.msra.mxu0 %v4421
      %4463 = vmatpush.msra.mxu0 %v4420
      %4464 = vmatpush.msra.mxu0 %v4419
      %4465 = vmatpush.msra.mxu0 %v4418
      %4466 = vmatmul.f32.gmra.mxu0 %v3173
      %v4467 = vpop.f32.mrf.mxu0
      %v4468 = vadd.f32 0.0, %v4467
      %4469 = vmatmul.f32.gmra.mxu0 %v3176
      %v4470 = vpop.f32.mrf.mxu0
      %v4471 = vadd.f32 0.0, %v4470
      %4472 = vdwg.mxu0
      %4473 = vmatpush.msra.mxu0 0.0
      %4474 = vmatpush.msra.mxu0 0.0
      %4475 = vmatpush.msra.mxu0 0.0
      %4476 = vmatpush.msra.mxu0 0.0
      %4477 = vmatpush.msra.mxu0 0.0
      %4478 = vmatpush.msra.mxu0 0.0
      %4479 = vmatpush.msra.mxu0 0.0
      %4480 = vmatpush.msra.mxu0 0.0
      %4481 = vmatpush.msra.mxu0 0.0
      %4482 = vmatpush.msra.mxu0 0.0
      %4483 = vmatpush.msra.mxu0 0.0
      %4484 = vmatpush.msra.mxu0 0.0
      %4485 = vmatpush.msra.mxu0 %v4425
      %4486 = vmatpush.msra.mxu0 %v4424
      %4487 = vmatpush.msra.mxu0 %v4423
      %4488 = vmatpush.msra.mxu0 %v4422
      %4489 = vmatmul.f32.gmra.mxu0 %v3202
      %v4490 = vpop.f32.mrf.mxu0
      %v4491 = vadd.f32 0.0, %v4490
      %4492 = vmatmul.f32.gmra.mxu0 %v3205
      %v4493 = vpop.f32.mrf.mxu0
      %v4494 = vadd.f32 0.0, %v4493
      %4495 = vdwg.mxu0
      %4496 = vmatpush.msra.mxu0 0.0
      %4497 = vmatpush.msra.mxu0 0.0
      %4498 = vmatpush.msra.mxu0 0.0
      %4499 = vmatpush.msra.mxu0 0.0
      %4500 = vmatpush.msra.mxu0 0.0
      %4501 = vmatpush.msra.mxu0 0.0
      %4502 = vmatpush.msra.mxu0 0.0
      %4503 = vmatpush.msra.mxu0 0.0
      %4504 = vmatpush.msra.mxu0 0.0
      %4505 = vmatpush.msra.mxu0 0.0
      %4506 = vmatpush.msra.mxu0 0.0
      %4507 = vmatpush.msra.mxu0 0.0
      %4508 = vmatpush.msra.mxu0 %v4429
      %4509 = vmatpush.msra.mxu0 %v4428
      %4510 = vmatpush.msra.mxu0 %v4427
      %4511 = vmatpush.msra.mxu0 %v4426
      %4512 = vmatmul.f32.gmra.mxu0 %v3231
      %v4513 = vpop.f32.mrf.mxu0
      %v4514 = vadd.f32 0.0, %v4513
      %4515 = vmatmul.f32.gmra.mxu0 %v3234
      %v4516 = vpop.f32.mrf.mxu0
      %v4517 = vadd.f32 0.0, %v4516
      %4518 = vdwg.mxu0
      %4519 = vmatpush.msra.mxu0 0.0
      %4520 = vmatpush.msra.mxu0 0.0
      %4521 = vmatpush.msra.mxu0 0.0
      %4522 = vmatpush.msra.mxu0 0.0
      %4523 = vmatpush.msra.mxu0 0.0
      %4524 = vmatpush.msra.mxu0 0.0
      %4525 = vmatpush.msra.mxu0 0.0
      %4526 = vmatpush.msra.mxu0 0.0
      %4527 = vmatpush.msra.mxu0 0.0
      %4528 = vmatpush.msra.mxu0 0.0
      %4529 = vmatpush.msra.mxu0 0.0
      %4530 = vmatpush.msra.mxu0 0.0
      %4531 = vmatpush.msra.mxu0 %v4433
      %4532 = vmatpush.msra.mxu0 %v4432
      %4533 = vmatpush.msra.mxu0 %v4431
      %4534 = vmatpush.msra.mxu0 %v4430
      %4535 = vmatmul.f32.gmra.mxu0 %v3260
      %v4536 = vpop.f32.mrf.mxu0
      %v4537 = vadd.f32 0.0, %v4536
      %4538 = vmatmul.f32.gmra.mxu0 %v3263
      %v4539 = vpop.f32.mrf.mxu0
      %v4540 = vadd.f32 0.0, %v4539
      %4541 = vdwg.mxu0
      %4542 = vmatpush.msra.mxu0 0.0
      %4543 = vmatpush.msra.mxu0 0.0
      %4544 = vmatpush.msra.mxu0 0.0
      %4545 = vmatpush.msra.mxu0 0.0
      %4546 = vmatpush.msra.mxu0 0.0
      %4547 = vmatpush.msra.mxu0 0.0
      %4548 = vmatpush.msra.mxu0 0.0
      %4549 = vmatpush.msra.mxu0 0.0
      %4550 = vmatpush.msra.mxu0 0.0
      %4551 = vmatpush.msra.mxu0 0.0
      %4552 = vmatpush.msra.mxu0 0.0
      %4553 = vmatpush.msra.mxu0 0.0
      %4554 = vmatpush.msra.mxu0 %v4437
      %4555 = vmatpush.msra.mxu0 %v4436
      %4556 = vmatpush.msra.mxu0 %v4435
      %4557 = vmatpush.msra.mxu0 %v4434
      %4558 = vmatmul.f32.gmra.mxu0 %v3289
      %v4559 = vpop.f32.mrf.mxu0
      %v4560 = vadd.f32 0.0, %v4559
      %4561 = vmatmul.f32.gmra.mxu0 %v3292
      %v4562 = vpop.f32.mrf.mxu0
      %v4563 = vadd.f32 0.0, %v4562
      %4564 = vdwg.mxu0
      %4565 = vmatpush.msra.mxu0 0.0
      %4566 = vmatpush.msra.mxu0 0.0
      %4567 = vmatpush.msra.mxu0 0.0
      %4568 = vmatpush.msra.mxu0 0.0
      %4569 = vmatpush.msra.mxu0 0.0
      %4570 = vmatpush.msra.mxu0 0.0
      %4571 = vmatpush.msra.mxu0 0.0
      %4572 = vmatpush.msra.mxu0 0.0
      %4573 = vmatpush.msra.mxu0 0.0
      %4574 = vmatpush.msra.mxu0 0.0
      %4575 = vmatpush.msra.mxu0 0.0
      %4576 = vmatpush.msra.mxu0 0.0
      %4577 = vmatpush.msra.mxu0 %v4441
      %4578 = vmatpush.msra.mxu0 %v4440
      %4579 = vmatpush.msra.mxu0 %v4439
      %4580 = vmatpush.msra.mxu0 %v4438
      %4581 = vmatmul.f32.gmra.mxu0 %v3318
      %v4582 = vpop.f32.mrf.mxu0
      %v4583 = vadd.f32 0.0, %v4582
      %4584 = vmatmul.f32.gmra.mxu0 %v3321
      %v4585 = vpop.f32.mrf.mxu0
      %v4586 = vadd.f32 0.0, %v4585
      %4587 = vdwg.mxu0
      %4588 = vmatpush.msra.mxu0 0.0
      %4589 = vmatpush.msra.mxu0 0.0
      %4590 = vmatpush.msra.mxu0 0.0
      %4591 = vmatpush.msra.mxu0 0.0
      %4592 = vmatpush.msra.mxu0 0.0
      %4593 = vmatpush.msra.mxu0 0.0
      %4594 = vmatpush.msra.mxu0 0.0
      %4595 = vmatpush.msra.mxu0 0.0
      %4596 = vmatpush.msra.mxu0 0.0
      %4597 = vmatpush.msra.mxu0 0.0
      %4598 = vmatpush.msra.mxu0 0.0
      %4599 = vmatpush.msra.mxu0 0.0
      %4600 = vmatpush.msra.mxu0 %v4445
      %4601 = vmatpush.msra.mxu0 %v4444
      %4602 = vmatpush.msra.mxu0 %v4443
      %4603 = vmatpush.msra.mxu0 %v4442
      %4604 = vmatmul.f32.gmra.mxu0 %v3347
      %v4605 = vpop.f32.mrf.mxu0
      %v4606 = vadd.f32 0.0, %v4605
      %4607 = vmatmul.f32.gmra.mxu0 %v3350
      %v4608 = vpop.f32.mrf.mxu0
      %v4609 = vadd.f32 0.0, %v4608
      %4610 = vdwg.mxu0
      %4611 = vmatpush.msra.mxu0 0.0
      %4612 = vmatpush.msra.mxu0 0.0
      %4613 = vmatpush.msra.mxu0 0.0
      %4614 = vmatpush.msra.mxu0 0.0
      %4615 = vmatpush.msra.mxu0 0.0
      %4616 = vmatpush.msra.mxu0 0.0
      %4617 = vmatpush.msra.mxu0 0.0
      %4618 = vmatpush.msra.mxu0 0.0
      %4619 = vmatpush.msra.mxu0 0.0
      %4620 = vmatpush.msra.mxu0 0.0
      %4621 = vmatpush.msra.mxu0 0.0
      %4622 = vmatpush.msra.mxu0 0.0
      %4623 = vmatpush.msra.mxu0 %v4449
      %4624 = vmatpush.msra.mxu0 %v4448
      %4625 = vmatpush.msra.mxu0 %v4447
      %4626 = vmatpush.msra.mxu0 %v4446
      %4627 = vmatmul.f32.gmra.mxu0 %v3376
      %v4628 = vpop.f32.mrf.mxu0
      %v4629 = vadd.f32 0.0, %v4628
      %4630 = vmatmul.f32.gmra.mxu0 %v3379
      %v4631 = vpop.f32.mrf.mxu0
      %v4632 = vadd.f32 0.0, %v4631
      %4633 = vdwg.mxu0
      %s4634 = scalar_lea.vmem %s272, 768
      %v4635 = vld [vmem:[%s4634] sm:$0xff]
      %v4636 = vld [vmem:[%s4634 + $0x8] sm:$0xff]
      %v4637 = vld [vmem:[%s4634 + $0x10] sm:$0xff]
      %v4638 = vld [vmem:[%s4634 + $0x18] sm:$0xff]
      %v4639 = vld [vmem:[%s4634 + $0x20] sm:$0xff]
      %v4640 = vld [vmem:[%s4634 + $0x28] sm:$0xff]
      %v4641 = vld [vmem:[%s4634 + $0x30] sm:$0xff]
      %v4642 = vld [vmem:[%s4634 + $0x38] sm:$0xff]
      %v4643 = vld [vmem:[%s4634 + $0x40] sm:$0xff]
      %v4644 = vld [vmem:[%s4634 + $0x48] sm:$0xff]
      %v4645 = vld [vmem:[%s4634 + $0x50] sm:$0xff]
      %v4646 = vld [vmem:[%s4634 + $0x58] sm:$0xff]
      %v4647 = vld [vmem:[%s4634 + $0x60] sm:$0xff]
      %v4648 = vld [vmem:[%s4634 + $0x68] sm:$0xff]
      %v4649 = vld [vmem:[%s4634 + $0x70] sm:$0xff]
      %v4650 = vld [vmem:[%s4634 + $0x78] sm:$0xff]
      %v4651 = vsub.f32 %v4635, %v4468
      %v4652 = vsub.f32 %v4636, %v4471
      %v4653 = vsub.f32 %v4637, %v4491
      %v4654 = vsub.f32 %v4638, %v4494
      %v4655 = vsub.f32 %v4639, %v4514
      %v4656 = vsub.f32 %v4640, %v4517
      %v4657 = vsub.f32 %v4641, %v4537
      %v4658 = vsub.f32 %v4642, %v4540
      %v4659 = vsub.f32 %v4643, %v4560
      %v4660 = vsub.f32 %v4644, %v4563
      %v4661 = vsub.f32 %v4645, %v4583
      %v4662 = vsub.f32 %v4646, %v4586
      %v4663 = vsub.f32 %v4647, %v4606
      %v4664 = vsub.f32 %v4648, %v4609
      %v4665 = vsub.f32 %v4649, %v4629
      %v4666 = vsub.f32 %v4650, %v4632
      %v4667 = vand.u32 2147483647, %v4651
      %v4668 = vand.u32 2147483647, %v4652
      %v4669 = vand.u32 2147483647, %v4653
      %v4670 = vand.u32 2147483647, %v4654
      %v4671 = vand.u32 2147483647, %v4655
      %v4672 = vand.u32 2147483647, %v4656
      %v4673 = vand.u32 2147483647, %v4657
      %v4674 = vand.u32 2147483647, %v4658
      %v4675 = vand.u32 2147483647, %v4659
      %v4676 = vand.u32 2147483647, %v4660
      %v4677 = vand.u32 2147483647, %v4661
      %v4678 = vand.u32 2147483647, %v4662
      %v4679 = vand.u32 2147483647, %v4663
      %v4680 = vand.u32 2147483647, %v4664
      %v4681 = vand.u32 2147483647, %v4665
      %v4682 = vand.u32 2147483647, %v4666
      %v4683 = vsel %vm913, %v4667, 0.0
      %v4684 = vsel %vm913, %v4668, 0.0
      %v4685 = vadd.f32 %v4683, %v4684
      %v4686 = vrot.slane %v4685, 4
      %v4687 = vadd.f32 %v4685, %v4686
      %v4688 = vrot.slane %v4687, 2
      %v4689 = vadd.f32 %v4687, %v4688
      %v4690 = vrot.slane %v4689, 1
      %v4691 = vadd.f32 %v4689, %v4690
      %v4692 = vsel %vm913, %v4669, 0.0
      %v4693 = vsel %vm913, %v4670, 0.0
      %v4694 = vadd.f32 %v4692, %v4693
      %v4695 = vrot.slane %v4694, 4
      %v4696 = vadd.f32 %v4694, %v4695
      %v4697 = vrot.slane %v4696, 2
      %v4698 = vadd.f32 %v4696, %v4697
      %v4699 = vrot.slane %v4698, 1
      %v4700 = vadd.f32 %v4698, %v4699
      %v4701 = vsel %vm913, %v4671, 0.0
      %v4702 = vsel %vm913, %v4672, 0.0
      %v4703 = vadd.f32 %v4701, %v4702
      %v4704 = vrot.slane %v4703, 4
      %v4705 = vadd.f32 %v4703, %v4704
      %v4706 = vrot.slane %v4705, 2
      %v4707 = vadd.f32 %v4705, %v4706
      %v4708 = vrot.slane %v4707, 1
      %v4709 = vadd.f32 %v4707, %v4708
      %v4710 = vsel %vm913, %v4673, 0.0
      %v4711 = vsel %vm913, %v4674, 0.0
      %v4712 = vadd.f32 %v4710, %v4711
      %v4713 = vrot.slane %v4712, 4
      %v4714 = vadd.f32 %v4712, %v4713
      %v4715 = vrot.slane %v4714, 2
      %v4716 = vadd.f32 %v4714, %v4715
      %v4717 = vrot.slane %v4716, 1
      %v4718 = vadd.f32 %v4716, %v4717
      %v4719 = vsel %vm913, %v4675, 0.0
      %v4720 = vsel %vm913, %v4676, 0.0
      %v4721 = vadd.f32 %v4719, %v4720
      %v4722 = vrot.slane %v4721, 4
      %v4723 = vadd.f32 %v4721, %v4722
      %v4724 = vrot.slane %v4723, 2
      %v4725 = vadd.f32 %v4723, %v4724
      %v4726 = vrot.slane %v4725, 1
      %v4727 = vadd.f32 %v4725, %v4726
      %v4728 = vsel %vm913, %v4677, 0.0
      %v4729 = vsel %vm913, %v4678, 0.0
      %v4730 = vadd.f32 %v4728, %v4729
      %v4731 = vrot.slane %v4730, 4
      %v4732 = vadd.f32 %v4730, %v4731
      %v4733 = vrot.slane %v4732, 2
      %v4734 = vadd.f32 %v4732, %v4733
      %v4735 = vrot.slane %v4734, 1
      %v4736 = vadd.f32 %v4734, %v4735
      %v4737 = vsel %vm913, %v4679, 0.0
      %v4738 = vsel %vm913, %v4680, 0.0
      %v4739 = vadd.f32 %v4737, %v4738
      %v4740 = vrot.slane %v4739, 4
      %v4741 = vadd.f32 %v4739, %v4740
      %v4742 = vrot.slane %v4741, 2
      %v4743 = vadd.f32 %v4741, %v4742
      %v4744 = vrot.slane %v4743, 1
      %v4745 = vadd.f32 %v4743, %v4744
      %v4746 = vsel %vm913, %v4681, 0.0
      %v4747 = vsel %vm913, %v4682, 0.0
      %v4748 = vadd.f32 %v4746, %v4747
      %v4749 = vrot.slane %v4748, 4
      %v4750 = vadd.f32 %v4748, %v4749
      %v4751 = vrot.slane %v4750, 2
      %v4752 = vadd.f32 %v4750, %v4751
      %v4753 = vrot.slane %v4752, 1
      %v4754 = vadd.f32 %v4752, %v4753
      %v4763 = vsel %vm994, %v4700, %v4691
      %v4764 = vsel %vm996, %v4709, %v4763
      %v4765 = vsel %vm998, %v4718, %v4764
      %v4766 = vsel %vm1000, %v4727, %v4765
      %v4767 = vsel %vm1002, %v4736, %v4766
      %v4768 = vsel %vm1004, %v4745, %v4767
      %v4769 = vsel %vm1006, %v4754, %v4768
      %s4771 = scalar_lea.vmem %s296, 48
      %4772 = vst.msk [vmem:[%s4771] sm:$0xff] %vm913, %v4769
      %v4773 = vadd.f32 %v2879, %v2244
      %v4774 = vsub.f32 %v2246, %v4773
      %v4775 = vmul.f32 %v4774, 1.032258
      %v4776 = vadd.f32 %v4775, -0.5
      %v4777 = vfloor.f32 %v4776
      %v4778 = vsub.f32 %v4776, %v4777
      %v4780 = vrot.slane %v4777, 1
      %v4781 = vrot.slane %v4777, 2
      %v4782 = vrot.slane %v4777, 3
      %v4783 = vrot.slane %v4777, 4
      %v4784 = vrot.slane %v4777, 5
      %v4785 = vrot.slane %v4777, 6
      %v4786 = vrot.slane %v4777, 7
      %v4795 = vrot.slane %v4778, 1
      %v4796 = vrot.slane %v4778, 2
      %v4797 = vrot.slane %v4778, 3
      %v4798 = vrot.slane %v4778, 4
      %v4799 = vrot.slane %v4778, 5
      %v4800 = vrot.slane %v4778, 6
      %v4801 = vrot.slane %v4778, 7
      %v4809 = vperm.slane %v4777, 0
      %v4810 = vperm.slane %v4780, 0
      %v4811 = vperm.slane %v4781, 0
      %v4812 = vperm.slane %v4782, 0
      %v4813 = vperm.slane %v4783, 0
      %v4814 = vperm.slane %v4784, 0
      %v4815 = vperm.slane %v4785, 0
      %v4816 = vperm.slane %v4786, 0
      %vm4825 = vcmp.eq.f32.partialorder %v316, %v4809
      %vm4826 = vcmp.eq.f32.partialorder %v317, %v4809
      %vm4827 = vcmp.eq.f32.partialorder %v318, %v4809
      %vm4828 = vcmp.eq.f32.partialorder %v319, %v4809
      %vm4829 = vcmp.eq.f32.partialorder %v316, %v4810
      %vm4830 = vcmp.eq.f32.partialorder %v317, %v4810
      %vm4831 = vcmp.eq.f32.partialorder %v318, %v4810
      %vm4832 = vcmp.eq.f32.partialorder %v319, %v4810
      %vm4833 = vcmp.eq.f32.partialorder %v316, %v4811
      %vm4834 = vcmp.eq.f32.partialorder %v317, %v4811
      %vm4835 = vcmp.eq.f32.partialorder %v318, %v4811
      %vm4836 = vcmp.eq.f32.partialorder %v319, %v4811
      %vm4837 = vcmp.eq.f32.partialorder %v316, %v4812
      %vm4838 = vcmp.eq.f32.partialorder %v317, %v4812
      %vm4839 = vcmp.eq.f32.partialorder %v318, %v4812
      %vm4840 = vcmp.eq.f32.partialorder %v319, %v4812
      %vm4841 = vcmp.eq.f32.partialorder %v316, %v4813
      %vm4842 = vcmp.eq.f32.partialorder %v317, %v4813
      %vm4843 = vcmp.eq.f32.partialorder %v318, %v4813
      %vm4844 = vcmp.eq.f32.partialorder %v319, %v4813
      %vm4845 = vcmp.eq.f32.partialorder %v316, %v4814
      %vm4846 = vcmp.eq.f32.partialorder %v317, %v4814
      %vm4847 = vcmp.eq.f32.partialorder %v318, %v4814
      %vm4848 = vcmp.eq.f32.partialorder %v319, %v4814
      %vm4849 = vcmp.eq.f32.partialorder %v316, %v4815
      %vm4850 = vcmp.eq.f32.partialorder %v317, %v4815
      %vm4851 = vcmp.eq.f32.partialorder %v318, %v4815
      %vm4852 = vcmp.eq.f32.partialorder %v319, %v4815
      %vm4853 = vcmp.eq.f32.partialorder %v316, %v4816
      %vm4854 = vcmp.eq.f32.partialorder %v317, %v4816
      %vm4855 = vcmp.eq.f32.partialorder %v318, %v4816
      %vm4856 = vcmp.eq.f32.partialorder %v319, %v4816
      %v4857 = vsub.f32 1.0, %v4778
      %v4858 = vsub.f32 1.0, %v4795
      %v4859 = vsub.f32 1.0, %v4796
      %v4860 = vsub.f32 1.0, %v4797
      %v4861 = vsub.f32 1.0, %v4798
      %v4862 = vsub.f32 1.0, %v4799
      %v4863 = vsub.f32 1.0, %v4800
      %v4864 = vsub.f32 1.0, %v4801
      %v4873 = vperm.slane %v4857, 0
      %v4874 = vperm.slane %v4858, 0
      %v4875 = vperm.slane %v4859, 0
      %v4876 = vperm.slane %v4860, 0
      %v4877 = vperm.slane %v4861, 0
      %v4878 = vperm.slane %v4862, 0
      %v4879 = vperm.slane %v4863, 0
      %v4880 = vperm.slane %v4864, 0
      %v4889 = vsel %vm4825, %v4873, 0.0
      %v4890 = vsel %vm4826, %v4873, 0.0
      %v4891 = vsel %vm4827, %v4873, 0.0
      %v4892 = vsel %vm4828, %v4873, 0.0
      %v4893 = vsel %vm4829, %v4874, 0.0
      %v4894 = vsel %vm4830, %v4874, 0.0
      %v4895 = vsel %vm4831, %v4874, 0.0
      %v4896 = vsel %vm4832, %v4874, 0.0
      %v4897 = vsel %vm4833, %v4875, 0.0
      %v4898 = vsel %vm4834, %v4875, 0.0
      %v4899 = vsel %vm4835, %v4875, 0.0
      %v4900 = vsel %vm4836, %v4875, 0.0
      %v4901 = vsel %vm4837, %v4876, 0.0
      %v4902 = vsel %vm4838, %v4876, 0.0
      %v4903 = vsel %vm4839, %v4876, 0.0
      %v4904 = vsel %vm4840, %v4876, 0.0
      %v4905 = vsel %vm4841, %v4877, 0.0
      %v4906 = vsel %vm4842, %v4877, 0.0
      %v4907 = vsel %vm4843, %v4877, 0.0
      %v4908 = vsel %vm4844, %v4877, 0.0
      %v4909 = vsel %vm4845, %v4878, 0.0
      %v4910 = vsel %vm4846, %v4878, 0.0
      %v4911 = vsel %vm4847, %v4878, 0.0
      %v4912 = vsel %vm4848, %v4878, 0.0
      %v4913 = vsel %vm4849, %v4879, 0.0
      %v4914 = vsel %vm4850, %v4879, 0.0
      %v4915 = vsel %vm4851, %v4879, 0.0
      %v4916 = vsel %vm4852, %v4879, 0.0
      %v4917 = vsel %vm4853, %v4880, 0.0
      %v4918 = vsel %vm4854, %v4880, 0.0
      %v4919 = vsel %vm4855, %v4880, 0.0
      %v4920 = vsel %vm4856, %v4880, 0.0
      %v4921 = vadd.f32 %v4777, 1.0
      %v4922 = vadd.f32 %v4780, 1.0
      %v4923 = vadd.f32 %v4781, 1.0
      %v4924 = vadd.f32 %v4782, 1.0
      %v4925 = vadd.f32 %v4783, 1.0
      %v4926 = vadd.f32 %v4784, 1.0
      %v4927 = vadd.f32 %v4785, 1.0
      %v4928 = vadd.f32 %v4786, 1.0
      %v4937 = vperm.slane %v4921, 0
      %v4938 = vperm.slane %v4922, 0
      %v4939 = vperm.slane %v4923, 0
      %v4940 = vperm.slane %v4924, 0
      %v4941 = vperm.slane %v4925, 0
      %v4942 = vperm.slane %v4926, 0
      %v4943 = vperm.slane %v4927, 0
      %v4944 = vperm.slane %v4928, 0
      %vm4953 = vcmp.eq.f32.partialorder %v316, %v4937
      %vm4954 = vcmp.eq.f32.partialorder %v317, %v4937
      %vm4955 = vcmp.eq.f32.partialorder %v318, %v4937
      %vm4956 = vcmp.eq.f32.partialorder %v319, %v4937
      %vm4957 = vcmp.eq.f32.partialorder %v316, %v4938
      %vm4958 = vcmp.eq.f32.partialorder %v317, %v4938
      %vm4959 = vcmp.eq.f32.partialorder %v318, %v4938
      %vm4960 = vcmp.eq.f32.partialorder %v319, %v4938
      %vm4961 = vcmp.eq.f32.partialorder %v316, %v4939
      %vm4962 = vcmp.eq.f32.partialorder %v317, %v4939
      %vm4963 = vcmp.eq.f32.partialorder %v318, %v4939
      %vm4964 = vcmp.eq.f32.partialorder %v319, %v4939
      %vm4965 = vcmp.eq.f32.partialorder %v316, %v4940
      %vm4966 = vcmp.eq.f32.partialorder %v317, %v4940
      %vm4967 = vcmp.eq.f32.partialorder %v318, %v4940
      %vm4968 = vcmp.eq.f32.partialorder %v319, %v4940
      %vm4969 = vcmp.eq.f32.partialorder %v316, %v4941
      %vm4970 = vcmp.eq.f32.partialorder %v317, %v4941
      %vm4971 = vcmp.eq.f32.partialorder %v318, %v4941
      %vm4972 = vcmp.eq.f32.partialorder %v319, %v4941
      %vm4973 = vcmp.eq.f32.partialorder %v316, %v4942
      %vm4974 = vcmp.eq.f32.partialorder %v317, %v4942
      %vm4975 = vcmp.eq.f32.partialorder %v318, %v4942
      %vm4976 = vcmp.eq.f32.partialorder %v319, %v4942
      %vm4977 = vcmp.eq.f32.partialorder %v316, %v4943
      %vm4978 = vcmp.eq.f32.partialorder %v317, %v4943
      %vm4979 = vcmp.eq.f32.partialorder %v318, %v4943
      %vm4980 = vcmp.eq.f32.partialorder %v319, %v4943
      %vm4981 = vcmp.eq.f32.partialorder %v316, %v4944
      %vm4982 = vcmp.eq.f32.partialorder %v317, %v4944
      %vm4983 = vcmp.eq.f32.partialorder %v318, %v4944
      %vm4984 = vcmp.eq.f32.partialorder %v319, %v4944
      %v4985 = vperm.slane %v4778, 0
      %v4986 = vperm.slane %v4795, 0
      %v4987 = vperm.slane %v4796, 0
      %v4988 = vperm.slane %v4797, 0
      %v4989 = vperm.slane %v4798, 0
      %v4990 = vperm.slane %v4799, 0
      %v4991 = vperm.slane %v4800, 0
      %v4992 = vperm.slane %v4801, 0
      %v5001 = vsel %vm4953, %v4985, 0.0
      %v5002 = vsel %vm4954, %v4985, 0.0
      %v5003 = vsel %vm4955, %v4985, 0.0
      %v5004 = vsel %vm4956, %v4985, 0.0
      %v5005 = vsel %vm4957, %v4986, 0.0
      %v5006 = vsel %vm4958, %v4986, 0.0
      %v5007 = vsel %vm4959, %v4986, 0.0
      %v5008 = vsel %vm4960, %v4986, 0.0
      %v5009 = vsel %vm4961, %v4987, 0.0
      %v5010 = vsel %vm4962, %v4987, 0.0
      %v5011 = vsel %vm4963, %v4987, 0.0
      %v5012 = vsel %vm4964, %v4987, 0.0
      %v5013 = vsel %vm4965, %v4988, 0.0
      %v5014 = vsel %vm4966, %v4988, 0.0
      %v5015 = vsel %vm4967, %v4988, 0.0
      %v5016 = vsel %vm4968, %v4988, 0.0
      %v5017 = vsel %vm4969, %v4989, 0.0
      %v5018 = vsel %vm4970, %v4989, 0.0
      %v5019 = vsel %vm4971, %v4989, 0.0
      %v5020 = vsel %vm4972, %v4989, 0.0
      %v5021 = vsel %vm4973, %v4990, 0.0
      %v5022 = vsel %vm4974, %v4990, 0.0
      %v5023 = vsel %vm4975, %v4990, 0.0
      %v5024 = vsel %vm4976, %v4990, 0.0
      %v5025 = vsel %vm4977, %v4991, 0.0
      %v5026 = vsel %vm4978, %v4991, 0.0
      %v5027 = vsel %vm4979, %v4991, 0.0
      %v5028 = vsel %vm4980, %v4991, 0.0
      %v5029 = vsel %vm4981, %v4992, 0.0
      %v5030 = vsel %vm4982, %v4992, 0.0
      %v5031 = vsel %vm4983, %v4992, 0.0
      %v5032 = vsel %vm4984, %v4992, 0.0
      %v5033 = vadd.f32 %v4889, %v5001
      %v5034 = vadd.f32 %v4890, %v5002
      %v5035 = vadd.f32 %v4891, %v5003
      %v5036 = vadd.f32 %v4892, %v5004
      %v5037 = vadd.f32 %v4893, %v5005
      %v5038 = vadd.f32 %v4894, %v5006
      %v5039 = vadd.f32 %v4895, %v5007
      %v5040 = vadd.f32 %v4896, %v5008
      %v5041 = vadd.f32 %v4897, %v5009
      %v5042 = vadd.f32 %v4898, %v5010
      %v5043 = vadd.f32 %v4899, %v5011
      %v5044 = vadd.f32 %v4900, %v5012
      %v5045 = vadd.f32 %v4901, %v5013
      %v5046 = vadd.f32 %v4902, %v5014
      %v5047 = vadd.f32 %v4903, %v5015
      %v5048 = vadd.f32 %v4904, %v5016
      %v5049 = vadd.f32 %v4905, %v5017
      %v5050 = vadd.f32 %v4906, %v5018
      %v5051 = vadd.f32 %v4907, %v5019
      %v5052 = vadd.f32 %v4908, %v5020
      %v5053 = vadd.f32 %v4909, %v5021
      %v5054 = vadd.f32 %v4910, %v5022
      %v5055 = vadd.f32 %v4911, %v5023
      %v5056 = vadd.f32 %v4912, %v5024
      %v5057 = vadd.f32 %v4913, %v5025
      %v5058 = vadd.f32 %v4914, %v5026
      %v5059 = vadd.f32 %v4915, %v5027
      %v5060 = vadd.f32 %v4916, %v5028
      %v5061 = vadd.f32 %v4917, %v5029
      %v5062 = vadd.f32 %v4918, %v5030
      %v5063 = vadd.f32 %v4919, %v5031
      %v5064 = vadd.f32 %v4920, %v5032
      %5065 = vmatpush.msra.mxu0 0.0
      %5066 = vmatpush.msra.mxu0 0.0
      %5067 = vmatpush.msra.mxu0 0.0
      %5068 = vmatpush.msra.mxu0 0.0
      %5069 = vmatpush.msra.mxu0 0.0
      %5070 = vmatpush.msra.mxu0 0.0
      %5071 = vmatpush.msra.mxu0 0.0
      %5072 = vmatpush.msra.mxu0 0.0
      %5073 = vmatpush.msra.mxu0 0.0
      %5074 = vmatpush.msra.mxu0 0.0
      %5075 = vmatpush.msra.mxu0 0.0
      %5076 = vmatpush.msra.mxu0 0.0
      %5077 = vmatpush.msra.mxu0 %v5036
      %5078 = vmatpush.msra.mxu0 %v5035
      %5079 = vmatpush.msra.mxu0 %v5034
      %5080 = vmatpush.msra.mxu0 %v5033
      %5081 = vmatmul.f32.gmra.mxu0 %v3173
      %v5082 = vpop.f32.mrf.mxu0
      %v5083 = vadd.f32 0.0, %v5082
      %5084 = vmatmul.f32.gmra.mxu0 %v3176
      %v5085 = vpop.f32.mrf.mxu0
      %v5086 = vadd.f32 0.0, %v5085
      %5087 = vdwg.mxu0
      %5088 = vmatpush.msra.mxu0 0.0
      %5089 = vmatpush.msra.mxu0 0.0
      %5090 = vmatpush.msra.mxu0 0.0
      %5091 = vmatpush.msra.mxu0 0.0
      %5092 = vmatpush.msra.mxu0 0.0
      %5093 = vmatpush.msra.mxu0 0.0
      %5094 = vmatpush.msra.mxu0 0.0
      %5095 = vmatpush.msra.mxu0 0.0
      %5096 = vmatpush.msra.mxu0 0.0
      %5097 = vmatpush.msra.mxu0 0.0
      %5098 = vmatpush.msra.mxu0 0.0
      %5099 = vmatpush.msra.mxu0 0.0
      %5100 = vmatpush.msra.mxu0 %v5040
      %5101 = vmatpush.msra.mxu0 %v5039
      %5102 = vmatpush.msra.mxu0 %v5038
      %5103 = vmatpush.msra.mxu0 %v5037
      %5104 = vmatmul.f32.gmra.mxu0 %v3202
      %v5105 = vpop.f32.mrf.mxu0
      %v5106 = vadd.f32 0.0, %v5105
      %5107 = vmatmul.f32.gmra.mxu0 %v3205
      %v5108 = vpop.f32.mrf.mxu0
      %v5109 = vadd.f32 0.0, %v5108
      %5110 = vdwg.mxu0
      %5111 = vmatpush.msra.mxu0 0.0
      %5112 = vmatpush.msra.mxu0 0.0
      %5113 = vmatpush.msra.mxu0 0.0
      %5114 = vmatpush.msra.mxu0 0.0
      %5115 = vmatpush.msra.mxu0 0.0
      %5116 = vmatpush.msra.mxu0 0.0
      %5117 = vmatpush.msra.mxu0 0.0
      %5118 = vmatpush.msra.mxu0 0.0
      %5119 = vmatpush.msra.mxu0 0.0
      %5120 = vmatpush.msra.mxu0 0.0
      %5121 = vmatpush.msra.mxu0 0.0
      %5122 = vmatpush.msra.mxu0 0.0
      %5123 = vmatpush.msra.mxu0 %v5044
      %5124 = vmatpush.msra.mxu0 %v5043
      %5125 = vmatpush.msra.mxu0 %v5042
      %5126 = vmatpush.msra.mxu0 %v5041
      %5127 = vmatmul.f32.gmra.mxu0 %v3231
      %v5128 = vpop.f32.mrf.mxu0
      %v5129 = vadd.f32 0.0, %v5128
      %5130 = vmatmul.f32.gmra.mxu0 %v3234
      %v5131 = vpop.f32.mrf.mxu0
      %v5132 = vadd.f32 0.0, %v5131
      %5133 = vdwg.mxu0
      %5134 = vmatpush.msra.mxu0 0.0
      %5135 = vmatpush.msra.mxu0 0.0
      %5136 = vmatpush.msra.mxu0 0.0
      %5137 = vmatpush.msra.mxu0 0.0
      %5138 = vmatpush.msra.mxu0 0.0
      %5139 = vmatpush.msra.mxu0 0.0
      %5140 = vmatpush.msra.mxu0 0.0
      %5141 = vmatpush.msra.mxu0 0.0
      %5142 = vmatpush.msra.mxu0 0.0
      %5143 = vmatpush.msra.mxu0 0.0
      %5144 = vmatpush.msra.mxu0 0.0
      %5145 = vmatpush.msra.mxu0 0.0
      %5146 = vmatpush.msra.mxu0 %v5048
      %5147 = vmatpush.msra.mxu0 %v5047
      %5148 = vmatpush.msra.mxu0 %v5046
      %5149 = vmatpush.msra.mxu0 %v5045
      %5150 = vmatmul.f32.gmra.mxu0 %v3260
      %v5151 = vpop.f32.mrf.mxu0
      %v5152 = vadd.f32 0.0, %v5151
      %5153 = vmatmul.f32.gmra.mxu0 %v3263
      %v5154 = vpop.f32.mrf.mxu0
      %v5155 = vadd.f32 0.0, %v5154
      %5156 = vdwg.mxu0
      %5157 = vmatpush.msra.mxu0 0.0
      %5158 = vmatpush.msra.mxu0 0.0
      %5159 = vmatpush.msra.mxu0 0.0
      %5160 = vmatpush.msra.mxu0 0.0
      %5161 = vmatpush.msra.mxu0 0.0
      %5162 = vmatpush.msra.mxu0 0.0
      %5163 = vmatpush.msra.mxu0 0.0
      %5164 = vmatpush.msra.mxu0 0.0
      %5165 = vmatpush.msra.mxu0 0.0
      %5166 = vmatpush.msra.mxu0 0.0
      %5167 = vmatpush.msra.mxu0 0.0
      %5168 = vmatpush.msra.mxu0 0.0
      %5169 = vmatpush.msra.mxu0 %v5052
      %5170 = vmatpush.msra.mxu0 %v5051
      %5171 = vmatpush.msra.mxu0 %v5050
      %5172 = vmatpush.msra.mxu0 %v5049
      %5173 = vmatmul.f32.gmra.mxu0 %v3289
      %v5174 = vpop.f32.mrf.mxu0
      %v5175 = vadd.f32 0.0, %v5174
      %5176 = vmatmul.f32.gmra.mxu0 %v3292
      %v5177 = vpop.f32.mrf.mxu0
      %v5178 = vadd.f32 0.0, %v5177
      %5179 = vdwg.mxu0
      %5180 = vmatpush.msra.mxu0 0.0
      %5181 = vmatpush.msra.mxu0 0.0
      %5182 = vmatpush.msra.mxu0 0.0
      %5183 = vmatpush.msra.mxu0 0.0
      %5184 = vmatpush.msra.mxu0 0.0
      %5185 = vmatpush.msra.mxu0 0.0
      %5186 = vmatpush.msra.mxu0 0.0
      %5187 = vmatpush.msra.mxu0 0.0
      %5188 = vmatpush.msra.mxu0 0.0
      %5189 = vmatpush.msra.mxu0 0.0
      %5190 = vmatpush.msra.mxu0 0.0
      %5191 = vmatpush.msra.mxu0 0.0
      %5192 = vmatpush.msra.mxu0 %v5056
      %5193 = vmatpush.msra.mxu0 %v5055
      %5194 = vmatpush.msra.mxu0 %v5054
      %5195 = vmatpush.msra.mxu0 %v5053
      %5196 = vmatmul.f32.gmra.mxu0 %v3318
      %v5197 = vpop.f32.mrf.mxu0
      %v5198 = vadd.f32 0.0, %v5197
      %5199 = vmatmul.f32.gmra.mxu0 %v3321
      %v5200 = vpop.f32.mrf.mxu0
      %v5201 = vadd.f32 0.0, %v5200
      %5202 = vdwg.mxu0
      %5203 = vmatpush.msra.mxu0 0.0
      %5204 = vmatpush.msra.mxu0 0.0
      %5205 = vmatpush.msra.mxu0 0.0
      %5206 = vmatpush.msra.mxu0 0.0
      %5207 = vmatpush.msra.mxu0 0.0
      %5208 = vmatpush.msra.mxu0 0.0
      %5209 = vmatpush.msra.mxu0 0.0
      %5210 = vmatpush.msra.mxu0 0.0
      %5211 = vmatpush.msra.mxu0 0.0
      %5212 = vmatpush.msra.mxu0 0.0
      %5213 = vmatpush.msra.mxu0 0.0
      %5214 = vmatpush.msra.mxu0 0.0
      %5215 = vmatpush.msra.mxu0 %v5060
      %5216 = vmatpush.msra.mxu0 %v5059
      %5217 = vmatpush.msra.mxu0 %v5058
      %5218 = vmatpush.msra.mxu0 %v5057
      %5219 = vmatmul.f32.gmra.mxu0 %v3347
      %v5220 = vpop.f32.mrf.mxu0
      %v5221 = vadd.f32 0.0, %v5220
      %5222 = vmatmul.f32.gmra.mxu0 %v3350
      %v5223 = vpop.f32.mrf.mxu0
      %v5224 = vadd.f32 0.0, %v5223
      %5225 = vdwg.mxu0
      %5226 = vmatpush.msra.mxu0 0.0
      %5227 = vmatpush.msra.mxu0 0.0
      %5228 = vmatpush.msra.mxu0 0.0
      %5229 = vmatpush.msra.mxu0 0.0
      %5230 = vmatpush.msra.mxu0 0.0
      %5231 = vmatpush.msra.mxu0 0.0
      %5232 = vmatpush.msra.mxu0 0.0
      %5233 = vmatpush.msra.mxu0 0.0
      %5234 = vmatpush.msra.mxu0 0.0
      %5235 = vmatpush.msra.mxu0 0.0
      %5236 = vmatpush.msra.mxu0 0.0
      %5237 = vmatpush.msra.mxu0 0.0
      %5238 = vmatpush.msra.mxu0 %v5064
      %5239 = vmatpush.msra.mxu0 %v5063
      %5240 = vmatpush.msra.mxu0 %v5062
      %5241 = vmatpush.msra.mxu0 %v5061
      %5242 = vmatmul.f32.gmra.mxu0 %v3376
      %v5243 = vpop.f32.mrf.mxu0
      %v5244 = vadd.f32 0.0, %v5243
      %5245 = vmatmul.f32.gmra.mxu0 %v3379
      %v5246 = vpop.f32.mrf.mxu0
      %v5247 = vadd.f32 0.0, %v5246
      %5248 = vdwg.mxu0
      %s5249 = scalar_lea.vmem %s272, 896
      %v5250 = vld [vmem:[%s5249] sm:$0xff]
      %v5251 = vld [vmem:[%s5249 + $0x8] sm:$0xff]
      %v5252 = vld [vmem:[%s5249 + $0x10] sm:$0xff]
      %v5253 = vld [vmem:[%s5249 + $0x18] sm:$0xff]
      %v5254 = vld [vmem:[%s5249 + $0x20] sm:$0xff]
      %v5255 = vld [vmem:[%s5249 + $0x28] sm:$0xff]
      %v5256 = vld [vmem:[%s5249 + $0x30] sm:$0xff]
      %v5257 = vld [vmem:[%s5249 + $0x38] sm:$0xff]
      %v5258 = vld [vmem:[%s5249 + $0x40] sm:$0xff]
      %v5259 = vld [vmem:[%s5249 + $0x48] sm:$0xff]
      %v5260 = vld [vmem:[%s5249 + $0x50] sm:$0xff]
      %v5261 = vld [vmem:[%s5249 + $0x58] sm:$0xff]
      %v5262 = vld [vmem:[%s5249 + $0x60] sm:$0xff]
      %v5263 = vld [vmem:[%s5249 + $0x68] sm:$0xff]
      %v5264 = vld [vmem:[%s5249 + $0x70] sm:$0xff]
      %v5265 = vld [vmem:[%s5249 + $0x78] sm:$0xff]
      %v5266 = vsub.f32 %v5250, %v5083
      %v5267 = vsub.f32 %v5251, %v5086
      %v5268 = vsub.f32 %v5252, %v5106
      %v5269 = vsub.f32 %v5253, %v5109
      %v5270 = vsub.f32 %v5254, %v5129
      %v5271 = vsub.f32 %v5255, %v5132
      %v5272 = vsub.f32 %v5256, %v5152
      %v5273 = vsub.f32 %v5257, %v5155
      %v5274 = vsub.f32 %v5258, %v5175
      %v5275 = vsub.f32 %v5259, %v5178
      %v5276 = vsub.f32 %v5260, %v5198
      %v5277 = vsub.f32 %v5261, %v5201
      %v5278 = vsub.f32 %v5262, %v5221
      %v5279 = vsub.f32 %v5263, %v5224
      %v5280 = vsub.f32 %v5264, %v5244
      %v5281 = vsub.f32 %v5265, %v5247
      %v5282 = vand.u32 2147483647, %v5266
      %v5283 = vand.u32 2147483647, %v5267
      %v5284 = vand.u32 2147483647, %v5268
      %v5285 = vand.u32 2147483647, %v5269
      %v5286 = vand.u32 2147483647, %v5270
      %v5287 = vand.u32 2147483647, %v5271
      %v5288 = vand.u32 2147483647, %v5272
      %v5289 = vand.u32 2147483647, %v5273
      %v5290 = vand.u32 2147483647, %v5274
      %v5291 = vand.u32 2147483647, %v5275
      %v5292 = vand.u32 2147483647, %v5276
      %v5293 = vand.u32 2147483647, %v5277
      %v5294 = vand.u32 2147483647, %v5278
      %v5295 = vand.u32 2147483647, %v5279
      %v5296 = vand.u32 2147483647, %v5280
      %v5297 = vand.u32 2147483647, %v5281
      %v5298 = vsel %vm913, %v5282, 0.0
      %v5299 = vsel %vm913, %v5283, 0.0
      %v5300 = vadd.f32 %v5298, %v5299
      %v5301 = vrot.slane %v5300, 4
      %v5302 = vadd.f32 %v5300, %v5301
      %v5303 = vrot.slane %v5302, 2
      %v5304 = vadd.f32 %v5302, %v5303
      %v5305 = vrot.slane %v5304, 1
      %v5306 = vadd.f32 %v5304, %v5305
      %v5307 = vsel %vm913, %v5284, 0.0
      %v5308 = vsel %vm913, %v5285, 0.0
      %v5309 = vadd.f32 %v5307, %v5308
      %v5310 = vrot.slane %v5309, 4
      %v5311 = vadd.f32 %v5309, %v5310
      %v5312 = vrot.slane %v5311, 2
      %v5313 = vadd.f32 %v5311, %v5312
      %v5314 = vrot.slane %v5313, 1
      %v5315 = vadd.f32 %v5313, %v5314
      %v5316 = vsel %vm913, %v5286, 0.0
      %v5317 = vsel %vm913, %v5287, 0.0
      %v5318 = vadd.f32 %v5316, %v5317
      %v5319 = vrot.slane %v5318, 4
      %v5320 = vadd.f32 %v5318, %v5319
      %v5321 = vrot.slane %v5320, 2
      %v5322 = vadd.f32 %v5320, %v5321
      %v5323 = vrot.slane %v5322, 1
      %v5324 = vadd.f32 %v5322, %v5323
      %v5325 = vsel %vm913, %v5288, 0.0
      %v5326 = vsel %vm913, %v5289, 0.0
      %v5327 = vadd.f32 %v5325, %v5326
      %v5328 = vrot.slane %v5327, 4
      %v5329 = vadd.f32 %v5327, %v5328
      %v5330 = vrot.slane %v5329, 2
      %v5331 = vadd.f32 %v5329, %v5330
      %v5332 = vrot.slane %v5331, 1
      %v5333 = vadd.f32 %v5331, %v5332
      %v5334 = vsel %vm913, %v5290, 0.0
      %v5335 = vsel %vm913, %v5291, 0.0
      %v5336 = vadd.f32 %v5334, %v5335
      %v5337 = vrot.slane %v5336, 4
      %v5338 = vadd.f32 %v5336, %v5337
      %v5339 = vrot.slane %v5338, 2
      %v5340 = vadd.f32 %v5338, %v5339
      %v5341 = vrot.slane %v5340, 1
      %v5342 = vadd.f32 %v5340, %v5341
      %v5343 = vsel %vm913, %v5292, 0.0
      %v5344 = vsel %vm913, %v5293, 0.0
      %v5345 = vadd.f32 %v5343, %v5344
      %v5346 = vrot.slane %v5345, 4
      %v5347 = vadd.f32 %v5345, %v5346
      %v5348 = vrot.slane %v5347, 2
      %v5349 = vadd.f32 %v5347, %v5348
      %v5350 = vrot.slane %v5349, 1
      %v5351 = vadd.f32 %v5349, %v5350
      %v5352 = vsel %vm913, %v5294, 0.0
      %v5353 = vsel %vm913, %v5295, 0.0
      %v5354 = vadd.f32 %v5352, %v5353
      %v5355 = vrot.slane %v5354, 4
      %v5356 = vadd.f32 %v5354, %v5355
      %v5357 = vrot.slane %v5356, 2
      %v5358 = vadd.f32 %v5356, %v5357
      %v5359 = vrot.slane %v5358, 1
      %v5360 = vadd.f32 %v5358, %v5359
      %v5361 = vsel %vm913, %v5296, 0.0
      %v5362 = vsel %vm913, %v5297, 0.0
      %v5363 = vadd.f32 %v5361, %v5362
      %v5364 = vrot.slane %v5363, 4
      %v5365 = vadd.f32 %v5363, %v5364
      %v5366 = vrot.slane %v5365, 2
      %v5367 = vadd.f32 %v5365, %v5366
      %v5368 = vrot.slane %v5367, 1
      %v5369 = vadd.f32 %v5367, %v5368
      %v5378 = vsel %vm994, %v5315, %v5306
      %v5379 = vsel %vm996, %v5324, %v5378
      %v5380 = vsel %vm998, %v5333, %v5379
      %v5381 = vsel %vm1000, %v5342, %v5380
      %v5382 = vsel %vm1002, %v5351, %v5381
      %v5383 = vsel %vm1004, %v5360, %v5382
      %v5384 = vsel %vm1006, %v5369, %v5383
      %s5386 = scalar_lea.vmem %s296, 56
      %5387 = vst.msk [vmem:[%s5386] sm:$0xff] %vm913, %v5384
      %s5388 = scalar_lea.vmem %s283, 256
      %v5389 = vld [vmem:[%s5388] sm:$0xff]
      %v5390 = vld [vmem:[%s5388 + $0x8] sm:$0xff]
      %v5391 = vld [vmem:[%s5388 + $0x10] sm:$0xff]
      %v5392 = vld [vmem:[%s5388 + $0x18] sm:$0xff]
      %v5393 = vld [vmem:[%s5388 + $0x20] sm:$0xff]
      %v5394 = vld [vmem:[%s5388 + $0x28] sm:$0xff]
      %v5395 = vld [vmem:[%s5388 + $0x30] sm:$0xff]
      %v5396 = vld [vmem:[%s5388 + $0x38] sm:$0xff]
      %v5397 = vld [vmem:[%s5388 + $0x40] sm:$0xff]
      %v5398 = vld [vmem:[%s5388 + $0x48] sm:$0xff]
      %v5399 = vld [vmem:[%s5388 + $0x50] sm:$0xff]
      %v5400 = vld [vmem:[%s5388 + $0x58] sm:$0xff]
      %v5401 = vld [vmem:[%s5388 + $0x60] sm:$0xff]
      %v5402 = vld [vmem:[%s5388 + $0x68] sm:$0xff]
      %v5403 = vld [vmem:[%s5388 + $0x70] sm:$0xff]
      %v5404 = vld [vmem:[%s5388 + $0x78] sm:$0xff]
      %v5405 = vmul.f32 %v302, 0.5
      %v5406 = vadd.f32 %v306, %v5405
      %v5407 = vadd.f32 %v5406, %v338
      %v5408 = vsub.f32 %v340, %v5407
      %v5409 = vmul.f32 %v5408, 1.032258
      %v5410 = vadd.f32 %v5409, -0.5
      %v5411 = vfloor.f32 %v5410
      %v5412 = vsub.f32 %v5410, %v5411
      %v5414 = vrot.slane %v5411, 1
      %v5415 = vrot.slane %v5411, 2
      %v5416 = vrot.slane %v5411, 3
      %v5417 = vrot.slane %v5411, 4
      %v5418 = vrot.slane %v5411, 5
      %v5419 = vrot.slane %v5411, 6
      %v5420 = vrot.slane %v5411, 7
      %v5429 = vrot.slane %v5412, 1
      %v5430 = vrot.slane %v5412, 2
      %v5431 = vrot.slane %v5412, 3
      %v5432 = vrot.slane %v5412, 4
      %v5433 = vrot.slane %v5412, 5
      %v5434 = vrot.slane %v5412, 6
      %v5435 = vrot.slane %v5412, 7
      %v5443 = vperm.slane %v5411, 0
      %v5444 = vperm.slane %v5414, 0
      %v5445 = vperm.slane %v5415, 0
      %v5446 = vperm.slane %v5416, 0
      %v5447 = vperm.slane %v5417, 0
      %v5448 = vperm.slane %v5418, 0
      %v5449 = vperm.slane %v5419, 0
      %v5450 = vperm.slane %v5420, 0
      %vm5459 = vcmp.eq.f32.partialorder %v316, %v5443
      %vm5460 = vcmp.eq.f32.partialorder %v317, %v5443
      %vm5461 = vcmp.eq.f32.partialorder %v318, %v5443
      %vm5462 = vcmp.eq.f32.partialorder %v319, %v5443
      %vm5463 = vcmp.eq.f32.partialorder %v316, %v5444
      %vm5464 = vcmp.eq.f32.partialorder %v317, %v5444
      %vm5465 = vcmp.eq.f32.partialorder %v318, %v5444
      %vm5466 = vcmp.eq.f32.partialorder %v319, %v5444
      %vm5467 = vcmp.eq.f32.partialorder %v316, %v5445
      %vm5468 = vcmp.eq.f32.partialorder %v317, %v5445
      %vm5469 = vcmp.eq.f32.partialorder %v318, %v5445
      %vm5470 = vcmp.eq.f32.partialorder %v319, %v5445
      %vm5471 = vcmp.eq.f32.partialorder %v316, %v5446
      %vm5472 = vcmp.eq.f32.partialorder %v317, %v5446
      %vm5473 = vcmp.eq.f32.partialorder %v318, %v5446
      %vm5474 = vcmp.eq.f32.partialorder %v319, %v5446
      %vm5475 = vcmp.eq.f32.partialorder %v316, %v5447
      %vm5476 = vcmp.eq.f32.partialorder %v317, %v5447
      %vm5477 = vcmp.eq.f32.partialorder %v318, %v5447
      %vm5478 = vcmp.eq.f32.partialorder %v319, %v5447
      %vm5479 = vcmp.eq.f32.partialorder %v316, %v5448
      %vm5480 = vcmp.eq.f32.partialorder %v317, %v5448
      %vm5481 = vcmp.eq.f32.partialorder %v318, %v5448
      %vm5482 = vcmp.eq.f32.partialorder %v319, %v5448
      %vm5483 = vcmp.eq.f32.partialorder %v316, %v5449
      %vm5484 = vcmp.eq.f32.partialorder %v317, %v5449
      %vm5485 = vcmp.eq.f32.partialorder %v318, %v5449
      %vm5486 = vcmp.eq.f32.partialorder %v319, %v5449
      %vm5487 = vcmp.eq.f32.partialorder %v316, %v5450
      %vm5488 = vcmp.eq.f32.partialorder %v317, %v5450
      %vm5489 = vcmp.eq.f32.partialorder %v318, %v5450
      %vm5490 = vcmp.eq.f32.partialorder %v319, %v5450
      %v5491 = vsub.f32 1.0, %v5412
      %v5492 = vsub.f32 1.0, %v5429
      %v5493 = vsub.f32 1.0, %v5430
      %v5494 = vsub.f32 1.0, %v5431
      %v5495 = vsub.f32 1.0, %v5432
      %v5496 = vsub.f32 1.0, %v5433
      %v5497 = vsub.f32 1.0, %v5434
      %v5498 = vsub.f32 1.0, %v5435
      %v5507 = vperm.slane %v5491, 0
      %v5508 = vperm.slane %v5492, 0
      %v5509 = vperm.slane %v5493, 0
      %v5510 = vperm.slane %v5494, 0
      %v5511 = vperm.slane %v5495, 0
      %v5512 = vperm.slane %v5496, 0
      %v5513 = vperm.slane %v5497, 0
      %v5514 = vperm.slane %v5498, 0
      %v5523 = vsel %vm5459, %v5507, 0.0
      %v5524 = vsel %vm5460, %v5507, 0.0
      %v5525 = vsel %vm5461, %v5507, 0.0
      %v5526 = vsel %vm5462, %v5507, 0.0
      %v5527 = vsel %vm5463, %v5508, 0.0
      %v5528 = vsel %vm5464, %v5508, 0.0
      %v5529 = vsel %vm5465, %v5508, 0.0
      %v5530 = vsel %vm5466, %v5508, 0.0
      %v5531 = vsel %vm5467, %v5509, 0.0
      %v5532 = vsel %vm5468, %v5509, 0.0
      %v5533 = vsel %vm5469, %v5509, 0.0
      %v5534 = vsel %vm5470, %v5509, 0.0
      %v5535 = vsel %vm5471, %v5510, 0.0
      %v5536 = vsel %vm5472, %v5510, 0.0
      %v5537 = vsel %vm5473, %v5510, 0.0
      %v5538 = vsel %vm5474, %v5510, 0.0
      %v5539 = vsel %vm5475, %v5511, 0.0
      %v5540 = vsel %vm5476, %v5511, 0.0
      %v5541 = vsel %vm5477, %v5511, 0.0
      %v5542 = vsel %vm5478, %v5511, 0.0
      %v5543 = vsel %vm5479, %v5512, 0.0
      %v5544 = vsel %vm5480, %v5512, 0.0
      %v5545 = vsel %vm5481, %v5512, 0.0
      %v5546 = vsel %vm5482, %v5512, 0.0
      %v5547 = vsel %vm5483, %v5513, 0.0
      %v5548 = vsel %vm5484, %v5513, 0.0
      %v5549 = vsel %vm5485, %v5513, 0.0
      %v5550 = vsel %vm5486, %v5513, 0.0
      %v5551 = vsel %vm5487, %v5514, 0.0
      %v5552 = vsel %vm5488, %v5514, 0.0
      %v5553 = vsel %vm5489, %v5514, 0.0
      %v5554 = vsel %vm5490, %v5514, 0.0
      %v5555 = vadd.f32 %v5411, 1.0
      %v5556 = vadd.f32 %v5414, 1.0
      %v5557 = vadd.f32 %v5415, 1.0
      %v5558 = vadd.f32 %v5416, 1.0
      %v5559 = vadd.f32 %v5417, 1.0
      %v5560 = vadd.f32 %v5418, 1.0
      %v5561 = vadd.f32 %v5419, 1.0
      %v5562 = vadd.f32 %v5420, 1.0
      %v5571 = vperm.slane %v5555, 0
      %v5572 = vperm.slane %v5556, 0
      %v5573 = vperm.slane %v5557, 0
      %v5574 = vperm.slane %v5558, 0
      %v5575 = vperm.slane %v5559, 0
      %v5576 = vperm.slane %v5560, 0
      %v5577 = vperm.slane %v5561, 0
      %v5578 = vperm.slane %v5562, 0
      %vm5587 = vcmp.eq.f32.partialorder %v316, %v5571
      %vm5588 = vcmp.eq.f32.partialorder %v317, %v5571
      %vm5589 = vcmp.eq.f32.partialorder %v318, %v5571
      %vm5590 = vcmp.eq.f32.partialorder %v319, %v5571
      %vm5591 = vcmp.eq.f32.partialorder %v316, %v5572
      %vm5592 = vcmp.eq.f32.partialorder %v317, %v5572
      %vm5593 = vcmp.eq.f32.partialorder %v318, %v5572
      %vm5594 = vcmp.eq.f32.partialorder %v319, %v5572
      %vm5595 = vcmp.eq.f32.partialorder %v316, %v5573
      %vm5596 = vcmp.eq.f32.partialorder %v317, %v5573
      %vm5597 = vcmp.eq.f32.partialorder %v318, %v5573
      %vm5598 = vcmp.eq.f32.partialorder %v319, %v5573
      %vm5599 = vcmp.eq.f32.partialorder %v316, %v5574
      %vm5600 = vcmp.eq.f32.partialorder %v317, %v5574
      %vm5601 = vcmp.eq.f32.partialorder %v318, %v5574
      %vm5602 = vcmp.eq.f32.partialorder %v319, %v5574
      %vm5603 = vcmp.eq.f32.partialorder %v316, %v5575
      %vm5604 = vcmp.eq.f32.partialorder %v317, %v5575
      %vm5605 = vcmp.eq.f32.partialorder %v318, %v5575
      %vm5606 = vcmp.eq.f32.partialorder %v319, %v5575
      %vm5607 = vcmp.eq.f32.partialorder %v316, %v5576
      %vm5608 = vcmp.eq.f32.partialorder %v317, %v5576
      %vm5609 = vcmp.eq.f32.partialorder %v318, %v5576
      %vm5610 = vcmp.eq.f32.partialorder %v319, %v5576
      %vm5611 = vcmp.eq.f32.partialorder %v316, %v5577
      %vm5612 = vcmp.eq.f32.partialorder %v317, %v5577
      %vm5613 = vcmp.eq.f32.partialorder %v318, %v5577
      %vm5614 = vcmp.eq.f32.partialorder %v319, %v5577
      %vm5615 = vcmp.eq.f32.partialorder %v316, %v5578
      %vm5616 = vcmp.eq.f32.partialorder %v317, %v5578
      %vm5617 = vcmp.eq.f32.partialorder %v318, %v5578
      %vm5618 = vcmp.eq.f32.partialorder %v319, %v5578
      %v5619 = vperm.slane %v5412, 0
      %v5620 = vperm.slane %v5429, 0
      %v5621 = vperm.slane %v5430, 0
      %v5622 = vperm.slane %v5431, 0
      %v5623 = vperm.slane %v5432, 0
      %v5624 = vperm.slane %v5433, 0
      %v5625 = vperm.slane %v5434, 0
      %v5626 = vperm.slane %v5435, 0
      %v5635 = vsel %vm5587, %v5619, 0.0
      %v5636 = vsel %vm5588, %v5619, 0.0
      %v5637 = vsel %vm5589, %v5619, 0.0
      %v5638 = vsel %vm5590, %v5619, 0.0
      %v5639 = vsel %vm5591, %v5620, 0.0
      %v5640 = vsel %vm5592, %v5620, 0.0
      %v5641 = vsel %vm5593, %v5620, 0.0
      %v5642 = vsel %vm5594, %v5620, 0.0
      %v5643 = vsel %vm5595, %v5621, 0.0
      %v5644 = vsel %vm5596, %v5621, 0.0
      %v5645 = vsel %vm5597, %v5621, 0.0
      %v5646 = vsel %vm5598, %v5621, 0.0
      %v5647 = vsel %vm5599, %v5622, 0.0
      %v5648 = vsel %vm5600, %v5622, 0.0
      %v5649 = vsel %vm5601, %v5622, 0.0
      %v5650 = vsel %vm5602, %v5622, 0.0
      %v5651 = vsel %vm5603, %v5623, 0.0
      %v5652 = vsel %vm5604, %v5623, 0.0
      %v5653 = vsel %vm5605, %v5623, 0.0
      %v5654 = vsel %vm5606, %v5623, 0.0
      %v5655 = vsel %vm5607, %v5624, 0.0
      %v5656 = vsel %vm5608, %v5624, 0.0
      %v5657 = vsel %vm5609, %v5624, 0.0
      %v5658 = vsel %vm5610, %v5624, 0.0
      %v5659 = vsel %vm5611, %v5625, 0.0
      %v5660 = vsel %vm5612, %v5625, 0.0
      %v5661 = vsel %vm5613, %v5625, 0.0
      %v5662 = vsel %vm5614, %v5625, 0.0
      %v5663 = vsel %vm5615, %v5626, 0.0
      %v5664 = vsel %vm5616, %v5626, 0.0
      %v5665 = vsel %vm5617, %v5626, 0.0
      %v5666 = vsel %vm5618, %v5626, 0.0
      %v5667 = vadd.f32 %v5523, %v5635
      %v5668 = vadd.f32 %v5524, %v5636
      %v5669 = vadd.f32 %v5525, %v5637
      %v5670 = vadd.f32 %v5526, %v5638
      %v5671 = vadd.f32 %v5527, %v5639
      %v5672 = vadd.f32 %v5528, %v5640
      %v5673 = vadd.f32 %v5529, %v5641
      %v5674 = vadd.f32 %v5530, %v5642
      %v5675 = vadd.f32 %v5531, %v5643
      %v5676 = vadd.f32 %v5532, %v5644
      %v5677 = vadd.f32 %v5533, %v5645
      %v5678 = vadd.f32 %v5534, %v5646
      %v5679 = vadd.f32 %v5535, %v5647
      %v5680 = vadd.f32 %v5536, %v5648
      %v5681 = vadd.f32 %v5537, %v5649
      %v5682 = vadd.f32 %v5538, %v5650
      %v5683 = vadd.f32 %v5539, %v5651
      %v5684 = vadd.f32 %v5540, %v5652
      %v5685 = vadd.f32 %v5541, %v5653
      %v5686 = vadd.f32 %v5542, %v5654
      %v5687 = vadd.f32 %v5543, %v5655
      %v5688 = vadd.f32 %v5544, %v5656
      %v5689 = vadd.f32 %v5545, %v5657
      %v5690 = vadd.f32 %v5546, %v5658
      %v5691 = vadd.f32 %v5547, %v5659
      %v5692 = vadd.f32 %v5548, %v5660
      %v5693 = vadd.f32 %v5549, %v5661
      %v5694 = vadd.f32 %v5550, %v5662
      %v5695 = vadd.f32 %v5551, %v5663
      %v5696 = vadd.f32 %v5552, %v5664
      %v5697 = vadd.f32 %v5553, %v5665
      %v5698 = vadd.f32 %v5554, %v5666
      %v5700 = vsel %vm632, %v5389, 0
      %v5703 = vsel %vm632, %v5390, 0
      %5705 = vmatpush.msra.mxu0 0.0
      %5706 = vmatpush.msra.mxu0 0.0
      %5707 = vmatpush.msra.mxu0 0.0
      %5708 = vmatpush.msra.mxu0 0.0
      %5709 = vmatpush.msra.mxu0 0.0
      %5710 = vmatpush.msra.mxu0 0.0
      %5711 = vmatpush.msra.mxu0 0.0
      %5712 = vmatpush.msra.mxu0 0.0
      %5713 = vmatpush.msra.mxu0 0.0
      %5714 = vmatpush.msra.mxu0 0.0
      %5715 = vmatpush.msra.mxu0 0.0
      %5716 = vmatpush.msra.mxu0 0.0
      %5717 = vmatpush.msra.mxu0 %v5670
      %5718 = vmatpush.msra.mxu0 %v5669
      %5719 = vmatpush.msra.mxu0 %v5668
      %5720 = vmatpush.msra.mxu0 %v5667
      %5721 = vmatmul.f32.gmra.mxu0 %v5700
      %v5722 = vpop.f32.mrf.mxu0
      %v5723 = vadd.f32 0.0, %v5722
      %5724 = vmatmul.f32.gmra.mxu0 %v5703
      %v5725 = vpop.f32.mrf.mxu0
      %v5726 = vadd.f32 0.0, %v5725
      %5727 = vdwg.mxu0
      %v5729 = vsel %vm632, %v5391, 0
      %v5732 = vsel %vm632, %v5392, 0
      %5734 = vmatpush.msra.mxu0 0.0
      %5735 = vmatpush.msra.mxu0 0.0
      %5736 = vmatpush.msra.mxu0 0.0
      %5737 = vmatpush.msra.mxu0 0.0
      %5738 = vmatpush.msra.mxu0 0.0
      %5739 = vmatpush.msra.mxu0 0.0
      %5740 = vmatpush.msra.mxu0 0.0
      %5741 = vmatpush.msra.mxu0 0.0
      %5742 = vmatpush.msra.mxu0 0.0
      %5743 = vmatpush.msra.mxu0 0.0
      %5744 = vmatpush.msra.mxu0 0.0
      %5745 = vmatpush.msra.mxu0 0.0
      %5746 = vmatpush.msra.mxu0 %v5674
      %5747 = vmatpush.msra.mxu0 %v5673
      %5748 = vmatpush.msra.mxu0 %v5672
      %5749 = vmatpush.msra.mxu0 %v5671
      %5750 = vmatmul.f32.gmra.mxu0 %v5729
      %v5751 = vpop.f32.mrf.mxu0
      %v5752 = vadd.f32 0.0, %v5751
      %5753 = vmatmul.f32.gmra.mxu0 %v5732
      %v5754 = vpop.f32.mrf.mxu0
      %v5755 = vadd.f32 0.0, %v5754
      %5756 = vdwg.mxu0
      %v5758 = vsel %vm632, %v5393, 0
      %v5761 = vsel %vm632, %v5394, 0
      %5763 = vmatpush.msra.mxu0 0.0
      %5764 = vmatpush.msra.mxu0 0.0
      %5765 = vmatpush.msra.mxu0 0.0
      %5766 = vmatpush.msra.mxu0 0.0
      %5767 = vmatpush.msra.mxu0 0.0
      %5768 = vmatpush.msra.mxu0 0.0
      %5769 = vmatpush.msra.mxu0 0.0
      %5770 = vmatpush.msra.mxu0 0.0
      %5771 = vmatpush.msra.mxu0 0.0
      %5772 = vmatpush.msra.mxu0 0.0
      %5773 = vmatpush.msra.mxu0 0.0
      %5774 = vmatpush.msra.mxu0 0.0
      %5775 = vmatpush.msra.mxu0 %v5678
      %5776 = vmatpush.msra.mxu0 %v5677
      %5777 = vmatpush.msra.mxu0 %v5676
      %5778 = vmatpush.msra.mxu0 %v5675
      %5779 = vmatmul.f32.gmra.mxu0 %v5758
      %v5780 = vpop.f32.mrf.mxu0
      %v5781 = vadd.f32 0.0, %v5780
      %5782 = vmatmul.f32.gmra.mxu0 %v5761
      %v5783 = vpop.f32.mrf.mxu0
      %v5784 = vadd.f32 0.0, %v5783
      %5785 = vdwg.mxu0
      %v5787 = vsel %vm632, %v5395, 0
      %v5790 = vsel %vm632, %v5396, 0
      %5792 = vmatpush.msra.mxu0 0.0
      %5793 = vmatpush.msra.mxu0 0.0
      %5794 = vmatpush.msra.mxu0 0.0
      %5795 = vmatpush.msra.mxu0 0.0
      %5796 = vmatpush.msra.mxu0 0.0
      %5797 = vmatpush.msra.mxu0 0.0
      %5798 = vmatpush.msra.mxu0 0.0
      %5799 = vmatpush.msra.mxu0 0.0
      %5800 = vmatpush.msra.mxu0 0.0
      %5801 = vmatpush.msra.mxu0 0.0
      %5802 = vmatpush.msra.mxu0 0.0
      %5803 = vmatpush.msra.mxu0 0.0
      %5804 = vmatpush.msra.mxu0 %v5682
      %5805 = vmatpush.msra.mxu0 %v5681
      %5806 = vmatpush.msra.mxu0 %v5680
      %5807 = vmatpush.msra.mxu0 %v5679
      %5808 = vmatmul.f32.gmra.mxu0 %v5787
      %v5809 = vpop.f32.mrf.mxu0
      %v5810 = vadd.f32 0.0, %v5809
      %5811 = vmatmul.f32.gmra.mxu0 %v5790
      %v5812 = vpop.f32.mrf.mxu0
      %v5813 = vadd.f32 0.0, %v5812
      %5814 = vdwg.mxu0
      %v5816 = vsel %vm632, %v5397, 0
      %v5819 = vsel %vm632, %v5398, 0
      %5821 = vmatpush.msra.mxu0 0.0
      %5822 = vmatpush.msra.mxu0 0.0
      %5823 = vmatpush.msra.mxu0 0.0
      %5824 = vmatpush.msra.mxu0 0.0
      %5825 = vmatpush.msra.mxu0 0.0
      %5826 = vmatpush.msra.mxu0 0.0
      %5827 = vmatpush.msra.mxu0 0.0
      %5828 = vmatpush.msra.mxu0 0.0
      %5829 = vmatpush.msra.mxu0 0.0
      %5830 = vmatpush.msra.mxu0 0.0
      %5831 = vmatpush.msra.mxu0 0.0
      %5832 = vmatpush.msra.mxu0 0.0
      %5833 = vmatpush.msra.mxu0 %v5686
      %5834 = vmatpush.msra.mxu0 %v5685
      %5835 = vmatpush.msra.mxu0 %v5684
      %5836 = vmatpush.msra.mxu0 %v5683
      %5837 = vmatmul.f32.gmra.mxu0 %v5816
      %v5838 = vpop.f32.mrf.mxu0
      %v5839 = vadd.f32 0.0, %v5838
      %5840 = vmatmul.f32.gmra.mxu0 %v5819
      %v5841 = vpop.f32.mrf.mxu0
      %v5842 = vadd.f32 0.0, %v5841
      %5843 = vdwg.mxu0
      %v5845 = vsel %vm632, %v5399, 0
      %v5848 = vsel %vm632, %v5400, 0
      %5850 = vmatpush.msra.mxu0 0.0
      %5851 = vmatpush.msra.mxu0 0.0
      %5852 = vmatpush.msra.mxu0 0.0
      %5853 = vmatpush.msra.mxu0 0.0
      %5854 = vmatpush.msra.mxu0 0.0
      %5855 = vmatpush.msra.mxu0 0.0
      %5856 = vmatpush.msra.mxu0 0.0
      %5857 = vmatpush.msra.mxu0 0.0
      %5858 = vmatpush.msra.mxu0 0.0
      %5859 = vmatpush.msra.mxu0 0.0
      %5860 = vmatpush.msra.mxu0 0.0
      %5861 = vmatpush.msra.mxu0 0.0
      %5862 = vmatpush.msra.mxu0 %v5690
      %5863 = vmatpush.msra.mxu0 %v5689
      %5864 = vmatpush.msra.mxu0 %v5688
      %5865 = vmatpush.msra.mxu0 %v5687
      %5866 = vmatmul.f32.gmra.mxu0 %v5845
      %v5867 = vpop.f32.mrf.mxu0
      %v5868 = vadd.f32 0.0, %v5867
      %5869 = vmatmul.f32.gmra.mxu0 %v5848
      %v5870 = vpop.f32.mrf.mxu0
      %v5871 = vadd.f32 0.0, %v5870
      %5872 = vdwg.mxu0
      %v5874 = vsel %vm632, %v5401, 0
      %v5877 = vsel %vm632, %v5402, 0
      %5879 = vmatpush.msra.mxu0 0.0
      %5880 = vmatpush.msra.mxu0 0.0
      %5881 = vmatpush.msra.mxu0 0.0
      %5882 = vmatpush.msra.mxu0 0.0
      %5883 = vmatpush.msra.mxu0 0.0
      %5884 = vmatpush.msra.mxu0 0.0
      %5885 = vmatpush.msra.mxu0 0.0
      %5886 = vmatpush.msra.mxu0 0.0
      %5887 = vmatpush.msra.mxu0 0.0
      %5888 = vmatpush.msra.mxu0 0.0
      %5889 = vmatpush.msra.mxu0 0.0
      %5890 = vmatpush.msra.mxu0 0.0
      %5891 = vmatpush.msra.mxu0 %v5694
      %5892 = vmatpush.msra.mxu0 %v5693
      %5893 = vmatpush.msra.mxu0 %v5692
      %5894 = vmatpush.msra.mxu0 %v5691
      %5895 = vmatmul.f32.gmra.mxu0 %v5874
      %v5896 = vpop.f32.mrf.mxu0
      %v5897 = vadd.f32 0.0, %v5896
      %5898 = vmatmul.f32.gmra.mxu0 %v5877
      %v5899 = vpop.f32.mrf.mxu0
      %v5900 = vadd.f32 0.0, %v5899
      %5901 = vdwg.mxu0
      %v5903 = vsel %vm632, %v5403, 0
      %v5906 = vsel %vm632, %v5404, 0
      %5908 = vmatpush.msra.mxu0 0.0
      %5909 = vmatpush.msra.mxu0 0.0
      %5910 = vmatpush.msra.mxu0 0.0
      %5911 = vmatpush.msra.mxu0 0.0
      %5912 = vmatpush.msra.mxu0 0.0
      %5913 = vmatpush.msra.mxu0 0.0
      %5914 = vmatpush.msra.mxu0 0.0
      %5915 = vmatpush.msra.mxu0 0.0
      %5916 = vmatpush.msra.mxu0 0.0
      %5917 = vmatpush.msra.mxu0 0.0
      %5918 = vmatpush.msra.mxu0 0.0
      %5919 = vmatpush.msra.mxu0 0.0
      %5920 = vmatpush.msra.mxu0 %v5698
      %5921 = vmatpush.msra.mxu0 %v5697
      %5922 = vmatpush.msra.mxu0 %v5696
      %5923 = vmatpush.msra.mxu0 %v5695
      %5924 = vmatmul.f32.gmra.mxu0 %v5903
      %v5925 = vpop.f32.mrf.mxu0
      %v5926 = vadd.f32 0.0, %v5925
      %5927 = vmatmul.f32.gmra.mxu0 %v5906
      %v5928 = vpop.f32.mrf.mxu0
      %v5929 = vadd.f32 0.0, %v5928
      %5930 = vdwg.mxu0
      %s5931 = scalar_lea.vmem %s272, 1024
      %v5932 = vld [vmem:[%s5931] sm:$0xff]
      %v5933 = vld [vmem:[%s5931 + $0x8] sm:$0xff]
      %v5934 = vld [vmem:[%s5931 + $0x10] sm:$0xff]
      %v5935 = vld [vmem:[%s5931 + $0x18] sm:$0xff]
      %v5936 = vld [vmem:[%s5931 + $0x20] sm:$0xff]
      %v5937 = vld [vmem:[%s5931 + $0x28] sm:$0xff]
      %v5938 = vld [vmem:[%s5931 + $0x30] sm:$0xff]
      %v5939 = vld [vmem:[%s5931 + $0x38] sm:$0xff]
      %v5940 = vld [vmem:[%s5931 + $0x40] sm:$0xff]
      %v5941 = vld [vmem:[%s5931 + $0x48] sm:$0xff]
      %v5942 = vld [vmem:[%s5931 + $0x50] sm:$0xff]
      %v5943 = vld [vmem:[%s5931 + $0x58] sm:$0xff]
      %v5944 = vld [vmem:[%s5931 + $0x60] sm:$0xff]
      %v5945 = vld [vmem:[%s5931 + $0x68] sm:$0xff]
      %v5946 = vld [vmem:[%s5931 + $0x70] sm:$0xff]
      %v5947 = vld [vmem:[%s5931 + $0x78] sm:$0xff]
      %v5948 = vsub.f32 %v5932, %v5723
      %v5949 = vsub.f32 %v5933, %v5726
      %v5950 = vsub.f32 %v5934, %v5752
      %v5951 = vsub.f32 %v5935, %v5755
      %v5952 = vsub.f32 %v5936, %v5781
      %v5953 = vsub.f32 %v5937, %v5784
      %v5954 = vsub.f32 %v5938, %v5810
      %v5955 = vsub.f32 %v5939, %v5813
      %v5956 = vsub.f32 %v5940, %v5839
      %v5957 = vsub.f32 %v5941, %v5842
      %v5958 = vsub.f32 %v5942, %v5868
      %v5959 = vsub.f32 %v5943, %v5871
      %v5960 = vsub.f32 %v5944, %v5897
      %v5961 = vsub.f32 %v5945, %v5900
      %v5962 = vsub.f32 %v5946, %v5926
      %v5963 = vsub.f32 %v5947, %v5929
      %v5964 = vand.u32 2147483647, %v5948
      %v5965 = vand.u32 2147483647, %v5949
      %v5966 = vand.u32 2147483647, %v5950
      %v5967 = vand.u32 2147483647, %v5951
      %v5968 = vand.u32 2147483647, %v5952
      %v5969 = vand.u32 2147483647, %v5953
      %v5970 = vand.u32 2147483647, %v5954
      %v5971 = vand.u32 2147483647, %v5955
      %v5972 = vand.u32 2147483647, %v5956
      %v5973 = vand.u32 2147483647, %v5957
      %v5974 = vand.u32 2147483647, %v5958
      %v5975 = vand.u32 2147483647, %v5959
      %v5976 = vand.u32 2147483647, %v5960
      %v5977 = vand.u32 2147483647, %v5961
      %v5978 = vand.u32 2147483647, %v5962
      %v5979 = vand.u32 2147483647, %v5963
      %v5980 = vsel %vm913, %v5964, 0.0
      %v5981 = vsel %vm913, %v5965, 0.0
      %v5982 = vadd.f32 %v5980, %v5981
      %v5983 = vrot.slane %v5982, 4
      %v5984 = vadd.f32 %v5982, %v5983
      %v5985 = vrot.slane %v5984, 2
      %v5986 = vadd.f32 %v5984, %v5985
      %v5987 = vrot.slane %v5986, 1
      %v5988 = vadd.f32 %v5986, %v5987
      %v5989 = vsel %vm913, %v5966, 0.0
      %v5990 = vsel %vm913, %v5967, 0.0
      %v5991 = vadd.f32 %v5989, %v5990
      %v5992 = vrot.slane %v5991, 4
      %v5993 = vadd.f32 %v5991, %v5992
      %v5994 = vrot.slane %v5993, 2
      %v5995 = vadd.f32 %v5993, %v5994
      %v5996 = vrot.slane %v5995, 1
      %v5997 = vadd.f32 %v5995, %v5996
      %v5998 = vsel %vm913, %v5968, 0.0
      %v5999 = vsel %vm913, %v5969, 0.0
      %v6000 = vadd.f32 %v5998, %v5999
      %v6001 = vrot.slane %v6000, 4
      %v6002 = vadd.f32 %v6000, %v6001
      %v6003 = vrot.slane %v6002, 2
      %v6004 = vadd.f32 %v6002, %v6003
      %v6005 = vrot.slane %v6004, 1
      %v6006 = vadd.f32 %v6004, %v6005
      %v6007 = vsel %vm913, %v5970, 0.0
      %v6008 = vsel %vm913, %v5971, 0.0
      %v6009 = vadd.f32 %v6007, %v6008
      %v6010 = vrot.slane %v6009, 4
      %v6011 = vadd.f32 %v6009, %v6010
      %v6012 = vrot.slane %v6011, 2
      %v6013 = vadd.f32 %v6011, %v6012
      %v6014 = vrot.slane %v6013, 1
      %v6015 = vadd.f32 %v6013, %v6014
      %v6016 = vsel %vm913, %v5972, 0.0
      %v6017 = vsel %vm913, %v5973, 0.0
      %v6018 = vadd.f32 %v6016, %v6017
      %v6019 = vrot.slane %v6018, 4
      %v6020 = vadd.f32 %v6018, %v6019
      %v6021 = vrot.slane %v6020, 2
      %v6022 = vadd.f32 %v6020, %v6021
      %v6023 = vrot.slane %v6022, 1
      %v6024 = vadd.f32 %v6022, %v6023
      %v6025 = vsel %vm913, %v5974, 0.0
      %v6026 = vsel %vm913, %v5975, 0.0
      %v6027 = vadd.f32 %v6025, %v6026
      %v6028 = vrot.slane %v6027, 4
      %v6029 = vadd.f32 %v6027, %v6028
      %v6030 = vrot.slane %v6029, 2
      %v6031 = vadd.f32 %v6029, %v6030
      %v6032 = vrot.slane %v6031, 1
      %v6033 = vadd.f32 %v6031, %v6032
      %v6034 = vsel %vm913, %v5976, 0.0
      %v6035 = vsel %vm913, %v5977, 0.0
      %v6036 = vadd.f32 %v6034, %v6035
      %v6037 = vrot.slane %v6036, 4
      %v6038 = vadd.f32 %v6036, %v6037
      %v6039 = vrot.slane %v6038, 2
      %v6040 = vadd.f32 %v6038, %v6039
      %v6041 = vrot.slane %v6040, 1
      %v6042 = vadd.f32 %v6040, %v6041
      %v6043 = vsel %vm913, %v5978, 0.0
      %v6044 = vsel %vm913, %v5979, 0.0
      %v6045 = vadd.f32 %v6043, %v6044
      %v6046 = vrot.slane %v6045, 4
      %v6047 = vadd.f32 %v6045, %v6046
      %v6048 = vrot.slane %v6047, 2
      %v6049 = vadd.f32 %v6047, %v6048
      %v6050 = vrot.slane %v6049, 1
      %v6051 = vadd.f32 %v6049, %v6050
      %v6060 = vsel %vm994, %v5997, %v5988
      %v6061 = vsel %vm996, %v6006, %v6060
      %v6062 = vsel %vm998, %v6015, %v6061
      %v6063 = vsel %vm1000, %v6024, %v6062
      %v6064 = vsel %vm1002, %v6033, %v6063
      %v6065 = vsel %vm1004, %v6042, %v6064
      %v6066 = vsel %vm1006, %v6051, %v6065
      %s6068 = scalar_lea.vmem %s296, 64
      %6069 = vst.msk [vmem:[%s6068] sm:$0xff] %vm913, %v6066
      %v6070 = vadd.f32 %v5406, %v1010
      %v6071 = vsub.f32 %v1012, %v6070
      %v6072 = vmul.f32 %v6071, 1.032258
      %v6073 = vadd.f32 %v6072, -0.5
      %v6074 = vfloor.f32 %v6073
      %v6075 = vsub.f32 %v6073, %v6074
      %v6077 = vrot.slane %v6074, 1
      %v6078 = vrot.slane %v6074, 2
      %v6079 = vrot.slane %v6074, 3
      %v6080 = vrot.slane %v6074, 4
      %v6081 = vrot.slane %v6074, 5
      %v6082 = vrot.slane %v6074, 6
      %v6083 = vrot.slane %v6074, 7
      %v6092 = vrot.slane %v6075, 1
      %v6093 = vrot.slane %v6075, 2
      %v6094 = vrot.slane %v6075, 3
      %v6095 = vrot.slane %v6075, 4
      %v6096 = vrot.slane %v6075, 5
      %v6097 = vrot.slane %v6075, 6
      %v6098 = vrot.slane %v6075, 7
      %v6106 = vperm.slane %v6074, 0
      %v6107 = vperm.slane %v6077, 0
      %v6108 = vperm.slane %v6078, 0
      %v6109 = vperm.slane %v6079, 0
      %v6110 = vperm.slane %v6080, 0
      %v6111 = vperm.slane %v6081, 0
      %v6112 = vperm.slane %v6082, 0
      %v6113 = vperm.slane %v6083, 0
      %vm6122 = vcmp.eq.f32.partialorder %v316, %v6106
      %vm6123 = vcmp.eq.f32.partialorder %v317, %v6106
      %vm6124 = vcmp.eq.f32.partialorder %v318, %v6106
      %vm6125 = vcmp.eq.f32.partialorder %v319, %v6106
      %vm6126 = vcmp.eq.f32.partialorder %v316, %v6107
      %vm6127 = vcmp.eq.f32.partialorder %v317, %v6107
      %vm6128 = vcmp.eq.f32.partialorder %v318, %v6107
      %vm6129 = vcmp.eq.f32.partialorder %v319, %v6107
      %vm6130 = vcmp.eq.f32.partialorder %v316, %v6108
      %vm6131 = vcmp.eq.f32.partialorder %v317, %v6108
      %vm6132 = vcmp.eq.f32.partialorder %v318, %v6108
      %vm6133 = vcmp.eq.f32.partialorder %v319, %v6108
      %vm6134 = vcmp.eq.f32.partialorder %v316, %v6109
      %vm6135 = vcmp.eq.f32.partialorder %v317, %v6109
      %vm6136 = vcmp.eq.f32.partialorder %v318, %v6109
      %vm6137 = vcmp.eq.f32.partialorder %v319, %v6109
      %vm6138 = vcmp.eq.f32.partialorder %v316, %v6110
      %vm6139 = vcmp.eq.f32.partialorder %v317, %v6110
      %vm6140 = vcmp.eq.f32.partialorder %v318, %v6110
      %vm6141 = vcmp.eq.f32.partialorder %v319, %v6110
      %vm6142 = vcmp.eq.f32.partialorder %v316, %v6111
      %vm6143 = vcmp.eq.f32.partialorder %v317, %v6111
      %vm6144 = vcmp.eq.f32.partialorder %v318, %v6111
      %vm6145 = vcmp.eq.f32.partialorder %v319, %v6111
      %vm6146 = vcmp.eq.f32.partialorder %v316, %v6112
      %vm6147 = vcmp.eq.f32.partialorder %v317, %v6112
      %vm6148 = vcmp.eq.f32.partialorder %v318, %v6112
      %vm6149 = vcmp.eq.f32.partialorder %v319, %v6112
      %vm6150 = vcmp.eq.f32.partialorder %v316, %v6113
      %vm6151 = vcmp.eq.f32.partialorder %v317, %v6113
      %vm6152 = vcmp.eq.f32.partialorder %v318, %v6113
      %vm6153 = vcmp.eq.f32.partialorder %v319, %v6113
      %v6154 = vsub.f32 1.0, %v6075
      %v6155 = vsub.f32 1.0, %v6092
      %v6156 = vsub.f32 1.0, %v6093
      %v6157 = vsub.f32 1.0, %v6094
      %v6158 = vsub.f32 1.0, %v6095
      %v6159 = vsub.f32 1.0, %v6096
      %v6160 = vsub.f32 1.0, %v6097
      %v6161 = vsub.f32 1.0, %v6098
      %v6170 = vperm.slane %v6154, 0
      %v6171 = vperm.slane %v6155, 0
      %v6172 = vperm.slane %v6156, 0
      %v6173 = vperm.slane %v6157, 0
      %v6174 = vperm.slane %v6158, 0
      %v6175 = vperm.slane %v6159, 0
      %v6176 = vperm.slane %v6160, 0
      %v6177 = vperm.slane %v6161, 0
      %v6186 = vsel %vm6122, %v6170, 0.0
      %v6187 = vsel %vm6123, %v6170, 0.0
      %v6188 = vsel %vm6124, %v6170, 0.0
      %v6189 = vsel %vm6125, %v6170, 0.0
      %v6190 = vsel %vm6126, %v6171, 0.0
      %v6191 = vsel %vm6127, %v6171, 0.0
      %v6192 = vsel %vm6128, %v6171, 0.0
      %v6193 = vsel %vm6129, %v6171, 0.0
      %v6194 = vsel %vm6130, %v6172, 0.0
      %v6195 = vsel %vm6131, %v6172, 0.0
      %v6196 = vsel %vm6132, %v6172, 0.0
      %v6197 = vsel %vm6133, %v6172, 0.0
      %v6198 = vsel %vm6134, %v6173, 0.0
      %v6199 = vsel %vm6135, %v6173, 0.0
      %v6200 = vsel %vm6136, %v6173, 0.0
      %v6201 = vsel %vm6137, %v6173, 0.0
      %v6202 = vsel %vm6138, %v6174, 0.0
      %v6203 = vsel %vm6139, %v6174, 0.0
      %v6204 = vsel %vm6140, %v6174, 0.0
      %v6205 = vsel %vm6141, %v6174, 0.0
      %v6206 = vsel %vm6142, %v6175, 0.0
      %v6207 = vsel %vm6143, %v6175, 0.0
      %v6208 = vsel %vm6144, %v6175, 0.0
      %v6209 = vsel %vm6145, %v6175, 0.0
      %v6210 = vsel %vm6146, %v6176, 0.0
      %v6211 = vsel %vm6147, %v6176, 0.0
      %v6212 = vsel %vm6148, %v6176, 0.0
      %v6213 = vsel %vm6149, %v6176, 0.0
      %v6214 = vsel %vm6150, %v6177, 0.0
      %v6215 = vsel %vm6151, %v6177, 0.0
      %v6216 = vsel %vm6152, %v6177, 0.0
      %v6217 = vsel %vm6153, %v6177, 0.0
      %v6218 = vadd.f32 %v6074, 1.0
      %v6219 = vadd.f32 %v6077, 1.0
      %v6220 = vadd.f32 %v6078, 1.0
      %v6221 = vadd.f32 %v6079, 1.0
      %v6222 = vadd.f32 %v6080, 1.0
      %v6223 = vadd.f32 %v6081, 1.0
      %v6224 = vadd.f32 %v6082, 1.0
      %v6225 = vadd.f32 %v6083, 1.0
      %v6234 = vperm.slane %v6218, 0
      %v6235 = vperm.slane %v6219, 0
      %v6236 = vperm.slane %v6220, 0
      %v6237 = vperm.slane %v6221, 0
      %v6238 = vperm.slane %v6222, 0
      %v6239 = vperm.slane %v6223, 0
      %v6240 = vperm.slane %v6224, 0
      %v6241 = vperm.slane %v6225, 0
      %vm6250 = vcmp.eq.f32.partialorder %v316, %v6234
      %vm6251 = vcmp.eq.f32.partialorder %v317, %v6234
      %vm6252 = vcmp.eq.f32.partialorder %v318, %v6234
      %vm6253 = vcmp.eq.f32.partialorder %v319, %v6234
      %vm6254 = vcmp.eq.f32.partialorder %v316, %v6235
      %vm6255 = vcmp.eq.f32.partialorder %v317, %v6235
      %vm6256 = vcmp.eq.f32.partialorder %v318, %v6235
      %vm6257 = vcmp.eq.f32.partialorder %v319, %v6235
      %vm6258 = vcmp.eq.f32.partialorder %v316, %v6236
      %vm6259 = vcmp.eq.f32.partialorder %v317, %v6236
      %vm6260 = vcmp.eq.f32.partialorder %v318, %v6236
      %vm6261 = vcmp.eq.f32.partialorder %v319, %v6236
      %vm6262 = vcmp.eq.f32.partialorder %v316, %v6237
      %vm6263 = vcmp.eq.f32.partialorder %v317, %v6237
      %vm6264 = vcmp.eq.f32.partialorder %v318, %v6237
      %vm6265 = vcmp.eq.f32.partialorder %v319, %v6237
      %vm6266 = vcmp.eq.f32.partialorder %v316, %v6238
      %vm6267 = vcmp.eq.f32.partialorder %v317, %v6238
      %vm6268 = vcmp.eq.f32.partialorder %v318, %v6238
      %vm6269 = vcmp.eq.f32.partialorder %v319, %v6238
      %vm6270 = vcmp.eq.f32.partialorder %v316, %v6239
      %vm6271 = vcmp.eq.f32.partialorder %v317, %v6239
      %vm6272 = vcmp.eq.f32.partialorder %v318, %v6239
      %vm6273 = vcmp.eq.f32.partialorder %v319, %v6239
      %vm6274 = vcmp.eq.f32.partialorder %v316, %v6240
      %vm6275 = vcmp.eq.f32.partialorder %v317, %v6240
      %vm6276 = vcmp.eq.f32.partialorder %v318, %v6240
      %vm6277 = vcmp.eq.f32.partialorder %v319, %v6240
      %vm6278 = vcmp.eq.f32.partialorder %v316, %v6241
      %vm6279 = vcmp.eq.f32.partialorder %v317, %v6241
      %vm6280 = vcmp.eq.f32.partialorder %v318, %v6241
      %vm6281 = vcmp.eq.f32.partialorder %v319, %v6241
      %v6282 = vperm.slane %v6075, 0
      %v6283 = vperm.slane %v6092, 0
      %v6284 = vperm.slane %v6093, 0
      %v6285 = vperm.slane %v6094, 0
      %v6286 = vperm.slane %v6095, 0
      %v6287 = vperm.slane %v6096, 0
      %v6288 = vperm.slane %v6097, 0
      %v6289 = vperm.slane %v6098, 0
      %v6298 = vsel %vm6250, %v6282, 0.0
      %v6299 = vsel %vm6251, %v6282, 0.0
      %v6300 = vsel %vm6252, %v6282, 0.0
      %v6301 = vsel %vm6253, %v6282, 0.0
      %v6302 = vsel %vm6254, %v6283, 0.0
      %v6303 = vsel %vm6255, %v6283, 0.0
      %v6304 = vsel %vm6256, %v6283, 0.0
      %v6305 = vsel %vm6257, %v6283, 0.0
      %v6306 = vsel %vm6258, %v6284, 0.0
      %v6307 = vsel %vm6259, %v6284, 0.0
      %v6308 = vsel %vm6260, %v6284, 0.0
      %v6309 = vsel %vm6261, %v6284, 0.0
      %v6310 = vsel %vm6262, %v6285, 0.0
      %v6311 = vsel %vm6263, %v6285, 0.0
      %v6312 = vsel %vm6264, %v6285, 0.0
      %v6313 = vsel %vm6265, %v6285, 0.0
      %v6314 = vsel %vm6266, %v6286, 0.0
      %v6315 = vsel %vm6267, %v6286, 0.0
      %v6316 = vsel %vm6268, %v6286, 0.0
      %v6317 = vsel %vm6269, %v6286, 0.0
      %v6318 = vsel %vm6270, %v6287, 0.0
      %v6319 = vsel %vm6271, %v6287, 0.0
      %v6320 = vsel %vm6272, %v6287, 0.0
      %v6321 = vsel %vm6273, %v6287, 0.0
      %v6322 = vsel %vm6274, %v6288, 0.0
      %v6323 = vsel %vm6275, %v6288, 0.0
      %v6324 = vsel %vm6276, %v6288, 0.0
      %v6325 = vsel %vm6277, %v6288, 0.0
      %v6326 = vsel %vm6278, %v6289, 0.0
      %v6327 = vsel %vm6279, %v6289, 0.0
      %v6328 = vsel %vm6280, %v6289, 0.0
      %v6329 = vsel %vm6281, %v6289, 0.0
      %v6330 = vadd.f32 %v6186, %v6298
      %v6331 = vadd.f32 %v6187, %v6299
      %v6332 = vadd.f32 %v6188, %v6300
      %v6333 = vadd.f32 %v6189, %v6301
      %v6334 = vadd.f32 %v6190, %v6302
      %v6335 = vadd.f32 %v6191, %v6303
      %v6336 = vadd.f32 %v6192, %v6304
      %v6337 = vadd.f32 %v6193, %v6305
      %v6338 = vadd.f32 %v6194, %v6306
      %v6339 = vadd.f32 %v6195, %v6307
      %v6340 = vadd.f32 %v6196, %v6308
      %v6341 = vadd.f32 %v6197, %v6309
      %v6342 = vadd.f32 %v6198, %v6310
      %v6343 = vadd.f32 %v6199, %v6311
      %v6344 = vadd.f32 %v6200, %v6312
      %v6345 = vadd.f32 %v6201, %v6313
      %v6346 = vadd.f32 %v6202, %v6314
      %v6347 = vadd.f32 %v6203, %v6315
      %v6348 = vadd.f32 %v6204, %v6316
      %v6349 = vadd.f32 %v6205, %v6317
      %v6350 = vadd.f32 %v6206, %v6318
      %v6351 = vadd.f32 %v6207, %v6319
      %v6352 = vadd.f32 %v6208, %v6320
      %v6353 = vadd.f32 %v6209, %v6321
      %v6354 = vadd.f32 %v6210, %v6322
      %v6355 = vadd.f32 %v6211, %v6323
      %v6356 = vadd.f32 %v6212, %v6324
      %v6357 = vadd.f32 %v6213, %v6325
      %v6358 = vadd.f32 %v6214, %v6326
      %v6359 = vadd.f32 %v6215, %v6327
      %v6360 = vadd.f32 %v6216, %v6328
      %v6361 = vadd.f32 %v6217, %v6329
      %6362 = vmatpush.msra.mxu0 0.0
      %6363 = vmatpush.msra.mxu0 0.0
      %6364 = vmatpush.msra.mxu0 0.0
      %6365 = vmatpush.msra.mxu0 0.0
      %6366 = vmatpush.msra.mxu0 0.0
      %6367 = vmatpush.msra.mxu0 0.0
      %6368 = vmatpush.msra.mxu0 0.0
      %6369 = vmatpush.msra.mxu0 0.0
      %6370 = vmatpush.msra.mxu0 0.0
      %6371 = vmatpush.msra.mxu0 0.0
      %6372 = vmatpush.msra.mxu0 0.0
      %6373 = vmatpush.msra.mxu0 0.0
      %6374 = vmatpush.msra.mxu0 %v6333
      %6375 = vmatpush.msra.mxu0 %v6332
      %6376 = vmatpush.msra.mxu0 %v6331
      %6377 = vmatpush.msra.mxu0 %v6330
      %6378 = vmatmul.f32.gmra.mxu0 %v5700
      %v6379 = vpop.f32.mrf.mxu0
      %v6380 = vadd.f32 0.0, %v6379
      %6381 = vmatmul.f32.gmra.mxu0 %v5703
      %v6382 = vpop.f32.mrf.mxu0
      %v6383 = vadd.f32 0.0, %v6382
      %6384 = vdwg.mxu0
      %6385 = vmatpush.msra.mxu0 0.0
      %6386 = vmatpush.msra.mxu0 0.0
      %6387 = vmatpush.msra.mxu0 0.0
      %6388 = vmatpush.msra.mxu0 0.0
      %6389 = vmatpush.msra.mxu0 0.0
      %6390 = vmatpush.msra.mxu0 0.0
      %6391 = vmatpush.msra.mxu0 0.0
      %6392 = vmatpush.msra.mxu0 0.0
      %6393 = vmatpush.msra.mxu0 0.0
      %6394 = vmatpush.msra.mxu0 0.0
      %6395 = vmatpush.msra.mxu0 0.0
      %6396 = vmatpush.msra.mxu0 0.0
      %6397 = vmatpush.msra.mxu0 %v6337
      %6398 = vmatpush.msra.mxu0 %v6336
      %6399 = vmatpush.msra.mxu0 %v6335
      %6400 = vmatpush.msra.mxu0 %v6334
      %6401 = vmatmul.f32.gmra.mxu0 %v5729
      %v6402 = vpop.f32.mrf.mxu0
      %v6403 = vadd.f32 0.0, %v6402
      %6404 = vmatmul.f32.gmra.mxu0 %v5732
      %v6405 = vpop.f32.mrf.mxu0
      %v6406 = vadd.f32 0.0, %v6405
      %6407 = vdwg.mxu0
      %6408 = vmatpush.msra.mxu0 0.0
      %6409 = vmatpush.msra.mxu0 0.0
      %6410 = vmatpush.msra.mxu0 0.0
      %6411 = vmatpush.msra.mxu0 0.0
      %6412 = vmatpush.msra.mxu0 0.0
      %6413 = vmatpush.msra.mxu0 0.0
      %6414 = vmatpush.msra.mxu0 0.0
      %6415 = vmatpush.msra.mxu0 0.0
      %6416 = vmatpush.msra.mxu0 0.0
      %6417 = vmatpush.msra.mxu0 0.0
      %6418 = vmatpush.msra.mxu0 0.0
      %6419 = vmatpush.msra.mxu0 0.0
      %6420 = vmatpush.msra.mxu0 %v6341
      %6421 = vmatpush.msra.mxu0 %v6340
      %6422 = vmatpush.msra.mxu0 %v6339
      %6423 = vmatpush.msra.mxu0 %v6338
      %6424 = vmatmul.f32.gmra.mxu0 %v5758
      %v6425 = vpop.f32.mrf.mxu0
      %v6426 = vadd.f32 0.0, %v6425
      %6427 = vmatmul.f32.gmra.mxu0 %v5761
      %v6428 = vpop.f32.mrf.mxu0
      %v6429 = vadd.f32 0.0, %v6428
      %6430 = vdwg.mxu0
      %6431 = vmatpush.msra.mxu0 0.0
      %6432 = vmatpush.msra.mxu0 0.0
      %6433 = vmatpush.msra.mxu0 0.0
      %6434 = vmatpush.msra.mxu0 0.0
      %6435 = vmatpush.msra.mxu0 0.0
      %6436 = vmatpush.msra.mxu0 0.0
      %6437 = vmatpush.msra.mxu0 0.0
      %6438 = vmatpush.msra.mxu0 0.0
      %6439 = vmatpush.msra.mxu0 0.0
      %6440 = vmatpush.msra.mxu0 0.0
      %6441 = vmatpush.msra.mxu0 0.0
      %6442 = vmatpush.msra.mxu0 0.0
      %6443 = vmatpush.msra.mxu0 %v6345
      %6444 = vmatpush.msra.mxu0 %v6344
      %6445 = vmatpush.msra.mxu0 %v6343
      %6446 = vmatpush.msra.mxu0 %v6342
      %6447 = vmatmul.f32.gmra.mxu0 %v5787
      %v6448 = vpop.f32.mrf.mxu0
      %v6449 = vadd.f32 0.0, %v6448
      %6450 = vmatmul.f32.gmra.mxu0 %v5790
      %v6451 = vpop.f32.mrf.mxu0
      %v6452 = vadd.f32 0.0, %v6451
      %6453 = vdwg.mxu0
      %6454 = vmatpush.msra.mxu0 0.0
      %6455 = vmatpush.msra.mxu0 0.0
      %6456 = vmatpush.msra.mxu0 0.0
      %6457 = vmatpush.msra.mxu0 0.0
      %6458 = vmatpush.msra.mxu0 0.0
      %6459 = vmatpush.msra.mxu0 0.0
      %6460 = vmatpush.msra.mxu0 0.0
      %6461 = vmatpush.msra.mxu0 0.0
      %6462 = vmatpush.msra.mxu0 0.0
      %6463 = vmatpush.msra.mxu0 0.0
      %6464 = vmatpush.msra.mxu0 0.0
      %6465 = vmatpush.msra.mxu0 0.0
      %6466 = vmatpush.msra.mxu0 %v6349
      %6467 = vmatpush.msra.mxu0 %v6348
      %6468 = vmatpush.msra.mxu0 %v6347
      %6469 = vmatpush.msra.mxu0 %v6346
      %6470 = vmatmul.f32.gmra.mxu0 %v5816
      %v6471 = vpop.f32.mrf.mxu0
      %v6472 = vadd.f32 0.0, %v6471
      %6473 = vmatmul.f32.gmra.mxu0 %v5819
      %v6474 = vpop.f32.mrf.mxu0
      %v6475 = vadd.f32 0.0, %v6474
      %6476 = vdwg.mxu0
      %6477 = vmatpush.msra.mxu0 0.0
      %6478 = vmatpush.msra.mxu0 0.0
      %6479 = vmatpush.msra.mxu0 0.0
      %6480 = vmatpush.msra.mxu0 0.0
      %6481 = vmatpush.msra.mxu0 0.0
      %6482 = vmatpush.msra.mxu0 0.0
      %6483 = vmatpush.msra.mxu0 0.0
      %6484 = vmatpush.msra.mxu0 0.0
      %6485 = vmatpush.msra.mxu0 0.0
      %6486 = vmatpush.msra.mxu0 0.0
      %6487 = vmatpush.msra.mxu0 0.0
      %6488 = vmatpush.msra.mxu0 0.0
      %6489 = vmatpush.msra.mxu0 %v6353
      %6490 = vmatpush.msra.mxu0 %v6352
      %6491 = vmatpush.msra.mxu0 %v6351
      %6492 = vmatpush.msra.mxu0 %v6350
      %6493 = vmatmul.f32.gmra.mxu0 %v5845
      %v6494 = vpop.f32.mrf.mxu0
      %v6495 = vadd.f32 0.0, %v6494
      %6496 = vmatmul.f32.gmra.mxu0 %v5848
      %v6497 = vpop.f32.mrf.mxu0
      %v6498 = vadd.f32 0.0, %v6497
      %6499 = vdwg.mxu0
      %6500 = vmatpush.msra.mxu0 0.0
      %6501 = vmatpush.msra.mxu0 0.0
      %6502 = vmatpush.msra.mxu0 0.0
      %6503 = vmatpush.msra.mxu0 0.0
      %6504 = vmatpush.msra.mxu0 0.0
      %6505 = vmatpush.msra.mxu0 0.0
      %6506 = vmatpush.msra.mxu0 0.0
      %6507 = vmatpush.msra.mxu0 0.0
      %6508 = vmatpush.msra.mxu0 0.0
      %6509 = vmatpush.msra.mxu0 0.0
      %6510 = vmatpush.msra.mxu0 0.0
      %6511 = vmatpush.msra.mxu0 0.0
      %6512 = vmatpush.msra.mxu0 %v6357
      %6513 = vmatpush.msra.mxu0 %v6356
      %6514 = vmatpush.msra.mxu0 %v6355
      %6515 = vmatpush.msra.mxu0 %v6354
      %6516 = vmatmul.f32.gmra.mxu0 %v5874
      %v6517 = vpop.f32.mrf.mxu0
      %v6518 = vadd.f32 0.0, %v6517
      %6519 = vmatmul.f32.gmra.mxu0 %v5877
      %v6520 = vpop.f32.mrf.mxu0
      %v6521 = vadd.f32 0.0, %v6520
      %6522 = vdwg.mxu0
      %6523 = vmatpush.msra.mxu0 0.0
      %6524 = vmatpush.msra.mxu0 0.0
      %6525 = vmatpush.msra.mxu0 0.0
      %6526 = vmatpush.msra.mxu0 0.0
      %6527 = vmatpush.msra.mxu0 0.0
      %6528 = vmatpush.msra.mxu0 0.0
      %6529 = vmatpush.msra.mxu0 0.0
      %6530 = vmatpush.msra.mxu0 0.0
      %6531 = vmatpush.msra.mxu0 0.0
      %6532 = vmatpush.msra.mxu0 0.0
      %6533 = vmatpush.msra.mxu0 0.0
      %6534 = vmatpush.msra.mxu0 0.0
      %6535 = vmatpush.msra.mxu0 %v6361
      %6536 = vmatpush.msra.mxu0 %v6360
      %6537 = vmatpush.msra.mxu0 %v6359
      %6538 = vmatpush.msra.mxu0 %v6358
      %6539 = vmatmul.f32.gmra.mxu0 %v5903
      %v6540 = vpop.f32.mrf.mxu0
      %v6541 = vadd.f32 0.0, %v6540
      %6542 = vmatmul.f32.gmra.mxu0 %v5906
      %v6543 = vpop.f32.mrf.mxu0
      %v6544 = vadd.f32 0.0, %v6543
      %6545 = vdwg.mxu0
      %s6546 = scalar_lea.vmem %s272, 1152
      %v6547 = vld [vmem:[%s6546] sm:$0xff]
      %v6548 = vld [vmem:[%s6546 + $0x8] sm:$0xff]
      %v6549 = vld [vmem:[%s6546 + $0x10] sm:$0xff]
      %v6550 = vld [vmem:[%s6546 + $0x18] sm:$0xff]
      %v6551 = vld [vmem:[%s6546 + $0x20] sm:$0xff]
      %v6552 = vld [vmem:[%s6546 + $0x28] sm:$0xff]
      %v6553 = vld [vmem:[%s6546 + $0x30] sm:$0xff]
      %v6554 = vld [vmem:[%s6546 + $0x38] sm:$0xff]
      %v6555 = vld [vmem:[%s6546 + $0x40] sm:$0xff]
      %v6556 = vld [vmem:[%s6546 + $0x48] sm:$0xff]
      %v6557 = vld [vmem:[%s6546 + $0x50] sm:$0xff]
      %v6558 = vld [vmem:[%s6546 + $0x58] sm:$0xff]
      %v6559 = vld [vmem:[%s6546 + $0x60] sm:$0xff]
      %v6560 = vld [vmem:[%s6546 + $0x68] sm:$0xff]
      %v6561 = vld [vmem:[%s6546 + $0x70] sm:$0xff]
      %v6562 = vld [vmem:[%s6546 + $0x78] sm:$0xff]
      %v6563 = vsub.f32 %v6547, %v6380
      %v6564 = vsub.f32 %v6548, %v6383
      %v6565 = vsub.f32 %v6549, %v6403
      %v6566 = vsub.f32 %v6550, %v6406
      %v6567 = vsub.f32 %v6551, %v6426
      %v6568 = vsub.f32 %v6552, %v6429
      %v6569 = vsub.f32 %v6553, %v6449
      %v6570 = vsub.f32 %v6554, %v6452
      %v6571 = vsub.f32 %v6555, %v6472
      %v6572 = vsub.f32 %v6556, %v6475
      %v6573 = vsub.f32 %v6557, %v6495
      %v6574 = vsub.f32 %v6558, %v6498
      %v6575 = vsub.f32 %v6559, %v6518
      %v6576 = vsub.f32 %v6560, %v6521
      %v6577 = vsub.f32 %v6561, %v6541
      %v6578 = vsub.f32 %v6562, %v6544
      %v6579 = vand.u32 2147483647, %v6563
      %v6580 = vand.u32 2147483647, %v6564
      %v6581 = vand.u32 2147483647, %v6565
      %v6582 = vand.u32 2147483647, %v6566
      %v6583 = vand.u32 2147483647, %v6567
      %v6584 = vand.u32 2147483647, %v6568
      %v6585 = vand.u32 2147483647, %v6569
      %v6586 = vand.u32 2147483647, %v6570
      %v6587 = vand.u32 2147483647, %v6571
      %v6588 = vand.u32 2147483647, %v6572
      %v6589 = vand.u32 2147483647, %v6573
      %v6590 = vand.u32 2147483647, %v6574
      %v6591 = vand.u32 2147483647, %v6575
      %v6592 = vand.u32 2147483647, %v6576
      %v6593 = vand.u32 2147483647, %v6577
      %v6594 = vand.u32 2147483647, %v6578
      %v6595 = vsel %vm913, %v6579, 0.0
      %v6596 = vsel %vm913, %v6580, 0.0
      %v6597 = vadd.f32 %v6595, %v6596
      %v6598 = vrot.slane %v6597, 4
      %v6599 = vadd.f32 %v6597, %v6598
      %v6600 = vrot.slane %v6599, 2
      %v6601 = vadd.f32 %v6599, %v6600
      %v6602 = vrot.slane %v6601, 1
      %v6603 = vadd.f32 %v6601, %v6602
      %v6604 = vsel %vm913, %v6581, 0.0
      %v6605 = vsel %vm913, %v6582, 0.0
      %v6606 = vadd.f32 %v6604, %v6605
      %v6607 = vrot.slane %v6606, 4
      %v6608 = vadd.f32 %v6606, %v6607
      %v6609 = vrot.slane %v6608, 2
      %v6610 = vadd.f32 %v6608, %v6609
      %v6611 = vrot.slane %v6610, 1
      %v6612 = vadd.f32 %v6610, %v6611
      %v6613 = vsel %vm913, %v6583, 0.0
      %v6614 = vsel %vm913, %v6584, 0.0
      %v6615 = vadd.f32 %v6613, %v6614
      %v6616 = vrot.slane %v6615, 4
      %v6617 = vadd.f32 %v6615, %v6616
      %v6618 = vrot.slane %v6617, 2
      %v6619 = vadd.f32 %v6617, %v6618
      %v6620 = vrot.slane %v6619, 1
      %v6621 = vadd.f32 %v6619, %v6620
      %v6622 = vsel %vm913, %v6585, 0.0
      %v6623 = vsel %vm913, %v6586, 0.0
      %v6624 = vadd.f32 %v6622, %v6623
      %v6625 = vrot.slane %v6624, 4
      %v6626 = vadd.f32 %v6624, %v6625
      %v6627 = vrot.slane %v6626, 2
      %v6628 = vadd.f32 %v6626, %v6627
      %v6629 = vrot.slane %v6628, 1
      %v6630 = vadd.f32 %v6628, %v6629
      %v6631 = vsel %vm913, %v6587, 0.0
      %v6632 = vsel %vm913, %v6588, 0.0
      %v6633 = vadd.f32 %v6631, %v6632
      %v6634 = vrot.slane %v6633, 4
      %v6635 = vadd.f32 %v6633, %v6634
      %v6636 = vrot.slane %v6635, 2
      %v6637 = vadd.f32 %v6635, %v6636
      %v6638 = vrot.slane %v6637, 1
      %v6639 = vadd.f32 %v6637, %v6638
      %v6640 = vsel %vm913, %v6589, 0.0
      %v6641 = vsel %vm913, %v6590, 0.0
      %v6642 = vadd.f32 %v6640, %v6641
      %v6643 = vrot.slane %v6642, 4
      %v6644 = vadd.f32 %v6642, %v6643
      %v6645 = vrot.slane %v6644, 2
      %v6646 = vadd.f32 %v6644, %v6645
      %v6647 = vrot.slane %v6646, 1
      %v6648 = vadd.f32 %v6646, %v6647
      %v6649 = vsel %vm913, %v6591, 0.0
      %v6650 = vsel %vm913, %v6592, 0.0
      %v6651 = vadd.f32 %v6649, %v6650
      %v6652 = vrot.slane %v6651, 4
      %v6653 = vadd.f32 %v6651, %v6652
      %v6654 = vrot.slane %v6653, 2
      %v6655 = vadd.f32 %v6653, %v6654
      %v6656 = vrot.slane %v6655, 1
      %v6657 = vadd.f32 %v6655, %v6656
      %v6658 = vsel %vm913, %v6593, 0.0
      %v6659 = vsel %vm913, %v6594, 0.0
      %v6660 = vadd.f32 %v6658, %v6659
      %v6661 = vrot.slane %v6660, 4
      %v6662 = vadd.f32 %v6660, %v6661
      %v6663 = vrot.slane %v6662, 2
      %v6664 = vadd.f32 %v6662, %v6663
      %v6665 = vrot.slane %v6664, 1
      %v6666 = vadd.f32 %v6664, %v6665
      %v6675 = vsel %vm994, %v6612, %v6603
      %v6676 = vsel %vm996, %v6621, %v6675
      %v6677 = vsel %vm998, %v6630, %v6676
      %v6678 = vsel %vm1000, %v6639, %v6677
      %v6679 = vsel %vm1002, %v6648, %v6678
      %v6680 = vsel %vm1004, %v6657, %v6679
      %v6681 = vsel %vm1006, %v6666, %v6680
      %s6683 = scalar_lea.vmem %s296, 72
      %6684 = vst.msk [vmem:[%s6683] sm:$0xff] %vm913, %v6681
      %v6685 = vadd.f32 %v5406, %v1627
      %v6686 = vsub.f32 %v1629, %v6685
      %v6687 = vmul.f32 %v6686, 1.032258
      %v6688 = vadd.f32 %v6687, -0.5
      %v6689 = vfloor.f32 %v6688
      %v6690 = vsub.f32 %v6688, %v6689
      %v6692 = vrot.slane %v6689, 1
      %v6693 = vrot.slane %v6689, 2
      %v6694 = vrot.slane %v6689, 3
      %v6695 = vrot.slane %v6689, 4
      %v6696 = vrot.slane %v6689, 5
      %v6697 = vrot.slane %v6689, 6
      %v6698 = vrot.slane %v6689, 7
      %v6707 = vrot.slane %v6690, 1
      %v6708 = vrot.slane %v6690, 2
      %v6709 = vrot.slane %v6690, 3
      %v6710 = vrot.slane %v6690, 4
      %v6711 = vrot.slane %v6690, 5
      %v6712 = vrot.slane %v6690, 6
      %v6713 = vrot.slane %v6690, 7
      %v6721 = vperm.slane %v6689, 0
      %v6722 = vperm.slane %v6692, 0
      %v6723 = vperm.slane %v6693, 0
      %v6724 = vperm.slane %v6694, 0
      %v6725 = vperm.slane %v6695, 0
      %v6726 = vperm.slane %v6696, 0
      %v6727 = vperm.slane %v6697, 0
      %v6728 = vperm.slane %v6698, 0
      %vm6737 = vcmp.eq.f32.partialorder %v316, %v6721
      %vm6738 = vcmp.eq.f32.partialorder %v317, %v6721
      %vm6739 = vcmp.eq.f32.partialorder %v318, %v6721
      %vm6740 = vcmp.eq.f32.partialorder %v319, %v6721
      %vm6741 = vcmp.eq.f32.partialorder %v316, %v6722
      %vm6742 = vcmp.eq.f32.partialorder %v317, %v6722
      %vm6743 = vcmp.eq.f32.partialorder %v318, %v6722
      %vm6744 = vcmp.eq.f32.partialorder %v319, %v6722
      %vm6745 = vcmp.eq.f32.partialorder %v316, %v6723
      %vm6746 = vcmp.eq.f32.partialorder %v317, %v6723
      %vm6747 = vcmp.eq.f32.partialorder %v318, %v6723
      %vm6748 = vcmp.eq.f32.partialorder %v319, %v6723
      %vm6749 = vcmp.eq.f32.partialorder %v316, %v6724
      %vm6750 = vcmp.eq.f32.partialorder %v317, %v6724
      %vm6751 = vcmp.eq.f32.partialorder %v318, %v6724
      %vm6752 = vcmp.eq.f32.partialorder %v319, %v6724
      %vm6753 = vcmp.eq.f32.partialorder %v316, %v6725
      %vm6754 = vcmp.eq.f32.partialorder %v317, %v6725
      %vm6755 = vcmp.eq.f32.partialorder %v318, %v6725
      %vm6756 = vcmp.eq.f32.partialorder %v319, %v6725
      %vm6757 = vcmp.eq.f32.partialorder %v316, %v6726
      %vm6758 = vcmp.eq.f32.partialorder %v317, %v6726
      %vm6759 = vcmp.eq.f32.partialorder %v318, %v6726
      %vm6760 = vcmp.eq.f32.partialorder %v319, %v6726
      %vm6761 = vcmp.eq.f32.partialorder %v316, %v6727
      %vm6762 = vcmp.eq.f32.partialorder %v317, %v6727
      %vm6763 = vcmp.eq.f32.partialorder %v318, %v6727
      %vm6764 = vcmp.eq.f32.partialorder %v319, %v6727
      %vm6765 = vcmp.eq.f32.partialorder %v316, %v6728
      %vm6766 = vcmp.eq.f32.partialorder %v317, %v6728
      %vm6767 = vcmp.eq.f32.partialorder %v318, %v6728
      %vm6768 = vcmp.eq.f32.partialorder %v319, %v6728
      %v6769 = vsub.f32 1.0, %v6690
      %v6770 = vsub.f32 1.0, %v6707
      %v6771 = vsub.f32 1.0, %v6708
      %v6772 = vsub.f32 1.0, %v6709
      %v6773 = vsub.f32 1.0, %v6710
      %v6774 = vsub.f32 1.0, %v6711
      %v6775 = vsub.f32 1.0, %v6712
      %v6776 = vsub.f32 1.0, %v6713
      %v6785 = vperm.slane %v6769, 0
      %v6786 = vperm.slane %v6770, 0
      %v6787 = vperm.slane %v6771, 0
      %v6788 = vperm.slane %v6772, 0
      %v6789 = vperm.slane %v6773, 0
      %v6790 = vperm.slane %v6774, 0
      %v6791 = vperm.slane %v6775, 0
      %v6792 = vperm.slane %v6776, 0
      %v6801 = vsel %vm6737, %v6785, 0.0
      %v6802 = vsel %vm6738, %v6785, 0.0
      %v6803 = vsel %vm6739, %v6785, 0.0
      %v6804 = vsel %vm6740, %v6785, 0.0
      %v6805 = vsel %vm6741, %v6786, 0.0
      %v6806 = vsel %vm6742, %v6786, 0.0
      %v6807 = vsel %vm6743, %v6786, 0.0
      %v6808 = vsel %vm6744, %v6786, 0.0
      %v6809 = vsel %vm6745, %v6787, 0.0
      %v6810 = vsel %vm6746, %v6787, 0.0
      %v6811 = vsel %vm6747, %v6787, 0.0
      %v6812 = vsel %vm6748, %v6787, 0.0
      %v6813 = vsel %vm6749, %v6788, 0.0
      %v6814 = vsel %vm6750, %v6788, 0.0
      %v6815 = vsel %vm6751, %v6788, 0.0
      %v6816 = vsel %vm6752, %v6788, 0.0
      %v6817 = vsel %vm6753, %v6789, 0.0
      %v6818 = vsel %vm6754, %v6789, 0.0
      %v6819 = vsel %vm6755, %v6789, 0.0
      %v6820 = vsel %vm6756, %v6789, 0.0
      %v6821 = vsel %vm6757, %v6790, 0.0
      %v6822 = vsel %vm6758, %v6790, 0.0
      %v6823 = vsel %vm6759, %v6790, 0.0
      %v6824 = vsel %vm6760, %v6790, 0.0
      %v6825 = vsel %vm6761, %v6791, 0.0
      %v6826 = vsel %vm6762, %v6791, 0.0
      %v6827 = vsel %vm6763, %v6791, 0.0
      %v6828 = vsel %vm6764, %v6791, 0.0
      %v6829 = vsel %vm6765, %v6792, 0.0
      %v6830 = vsel %vm6766, %v6792, 0.0
      %v6831 = vsel %vm6767, %v6792, 0.0
      %v6832 = vsel %vm6768, %v6792, 0.0
      %v6833 = vadd.f32 %v6689, 1.0
      %v6834 = vadd.f32 %v6692, 1.0
      %v6835 = vadd.f32 %v6693, 1.0
      %v6836 = vadd.f32 %v6694, 1.0
      %v6837 = vadd.f32 %v6695, 1.0
      %v6838 = vadd.f32 %v6696, 1.0
      %v6839 = vadd.f32 %v6697, 1.0
      %v6840 = vadd.f32 %v6698, 1.0
      %v6849 = vperm.slane %v6833, 0
      %v6850 = vperm.slane %v6834, 0
      %v6851 = vperm.slane %v6835, 0
      %v6852 = vperm.slane %v6836, 0
      %v6853 = vperm.slane %v6837, 0
      %v6854 = vperm.slane %v6838, 0
      %v6855 = vperm.slane %v6839, 0
      %v6856 = vperm.slane %v6840, 0
      %vm6865 = vcmp.eq.f32.partialorder %v316, %v6849
      %vm6866 = vcmp.eq.f32.partialorder %v317, %v6849
      %vm6867 = vcmp.eq.f32.partialorder %v318, %v6849
      %vm6868 = vcmp.eq.f32.partialorder %v319, %v6849
      %vm6869 = vcmp.eq.f32.partialorder %v316, %v6850
      %vm6870 = vcmp.eq.f32.partialorder %v317, %v6850
      %vm6871 = vcmp.eq.f32.partialorder %v318, %v6850
      %vm6872 = vcmp.eq.f32.partialorder %v319, %v6850
      %vm6873 = vcmp.eq.f32.partialorder %v316, %v6851
      %vm6874 = vcmp.eq.f32.partialorder %v317, %v6851
      %vm6875 = vcmp.eq.f32.partialorder %v318, %v6851
      %vm6876 = vcmp.eq.f32.partialorder %v319, %v6851
      %vm6877 = vcmp.eq.f32.partialorder %v316, %v6852
      %vm6878 = vcmp.eq.f32.partialorder %v317, %v6852
      %vm6879 = vcmp.eq.f32.partialorder %v318, %v6852
      %vm6880 = vcmp.eq.f32.partialorder %v319, %v6852
      %vm6881 = vcmp.eq.f32.partialorder %v316, %v6853
      %vm6882 = vcmp.eq.f32.partialorder %v317, %v6853
      %vm6883 = vcmp.eq.f32.partialorder %v318, %v6853
      %vm6884 = vcmp.eq.f32.partialorder %v319, %v6853
      %vm6885 = vcmp.eq.f32.partialorder %v316, %v6854
      %vm6886 = vcmp.eq.f32.partialorder %v317, %v6854
      %vm6887 = vcmp.eq.f32.partialorder %v318, %v6854
      %vm6888 = vcmp.eq.f32.partialorder %v319, %v6854
      %vm6889 = vcmp.eq.f32.partialorder %v316, %v6855
      %vm6890 = vcmp.eq.f32.partialorder %v317, %v6855
      %vm6891 = vcmp.eq.f32.partialorder %v318, %v6855
      %vm6892 = vcmp.eq.f32.partialorder %v319, %v6855
      %vm6893 = vcmp.eq.f32.partialorder %v316, %v6856
      %vm6894 = vcmp.eq.f32.partialorder %v317, %v6856
      %vm6895 = vcmp.eq.f32.partialorder %v318, %v6856
      %vm6896 = vcmp.eq.f32.partialorder %v319, %v6856
      %v6897 = vperm.slane %v6690, 0
      %v6898 = vperm.slane %v6707, 0
      %v6899 = vperm.slane %v6708, 0
      %v6900 = vperm.slane %v6709, 0
      %v6901 = vperm.slane %v6710, 0
      %v6902 = vperm.slane %v6711, 0
      %v6903 = vperm.slane %v6712, 0
      %v6904 = vperm.slane %v6713, 0
      %v6913 = vsel %vm6865, %v6897, 0.0
      %v6914 = vsel %vm6866, %v6897, 0.0
      %v6915 = vsel %vm6867, %v6897, 0.0
      %v6916 = vsel %vm6868, %v6897, 0.0
      %v6917 = vsel %vm6869, %v6898, 0.0
      %v6918 = vsel %vm6870, %v6898, 0.0
      %v6919 = vsel %vm6871, %v6898, 0.0
      %v6920 = vsel %vm6872, %v6898, 0.0
      %v6921 = vsel %vm6873, %v6899, 0.0
      %v6922 = vsel %vm6874, %v6899, 0.0
      %v6923 = vsel %vm6875, %v6899, 0.0
      %v6924 = vsel %vm6876, %v6899, 0.0
      %v6925 = vsel %vm6877, %v6900, 0.0
      %v6926 = vsel %vm6878, %v6900, 0.0
      %v6927 = vsel %vm6879, %v6900, 0.0
      %v6928 = vsel %vm6880, %v6900, 0.0
      %v6929 = vsel %vm6881, %v6901, 0.0
      %v6930 = vsel %vm6882, %v6901, 0.0
      %v6931 = vsel %vm6883, %v6901, 0.0
      %v6932 = vsel %vm6884, %v6901, 0.0
      %v6933 = vsel %vm6885, %v6902, 0.0
      %v6934 = vsel %vm6886, %v6902, 0.0
      %v6935 = vsel %vm6887, %v6902, 0.0
      %v6936 = vsel %vm6888, %v6902, 0.0
      %v6937 = vsel %vm6889, %v6903, 0.0
      %v6938 = vsel %vm6890, %v6903, 0.0
      %v6939 = vsel %vm6891, %v6903, 0.0
      %v6940 = vsel %vm6892, %v6903, 0.0
      %v6941 = vsel %vm6893, %v6904, 0.0
      %v6942 = vsel %vm6894, %v6904, 0.0
      %v6943 = vsel %vm6895, %v6904, 0.0
      %v6944 = vsel %vm6896, %v6904, 0.0
      %v6945 = vadd.f32 %v6801, %v6913
      %v6946 = vadd.f32 %v6802, %v6914
      %v6947 = vadd.f32 %v6803, %v6915
      %v6948 = vadd.f32 %v6804, %v6916
      %v6949 = vadd.f32 %v6805, %v6917
      %v6950 = vadd.f32 %v6806, %v6918
      %v6951 = vadd.f32 %v6807, %v6919
      %v6952 = vadd.f32 %v6808, %v6920
      %v6953 = vadd.f32 %v6809, %v6921
      %v6954 = vadd.f32 %v6810, %v6922
      %v6955 = vadd.f32 %v6811, %v6923
      %v6956 = vadd.f32 %v6812, %v6924
      %v6957 = vadd.f32 %v6813, %v6925
      %v6958 = vadd.f32 %v6814, %v6926
      %v6959 = vadd.f32 %v6815, %v6927
      %v6960 = vadd.f32 %v6816, %v6928
      %v6961 = vadd.f32 %v6817, %v6929
      %v6962 = vadd.f32 %v6818, %v6930
      %v6963 = vadd.f32 %v6819, %v6931
      %v6964 = vadd.f32 %v6820, %v6932
      %v6965 = vadd.f32 %v6821, %v6933
      %v6966 = vadd.f32 %v6822, %v6934
      %v6967 = vadd.f32 %v6823, %v6935
      %v6968 = vadd.f32 %v6824, %v6936
      %v6969 = vadd.f32 %v6825, %v6937
      %v6970 = vadd.f32 %v6826, %v6938
      %v6971 = vadd.f32 %v6827, %v6939
      %v6972 = vadd.f32 %v6828, %v6940
      %v6973 = vadd.f32 %v6829, %v6941
      %v6974 = vadd.f32 %v6830, %v6942
      %v6975 = vadd.f32 %v6831, %v6943
      %v6976 = vadd.f32 %v6832, %v6944
      %6977 = vmatpush.msra.mxu0 0.0
      %6978 = vmatpush.msra.mxu0 0.0
      %6979 = vmatpush.msra.mxu0 0.0
      %6980 = vmatpush.msra.mxu0 0.0
      %6981 = vmatpush.msra.mxu0 0.0
      %6982 = vmatpush.msra.mxu0 0.0
      %6983 = vmatpush.msra.mxu0 0.0
      %6984 = vmatpush.msra.mxu0 0.0
      %6985 = vmatpush.msra.mxu0 0.0
      %6986 = vmatpush.msra.mxu0 0.0
      %6987 = vmatpush.msra.mxu0 0.0
      %6988 = vmatpush.msra.mxu0 0.0
      %6989 = vmatpush.msra.mxu0 %v6948
      %6990 = vmatpush.msra.mxu0 %v6947
      %6991 = vmatpush.msra.mxu0 %v6946
      %6992 = vmatpush.msra.mxu0 %v6945
      %6993 = vmatmul.f32.gmra.mxu0 %v5700
      %v6994 = vpop.f32.mrf.mxu0
      %v6995 = vadd.f32 0.0, %v6994
      %6996 = vmatmul.f32.gmra.mxu0 %v5703
      %v6997 = vpop.f32.mrf.mxu0
      %v6998 = vadd.f32 0.0, %v6997
      %6999 = vdwg.mxu0
      %7000 = vmatpush.msra.mxu0 0.0
      %7001 = vmatpush.msra.mxu0 0.0
      %7002 = vmatpush.msra.mxu0 0.0
      %7003 = vmatpush.msra.mxu0 0.0
      %7004 = vmatpush.msra.mxu0 0.0
      %7005 = vmatpush.msra.mxu0 0.0
      %7006 = vmatpush.msra.mxu0 0.0
      %7007 = vmatpush.msra.mxu0 0.0
      %7008 = vmatpush.msra.mxu0 0.0
      %7009 = vmatpush.msra.mxu0 0.0
      %7010 = vmatpush.msra.mxu0 0.0
      %7011 = vmatpush.msra.mxu0 0.0
      %7012 = vmatpush.msra.mxu0 %v6952
      %7013 = vmatpush.msra.mxu0 %v6951
      %7014 = vmatpush.msra.mxu0 %v6950
      %7015 = vmatpush.msra.mxu0 %v6949
      %7016 = vmatmul.f32.gmra.mxu0 %v5729
      %v7017 = vpop.f32.mrf.mxu0
      %v7018 = vadd.f32 0.0, %v7017
      %7019 = vmatmul.f32.gmra.mxu0 %v5732
      %v7020 = vpop.f32.mrf.mxu0
      %v7021 = vadd.f32 0.0, %v7020
      %7022 = vdwg.mxu0
      %7023 = vmatpush.msra.mxu0 0.0
      %7024 = vmatpush.msra.mxu0 0.0
      %7025 = vmatpush.msra.mxu0 0.0
      %7026 = vmatpush.msra.mxu0 0.0
      %7027 = vmatpush.msra.mxu0 0.0
      %7028 = vmatpush.msra.mxu0 0.0
      %7029 = vmatpush.msra.mxu0 0.0
      %7030 = vmatpush.msra.mxu0 0.0
      %7031 = vmatpush.msra.mxu0 0.0
      %7032 = vmatpush.msra.mxu0 0.0
      %7033 = vmatpush.msra.mxu0 0.0
      %7034 = vmatpush.msra.mxu0 0.0
      %7035 = vmatpush.msra.mxu0 %v6956
      %7036 = vmatpush.msra.mxu0 %v6955
      %7037 = vmatpush.msra.mxu0 %v6954
      %7038 = vmatpush.msra.mxu0 %v6953
      %7039 = vmatmul.f32.gmra.mxu0 %v5758
      %v7040 = vpop.f32.mrf.mxu0
      %v7041 = vadd.f32 0.0, %v7040
      %7042 = vmatmul.f32.gmra.mxu0 %v5761
      %v7043 = vpop.f32.mrf.mxu0
      %v7044 = vadd.f32 0.0, %v7043
      %7045 = vdwg.mxu0
      %7046 = vmatpush.msra.mxu0 0.0
      %7047 = vmatpush.msra.mxu0 0.0
      %7048 = vmatpush.msra.mxu0 0.0
      %7049 = vmatpush.msra.mxu0 0.0
      %7050 = vmatpush.msra.mxu0 0.0
      %7051 = vmatpush.msra.mxu0 0.0
      %7052 = vmatpush.msra.mxu0 0.0
      %7053 = vmatpush.msra.mxu0 0.0
      %7054 = vmatpush.msra.mxu0 0.0
      %7055 = vmatpush.msra.mxu0 0.0
      %7056 = vmatpush.msra.mxu0 0.0
      %7057 = vmatpush.msra.mxu0 0.0
      %7058 = vmatpush.msra.mxu0 %v6960
      %7059 = vmatpush.msra.mxu0 %v6959
      %7060 = vmatpush.msra.mxu0 %v6958
      %7061 = vmatpush.msra.mxu0 %v6957
      %7062 = vmatmul.f32.gmra.mxu0 %v5787
      %v7063 = vpop.f32.mrf.mxu0
      %v7064 = vadd.f32 0.0, %v7063
      %7065 = vmatmul.f32.gmra.mxu0 %v5790
      %v7066 = vpop.f32.mrf.mxu0
      %v7067 = vadd.f32 0.0, %v7066
      %7068 = vdwg.mxu0
      %7069 = vmatpush.msra.mxu0 0.0
      %7070 = vmatpush.msra.mxu0 0.0
      %7071 = vmatpush.msra.mxu0 0.0
      %7072 = vmatpush.msra.mxu0 0.0
      %7073 = vmatpush.msra.mxu0 0.0
      %7074 = vmatpush.msra.mxu0 0.0
      %7075 = vmatpush.msra.mxu0 0.0
      %7076 = vmatpush.msra.mxu0 0.0
      %7077 = vmatpush.msra.mxu0 0.0
      %7078 = vmatpush.msra.mxu0 0.0
      %7079 = vmatpush.msra.mxu0 0.0
      %7080 = vmatpush.msra.mxu0 0.0
      %7081 = vmatpush.msra.mxu0 %v6964
      %7082 = vmatpush.msra.mxu0 %v6963
      %7083 = vmatpush.msra.mxu0 %v6962
      %7084 = vmatpush.msra.mxu0 %v6961
      %7085 = vmatmul.f32.gmra.mxu0 %v5816
      %v7086 = vpop.f32.mrf.mxu0
      %v7087 = vadd.f32 0.0, %v7086
      %7088 = vmatmul.f32.gmra.mxu0 %v5819
      %v7089 = vpop.f32.mrf.mxu0
      %v7090 = vadd.f32 0.0, %v7089
      %7091 = vdwg.mxu0
      %7092 = vmatpush.msra.mxu0 0.0
      %7093 = vmatpush.msra.mxu0 0.0
      %7094 = vmatpush.msra.mxu0 0.0
      %7095 = vmatpush.msra.mxu0 0.0
      %7096 = vmatpush.msra.mxu0 0.0
      %7097 = vmatpush.msra.mxu0 0.0
      %7098 = vmatpush.msra.mxu0 0.0
      %7099 = vmatpush.msra.mxu0 0.0
      %7100 = vmatpush.msra.mxu0 0.0
      %7101 = vmatpush.msra.mxu0 0.0
      %7102 = vmatpush.msra.mxu0 0.0
      %7103 = vmatpush.msra.mxu0 0.0
      %7104 = vmatpush.msra.mxu0 %v6968
      %7105 = vmatpush.msra.mxu0 %v6967
      %7106 = vmatpush.msra.mxu0 %v6966
      %7107 = vmatpush.msra.mxu0 %v6965
      %7108 = vmatmul.f32.gmra.mxu0 %v5845
      %v7109 = vpop.f32.mrf.mxu0
      %v7110 = vadd.f32 0.0, %v7109
      %7111 = vmatmul.f32.gmra.mxu0 %v5848
      %v7112 = vpop.f32.mrf.mxu0
      %v7113 = vadd.f32 0.0, %v7112
      %7114 = vdwg.mxu0
      %7115 = vmatpush.msra.mxu0 0.0
      %7116 = vmatpush.msra.mxu0 0.0
      %7117 = vmatpush.msra.mxu0 0.0
      %7118 = vmatpush.msra.mxu0 0.0
      %7119 = vmatpush.msra.mxu0 0.0
      %7120 = vmatpush.msra.mxu0 0.0
      %7121 = vmatpush.msra.mxu0 0.0
      %7122 = vmatpush.msra.mxu0 0.0
      %7123 = vmatpush.msra.mxu0 0.0
      %7124 = vmatpush.msra.mxu0 0.0
      %7125 = vmatpush.msra.mxu0 0.0
      %7126 = vmatpush.msra.mxu0 0.0
      %7127 = vmatpush.msra.mxu0 %v6972
      %7128 = vmatpush.msra.mxu0 %v6971
      %7129 = vmatpush.msra.mxu0 %v6970
      %7130 = vmatpush.msra.mxu0 %v6969
      %7131 = vmatmul.f32.gmra.mxu0 %v5874
      %v7132 = vpop.f32.mrf.mxu0
      %v7133 = vadd.f32 0.0, %v7132
      %7134 = vmatmul.f32.gmra.mxu0 %v5877
      %v7135 = vpop.f32.mrf.mxu0
      %v7136 = vadd.f32 0.0, %v7135
      %7137 = vdwg.mxu0
      %7138 = vmatpush.msra.mxu0 0.0
      %7139 = vmatpush.msra.mxu0 0.0
      %7140 = vmatpush.msra.mxu0 0.0
      %7141 = vmatpush.msra.mxu0 0.0
      %7142 = vmatpush.msra.mxu0 0.0
      %7143 = vmatpush.msra.mxu0 0.0
      %7144 = vmatpush.msra.mxu0 0.0
      %7145 = vmatpush.msra.mxu0 0.0
      %7146 = vmatpush.msra.mxu0 0.0
      %7147 = vmatpush.msra.mxu0 0.0
      %7148 = vmatpush.msra.mxu0 0.0
      %7149 = vmatpush.msra.mxu0 0.0
      %7150 = vmatpush.msra.mxu0 %v6976
      %7151 = vmatpush.msra.mxu0 %v6975
      %7152 = vmatpush.msra.mxu0 %v6974
      %7153 = vmatpush.msra.mxu0 %v6973
      %7154 = vmatmul.f32.gmra.mxu0 %v5903
      %v7155 = vpop.f32.mrf.mxu0
      %v7156 = vadd.f32 0.0, %v7155
      %7157 = vmatmul.f32.gmra.mxu0 %v5906
      %v7158 = vpop.f32.mrf.mxu0
      %v7159 = vadd.f32 0.0, %v7158
      %7160 = vdwg.mxu0
      %s7161 = scalar_lea.vmem %s272, 1280
      %v7162 = vld [vmem:[%s7161] sm:$0xff]
      %v7163 = vld [vmem:[%s7161 + $0x8] sm:$0xff]
      %v7164 = vld [vmem:[%s7161 + $0x10] sm:$0xff]
      %v7165 = vld [vmem:[%s7161 + $0x18] sm:$0xff]
      %v7166 = vld [vmem:[%s7161 + $0x20] sm:$0xff]
      %v7167 = vld [vmem:[%s7161 + $0x28] sm:$0xff]
      %v7168 = vld [vmem:[%s7161 + $0x30] sm:$0xff]
      %v7169 = vld [vmem:[%s7161 + $0x38] sm:$0xff]
      %v7170 = vld [vmem:[%s7161 + $0x40] sm:$0xff]
      %v7171 = vld [vmem:[%s7161 + $0x48] sm:$0xff]
      %v7172 = vld [vmem:[%s7161 + $0x50] sm:$0xff]
      %v7173 = vld [vmem:[%s7161 + $0x58] sm:$0xff]
      %v7174 = vld [vmem:[%s7161 + $0x60] sm:$0xff]
      %v7175 = vld [vmem:[%s7161 + $0x68] sm:$0xff]
      %v7176 = vld [vmem:[%s7161 + $0x70] sm:$0xff]
      %v7177 = vld [vmem:[%s7161 + $0x78] sm:$0xff]
      %v7178 = vsub.f32 %v7162, %v6995
      %v7179 = vsub.f32 %v7163, %v6998
      %v7180 = vsub.f32 %v7164, %v7018
      %v7181 = vsub.f32 %v7165, %v7021
      %v7182 = vsub.f32 %v7166, %v7041
      %v7183 = vsub.f32 %v7167, %v7044
      %v7184 = vsub.f32 %v7168, %v7064
      %v7185 = vsub.f32 %v7169, %v7067
      %v7186 = vsub.f32 %v7170, %v7087
      %v7187 = vsub.f32 %v7171, %v7090
      %v7188 = vsub.f32 %v7172, %v7110
      %v7189 = vsub.f32 %v7173, %v7113
      %v7190 = vsub.f32 %v7174, %v7133
      %v7191 = vsub.f32 %v7175, %v7136
      %v7192 = vsub.f32 %v7176, %v7156
      %v7193 = vsub.f32 %v7177, %v7159
      %v7194 = vand.u32 2147483647, %v7178
      %v7195 = vand.u32 2147483647, %v7179
      %v7196 = vand.u32 2147483647, %v7180
      %v7197 = vand.u32 2147483647, %v7181
      %v7198 = vand.u32 2147483647, %v7182
      %v7199 = vand.u32 2147483647, %v7183
      %v7200 = vand.u32 2147483647, %v7184
      %v7201 = vand.u32 2147483647, %v7185
      %v7202 = vand.u32 2147483647, %v7186
      %v7203 = vand.u32 2147483647, %v7187
      %v7204 = vand.u32 2147483647, %v7188
      %v7205 = vand.u32 2147483647, %v7189
      %v7206 = vand.u32 2147483647, %v7190
      %v7207 = vand.u32 2147483647, %v7191
      %v7208 = vand.u32 2147483647, %v7192
      %v7209 = vand.u32 2147483647, %v7193
      %v7210 = vsel %vm913, %v7194, 0.0
      %v7211 = vsel %vm913, %v7195, 0.0
      %v7212 = vadd.f32 %v7210, %v7211
      %v7213 = vrot.slane %v7212, 4
      %v7214 = vadd.f32 %v7212, %v7213
      %v7215 = vrot.slane %v7214, 2
      %v7216 = vadd.f32 %v7214, %v7215
      %v7217 = vrot.slane %v7216, 1
      %v7218 = vadd.f32 %v7216, %v7217
      %v7219 = vsel %vm913, %v7196, 0.0
      %v7220 = vsel %vm913, %v7197, 0.0
      %v7221 = vadd.f32 %v7219, %v7220
      %v7222 = vrot.slane %v7221, 4
      %v7223 = vadd.f32 %v7221, %v7222
      %v7224 = vrot.slane %v7223, 2
      %v7225 = vadd.f32 %v7223, %v7224
      %v7226 = vrot.slane %v7225, 1
      %v7227 = vadd.f32 %v7225, %v7226
      %v7228 = vsel %vm913, %v7198, 0.0
      %v7229 = vsel %vm913, %v7199, 0.0
      %v7230 = vadd.f32 %v7228, %v7229
      %v7231 = vrot.slane %v7230, 4
      %v7232 = vadd.f32 %v7230, %v7231
      %v7233 = vrot.slane %v7232, 2
      %v7234 = vadd.f32 %v7232, %v7233
      %v7235 = vrot.slane %v7234, 1
      %v7236 = vadd.f32 %v7234, %v7235
      %v7237 = vsel %vm913, %v7200, 0.0
      %v7238 = vsel %vm913, %v7201, 0.0
      %v7239 = vadd.f32 %v7237, %v7238
      %v7240 = vrot.slane %v7239, 4
      %v7241 = vadd.f32 %v7239, %v7240
      %v7242 = vrot.slane %v7241, 2
      %v7243 = vadd.f32 %v7241, %v7242
      %v7244 = vrot.slane %v7243, 1
      %v7245 = vadd.f32 %v7243, %v7244
      %v7246 = vsel %vm913, %v7202, 0.0
      %v7247 = vsel %vm913, %v7203, 0.0
      %v7248 = vadd.f32 %v7246, %v7247
      %v7249 = vrot.slane %v7248, 4
      %v7250 = vadd.f32 %v7248, %v7249
      %v7251 = vrot.slane %v7250, 2
      %v7252 = vadd.f32 %v7250, %v7251
      %v7253 = vrot.slane %v7252, 1
      %v7254 = vadd.f32 %v7252, %v7253
      %v7255 = vsel %vm913, %v7204, 0.0
      %v7256 = vsel %vm913, %v7205, 0.0
      %v7257 = vadd.f32 %v7255, %v7256
      %v7258 = vrot.slane %v7257, 4
      %v7259 = vadd.f32 %v7257, %v7258
      %v7260 = vrot.slane %v7259, 2
      %v7261 = vadd.f32 %v7259, %v7260
      %v7262 = vrot.slane %v7261, 1
      %v7263 = vadd.f32 %v7261, %v7262
      %v7264 = vsel %vm913, %v7206, 0.0
      %v7265 = vsel %vm913, %v7207, 0.0
      %v7266 = vadd.f32 %v7264, %v7265
      %v7267 = vrot.slane %v7266, 4
      %v7268 = vadd.f32 %v7266, %v7267
      %v7269 = vrot.slane %v7268, 2
      %v7270 = vadd.f32 %v7268, %v7269
      %v7271 = vrot.slane %v7270, 1
      %v7272 = vadd.f32 %v7270, %v7271
      %v7273 = vsel %vm913, %v7208, 0.0
      %v7274 = vsel %vm913, %v7209, 0.0
      %v7275 = vadd.f32 %v7273, %v7274
      %v7276 = vrot.slane %v7275, 4
      %v7277 = vadd.f32 %v7275, %v7276
      %v7278 = vrot.slane %v7277, 2
      %v7279 = vadd.f32 %v7277, %v7278
      %v7280 = vrot.slane %v7279, 1
      %v7281 = vadd.f32 %v7279, %v7280
      %v7290 = vsel %vm994, %v7227, %v7218
      %v7291 = vsel %vm996, %v7236, %v7290
      %v7292 = vsel %vm998, %v7245, %v7291
      %v7293 = vsel %vm1000, %v7254, %v7292
      %v7294 = vsel %vm1002, %v7263, %v7293
      %v7295 = vsel %vm1004, %v7272, %v7294
      %v7296 = vsel %vm1006, %v7281, %v7295
      %s7298 = scalar_lea.vmem %s296, 80
      %7299 = vst.msk [vmem:[%s7298] sm:$0xff] %vm913, %v7296
      %v7300 = vadd.f32 %v5406, %v2244
      %v7301 = vsub.f32 %v2246, %v7300
      %v7302 = vmul.f32 %v7301, 1.032258
      %v7303 = vadd.f32 %v7302, -0.5
      %v7304 = vfloor.f32 %v7303
      %v7305 = vsub.f32 %v7303, %v7304
      %v7307 = vrot.slane %v7304, 1
      %v7308 = vrot.slane %v7304, 2
      %v7309 = vrot.slane %v7304, 3
      %v7310 = vrot.slane %v7304, 4
      %v7311 = vrot.slane %v7304, 5
      %v7312 = vrot.slane %v7304, 6
      %v7313 = vrot.slane %v7304, 7
      %v7322 = vrot.slane %v7305, 1
      %v7323 = vrot.slane %v7305, 2
      %v7324 = vrot.slane %v7305, 3
      %v7325 = vrot.slane %v7305, 4
      %v7326 = vrot.slane %v7305, 5
      %v7327 = vrot.slane %v7305, 6
      %v7328 = vrot.slane %v7305, 7
      %v7336 = vperm.slane %v7304, 0
      %v7337 = vperm.slane %v7307, 0
      %v7338 = vperm.slane %v7308, 0
      %v7339 = vperm.slane %v7309, 0
      %v7340 = vperm.slane %v7310, 0
      %v7341 = vperm.slane %v7311, 0
      %v7342 = vperm.slane %v7312, 0
      %v7343 = vperm.slane %v7313, 0
      %vm7352 = vcmp.eq.f32.partialorder %v316, %v7336
      %vm7353 = vcmp.eq.f32.partialorder %v317, %v7336
      %vm7354 = vcmp.eq.f32.partialorder %v318, %v7336
      %vm7355 = vcmp.eq.f32.partialorder %v319, %v7336
      %vm7356 = vcmp.eq.f32.partialorder %v316, %v7337
      %vm7357 = vcmp.eq.f32.partialorder %v317, %v7337
      %vm7358 = vcmp.eq.f32.partialorder %v318, %v7337
      %vm7359 = vcmp.eq.f32.partialorder %v319, %v7337
      %vm7360 = vcmp.eq.f32.partialorder %v316, %v7338
      %vm7361 = vcmp.eq.f32.partialorder %v317, %v7338
      %vm7362 = vcmp.eq.f32.partialorder %v318, %v7338
      %vm7363 = vcmp.eq.f32.partialorder %v319, %v7338
      %vm7364 = vcmp.eq.f32.partialorder %v316, %v7339
      %vm7365 = vcmp.eq.f32.partialorder %v317, %v7339
      %vm7366 = vcmp.eq.f32.partialorder %v318, %v7339
      %vm7367 = vcmp.eq.f32.partialorder %v319, %v7339
      %vm7368 = vcmp.eq.f32.partialorder %v316, %v7340
      %vm7369 = vcmp.eq.f32.partialorder %v317, %v7340
      %vm7370 = vcmp.eq.f32.partialorder %v318, %v7340
      %vm7371 = vcmp.eq.f32.partialorder %v319, %v7340
      %vm7372 = vcmp.eq.f32.partialorder %v316, %v7341
      %vm7373 = vcmp.eq.f32.partialorder %v317, %v7341
      %vm7374 = vcmp.eq.f32.partialorder %v318, %v7341
      %vm7375 = vcmp.eq.f32.partialorder %v319, %v7341
      %vm7376 = vcmp.eq.f32.partialorder %v316, %v7342
      %vm7377 = vcmp.eq.f32.partialorder %v317, %v7342
      %vm7378 = vcmp.eq.f32.partialorder %v318, %v7342
      %vm7379 = vcmp.eq.f32.partialorder %v319, %v7342
      %vm7380 = vcmp.eq.f32.partialorder %v316, %v7343
      %vm7381 = vcmp.eq.f32.partialorder %v317, %v7343
      %vm7382 = vcmp.eq.f32.partialorder %v318, %v7343
      %vm7383 = vcmp.eq.f32.partialorder %v319, %v7343
      %v7384 = vsub.f32 1.0, %v7305
      %v7385 = vsub.f32 1.0, %v7322
      %v7386 = vsub.f32 1.0, %v7323
      %v7387 = vsub.f32 1.0, %v7324
      %v7388 = vsub.f32 1.0, %v7325
      %v7389 = vsub.f32 1.0, %v7326
      %v7390 = vsub.f32 1.0, %v7327
      %v7391 = vsub.f32 1.0, %v7328
      %v7400 = vperm.slane %v7384, 0
      %v7401 = vperm.slane %v7385, 0
      %v7402 = vperm.slane %v7386, 0
      %v7403 = vperm.slane %v7387, 0
      %v7404 = vperm.slane %v7388, 0
      %v7405 = vperm.slane %v7389, 0
      %v7406 = vperm.slane %v7390, 0
      %v7407 = vperm.slane %v7391, 0
      %v7416 = vsel %vm7352, %v7400, 0.0
      %v7417 = vsel %vm7353, %v7400, 0.0
      %v7418 = vsel %vm7354, %v7400, 0.0
      %v7419 = vsel %vm7355, %v7400, 0.0
      %v7420 = vsel %vm7356, %v7401, 0.0
      %v7421 = vsel %vm7357, %v7401, 0.0
      %v7422 = vsel %vm7358, %v7401, 0.0
      %v7423 = vsel %vm7359, %v7401, 0.0
      %v7424 = vsel %vm7360, %v7402, 0.0
      %v7425 = vsel %vm7361, %v7402, 0.0
      %v7426 = vsel %vm7362, %v7402, 0.0
      %v7427 = vsel %vm7363, %v7402, 0.0
      %v7428 = vsel %vm7364, %v7403, 0.0
      %v7429 = vsel %vm7365, %v7403, 0.0
      %v7430 = vsel %vm7366, %v7403, 0.0
      %v7431 = vsel %vm7367, %v7403, 0.0
      %v7432 = vsel %vm7368, %v7404, 0.0
      %v7433 = vsel %vm7369, %v7404, 0.0
      %v7434 = vsel %vm7370, %v7404, 0.0
      %v7435 = vsel %vm7371, %v7404, 0.0
      %v7436 = vsel %vm7372, %v7405, 0.0
      %v7437 = vsel %vm7373, %v7405, 0.0
      %v7438 = vsel %vm7374, %v7405, 0.0
      %v7439 = vsel %vm7375, %v7405, 0.0
      %v7440 = vsel %vm7376, %v7406, 0.0
      %v7441 = vsel %vm7377, %v7406, 0.0
      %v7442 = vsel %vm7378, %v7406, 0.0
      %v7443 = vsel %vm7379, %v7406, 0.0
      %v7444 = vsel %vm7380, %v7407, 0.0
      %v7445 = vsel %vm7381, %v7407, 0.0
      %v7446 = vsel %vm7382, %v7407, 0.0
      %v7447 = vsel %vm7383, %v7407, 0.0
      %v7448 = vadd.f32 %v7304, 1.0
      %v7449 = vadd.f32 %v7307, 1.0
      %v7450 = vadd.f32 %v7308, 1.0
      %v7451 = vadd.f32 %v7309, 1.0
      %v7452 = vadd.f32 %v7310, 1.0
      %v7453 = vadd.f32 %v7311, 1.0
      %v7454 = vadd.f32 %v7312, 1.0
      %v7455 = vadd.f32 %v7313, 1.0
      %v7464 = vperm.slane %v7448, 0
      %v7465 = vperm.slane %v7449, 0
      %v7466 = vperm.slane %v7450, 0
      %v7467 = vperm.slane %v7451, 0
      %v7468 = vperm.slane %v7452, 0
      %v7469 = vperm.slane %v7453, 0
      %v7470 = vperm.slane %v7454, 0
      %v7471 = vperm.slane %v7455, 0
      %vm7480 = vcmp.eq.f32.partialorder %v316, %v7464
      %vm7481 = vcmp.eq.f32.partialorder %v317, %v7464
      %vm7482 = vcmp.eq.f32.partialorder %v318, %v7464
      %vm7483 = vcmp.eq.f32.partialorder %v319, %v7464
      %vm7484 = vcmp.eq.f32.partialorder %v316, %v7465
      %vm7485 = vcmp.eq.f32.partialorder %v317, %v7465
      %vm7486 = vcmp.eq.f32.partialorder %v318, %v7465
      %vm7487 = vcmp.eq.f32.partialorder %v319, %v7465
      %vm7488 = vcmp.eq.f32.partialorder %v316, %v7466
      %vm7489 = vcmp.eq.f32.partialorder %v317, %v7466
      %vm7490 = vcmp.eq.f32.partialorder %v318, %v7466
      %vm7491 = vcmp.eq.f32.partialorder %v319, %v7466
      %vm7492 = vcmp.eq.f32.partialorder %v316, %v7467
      %vm7493 = vcmp.eq.f32.partialorder %v317, %v7467
      %vm7494 = vcmp.eq.f32.partialorder %v318, %v7467
      %vm7495 = vcmp.eq.f32.partialorder %v319, %v7467
      %vm7496 = vcmp.eq.f32.partialorder %v316, %v7468
      %vm7497 = vcmp.eq.f32.partialorder %v317, %v7468
      %vm7498 = vcmp.eq.f32.partialorder %v318, %v7468
      %vm7499 = vcmp.eq.f32.partialorder %v319, %v7468
      %vm7500 = vcmp.eq.f32.partialorder %v316, %v7469
      %vm7501 = vcmp.eq.f32.partialorder %v317, %v7469
      %vm7502 = vcmp.eq.f32.partialorder %v318, %v7469
      %vm7503 = vcmp.eq.f32.partialorder %v319, %v7469
      %vm7504 = vcmp.eq.f32.partialorder %v316, %v7470
      %vm7505 = vcmp.eq.f32.partialorder %v317, %v7470
      %vm7506 = vcmp.eq.f32.partialorder %v318, %v7470
      %vm7507 = vcmp.eq.f32.partialorder %v319, %v7470
      %vm7508 = vcmp.eq.f32.partialorder %v316, %v7471
      %vm7509 = vcmp.eq.f32.partialorder %v317, %v7471
      %vm7510 = vcmp.eq.f32.partialorder %v318, %v7471
      %vm7511 = vcmp.eq.f32.partialorder %v319, %v7471
      %v7512 = vperm.slane %v7305, 0
      %v7513 = vperm.slane %v7322, 0
      %v7514 = vperm.slane %v7323, 0
      %v7515 = vperm.slane %v7324, 0
      %v7516 = vperm.slane %v7325, 0
      %v7517 = vperm.slane %v7326, 0
      %v7518 = vperm.slane %v7327, 0
      %v7519 = vperm.slane %v7328, 0
      %v7528 = vsel %vm7480, %v7512, 0.0
      %v7529 = vsel %vm7481, %v7512, 0.0
      %v7530 = vsel %vm7482, %v7512, 0.0
      %v7531 = vsel %vm7483, %v7512, 0.0
      %v7532 = vsel %vm7484, %v7513, 0.0
      %v7533 = vsel %vm7485, %v7513, 0.0
      %v7534 = vsel %vm7486, %v7513, 0.0
      %v7535 = vsel %vm7487, %v7513, 0.0
      %v7536 = vsel %vm7488, %v7514, 0.0
      %v7537 = vsel %vm7489, %v7514, 0.0
      %v7538 = vsel %vm7490, %v7514, 0.0
      %v7539 = vsel %vm7491, %v7514, 0.0
      %v7540 = vsel %vm7492, %v7515, 0.0
      %v7541 = vsel %vm7493, %v7515, 0.0
      %v7542 = vsel %vm7494, %v7515, 0.0
      %v7543 = vsel %vm7495, %v7515, 0.0
      %v7544 = vsel %vm7496, %v7516, 0.0
      %v7545 = vsel %vm7497, %v7516, 0.0
      %v7546 = vsel %vm7498, %v7516, 0.0
      %v7547 = vsel %vm7499, %v7516, 0.0
      %v7548 = vsel %vm7500, %v7517, 0.0
      %v7549 = vsel %vm7501, %v7517, 0.0
      %v7550 = vsel %vm7502, %v7517, 0.0
      %v7551 = vsel %vm7503, %v7517, 0.0
      %v7552 = vsel %vm7504, %v7518, 0.0
      %v7553 = vsel %vm7505, %v7518, 0.0
      %v7554 = vsel %vm7506, %v7518, 0.0
      %v7555 = vsel %vm7507, %v7518, 0.0
      %v7556 = vsel %vm7508, %v7519, 0.0
      %v7557 = vsel %vm7509, %v7519, 0.0
      %v7558 = vsel %vm7510, %v7519, 0.0
      %v7559 = vsel %vm7511, %v7519, 0.0
      %v7560 = vadd.f32 %v7416, %v7528
      %v7561 = vadd.f32 %v7417, %v7529
      %v7562 = vadd.f32 %v7418, %v7530
      %v7563 = vadd.f32 %v7419, %v7531
      %v7564 = vadd.f32 %v7420, %v7532
      %v7565 = vadd.f32 %v7421, %v7533
      %v7566 = vadd.f32 %v7422, %v7534
      %v7567 = vadd.f32 %v7423, %v7535
      %v7568 = vadd.f32 %v7424, %v7536
      %v7569 = vadd.f32 %v7425, %v7537
      %v7570 = vadd.f32 %v7426, %v7538
      %v7571 = vadd.f32 %v7427, %v7539
      %v7572 = vadd.f32 %v7428, %v7540
      %v7573 = vadd.f32 %v7429, %v7541
      %v7574 = vadd.f32 %v7430, %v7542
      %v7575 = vadd.f32 %v7431, %v7543
      %v7576 = vadd.f32 %v7432, %v7544
      %v7577 = vadd.f32 %v7433, %v7545
      %v7578 = vadd.f32 %v7434, %v7546
      %v7579 = vadd.f32 %v7435, %v7547
      %v7580 = vadd.f32 %v7436, %v7548
      %v7581 = vadd.f32 %v7437, %v7549
      %v7582 = vadd.f32 %v7438, %v7550
      %v7583 = vadd.f32 %v7439, %v7551
      %v7584 = vadd.f32 %v7440, %v7552
      %v7585 = vadd.f32 %v7441, %v7553
      %v7586 = vadd.f32 %v7442, %v7554
      %v7587 = vadd.f32 %v7443, %v7555
      %v7588 = vadd.f32 %v7444, %v7556
      %v7589 = vadd.f32 %v7445, %v7557
      %v7590 = vadd.f32 %v7446, %v7558
      %v7591 = vadd.f32 %v7447, %v7559
      %7592 = vmatpush.msra.mxu0 0.0
      %7593 = vmatpush.msra.mxu0 0.0
      %7594 = vmatpush.msra.mxu0 0.0
      %7595 = vmatpush.msra.mxu0 0.0
      %7596 = vmatpush.msra.mxu0 0.0
      %7597 = vmatpush.msra.mxu0 0.0
      %7598 = vmatpush.msra.mxu0 0.0
      %7599 = vmatpush.msra.mxu0 0.0
      %7600 = vmatpush.msra.mxu0 0.0
      %7601 = vmatpush.msra.mxu0 0.0
      %7602 = vmatpush.msra.mxu0 0.0
      %7603 = vmatpush.msra.mxu0 0.0
      %7604 = vmatpush.msra.mxu0 %v7563
      %7605 = vmatpush.msra.mxu0 %v7562
      %7606 = vmatpush.msra.mxu0 %v7561
      %7607 = vmatpush.msra.mxu0 %v7560
      %7608 = vmatmul.f32.gmra.mxu0 %v5700
      %v7609 = vpop.f32.mrf.mxu0
      %v7610 = vadd.f32 0.0, %v7609
      %7611 = vmatmul.f32.gmra.mxu0 %v5703
      %v7612 = vpop.f32.mrf.mxu0
      %v7613 = vadd.f32 0.0, %v7612
      %7614 = vdwg.mxu0
      %7615 = vmatpush.msra.mxu0 0.0
      %7616 = vmatpush.msra.mxu0 0.0
      %7617 = vmatpush.msra.mxu0 0.0
      %7618 = vmatpush.msra.mxu0 0.0
      %7619 = vmatpush.msra.mxu0 0.0
      %7620 = vmatpush.msra.mxu0 0.0
      %7621 = vmatpush.msra.mxu0 0.0
      %7622 = vmatpush.msra.mxu0 0.0
      %7623 = vmatpush.msra.mxu0 0.0
      %7624 = vmatpush.msra.mxu0 0.0
      %7625 = vmatpush.msra.mxu0 0.0
      %7626 = vmatpush.msra.mxu0 0.0
      %7627 = vmatpush.msra.mxu0 %v7567
      %7628 = vmatpush.msra.mxu0 %v7566
      %7629 = vmatpush.msra.mxu0 %v7565
      %7630 = vmatpush.msra.mxu0 %v7564
      %7631 = vmatmul.f32.gmra.mxu0 %v5729
      %v7632 = vpop.f32.mrf.mxu0
      %v7633 = vadd.f32 0.0, %v7632
      %7634 = vmatmul.f32.gmra.mxu0 %v5732
      %v7635 = vpop.f32.mrf.mxu0
      %v7636 = vadd.f32 0.0, %v7635
      %7637 = vdwg.mxu0
      %7638 = vmatpush.msra.mxu0 0.0
      %7639 = vmatpush.msra.mxu0 0.0
      %7640 = vmatpush.msra.mxu0 0.0
      %7641 = vmatpush.msra.mxu0 0.0
      %7642 = vmatpush.msra.mxu0 0.0
      %7643 = vmatpush.msra.mxu0 0.0
      %7644 = vmatpush.msra.mxu0 0.0
      %7645 = vmatpush.msra.mxu0 0.0
      %7646 = vmatpush.msra.mxu0 0.0
      %7647 = vmatpush.msra.mxu0 0.0
      %7648 = vmatpush.msra.mxu0 0.0
      %7649 = vmatpush.msra.mxu0 0.0
      %7650 = vmatpush.msra.mxu0 %v7571
      %7651 = vmatpush.msra.mxu0 %v7570
      %7652 = vmatpush.msra.mxu0 %v7569
      %7653 = vmatpush.msra.mxu0 %v7568
      %7654 = vmatmul.f32.gmra.mxu0 %v5758
      %v7655 = vpop.f32.mrf.mxu0
      %v7656 = vadd.f32 0.0, %v7655
      %7657 = vmatmul.f32.gmra.mxu0 %v5761
      %v7658 = vpop.f32.mrf.mxu0
      %v7659 = vadd.f32 0.0, %v7658
      %7660 = vdwg.mxu0
      %7661 = vmatpush.msra.mxu0 0.0
      %7662 = vmatpush.msra.mxu0 0.0
      %7663 = vmatpush.msra.mxu0 0.0
      %7664 = vmatpush.msra.mxu0 0.0
      %7665 = vmatpush.msra.mxu0 0.0
      %7666 = vmatpush.msra.mxu0 0.0
      %7667 = vmatpush.msra.mxu0 0.0
      %7668 = vmatpush.msra.mxu0 0.0
      %7669 = vmatpush.msra.mxu0 0.0
      %7670 = vmatpush.msra.mxu0 0.0
      %7671 = vmatpush.msra.mxu0 0.0
      %7672 = vmatpush.msra.mxu0 0.0
      %7673 = vmatpush.msra.mxu0 %v7575
      %7674 = vmatpush.msra.mxu0 %v7574
      %7675 = vmatpush.msra.mxu0 %v7573
      %7676 = vmatpush.msra.mxu0 %v7572
      %7677 = vmatmul.f32.gmra.mxu0 %v5787
      %v7678 = vpop.f32.mrf.mxu0
      %v7679 = vadd.f32 0.0, %v7678
      %7680 = vmatmul.f32.gmra.mxu0 %v5790
      %v7681 = vpop.f32.mrf.mxu0
      %v7682 = vadd.f32 0.0, %v7681
      %7683 = vdwg.mxu0
      %7684 = vmatpush.msra.mxu0 0.0
      %7685 = vmatpush.msra.mxu0 0.0
      %7686 = vmatpush.msra.mxu0 0.0
      %7687 = vmatpush.msra.mxu0 0.0
      %7688 = vmatpush.msra.mxu0 0.0
      %7689 = vmatpush.msra.mxu0 0.0
      %7690 = vmatpush.msra.mxu0 0.0
      %7691 = vmatpush.msra.mxu0 0.0
      %7692 = vmatpush.msra.mxu0 0.0
      %7693 = vmatpush.msra.mxu0 0.0
      %7694 = vmatpush.msra.mxu0 0.0
      %7695 = vmatpush.msra.mxu0 0.0
      %7696 = vmatpush.msra.mxu0 %v7579
      %7697 = vmatpush.msra.mxu0 %v7578
      %7698 = vmatpush.msra.mxu0 %v7577
      %7699 = vmatpush.msra.mxu0 %v7576
      %7700 = vmatmul.f32.gmra.mxu0 %v5816
      %v7701 = vpop.f32.mrf.mxu0
      %v7702 = vadd.f32 0.0, %v7701
      %7703 = vmatmul.f32.gmra.mxu0 %v5819
      %v7704 = vpop.f32.mrf.mxu0
      %v7705 = vadd.f32 0.0, %v7704
      %7706 = vdwg.mxu0
      %7707 = vmatpush.msra.mxu0 0.0
      %7708 = vmatpush.msra.mxu0 0.0
      %7709 = vmatpush.msra.mxu0 0.0
      %7710 = vmatpush.msra.mxu0 0.0
      %7711 = vmatpush.msra.mxu0 0.0
      %7712 = vmatpush.msra.mxu0 0.0
      %7713 = vmatpush.msra.mxu0 0.0
      %7714 = vmatpush.msra.mxu0 0.0
      %7715 = vmatpush.msra.mxu0 0.0
      %7716 = vmatpush.msra.mxu0 0.0
      %7717 = vmatpush.msra.mxu0 0.0
      %7718 = vmatpush.msra.mxu0 0.0
      %7719 = vmatpush.msra.mxu0 %v7583
      %7720 = vmatpush.msra.mxu0 %v7582
      %7721 = vmatpush.msra.mxu0 %v7581
      %7722 = vmatpush.msra.mxu0 %v7580
      %7723 = vmatmul.f32.gmra.mxu0 %v5845
      %v7724 = vpop.f32.mrf.mxu0
      %v7725 = vadd.f32 0.0, %v7724
      %7726 = vmatmul.f32.gmra.mxu0 %v5848
      %v7727 = vpop.f32.mrf.mxu0
      %v7728 = vadd.f32 0.0, %v7727
      %7729 = vdwg.mxu0
      %7730 = vmatpush.msra.mxu0 0.0
      %7731 = vmatpush.msra.mxu0 0.0
      %7732 = vmatpush.msra.mxu0 0.0
      %7733 = vmatpush.msra.mxu0 0.0
      %7734 = vmatpush.msra.mxu0 0.0
      %7735 = vmatpush.msra.mxu0 0.0
      %7736 = vmatpush.msra.mxu0 0.0
      %7737 = vmatpush.msra.mxu0 0.0
      %7738 = vmatpush.msra.mxu0 0.0
      %7739 = vmatpush.msra.mxu0 0.0
      %7740 = vmatpush.msra.mxu0 0.0
      %7741 = vmatpush.msra.mxu0 0.0
      %7742 = vmatpush.msra.mxu0 %v7587
      %7743 = vmatpush.msra.mxu0 %v7586
      %7744 = vmatpush.msra.mxu0 %v7585
      %7745 = vmatpush.msra.mxu0 %v7584
      %7746 = vmatmul.f32.gmra.mxu0 %v5874
      %v7747 = vpop.f32.mrf.mxu0
      %v7748 = vadd.f32 0.0, %v7747
      %7749 = vmatmul.f32.gmra.mxu0 %v5877
      %v7750 = vpop.f32.mrf.mxu0
      %v7751 = vadd.f32 0.0, %v7750
      %7752 = vdwg.mxu0
      %7753 = vmatpush.msra.mxu0 0.0
      %7754 = vmatpush.msra.mxu0 0.0
      %7755 = vmatpush.msra.mxu0 0.0
      %7756 = vmatpush.msra.mxu0 0.0
      %7757 = vmatpush.msra.mxu0 0.0
      %7758 = vmatpush.msra.mxu0 0.0
      %7759 = vmatpush.msra.mxu0 0.0
      %7760 = vmatpush.msra.mxu0 0.0
      %7761 = vmatpush.msra.mxu0 0.0
      %7762 = vmatpush.msra.mxu0 0.0
      %7763 = vmatpush.msra.mxu0 0.0
      %7764 = vmatpush.msra.mxu0 0.0
      %7765 = vmatpush.msra.mxu0 %v7591
      %7766 = vmatpush.msra.mxu0 %v7590
      %7767 = vmatpush.msra.mxu0 %v7589
      %7768 = vmatpush.msra.mxu0 %v7588
      %7769 = vmatmul.f32.gmra.mxu0 %v5903
      %v7770 = vpop.f32.mrf.mxu0
      %v7771 = vadd.f32 0.0, %v7770
      %7772 = vmatmul.f32.gmra.mxu0 %v5906
      %v7773 = vpop.f32.mrf.mxu0
      %v7774 = vadd.f32 0.0, %v7773
      %7775 = vdwg.mxu0
      %s7776 = scalar_lea.vmem %s272, 1408
      %v7777 = vld [vmem:[%s7776] sm:$0xff]
      %v7778 = vld [vmem:[%s7776 + $0x8] sm:$0xff]
      %v7779 = vld [vmem:[%s7776 + $0x10] sm:$0xff]
      %v7780 = vld [vmem:[%s7776 + $0x18] sm:$0xff]
      %v7781 = vld [vmem:[%s7776 + $0x20] sm:$0xff]
      %v7782 = vld [vmem:[%s7776 + $0x28] sm:$0xff]
      %v7783 = vld [vmem:[%s7776 + $0x30] sm:$0xff]
      %v7784 = vld [vmem:[%s7776 + $0x38] sm:$0xff]
      %v7785 = vld [vmem:[%s7776 + $0x40] sm:$0xff]
      %v7786 = vld [vmem:[%s7776 + $0x48] sm:$0xff]
      %v7787 = vld [vmem:[%s7776 + $0x50] sm:$0xff]
      %v7788 = vld [vmem:[%s7776 + $0x58] sm:$0xff]
      %v7789 = vld [vmem:[%s7776 + $0x60] sm:$0xff]
      %v7790 = vld [vmem:[%s7776 + $0x68] sm:$0xff]
      %v7791 = vld [vmem:[%s7776 + $0x70] sm:$0xff]
      %v7792 = vld [vmem:[%s7776 + $0x78] sm:$0xff]
      %v7793 = vsub.f32 %v7777, %v7610
      %v7794 = vsub.f32 %v7778, %v7613
      %v7795 = vsub.f32 %v7779, %v7633
      %v7796 = vsub.f32 %v7780, %v7636
      %v7797 = vsub.f32 %v7781, %v7656
      %v7798 = vsub.f32 %v7782, %v7659
      %v7799 = vsub.f32 %v7783, %v7679
      %v7800 = vsub.f32 %v7784, %v7682
      %v7801 = vsub.f32 %v7785, %v7702
      %v7802 = vsub.f32 %v7786, %v7705
      %v7803 = vsub.f32 %v7787, %v7725
      %v7804 = vsub.f32 %v7788, %v7728
      %v7805 = vsub.f32 %v7789, %v7748
      %v7806 = vsub.f32 %v7790, %v7751
      %v7807 = vsub.f32 %v7791, %v7771
      %v7808 = vsub.f32 %v7792, %v7774
      %v7809 = vand.u32 2147483647, %v7793
      %v7810 = vand.u32 2147483647, %v7794
      %v7811 = vand.u32 2147483647, %v7795
      %v7812 = vand.u32 2147483647, %v7796
      %v7813 = vand.u32 2147483647, %v7797
      %v7814 = vand.u32 2147483647, %v7798
      %v7815 = vand.u32 2147483647, %v7799
      %v7816 = vand.u32 2147483647, %v7800
      %v7817 = vand.u32 2147483647, %v7801
      %v7818 = vand.u32 2147483647, %v7802
      %v7819 = vand.u32 2147483647, %v7803
      %v7820 = vand.u32 2147483647, %v7804
      %v7821 = vand.u32 2147483647, %v7805
      %v7822 = vand.u32 2147483647, %v7806
      %v7823 = vand.u32 2147483647, %v7807
      %v7824 = vand.u32 2147483647, %v7808
      %v7825 = vsel %vm913, %v7809, 0.0
      %v7826 = vsel %vm913, %v7810, 0.0
      %v7827 = vadd.f32 %v7825, %v7826
      %v7828 = vrot.slane %v7827, 4
      %v7829 = vadd.f32 %v7827, %v7828
      %v7830 = vrot.slane %v7829, 2
      %v7831 = vadd.f32 %v7829, %v7830
      %v7832 = vrot.slane %v7831, 1
      %v7833 = vadd.f32 %v7831, %v7832
      %v7834 = vsel %vm913, %v7811, 0.0
      %v7835 = vsel %vm913, %v7812, 0.0
      %v7836 = vadd.f32 %v7834, %v7835
      %v7837 = vrot.slane %v7836, 4
      %v7838 = vadd.f32 %v7836, %v7837
      %v7839 = vrot.slane %v7838, 2
      %v7840 = vadd.f32 %v7838, %v7839
      %v7841 = vrot.slane %v7840, 1
      %v7842 = vadd.f32 %v7840, %v7841
      %v7843 = vsel %vm913, %v7813, 0.0
      %v7844 = vsel %vm913, %v7814, 0.0
      %v7845 = vadd.f32 %v7843, %v7844
      %v7846 = vrot.slane %v7845, 4
      %v7847 = vadd.f32 %v7845, %v7846
      %v7848 = vrot.slane %v7847, 2
      %v7849 = vadd.f32 %v7847, %v7848
      %v7850 = vrot.slane %v7849, 1
      %v7851 = vadd.f32 %v7849, %v7850
      %v7852 = vsel %vm913, %v7815, 0.0
      %v7853 = vsel %vm913, %v7816, 0.0
      %v7854 = vadd.f32 %v7852, %v7853
      %v7855 = vrot.slane %v7854, 4
      %v7856 = vadd.f32 %v7854, %v7855
      %v7857 = vrot.slane %v7856, 2
      %v7858 = vadd.f32 %v7856, %v7857
      %v7859 = vrot.slane %v7858, 1
      %v7860 = vadd.f32 %v7858, %v7859
      %v7861 = vsel %vm913, %v7817, 0.0
      %v7862 = vsel %vm913, %v7818, 0.0
      %v7863 = vadd.f32 %v7861, %v7862
      %v7864 = vrot.slane %v7863, 4
      %v7865 = vadd.f32 %v7863, %v7864
      %v7866 = vrot.slane %v7865, 2
      %v7867 = vadd.f32 %v7865, %v7866
      %v7868 = vrot.slane %v7867, 1
      %v7869 = vadd.f32 %v7867, %v7868
      %v7870 = vsel %vm913, %v7819, 0.0
      %v7871 = vsel %vm913, %v7820, 0.0
      %v7872 = vadd.f32 %v7870, %v7871
      %v7873 = vrot.slane %v7872, 4
      %v7874 = vadd.f32 %v7872, %v7873
      %v7875 = vrot.slane %v7874, 2
      %v7876 = vadd.f32 %v7874, %v7875
      %v7877 = vrot.slane %v7876, 1
      %v7878 = vadd.f32 %v7876, %v7877
      %v7879 = vsel %vm913, %v7821, 0.0
      %v7880 = vsel %vm913, %v7822, 0.0
      %v7881 = vadd.f32 %v7879, %v7880
      %v7882 = vrot.slane %v7881, 4
      %v7883 = vadd.f32 %v7881, %v7882
      %v7884 = vrot.slane %v7883, 2
      %v7885 = vadd.f32 %v7883, %v7884
      %v7886 = vrot.slane %v7885, 1
      %v7887 = vadd.f32 %v7885, %v7886
      %v7888 = vsel %vm913, %v7823, 0.0
      %v7889 = vsel %vm913, %v7824, 0.0
      %v7890 = vadd.f32 %v7888, %v7889
      %v7891 = vrot.slane %v7890, 4
      %v7892 = vadd.f32 %v7890, %v7891
      %v7893 = vrot.slane %v7892, 2
      %v7894 = vadd.f32 %v7892, %v7893
      %v7895 = vrot.slane %v7894, 1
      %v7896 = vadd.f32 %v7894, %v7895
      %v7905 = vsel %vm994, %v7842, %v7833
      %v7906 = vsel %vm996, %v7851, %v7905
      %v7907 = vsel %vm998, %v7860, %v7906
      %v7908 = vsel %vm1000, %v7869, %v7907
      %v7909 = vsel %vm1002, %v7878, %v7908
      %v7910 = vsel %vm1004, %v7887, %v7909
      %v7911 = vsel %vm1006, %v7896, %v7910
      %s7913 = scalar_lea.vmem %s296, 88
      %7914 = vst.msk [vmem:[%s7913] sm:$0xff] %vm913, %v7911
      %s7915 = scalar_lea.vmem %s283, 384
      %v7916 = vld [vmem:[%s7915] sm:$0xff]
      %v7917 = vld [vmem:[%s7915 + $0x8] sm:$0xff]
      %v7918 = vld [vmem:[%s7915 + $0x10] sm:$0xff]
      %v7919 = vld [vmem:[%s7915 + $0x18] sm:$0xff]
      %v7920 = vld [vmem:[%s7915 + $0x20] sm:$0xff]
      %v7921 = vld [vmem:[%s7915 + $0x28] sm:$0xff]
      %v7922 = vld [vmem:[%s7915 + $0x30] sm:$0xff]
      %v7923 = vld [vmem:[%s7915 + $0x38] sm:$0xff]
      %v7924 = vld [vmem:[%s7915 + $0x40] sm:$0xff]
      %v7925 = vld [vmem:[%s7915 + $0x48] sm:$0xff]
      %v7926 = vld [vmem:[%s7915 + $0x50] sm:$0xff]
      %v7927 = vld [vmem:[%s7915 + $0x58] sm:$0xff]
      %v7928 = vld [vmem:[%s7915 + $0x60] sm:$0xff]
      %v7929 = vld [vmem:[%s7915 + $0x68] sm:$0xff]
      %v7930 = vld [vmem:[%s7915 + $0x70] sm:$0xff]
      %v7931 = vld [vmem:[%s7915 + $0x78] sm:$0xff]
      %v7932 = vmul.f32 %v302, 1.5
      %v7933 = vadd.f32 %v306, %v7932
      %v7934 = vadd.f32 %v7933, %v338
      %v7935 = vsub.f32 %v340, %v7934
      %v7936 = vmul.f32 %v7935, 1.032258
      %v7937 = vadd.f32 %v7936, -0.5
      %v7938 = vfloor.f32 %v7937
      %v7939 = vsub.f32 %v7937, %v7938
      %v7941 = vrot.slane %v7938, 1
      %v7942 = vrot.slane %v7938, 2
      %v7943 = vrot.slane %v7938, 3
      %v7944 = vrot.slane %v7938, 4
      %v7945 = vrot.slane %v7938, 5
      %v7946 = vrot.slane %v7938, 6
      %v7947 = vrot.slane %v7938, 7
      %v7956 = vrot.slane %v7939, 1
      %v7957 = vrot.slane %v7939, 2
      %v7958 = vrot.slane %v7939, 3
      %v7959 = vrot.slane %v7939, 4
      %v7960 = vrot.slane %v7939, 5
      %v7961 = vrot.slane %v7939, 6
      %v7962 = vrot.slane %v7939, 7
      %v7970 = vperm.slane %v7938, 0
      %v7971 = vperm.slane %v7941, 0
      %v7972 = vperm.slane %v7942, 0
      %v7973 = vperm.slane %v7943, 0
      %v7974 = vperm.slane %v7944, 0
      %v7975 = vperm.slane %v7945, 0
      %v7976 = vperm.slane %v7946, 0
      %v7977 = vperm.slane %v7947, 0
      %vm7986 = vcmp.eq.f32.partialorder %v316, %v7970
      %vm7987 = vcmp.eq.f32.partialorder %v317, %v7970
      %vm7988 = vcmp.eq.f32.partialorder %v318, %v7970
      %vm7989 = vcmp.eq.f32.partialorder %v319, %v7970
      %vm7990 = vcmp.eq.f32.partialorder %v316, %v7971
      %vm7991 = vcmp.eq.f32.partialorder %v317, %v7971
      %vm7992 = vcmp.eq.f32.partialorder %v318, %v7971
      %vm7993 = vcmp.eq.f32.partialorder %v319, %v7971
      %vm7994 = vcmp.eq.f32.partialorder %v316, %v7972
      %vm7995 = vcmp.eq.f32.partialorder %v317, %v7972
      %vm7996 = vcmp.eq.f32.partialorder %v318, %v7972
      %vm7997 = vcmp.eq.f32.partialorder %v319, %v7972
      %vm7998 = vcmp.eq.f32.partialorder %v316, %v7973
      %vm7999 = vcmp.eq.f32.partialorder %v317, %v7973
      %vm8000 = vcmp.eq.f32.partialorder %v318, %v7973
      %vm8001 = vcmp.eq.f32.partialorder %v319, %v7973
      %vm8002 = vcmp.eq.f32.partialorder %v316, %v7974
      %vm8003 = vcmp.eq.f32.partialorder %v317, %v7974
      %vm8004 = vcmp.eq.f32.partialorder %v318, %v7974
      %vm8005 = vcmp.eq.f32.partialorder %v319, %v7974
      %vm8006 = vcmp.eq.f32.partialorder %v316, %v7975
      %vm8007 = vcmp.eq.f32.partialorder %v317, %v7975
      %vm8008 = vcmp.eq.f32.partialorder %v318, %v7975
      %vm8009 = vcmp.eq.f32.partialorder %v319, %v7975
      %vm8010 = vcmp.eq.f32.partialorder %v316, %v7976
      %vm8011 = vcmp.eq.f32.partialorder %v317, %v7976
      %vm8012 = vcmp.eq.f32.partialorder %v318, %v7976
      %vm8013 = vcmp.eq.f32.partialorder %v319, %v7976
      %vm8014 = vcmp.eq.f32.partialorder %v316, %v7977
      %vm8015 = vcmp.eq.f32.partialorder %v317, %v7977
      %vm8016 = vcmp.eq.f32.partialorder %v318, %v7977
      %vm8017 = vcmp.eq.f32.partialorder %v319, %v7977
      %v8018 = vsub.f32 1.0, %v7939
      %v8019 = vsub.f32 1.0, %v7956
      %v8020 = vsub.f32 1.0, %v7957
      %v8021 = vsub.f32 1.0, %v7958
      %v8022 = vsub.f32 1.0, %v7959
      %v8023 = vsub.f32 1.0, %v7960
      %v8024 = vsub.f32 1.0, %v7961
      %v8025 = vsub.f32 1.0, %v7962
      %v8034 = vperm.slane %v8018, 0
      %v8035 = vperm.slane %v8019, 0
      %v8036 = vperm.slane %v8020, 0
      %v8037 = vperm.slane %v8021, 0
      %v8038 = vperm.slane %v8022, 0
      %v8039 = vperm.slane %v8023, 0
      %v8040 = vperm.slane %v8024, 0
      %v8041 = vperm.slane %v8025, 0
      %v8050 = vsel %vm7986, %v8034, 0.0
      %v8051 = vsel %vm7987, %v8034, 0.0
      %v8052 = vsel %vm7988, %v8034, 0.0
      %v8053 = vsel %vm7989, %v8034, 0.0
      %v8054 = vsel %vm7990, %v8035, 0.0
      %v8055 = vsel %vm7991, %v8035, 0.0
      %v8056 = vsel %vm7992, %v8035, 0.0
      %v8057 = vsel %vm7993, %v8035, 0.0
      %v8058 = vsel %vm7994, %v8036, 0.0
      %v8059 = vsel %vm7995, %v8036, 0.0
      %v8060 = vsel %vm7996, %v8036, 0.0
      %v8061 = vsel %vm7997, %v8036, 0.0
      %v8062 = vsel %vm7998, %v8037, 0.0
      %v8063 = vsel %vm7999, %v8037, 0.0
      %v8064 = vsel %vm8000, %v8037, 0.0
      %v8065 = vsel %vm8001, %v8037, 0.0
      %v8066 = vsel %vm8002, %v8038, 0.0
      %v8067 = vsel %vm8003, %v8038, 0.0
      %v8068 = vsel %vm8004, %v8038, 0.0
      %v8069 = vsel %vm8005, %v8038, 0.0
      %v8070 = vsel %vm8006, %v8039, 0.0
      %v8071 = vsel %vm8007, %v8039, 0.0
      %v8072 = vsel %vm8008, %v8039, 0.0
      %v8073 = vsel %vm8009, %v8039, 0.0
      %v8074 = vsel %vm8010, %v8040, 0.0
      %v8075 = vsel %vm8011, %v8040, 0.0
      %v8076 = vsel %vm8012, %v8040, 0.0
      %v8077 = vsel %vm8013, %v8040, 0.0
      %v8078 = vsel %vm8014, %v8041, 0.0
      %v8079 = vsel %vm8015, %v8041, 0.0
      %v8080 = vsel %vm8016, %v8041, 0.0
      %v8081 = vsel %vm8017, %v8041, 0.0
      %v8082 = vadd.f32 %v7938, 1.0
      %v8083 = vadd.f32 %v7941, 1.0
      %v8084 = vadd.f32 %v7942, 1.0
      %v8085 = vadd.f32 %v7943, 1.0
      %v8086 = vadd.f32 %v7944, 1.0
      %v8087 = vadd.f32 %v7945, 1.0
      %v8088 = vadd.f32 %v7946, 1.0
      %v8089 = vadd.f32 %v7947, 1.0
      %v8098 = vperm.slane %v8082, 0
      %v8099 = vperm.slane %v8083, 0
      %v8100 = vperm.slane %v8084, 0
      %v8101 = vperm.slane %v8085, 0
      %v8102 = vperm.slane %v8086, 0
      %v8103 = vperm.slane %v8087, 0
      %v8104 = vperm.slane %v8088, 0
      %v8105 = vperm.slane %v8089, 0
      %vm8114 = vcmp.eq.f32.partialorder %v316, %v8098
      %vm8115 = vcmp.eq.f32.partialorder %v317, %v8098
      %vm8116 = vcmp.eq.f32.partialorder %v318, %v8098
      %vm8117 = vcmp.eq.f32.partialorder %v319, %v8098
      %vm8118 = vcmp.eq.f32.partialorder %v316, %v8099
      %vm8119 = vcmp.eq.f32.partialorder %v317, %v8099
      %vm8120 = vcmp.eq.f32.partialorder %v318, %v8099
      %vm8121 = vcmp.eq.f32.partialorder %v319, %v8099
      %vm8122 = vcmp.eq.f32.partialorder %v316, %v8100
      %vm8123 = vcmp.eq.f32.partialorder %v317, %v8100
      %vm8124 = vcmp.eq.f32.partialorder %v318, %v8100
      %vm8125 = vcmp.eq.f32.partialorder %v319, %v8100
      %vm8126 = vcmp.eq.f32.partialorder %v316, %v8101
      %vm8127 = vcmp.eq.f32.partialorder %v317, %v8101
      %vm8128 = vcmp.eq.f32.partialorder %v318, %v8101
      %vm8129 = vcmp.eq.f32.partialorder %v319, %v8101
      %vm8130 = vcmp.eq.f32.partialorder %v316, %v8102
      %vm8131 = vcmp.eq.f32.partialorder %v317, %v8102
      %vm8132 = vcmp.eq.f32.partialorder %v318, %v8102
      %vm8133 = vcmp.eq.f32.partialorder %v319, %v8102
      %vm8134 = vcmp.eq.f32.partialorder %v316, %v8103
      %vm8135 = vcmp.eq.f32.partialorder %v317, %v8103
      %vm8136 = vcmp.eq.f32.partialorder %v318, %v8103
      %vm8137 = vcmp.eq.f32.partialorder %v319, %v8103
      %vm8138 = vcmp.eq.f32.partialorder %v316, %v8104
      %vm8139 = vcmp.eq.f32.partialorder %v317, %v8104
      %vm8140 = vcmp.eq.f32.partialorder %v318, %v8104
      %vm8141 = vcmp.eq.f32.partialorder %v319, %v8104
      %vm8142 = vcmp.eq.f32.partialorder %v316, %v8105
      %vm8143 = vcmp.eq.f32.partialorder %v317, %v8105
      %vm8144 = vcmp.eq.f32.partialorder %v318, %v8105
      %vm8145 = vcmp.eq.f32.partialorder %v319, %v8105
      %v8146 = vperm.slane %v7939, 0
      %v8147 = vperm.slane %v7956, 0
      %v8148 = vperm.slane %v7957, 0
      %v8149 = vperm.slane %v7958, 0
      %v8150 = vperm.slane %v7959, 0
      %v8151 = vperm.slane %v7960, 0
      %v8152 = vperm.slane %v7961, 0
      %v8153 = vperm.slane %v7962, 0
      %v8162 = vsel %vm8114, %v8146, 0.0
      %v8163 = vsel %vm8115, %v8146, 0.0
      %v8164 = vsel %vm8116, %v8146, 0.0
      %v8165 = vsel %vm8117, %v8146, 0.0
      %v8166 = vsel %vm8118, %v8147, 0.0
      %v8167 = vsel %vm8119, %v8147, 0.0
      %v8168 = vsel %vm8120, %v8147, 0.0
      %v8169 = vsel %vm8121, %v8147, 0.0
      %v8170 = vsel %vm8122, %v8148, 0.0
      %v8171 = vsel %vm8123, %v8148, 0.0
      %v8172 = vsel %vm8124, %v8148, 0.0
      %v8173 = vsel %vm8125, %v8148, 0.0
      %v8174 = vsel %vm8126, %v8149, 0.0
      %v8175 = vsel %vm8127, %v8149, 0.0
      %v8176 = vsel %vm8128, %v8149, 0.0
      %v8177 = vsel %vm8129, %v8149, 0.0
      %v8178 = vsel %vm8130, %v8150, 0.0
      %v8179 = vsel %vm8131, %v8150, 0.0
      %v8180 = vsel %vm8132, %v8150, 0.0
      %v8181 = vsel %vm8133, %v8150, 0.0
      %v8182 = vsel %vm8134, %v8151, 0.0
      %v8183 = vsel %vm8135, %v8151, 0.0
      %v8184 = vsel %vm8136, %v8151, 0.0
      %v8185 = vsel %vm8137, %v8151, 0.0
      %v8186 = vsel %vm8138, %v8152, 0.0
      %v8187 = vsel %vm8139, %v8152, 0.0
      %v8188 = vsel %vm8140, %v8152, 0.0
      %v8189 = vsel %vm8141, %v8152, 0.0
      %v8190 = vsel %vm8142, %v8153, 0.0
      %v8191 = vsel %vm8143, %v8153, 0.0
      %v8192 = vsel %vm8144, %v8153, 0.0
      %v8193 = vsel %vm8145, %v8153, 0.0
      %v8194 = vadd.f32 %v8050, %v8162
      %v8195 = vadd.f32 %v8051, %v8163
      %v8196 = vadd.f32 %v8052, %v8164
      %v8197 = vadd.f32 %v8053, %v8165
      %v8198 = vadd.f32 %v8054, %v8166
      %v8199 = vadd.f32 %v8055, %v8167
      %v8200 = vadd.f32 %v8056, %v8168
      %v8201 = vadd.f32 %v8057, %v8169
      %v8202 = vadd.f32 %v8058, %v8170
      %v8203 = vadd.f32 %v8059, %v8171
      %v8204 = vadd.f32 %v8060, %v8172
      %v8205 = vadd.f32 %v8061, %v8173
      %v8206 = vadd.f32 %v8062, %v8174
      %v8207 = vadd.f32 %v8063, %v8175
      %v8208 = vadd.f32 %v8064, %v8176
      %v8209 = vadd.f32 %v8065, %v8177
      %v8210 = vadd.f32 %v8066, %v8178
      %v8211 = vadd.f32 %v8067, %v8179
      %v8212 = vadd.f32 %v8068, %v8180
      %v8213 = vadd.f32 %v8069, %v8181
      %v8214 = vadd.f32 %v8070, %v8182
      %v8215 = vadd.f32 %v8071, %v8183
      %v8216 = vadd.f32 %v8072, %v8184
      %v8217 = vadd.f32 %v8073, %v8185
      %v8218 = vadd.f32 %v8074, %v8186
      %v8219 = vadd.f32 %v8075, %v8187
      %v8220 = vadd.f32 %v8076, %v8188
      %v8221 = vadd.f32 %v8077, %v8189
      %v8222 = vadd.f32 %v8078, %v8190
      %v8223 = vadd.f32 %v8079, %v8191
      %v8224 = vadd.f32 %v8080, %v8192
      %v8225 = vadd.f32 %v8081, %v8193
      %v8227 = vsel %vm632, %v7916, 0
      %v8230 = vsel %vm632, %v7917, 0
      %8232 = vmatpush.msra.mxu0 0.0
      %8233 = vmatpush.msra.mxu0 0.0
      %8234 = vmatpush.msra.mxu0 0.0
      %8235 = vmatpush.msra.mxu0 0.0
      %8236 = vmatpush.msra.mxu0 0.0
      %8237 = vmatpush.msra.mxu0 0.0
      %8238 = vmatpush.msra.mxu0 0.0
      %8239 = vmatpush.msra.mxu0 0.0
      %8240 = vmatpush.msra.mxu0 0.0
      %8241 = vmatpush.msra.mxu0 0.0
      %8242 = vmatpush.msra.mxu0 0.0
      %8243 = vmatpush.msra.mxu0 0.0
      %8244 = vmatpush.msra.mxu0 %v8197
      %8245 = vmatpush.msra.mxu0 %v8196
      %8246 = vmatpush.msra.mxu0 %v8195
      %8247 = vmatpush.msra.mxu0 %v8194
      %8248 = vmatmul.f32.gmra.mxu0 %v8227
      %v8249 = vpop.f32.mrf.mxu0
      %v8250 = vadd.f32 0.0, %v8249
      %8251 = vmatmul.f32.gmra.mxu0 %v8230
      %v8252 = vpop.f32.mrf.mxu0
      %v8253 = vadd.f32 0.0, %v8252
      %8254 = vdwg.mxu0
      %v8256 = vsel %vm632, %v7918, 0
      %v8259 = vsel %vm632, %v7919, 0
      %8261 = vmatpush.msra.mxu0 0.0
      %8262 = vmatpush.msra.mxu0 0.0
      %8263 = vmatpush.msra.mxu0 0.0
      %8264 = vmatpush.msra.mxu0 0.0
      %8265 = vmatpush.msra.mxu0 0.0
      %8266 = vmatpush.msra.mxu0 0.0
      %8267 = vmatpush.msra.mxu0 0.0
      %8268 = vmatpush.msra.mxu0 0.0
      %8269 = vmatpush.msra.mxu0 0.0
      %8270 = vmatpush.msra.mxu0 0.0
      %8271 = vmatpush.msra.mxu0 0.0
      %8272 = vmatpush.msra.mxu0 0.0
      %8273 = vmatpush.msra.mxu0 %v8201
      %8274 = vmatpush.msra.mxu0 %v8200
      %8275 = vmatpush.msra.mxu0 %v8199
      %8276 = vmatpush.msra.mxu0 %v8198
      %8277 = vmatmul.f32.gmra.mxu0 %v8256
      %v8278 = vpop.f32.mrf.mxu0
      %v8279 = vadd.f32 0.0, %v8278
      %8280 = vmatmul.f32.gmra.mxu0 %v8259
      %v8281 = vpop.f32.mrf.mxu0
      %v8282 = vadd.f32 0.0, %v8281
      %8283 = vdwg.mxu0
      %v8285 = vsel %vm632, %v7920, 0
      %v8288 = vsel %vm632, %v7921, 0
      %8290 = vmatpush.msra.mxu0 0.0
      %8291 = vmatpush.msra.mxu0 0.0
      %8292 = vmatpush.msra.mxu0 0.0
      %8293 = vmatpush.msra.mxu0 0.0
      %8294 = vmatpush.msra.mxu0 0.0
      %8295 = vmatpush.msra.mxu0 0.0
      %8296 = vmatpush.msra.mxu0 0.0
      %8297 = vmatpush.msra.mxu0 0.0
      %8298 = vmatpush.msra.mxu0 0.0
      %8299 = vmatpush.msra.mxu0 0.0
      %8300 = vmatpush.msra.mxu0 0.0
      %8301 = vmatpush.msra.mxu0 0.0
      %8302 = vmatpush.msra.mxu0 %v8205
      %8303 = vmatpush.msra.mxu0 %v8204
      %8304 = vmatpush.msra.mxu0 %v8203
      %8305 = vmatpush.msra.mxu0 %v8202
      %8306 = vmatmul.f32.gmra.mxu0 %v8285
      %v8307 = vpop.f32.mrf.mxu0
      %v8308 = vadd.f32 0.0, %v8307
      %8309 = vmatmul.f32.gmra.mxu0 %v8288
      %v8310 = vpop.f32.mrf.mxu0
      %v8311 = vadd.f32 0.0, %v8310
      %8312 = vdwg.mxu0
      %v8314 = vsel %vm632, %v7922, 0
      %v8317 = vsel %vm632, %v7923, 0
      %8319 = vmatpush.msra.mxu0 0.0
      %8320 = vmatpush.msra.mxu0 0.0
      %8321 = vmatpush.msra.mxu0 0.0
      %8322 = vmatpush.msra.mxu0 0.0
      %8323 = vmatpush.msra.mxu0 0.0
      %8324 = vmatpush.msra.mxu0 0.0
      %8325 = vmatpush.msra.mxu0 0.0
      %8326 = vmatpush.msra.mxu0 0.0
      %8327 = vmatpush.msra.mxu0 0.0
      %8328 = vmatpush.msra.mxu0 0.0
      %8329 = vmatpush.msra.mxu0 0.0
      %8330 = vmatpush.msra.mxu0 0.0
      %8331 = vmatpush.msra.mxu0 %v8209
      %8332 = vmatpush.msra.mxu0 %v8208
      %8333 = vmatpush.msra.mxu0 %v8207
      %8334 = vmatpush.msra.mxu0 %v8206
      %8335 = vmatmul.f32.gmra.mxu0 %v8314
      %v8336 = vpop.f32.mrf.mxu0
      %v8337 = vadd.f32 0.0, %v8336
      %8338 = vmatmul.f32.gmra.mxu0 %v8317
      %v8339 = vpop.f32.mrf.mxu0
      %v8340 = vadd.f32 0.0, %v8339
      %8341 = vdwg.mxu0
      %v8343 = vsel %vm632, %v7924, 0
      %v8346 = vsel %vm632, %v7925, 0
      %8348 = vmatpush.msra.mxu0 0.0
      %8349 = vmatpush.msra.mxu0 0.0
      %8350 = vmatpush.msra.mxu0 0.0
      %8351 = vmatpush.msra.mxu0 0.0
      %8352 = vmatpush.msra.mxu0 0.0
      %8353 = vmatpush.msra.mxu0 0.0
      %8354 = vmatpush.msra.mxu0 0.0
      %8355 = vmatpush.msra.mxu0 0.0
      %8356 = vmatpush.msra.mxu0 0.0
      %8357 = vmatpush.msra.mxu0 0.0
      %8358 = vmatpush.msra.mxu0 0.0
      %8359 = vmatpush.msra.mxu0 0.0
      %8360 = vmatpush.msra.mxu0 %v8213
      %8361 = vmatpush.msra.mxu0 %v8212
      %8362 = vmatpush.msra.mxu0 %v8211
      %8363 = vmatpush.msra.mxu0 %v8210
      %8364 = vmatmul.f32.gmra.mxu0 %v8343
      %v8365 = vpop.f32.mrf.mxu0
      %v8366 = vadd.f32 0.0, %v8365
      %8367 = vmatmul.f32.gmra.mxu0 %v8346
      %v8368 = vpop.f32.mrf.mxu0
      %v8369 = vadd.f32 0.0, %v8368
      %8370 = vdwg.mxu0
      %v8372 = vsel %vm632, %v7926, 0
      %v8375 = vsel %vm632, %v7927, 0
      %8377 = vmatpush.msra.mxu0 0.0
      %8378 = vmatpush.msra.mxu0 0.0
      %8379 = vmatpush.msra.mxu0 0.0
      %8380 = vmatpush.msra.mxu0 0.0
      %8381 = vmatpush.msra.mxu0 0.0
      %8382 = vmatpush.msra.mxu0 0.0
      %8383 = vmatpush.msra.mxu0 0.0
      %8384 = vmatpush.msra.mxu0 0.0
      %8385 = vmatpush.msra.mxu0 0.0
      %8386 = vmatpush.msra.mxu0 0.0
      %8387 = vmatpush.msra.mxu0 0.0
      %8388 = vmatpush.msra.mxu0 0.0
      %8389 = vmatpush.msra.mxu0 %v8217
      %8390 = vmatpush.msra.mxu0 %v8216
      %8391 = vmatpush.msra.mxu0 %v8215
      %8392 = vmatpush.msra.mxu0 %v8214
      %8393 = vmatmul.f32.gmra.mxu0 %v8372
      %v8394 = vpop.f32.mrf.mxu0
      %v8395 = vadd.f32 0.0, %v8394
      %8396 = vmatmul.f32.gmra.mxu0 %v8375
      %v8397 = vpop.f32.mrf.mxu0
      %v8398 = vadd.f32 0.0, %v8397
      %8399 = vdwg.mxu0
      %v8401 = vsel %vm632, %v7928, 0
      %v8404 = vsel %vm632, %v7929, 0
      %8406 = vmatpush.msra.mxu0 0.0
      %8407 = vmatpush.msra.mxu0 0.0
      %8408 = vmatpush.msra.mxu0 0.0
      %8409 = vmatpush.msra.mxu0 0.0
      %8410 = vmatpush.msra.mxu0 0.0
      %8411 = vmatpush.msra.mxu0 0.0
      %8412 = vmatpush.msra.mxu0 0.0
      %8413 = vmatpush.msra.mxu0 0.0
      %8414 = vmatpush.msra.mxu0 0.0
      %8415 = vmatpush.msra.mxu0 0.0
      %8416 = vmatpush.msra.mxu0 0.0
      %8417 = vmatpush.msra.mxu0 0.0
      %8418 = vmatpush.msra.mxu0 %v8221
      %8419 = vmatpush.msra.mxu0 %v8220
      %8420 = vmatpush.msra.mxu0 %v8219
      %8421 = vmatpush.msra.mxu0 %v8218
      %8422 = vmatmul.f32.gmra.mxu0 %v8401
      %v8423 = vpop.f32.mrf.mxu0
      %v8424 = vadd.f32 0.0, %v8423
      %8425 = vmatmul.f32.gmra.mxu0 %v8404
      %v8426 = vpop.f32.mrf.mxu0
      %v8427 = vadd.f32 0.0, %v8426
      %8428 = vdwg.mxu0
      %v8430 = vsel %vm632, %v7930, 0
      %v8433 = vsel %vm632, %v7931, 0
      %8435 = vmatpush.msra.mxu0 0.0
      %8436 = vmatpush.msra.mxu0 0.0
      %8437 = vmatpush.msra.mxu0 0.0
      %8438 = vmatpush.msra.mxu0 0.0
      %8439 = vmatpush.msra.mxu0 0.0
      %8440 = vmatpush.msra.mxu0 0.0
      %8441 = vmatpush.msra.mxu0 0.0
      %8442 = vmatpush.msra.mxu0 0.0
      %8443 = vmatpush.msra.mxu0 0.0
      %8444 = vmatpush.msra.mxu0 0.0
      %8445 = vmatpush.msra.mxu0 0.0
      %8446 = vmatpush.msra.mxu0 0.0
      %8447 = vmatpush.msra.mxu0 %v8225
      %8448 = vmatpush.msra.mxu0 %v8224
      %8449 = vmatpush.msra.mxu0 %v8223
      %8450 = vmatpush.msra.mxu0 %v8222
      %8451 = vmatmul.f32.gmra.mxu0 %v8430
      %v8452 = vpop.f32.mrf.mxu0
      %v8453 = vadd.f32 0.0, %v8452
      %8454 = vmatmul.f32.gmra.mxu0 %v8433
      %v8455 = vpop.f32.mrf.mxu0
      %v8456 = vadd.f32 0.0, %v8455
      %8457 = vdwg.mxu0
      %s8458 = scalar_lea.vmem %s272, 1536
      %v8459 = vld [vmem:[%s8458] sm:$0xff]
      %v8460 = vld [vmem:[%s8458 + $0x8] sm:$0xff]
      %v8461 = vld [vmem:[%s8458 + $0x10] sm:$0xff]
      %v8462 = vld [vmem:[%s8458 + $0x18] sm:$0xff]
      %v8463 = vld [vmem:[%s8458 + $0x20] sm:$0xff]
      %v8464 = vld [vmem:[%s8458 + $0x28] sm:$0xff]
      %v8465 = vld [vmem:[%s8458 + $0x30] sm:$0xff]
      %v8466 = vld [vmem:[%s8458 + $0x38] sm:$0xff]
      %v8467 = vld [vmem:[%s8458 + $0x40] sm:$0xff]
      %v8468 = vld [vmem:[%s8458 + $0x48] sm:$0xff]
      %v8469 = vld [vmem:[%s8458 + $0x50] sm:$0xff]
      %v8470 = vld [vmem:[%s8458 + $0x58] sm:$0xff]
      %v8471 = vld [vmem:[%s8458 + $0x60] sm:$0xff]
      %v8472 = vld [vmem:[%s8458 + $0x68] sm:$0xff]
      %v8473 = vld [vmem:[%s8458 + $0x70] sm:$0xff]
      %v8474 = vld [vmem:[%s8458 + $0x78] sm:$0xff]
      %v8475 = vsub.f32 %v8459, %v8250
      %v8476 = vsub.f32 %v8460, %v8253
      %v8477 = vsub.f32 %v8461, %v8279
      %v8478 = vsub.f32 %v8462, %v8282
      %v8479 = vsub.f32 %v8463, %v8308
      %v8480 = vsub.f32 %v8464, %v8311
      %v8481 = vsub.f32 %v8465, %v8337
      %v8482 = vsub.f32 %v8466, %v8340
      %v8483 = vsub.f32 %v8467, %v8366
      %v8484 = vsub.f32 %v8468, %v8369
      %v8485 = vsub.f32 %v8469, %v8395
      %v8486 = vsub.f32 %v8470, %v8398
      %v8487 = vsub.f32 %v8471, %v8424
      %v8488 = vsub.f32 %v8472, %v8427
      %v8489 = vsub.f32 %v8473, %v8453
      %v8490 = vsub.f32 %v8474, %v8456
      %v8491 = vand.u32 2147483647, %v8475
      %v8492 = vand.u32 2147483647, %v8476
      %v8493 = vand.u32 2147483647, %v8477
      %v8494 = vand.u32 2147483647, %v8478
      %v8495 = vand.u32 2147483647, %v8479
      %v8496 = vand.u32 2147483647, %v8480
      %v8497 = vand.u32 2147483647, %v8481
      %v8498 = vand.u32 2147483647, %v8482
      %v8499 = vand.u32 2147483647, %v8483
      %v8500 = vand.u32 2147483647, %v8484
      %v8501 = vand.u32 2147483647, %v8485
      %v8502 = vand.u32 2147483647, %v8486
      %v8503 = vand.u32 2147483647, %v8487
      %v8504 = vand.u32 2147483647, %v8488
      %v8505 = vand.u32 2147483647, %v8489
      %v8506 = vand.u32 2147483647, %v8490
      %v8507 = vsel %vm913, %v8491, 0.0
      %v8508 = vsel %vm913, %v8492, 0.0
      %v8509 = vadd.f32 %v8507, %v8508
      %v8510 = vrot.slane %v8509, 4
      %v8511 = vadd.f32 %v8509, %v8510
      %v8512 = vrot.slane %v8511, 2
      %v8513 = vadd.f32 %v8511, %v8512
      %v8514 = vrot.slane %v8513, 1
      %v8515 = vadd.f32 %v8513, %v8514
      %v8516 = vsel %vm913, %v8493, 0.0
      %v8517 = vsel %vm913, %v8494, 0.0
      %v8518 = vadd.f32 %v8516, %v8517
      %v8519 = vrot.slane %v8518, 4
      %v8520 = vadd.f32 %v8518, %v8519
      %v8521 = vrot.slane %v8520, 2
      %v8522 = vadd.f32 %v8520, %v8521
      %v8523 = vrot.slane %v8522, 1
      %v8524 = vadd.f32 %v8522, %v8523
      %v8525 = vsel %vm913, %v8495, 0.0
      %v8526 = vsel %vm913, %v8496, 0.0
      %v8527 = vadd.f32 %v8525, %v8526
      %v8528 = vrot.slane %v8527, 4
      %v8529 = vadd.f32 %v8527, %v8528
      %v8530 = vrot.slane %v8529, 2
      %v8531 = vadd.f32 %v8529, %v8530
      %v8532 = vrot.slane %v8531, 1
      %v8533 = vadd.f32 %v8531, %v8532
      %v8534 = vsel %vm913, %v8497, 0.0
      %v8535 = vsel %vm913, %v8498, 0.0
      %v8536 = vadd.f32 %v8534, %v8535
      %v8537 = vrot.slane %v8536, 4
      %v8538 = vadd.f32 %v8536, %v8537
      %v8539 = vrot.slane %v8538, 2
      %v8540 = vadd.f32 %v8538, %v8539
      %v8541 = vrot.slane %v8540, 1
      %v8542 = vadd.f32 %v8540, %v8541
      %v8543 = vsel %vm913, %v8499, 0.0
      %v8544 = vsel %vm913, %v8500, 0.0
      %v8545 = vadd.f32 %v8543, %v8544
      %v8546 = vrot.slane %v8545, 4
      %v8547 = vadd.f32 %v8545, %v8546
      %v8548 = vrot.slane %v8547, 2
      %v8549 = vadd.f32 %v8547, %v8548
      %v8550 = vrot.slane %v8549, 1
      %v8551 = vadd.f32 %v8549, %v8550
      %v8552 = vsel %vm913, %v8501, 0.0
      %v8553 = vsel %vm913, %v8502, 0.0
      %v8554 = vadd.f32 %v8552, %v8553
      %v8555 = vrot.slane %v8554, 4
      %v8556 = vadd.f32 %v8554, %v8555
      %v8557 = vrot.slane %v8556, 2
      %v8558 = vadd.f32 %v8556, %v8557
      %v8559 = vrot.slane %v8558, 1
      %v8560 = vadd.f32 %v8558, %v8559
      %v8561 = vsel %vm913, %v8503, 0.0
      %v8562 = vsel %vm913, %v8504, 0.0
      %v8563 = vadd.f32 %v8561, %v8562
      %v8564 = vrot.slane %v8563, 4
      %v8565 = vadd.f32 %v8563, %v8564
      %v8566 = vrot.slane %v8565, 2
      %v8567 = vadd.f32 %v8565, %v8566
      %v8568 = vrot.slane %v8567, 1
      %v8569 = vadd.f32 %v8567, %v8568
      %v8570 = vsel %vm913, %v8505, 0.0
      %v8571 = vsel %vm913, %v8506, 0.0
      %v8572 = vadd.f32 %v8570, %v8571
      %v8573 = vrot.slane %v8572, 4
      %v8574 = vadd.f32 %v8572, %v8573
      %v8575 = vrot.slane %v8574, 2
      %v8576 = vadd.f32 %v8574, %v8575
      %v8577 = vrot.slane %v8576, 1
      %v8578 = vadd.f32 %v8576, %v8577
      %v8587 = vsel %vm994, %v8524, %v8515
      %v8588 = vsel %vm996, %v8533, %v8587
      %v8589 = vsel %vm998, %v8542, %v8588
      %v8590 = vsel %vm1000, %v8551, %v8589
      %v8591 = vsel %vm1002, %v8560, %v8590
      %v8592 = vsel %vm1004, %v8569, %v8591
      %v8593 = vsel %vm1006, %v8578, %v8592
      %s8595 = scalar_lea.vmem %s296, 96
      %8596 = vst.msk [vmem:[%s8595] sm:$0xff] %vm913, %v8593
      %v8597 = vadd.f32 %v7933, %v1010
      %v8598 = vsub.f32 %v1012, %v8597
      %v8599 = vmul.f32 %v8598, 1.032258
      %v8600 = vadd.f32 %v8599, -0.5
      %v8601 = vfloor.f32 %v8600
      %v8602 = vsub.f32 %v8600, %v8601
      %v8604 = vrot.slane %v8601, 1
      %v8605 = vrot.slane %v8601, 2
      %v8606 = vrot.slane %v8601, 3
      %v8607 = vrot.slane %v8601, 4
      %v8608 = vrot.slane %v8601, 5
      %v8609 = vrot.slane %v8601, 6
      %v8610 = vrot.slane %v8601, 7
      %v8619 = vrot.slane %v8602, 1
      %v8620 = vrot.slane %v8602, 2
      %v8621 = vrot.slane %v8602, 3
      %v8622 = vrot.slane %v8602, 4
      %v8623 = vrot.slane %v8602, 5
      %v8624 = vrot.slane %v8602, 6
      %v8625 = vrot.slane %v8602, 7
      %v8633 = vperm.slane %v8601, 0
      %v8634 = vperm.slane %v8604, 0
      %v8635 = vperm.slane %v8605, 0
      %v8636 = vperm.slane %v8606, 0
      %v8637 = vperm.slane %v8607, 0
      %v8638 = vperm.slane %v8608, 0
      %v8639 = vperm.slane %v8609, 0
      %v8640 = vperm.slane %v8610, 0
      %vm8649 = vcmp.eq.f32.partialorder %v316, %v8633
      %vm8650 = vcmp.eq.f32.partialorder %v317, %v8633
      %vm8651 = vcmp.eq.f32.partialorder %v318, %v8633
      %vm8652 = vcmp.eq.f32.partialorder %v319, %v8633
      %vm8653 = vcmp.eq.f32.partialorder %v316, %v8634
      %vm8654 = vcmp.eq.f32.partialorder %v317, %v8634
      %vm8655 = vcmp.eq.f32.partialorder %v318, %v8634
      %vm8656 = vcmp.eq.f32.partialorder %v319, %v8634
      %vm8657 = vcmp.eq.f32.partialorder %v316, %v8635
      %vm8658 = vcmp.eq.f32.partialorder %v317, %v8635
      %vm8659 = vcmp.eq.f32.partialorder %v318, %v8635
      %vm8660 = vcmp.eq.f32.partialorder %v319, %v8635
      %vm8661 = vcmp.eq.f32.partialorder %v316, %v8636
      %vm8662 = vcmp.eq.f32.partialorder %v317, %v8636
      %vm8663 = vcmp.eq.f32.partialorder %v318, %v8636
      %vm8664 = vcmp.eq.f32.partialorder %v319, %v8636
      %vm8665 = vcmp.eq.f32.partialorder %v316, %v8637
      %vm8666 = vcmp.eq.f32.partialorder %v317, %v8637
      %vm8667 = vcmp.eq.f32.partialorder %v318, %v8637
      %vm8668 = vcmp.eq.f32.partialorder %v319, %v8637
      %vm8669 = vcmp.eq.f32.partialorder %v316, %v8638
      %vm8670 = vcmp.eq.f32.partialorder %v317, %v8638
      %vm8671 = vcmp.eq.f32.partialorder %v318, %v8638
      %vm8672 = vcmp.eq.f32.partialorder %v319, %v8638
      %vm8673 = vcmp.eq.f32.partialorder %v316, %v8639
      %vm8674 = vcmp.eq.f32.partialorder %v317, %v8639
      %vm8675 = vcmp.eq.f32.partialorder %v318, %v8639
      %vm8676 = vcmp.eq.f32.partialorder %v319, %v8639
      %vm8677 = vcmp.eq.f32.partialorder %v316, %v8640
      %vm8678 = vcmp.eq.f32.partialorder %v317, %v8640
      %vm8679 = vcmp.eq.f32.partialorder %v318, %v8640
      %vm8680 = vcmp.eq.f32.partialorder %v319, %v8640
      %v8681 = vsub.f32 1.0, %v8602
      %v8682 = vsub.f32 1.0, %v8619
      %v8683 = vsub.f32 1.0, %v8620
      %v8684 = vsub.f32 1.0, %v8621
      %v8685 = vsub.f32 1.0, %v8622
      %v8686 = vsub.f32 1.0, %v8623
      %v8687 = vsub.f32 1.0, %v8624
      %v8688 = vsub.f32 1.0, %v8625
      %v8697 = vperm.slane %v8681, 0
      %v8698 = vperm.slane %v8682, 0
      %v8699 = vperm.slane %v8683, 0
      %v8700 = vperm.slane %v8684, 0
      %v8701 = vperm.slane %v8685, 0
      %v8702 = vperm.slane %v8686, 0
      %v8703 = vperm.slane %v8687, 0
      %v8704 = vperm.slane %v8688, 0
      %v8713 = vsel %vm8649, %v8697, 0.0
      %v8714 = vsel %vm8650, %v8697, 0.0
      %v8715 = vsel %vm8651, %v8697, 0.0
      %v8716 = vsel %vm8652, %v8697, 0.0
      %v8717 = vsel %vm8653, %v8698, 0.0
      %v8718 = vsel %vm8654, %v8698, 0.0
      %v8719 = vsel %vm8655, %v8698, 0.0
      %v8720 = vsel %vm8656, %v8698, 0.0
      %v8721 = vsel %vm8657, %v8699, 0.0
      %v8722 = vsel %vm8658, %v8699, 0.0
      %v8723 = vsel %vm8659, %v8699, 0.0
      %v8724 = vsel %vm8660, %v8699, 0.0
      %v8725 = vsel %vm8661, %v8700, 0.0
      %v8726 = vsel %vm8662, %v8700, 0.0
      %v8727 = vsel %vm8663, %v8700, 0.0
      %v8728 = vsel %vm8664, %v8700, 0.0
      %v8729 = vsel %vm8665, %v8701, 0.0
      %v8730 = vsel %vm8666, %v8701, 0.0
      %v8731 = vsel %vm8667, %v8701, 0.0
      %v8732 = vsel %vm8668, %v8701, 0.0
      %v8733 = vsel %vm8669, %v8702, 0.0
      %v8734 = vsel %vm8670, %v8702, 0.0
      %v8735 = vsel %vm8671, %v8702, 0.0
      %v8736 = vsel %vm8672, %v8702, 0.0
      %v8737 = vsel %vm8673, %v8703, 0.0
      %v8738 = vsel %vm8674, %v8703, 0.0
      %v8739 = vsel %vm8675, %v8703, 0.0
      %v8740 = vsel %vm8676, %v8703, 0.0
      %v8741 = vsel %vm8677, %v8704, 0.0
      %v8742 = vsel %vm8678, %v8704, 0.0
      %v8743 = vsel %vm8679, %v8704, 0.0
      %v8744 = vsel %vm8680, %v8704, 0.0
      %v8745 = vadd.f32 %v8601, 1.0
      %v8746 = vadd.f32 %v8604, 1.0
      %v8747 = vadd.f32 %v8605, 1.0
      %v8748 = vadd.f32 %v8606, 1.0
      %v8749 = vadd.f32 %v8607, 1.0
      %v8750 = vadd.f32 %v8608, 1.0
      %v8751 = vadd.f32 %v8609, 1.0
      %v8752 = vadd.f32 %v8610, 1.0
      %v8761 = vperm.slane %v8745, 0
      %v8762 = vperm.slane %v8746, 0
      %v8763 = vperm.slane %v8747, 0
      %v8764 = vperm.slane %v8748, 0
      %v8765 = vperm.slane %v8749, 0
      %v8766 = vperm.slane %v8750, 0
      %v8767 = vperm.slane %v8751, 0
      %v8768 = vperm.slane %v8752, 0
      %vm8777 = vcmp.eq.f32.partialorder %v316, %v8761
      %vm8778 = vcmp.eq.f32.partialorder %v317, %v8761
      %vm8779 = vcmp.eq.f32.partialorder %v318, %v8761
      %vm8780 = vcmp.eq.f32.partialorder %v319, %v8761
      %vm8781 = vcmp.eq.f32.partialorder %v316, %v8762
      %vm8782 = vcmp.eq.f32.partialorder %v317, %v8762
      %vm8783 = vcmp.eq.f32.partialorder %v318, %v8762
      %vm8784 = vcmp.eq.f32.partialorder %v319, %v8762
      %vm8785 = vcmp.eq.f32.partialorder %v316, %v8763
      %vm8786 = vcmp.eq.f32.partialorder %v317, %v8763
      %vm8787 = vcmp.eq.f32.partialorder %v318, %v8763
      %vm8788 = vcmp.eq.f32.partialorder %v319, %v8763
      %vm8789 = vcmp.eq.f32.partialorder %v316, %v8764
      %vm8790 = vcmp.eq.f32.partialorder %v317, %v8764
      %vm8791 = vcmp.eq.f32.partialorder %v318, %v8764
      %vm8792 = vcmp.eq.f32.partialorder %v319, %v8764
      %vm8793 = vcmp.eq.f32.partialorder %v316, %v8765
      %vm8794 = vcmp.eq.f32.partialorder %v317, %v8765
      %vm8795 = vcmp.eq.f32.partialorder %v318, %v8765
      %vm8796 = vcmp.eq.f32.partialorder %v319, %v8765
      %vm8797 = vcmp.eq.f32.partialorder %v316, %v8766
      %vm8798 = vcmp.eq.f32.partialorder %v317, %v8766
      %vm8799 = vcmp.eq.f32.partialorder %v318, %v8766
      %vm8800 = vcmp.eq.f32.partialorder %v319, %v8766
      %vm8801 = vcmp.eq.f32.partialorder %v316, %v8767
      %vm8802 = vcmp.eq.f32.partialorder %v317, %v8767
      %vm8803 = vcmp.eq.f32.partialorder %v318, %v8767
      %vm8804 = vcmp.eq.f32.partialorder %v319, %v8767
      %vm8805 = vcmp.eq.f32.partialorder %v316, %v8768
      %vm8806 = vcmp.eq.f32.partialorder %v317, %v8768
      %vm8807 = vcmp.eq.f32.partialorder %v318, %v8768
      %vm8808 = vcmp.eq.f32.partialorder %v319, %v8768
      %v8809 = vperm.slane %v8602, 0
      %v8810 = vperm.slane %v8619, 0
      %v8811 = vperm.slane %v8620, 0
      %v8812 = vperm.slane %v8621, 0
      %v8813 = vperm.slane %v8622, 0
      %v8814 = vperm.slane %v8623, 0
      %v8815 = vperm.slane %v8624, 0
      %v8816 = vperm.slane %v8625, 0
      %v8825 = vsel %vm8777, %v8809, 0.0
      %v8826 = vsel %vm8778, %v8809, 0.0
      %v8827 = vsel %vm8779, %v8809, 0.0
      %v8828 = vsel %vm8780, %v8809, 0.0
      %v8829 = vsel %vm8781, %v8810, 0.0
      %v8830 = vsel %vm8782, %v8810, 0.0
      %v8831 = vsel %vm8783, %v8810, 0.0
      %v8832 = vsel %vm8784, %v8810, 0.0
      %v8833 = vsel %vm8785, %v8811, 0.0
      %v8834 = vsel %vm8786, %v8811, 0.0
      %v8835 = vsel %vm8787, %v8811, 0.0
      %v8836 = vsel %vm8788, %v8811, 0.0
      %v8837 = vsel %vm8789, %v8812, 0.0
      %v8838 = vsel %vm8790, %v8812, 0.0
      %v8839 = vsel %vm8791, %v8812, 0.0
      %v8840 = vsel %vm8792, %v8812, 0.0
      %v8841 = vsel %vm8793, %v8813, 0.0
      %v8842 = vsel %vm8794, %v8813, 0.0
      %v8843 = vsel %vm8795, %v8813, 0.0
      %v8844 = vsel %vm8796, %v8813, 0.0
      %v8845 = vsel %vm8797, %v8814, 0.0
      %v8846 = vsel %vm8798, %v8814, 0.0
      %v8847 = vsel %vm8799, %v8814, 0.0
      %v8848 = vsel %vm8800, %v8814, 0.0
      %v8849 = vsel %vm8801, %v8815, 0.0
      %v8850 = vsel %vm8802, %v8815, 0.0
      %v8851 = vsel %vm8803, %v8815, 0.0
      %v8852 = vsel %vm8804, %v8815, 0.0
      %v8853 = vsel %vm8805, %v8816, 0.0
      %v8854 = vsel %vm8806, %v8816, 0.0
      %v8855 = vsel %vm8807, %v8816, 0.0
      %v8856 = vsel %vm8808, %v8816, 0.0
      %v8857 = vadd.f32 %v8713, %v8825
      %v8858 = vadd.f32 %v8714, %v8826
      %v8859 = vadd.f32 %v8715, %v8827
      %v8860 = vadd.f32 %v8716, %v8828
      %v8861 = vadd.f32 %v8717, %v8829
      %v8862 = vadd.f32 %v8718, %v8830
      %v8863 = vadd.f32 %v8719, %v8831
      %v8864 = vadd.f32 %v8720, %v8832
      %v8865 = vadd.f32 %v8721, %v8833
      %v8866 = vadd.f32 %v8722, %v8834
      %v8867 = vadd.f32 %v8723, %v8835
      %v8868 = vadd.f32 %v8724, %v8836
      %v8869 = vadd.f32 %v8725, %v8837
      %v8870 = vadd.f32 %v8726, %v8838
      %v8871 = vadd.f32 %v8727, %v8839
      %v8872 = vadd.f32 %v8728, %v8840
      %v8873 = vadd.f32 %v8729, %v8841
      %v8874 = vadd.f32 %v8730, %v8842
      %v8875 = vadd.f32 %v8731, %v8843
      %v8876 = vadd.f32 %v8732, %v8844
      %v8877 = vadd.f32 %v8733, %v8845
      %v8878 = vadd.f32 %v8734, %v8846
      %v8879 = vadd.f32 %v8735, %v8847
      %v8880 = vadd.f32 %v8736, %v8848
      %v8881 = vadd.f32 %v8737, %v8849
      %v8882 = vadd.f32 %v8738, %v8850
      %v8883 = vadd.f32 %v8739, %v8851
      %v8884 = vadd.f32 %v8740, %v8852
      %v8885 = vadd.f32 %v8741, %v8853
      %v8886 = vadd.f32 %v8742, %v8854
      %v8887 = vadd.f32 %v8743, %v8855
      %v8888 = vadd.f32 %v8744, %v8856
      %8889 = vmatpush.msra.mxu0 0.0
      %8890 = vmatpush.msra.mxu0 0.0
      %8891 = vmatpush.msra.mxu0 0.0
      %8892 = vmatpush.msra.mxu0 0.0
      %8893 = vmatpush.msra.mxu0 0.0
      %8894 = vmatpush.msra.mxu0 0.0
      %8895 = vmatpush.msra.mxu0 0.0
      %8896 = vmatpush.msra.mxu0 0.0
      %8897 = vmatpush.msra.mxu0 0.0
      %8898 = vmatpush.msra.mxu0 0.0
      %8899 = vmatpush.msra.mxu0 0.0
      %8900 = vmatpush.msra.mxu0 0.0
      %8901 = vmatpush.msra.mxu0 %v8860
      %8902 = vmatpush.msra.mxu0 %v8859
      %8903 = vmatpush.msra.mxu0 %v8858
      %8904 = vmatpush.msra.mxu0 %v8857
      %8905 = vmatmul.f32.gmra.mxu0 %v8227
      %v8906 = vpop.f32.mrf.mxu0
      %v8907 = vadd.f32 0.0, %v8906
      %8908 = vmatmul.f32.gmra.mxu0 %v8230
      %v8909 = vpop.f32.mrf.mxu0
      %v8910 = vadd.f32 0.0, %v8909
      %8911 = vdwg.mxu0
      %8912 = vmatpush.msra.mxu0 0.0
      %8913 = vmatpush.msra.mxu0 0.0
      %8914 = vmatpush.msra.mxu0 0.0
      %8915 = vmatpush.msra.mxu0 0.0
      %8916 = vmatpush.msra.mxu0 0.0
      %8917 = vmatpush.msra.mxu0 0.0
      %8918 = vmatpush.msra.mxu0 0.0
      %8919 = vmatpush.msra.mxu0 0.0
      %8920 = vmatpush.msra.mxu0 0.0
      %8921 = vmatpush.msra.mxu0 0.0
      %8922 = vmatpush.msra.mxu0 0.0
      %8923 = vmatpush.msra.mxu0 0.0
      %8924 = vmatpush.msra.mxu0 %v8864
      %8925 = vmatpush.msra.mxu0 %v8863
      %8926 = vmatpush.msra.mxu0 %v8862
      %8927 = vmatpush.msra.mxu0 %v8861
      %8928 = vmatmul.f32.gmra.mxu0 %v8256
      %v8929 = vpop.f32.mrf.mxu0
      %v8930 = vadd.f32 0.0, %v8929
      %8931 = vmatmul.f32.gmra.mxu0 %v8259
      %v8932 = vpop.f32.mrf.mxu0
      %v8933 = vadd.f32 0.0, %v8932
      %8934 = vdwg.mxu0
      %8935 = vmatpush.msra.mxu0 0.0
      %8936 = vmatpush.msra.mxu0 0.0
      %8937 = vmatpush.msra.mxu0 0.0
      %8938 = vmatpush.msra.mxu0 0.0
      %8939 = vmatpush.msra.mxu0 0.0
      %8940 = vmatpush.msra.mxu0 0.0
      %8941 = vmatpush.msra.mxu0 0.0
      %8942 = vmatpush.msra.mxu0 0.0
      %8943 = vmatpush.msra.mxu0 0.0
      %8944 = vmatpush.msra.mxu0 0.0
      %8945 = vmatpush.msra.mxu0 0.0
      %8946 = vmatpush.msra.mxu0 0.0
      %8947 = vmatpush.msra.mxu0 %v8868
      %8948 = vmatpush.msra.mxu0 %v8867
      %8949 = vmatpush.msra.mxu0 %v8866
      %8950 = vmatpush.msra.mxu0 %v8865
      %8951 = vmatmul.f32.gmra.mxu0 %v8285
      %v8952 = vpop.f32.mrf.mxu0
      %v8953 = vadd.f32 0.0, %v8952
      %8954 = vmatmul.f32.gmra.mxu0 %v8288
      %v8955 = vpop.f32.mrf.mxu0
      %v8956 = vadd.f32 0.0, %v8955
      %8957 = vdwg.mxu0
      %8958 = vmatpush.msra.mxu0 0.0
      %8959 = vmatpush.msra.mxu0 0.0
      %8960 = vmatpush.msra.mxu0 0.0
      %8961 = vmatpush.msra.mxu0 0.0
      %8962 = vmatpush.msra.mxu0 0.0
      %8963 = vmatpush.msra.mxu0 0.0
      %8964 = vmatpush.msra.mxu0 0.0
      %8965 = vmatpush.msra.mxu0 0.0
      %8966 = vmatpush.msra.mxu0 0.0
      %8967 = vmatpush.msra.mxu0 0.0
      %8968 = vmatpush.msra.mxu0 0.0
      %8969 = vmatpush.msra.mxu0 0.0
      %8970 = vmatpush.msra.mxu0 %v8872
      %8971 = vmatpush.msra.mxu0 %v8871
      %8972 = vmatpush.msra.mxu0 %v8870
      %8973 = vmatpush.msra.mxu0 %v8869
      %8974 = vmatmul.f32.gmra.mxu0 %v8314
      %v8975 = vpop.f32.mrf.mxu0
      %v8976 = vadd.f32 0.0, %v8975
      %8977 = vmatmul.f32.gmra.mxu0 %v8317
      %v8978 = vpop.f32.mrf.mxu0
      %v8979 = vadd.f32 0.0, %v8978
      %8980 = vdwg.mxu0
      %8981 = vmatpush.msra.mxu0 0.0
      %8982 = vmatpush.msra.mxu0 0.0
      %8983 = vmatpush.msra.mxu0 0.0
      %8984 = vmatpush.msra.mxu0 0.0
      %8985 = vmatpush.msra.mxu0 0.0
      %8986 = vmatpush.msra.mxu0 0.0
      %8987 = vmatpush.msra.mxu0 0.0
      %8988 = vmatpush.msra.mxu0 0.0
      %8989 = vmatpush.msra.mxu0 0.0
      %8990 = vmatpush.msra.mxu0 0.0
      %8991 = vmatpush.msra.mxu0 0.0
      %8992 = vmatpush.msra.mxu0 0.0
      %8993 = vmatpush.msra.mxu0 %v8876
      %8994 = vmatpush.msra.mxu0 %v8875
      %8995 = vmatpush.msra.mxu0 %v8874
      %8996 = vmatpush.msra.mxu0 %v8873
      %8997 = vmatmul.f32.gmra.mxu0 %v8343
      %v8998 = vpop.f32.mrf.mxu0
      %v8999 = vadd.f32 0.0, %v8998
      %9000 = vmatmul.f32.gmra.mxu0 %v8346
      %v9001 = vpop.f32.mrf.mxu0
      %v9002 = vadd.f32 0.0, %v9001
      %9003 = vdwg.mxu0
      %9004 = vmatpush.msra.mxu0 0.0
      %9005 = vmatpush.msra.mxu0 0.0
      %9006 = vmatpush.msra.mxu0 0.0
      %9007 = vmatpush.msra.mxu0 0.0
      %9008 = vmatpush.msra.mxu0 0.0
      %9009 = vmatpush.msra.mxu0 0.0
      %9010 = vmatpush.msra.mxu0 0.0
      %9011 = vmatpush.msra.mxu0 0.0
      %9012 = vmatpush.msra.mxu0 0.0
      %9013 = vmatpush.msra.mxu0 0.0
      %9014 = vmatpush.msra.mxu0 0.0
      %9015 = vmatpush.msra.mxu0 0.0
      %9016 = vmatpush.msra.mxu0 %v8880
      %9017 = vmatpush.msra.mxu0 %v8879
      %9018 = vmatpush.msra.mxu0 %v8878
      %9019 = vmatpush.msra.mxu0 %v8877
      %9020 = vmatmul.f32.gmra.mxu0 %v8372
      %v9021 = vpop.f32.mrf.mxu0
      %v9022 = vadd.f32 0.0, %v9021
      %9023 = vmatmul.f32.gmra.mxu0 %v8375
      %v9024 = vpop.f32.mrf.mxu0
      %v9025 = vadd.f32 0.0, %v9024
      %9026 = vdwg.mxu0
      %9027 = vmatpush.msra.mxu0 0.0
      %9028 = vmatpush.msra.mxu0 0.0
      %9029 = vmatpush.msra.mxu0 0.0
      %9030 = vmatpush.msra.mxu0 0.0
      %9031 = vmatpush.msra.mxu0 0.0
      %9032 = vmatpush.msra.mxu0 0.0
      %9033 = vmatpush.msra.mxu0 0.0
      %9034 = vmatpush.msra.mxu0 0.0
      %9035 = vmatpush.msra.mxu0 0.0
      %9036 = vmatpush.msra.mxu0 0.0
      %9037 = vmatpush.msra.mxu0 0.0
      %9038 = vmatpush.msra.mxu0 0.0
      %9039 = vmatpush.msra.mxu0 %v8884
      %9040 = vmatpush.msra.mxu0 %v8883
      %9041 = vmatpush.msra.mxu0 %v8882
      %9042 = vmatpush.msra.mxu0 %v8881
      %9043 = vmatmul.f32.gmra.mxu0 %v8401
      %v9044 = vpop.f32.mrf.mxu0
      %v9045 = vadd.f32 0.0, %v9044
      %9046 = vmatmul.f32.gmra.mxu0 %v8404
      %v9047 = vpop.f32.mrf.mxu0
      %v9048 = vadd.f32 0.0, %v9047
      %9049 = vdwg.mxu0
      %9050 = vmatpush.msra.mxu0 0.0
      %9051 = vmatpush.msra.mxu0 0.0
      %9052 = vmatpush.msra.mxu0 0.0
      %9053 = vmatpush.msra.mxu0 0.0
      %9054 = vmatpush.msra.mxu0 0.0
      %9055 = vmatpush.msra.mxu0 0.0
      %9056 = vmatpush.msra.mxu0 0.0
      %9057 = vmatpush.msra.mxu0 0.0
      %9058 = vmatpush.msra.mxu0 0.0
      %9059 = vmatpush.msra.mxu0 0.0
      %9060 = vmatpush.msra.mxu0 0.0
      %9061 = vmatpush.msra.mxu0 0.0
      %9062 = vmatpush.msra.mxu0 %v8888
      %9063 = vmatpush.msra.mxu0 %v8887
      %9064 = vmatpush.msra.mxu0 %v8886
      %9065 = vmatpush.msra.mxu0 %v8885
      %9066 = vmatmul.f32.gmra.mxu0 %v8430
      %v9067 = vpop.f32.mrf.mxu0
      %v9068 = vadd.f32 0.0, %v9067
      %9069 = vmatmul.f32.gmra.mxu0 %v8433
      %v9070 = vpop.f32.mrf.mxu0
      %v9071 = vadd.f32 0.0, %v9070
      %9072 = vdwg.mxu0
      %s9073 = scalar_lea.vmem %s272, 1664
      %v9074 = vld [vmem:[%s9073] sm:$0xff]
      %v9075 = vld [vmem:[%s9073 + $0x8] sm:$0xff]
      %v9076 = vld [vmem:[%s9073 + $0x10] sm:$0xff]
      %v9077 = vld [vmem:[%s9073 + $0x18] sm:$0xff]
      %v9078 = vld [vmem:[%s9073 + $0x20] sm:$0xff]
      %v9079 = vld [vmem:[%s9073 + $0x28] sm:$0xff]
      %v9080 = vld [vmem:[%s9073 + $0x30] sm:$0xff]
      %v9081 = vld [vmem:[%s9073 + $0x38] sm:$0xff]
      %v9082 = vld [vmem:[%s9073 + $0x40] sm:$0xff]
      %v9083 = vld [vmem:[%s9073 + $0x48] sm:$0xff]
      %v9084 = vld [vmem:[%s9073 + $0x50] sm:$0xff]
      %v9085 = vld [vmem:[%s9073 + $0x58] sm:$0xff]
      %v9086 = vld [vmem:[%s9073 + $0x60] sm:$0xff]
      %v9087 = vld [vmem:[%s9073 + $0x68] sm:$0xff]
      %v9088 = vld [vmem:[%s9073 + $0x70] sm:$0xff]
      %v9089 = vld [vmem:[%s9073 + $0x78] sm:$0xff]
      %v9090 = vsub.f32 %v9074, %v8907
      %v9091 = vsub.f32 %v9075, %v8910
      %v9092 = vsub.f32 %v9076, %v8930
      %v9093 = vsub.f32 %v9077, %v8933
      %v9094 = vsub.f32 %v9078, %v8953
      %v9095 = vsub.f32 %v9079, %v8956
      %v9096 = vsub.f32 %v9080, %v8976
      %v9097 = vsub.f32 %v9081, %v8979
      %v9098 = vsub.f32 %v9082, %v8999
      %v9099 = vsub.f32 %v9083, %v9002
      %v9100 = vsub.f32 %v9084, %v9022
      %v9101 = vsub.f32 %v9085, %v9025
      %v9102 = vsub.f32 %v9086, %v9045
      %v9103 = vsub.f32 %v9087, %v9048
      %v9104 = vsub.f32 %v9088, %v9068
      %v9105 = vsub.f32 %v9089, %v9071
      %v9106 = vand.u32 2147483647, %v9090
      %v9107 = vand.u32 2147483647, %v9091
      %v9108 = vand.u32 2147483647, %v9092
      %v9109 = vand.u32 2147483647, %v9093
      %v9110 = vand.u32 2147483647, %v9094
      %v9111 = vand.u32 2147483647, %v9095
      %v9112 = vand.u32 2147483647, %v9096
      %v9113 = vand.u32 2147483647, %v9097
      %v9114 = vand.u32 2147483647, %v9098
      %v9115 = vand.u32 2147483647, %v9099
      %v9116 = vand.u32 2147483647, %v9100
      %v9117 = vand.u32 2147483647, %v9101
      %v9118 = vand.u32 2147483647, %v9102
      %v9119 = vand.u32 2147483647, %v9103
      %v9120 = vand.u32 2147483647, %v9104
      %v9121 = vand.u32 2147483647, %v9105
      %v9122 = vsel %vm913, %v9106, 0.0
      %v9123 = vsel %vm913, %v9107, 0.0
      %v9124 = vadd.f32 %v9122, %v9123
      %v9125 = vrot.slane %v9124, 4
      %v9126 = vadd.f32 %v9124, %v9125
      %v9127 = vrot.slane %v9126, 2
      %v9128 = vadd.f32 %v9126, %v9127
      %v9129 = vrot.slane %v9128, 1
      %v9130 = vadd.f32 %v9128, %v9129
      %v9131 = vsel %vm913, %v9108, 0.0
      %v9132 = vsel %vm913, %v9109, 0.0
      %v9133 = vadd.f32 %v9131, %v9132
      %v9134 = vrot.slane %v9133, 4
      %v9135 = vadd.f32 %v9133, %v9134
      %v9136 = vrot.slane %v9135, 2
      %v9137 = vadd.f32 %v9135, %v9136
      %v9138 = vrot.slane %v9137, 1
      %v9139 = vadd.f32 %v9137, %v9138
      %v9140 = vsel %vm913, %v9110, 0.0
      %v9141 = vsel %vm913, %v9111, 0.0
      %v9142 = vadd.f32 %v9140, %v9141
      %v9143 = vrot.slane %v9142, 4
      %v9144 = vadd.f32 %v9142, %v9143
      %v9145 = vrot.slane %v9144, 2
      %v9146 = vadd.f32 %v9144, %v9145
      %v9147 = vrot.slane %v9146, 1
      %v9148 = vadd.f32 %v9146, %v9147
      %v9149 = vsel %vm913, %v9112, 0.0
      %v9150 = vsel %vm913, %v9113, 0.0
      %v9151 = vadd.f32 %v9149, %v9150
      %v9152 = vrot.slane %v9151, 4
      %v9153 = vadd.f32 %v9151, %v9152
      %v9154 = vrot.slane %v9153, 2
      %v9155 = vadd.f32 %v9153, %v9154
      %v9156 = vrot.slane %v9155, 1
      %v9157 = vadd.f32 %v9155, %v9156
      %v9158 = vsel %vm913, %v9114, 0.0
      %v9159 = vsel %vm913, %v9115, 0.0
      %v9160 = vadd.f32 %v9158, %v9159
      %v9161 = vrot.slane %v9160, 4
      %v9162 = vadd.f32 %v9160, %v9161
      %v9163 = vrot.slane %v9162, 2
      %v9164 = vadd.f32 %v9162, %v9163
      %v9165 = vrot.slane %v9164, 1
      %v9166 = vadd.f32 %v9164, %v9165
      %v9167 = vsel %vm913, %v9116, 0.0
      %v9168 = vsel %vm913, %v9117, 0.0
      %v9169 = vadd.f32 %v9167, %v9168
      %v9170 = vrot.slane %v9169, 4
      %v9171 = vadd.f32 %v9169, %v9170
      %v9172 = vrot.slane %v9171, 2
      %v9173 = vadd.f32 %v9171, %v9172
      %v9174 = vrot.slane %v9173, 1
      %v9175 = vadd.f32 %v9173, %v9174
      %v9176 = vsel %vm913, %v9118, 0.0
      %v9177 = vsel %vm913, %v9119, 0.0
      %v9178 = vadd.f32 %v9176, %v9177
      %v9179 = vrot.slane %v9178, 4
      %v9180 = vadd.f32 %v9178, %v9179
      %v9181 = vrot.slane %v9180, 2
      %v9182 = vadd.f32 %v9180, %v9181
      %v9183 = vrot.slane %v9182, 1
      %v9184 = vadd.f32 %v9182, %v9183
      %v9185 = vsel %vm913, %v9120, 0.0
      %v9186 = vsel %vm913, %v9121, 0.0
      %v9187 = vadd.f32 %v9185, %v9186
      %v9188 = vrot.slane %v9187, 4
      %v9189 = vadd.f32 %v9187, %v9188
      %v9190 = vrot.slane %v9189, 2
      %v9191 = vadd.f32 %v9189, %v9190
      %v9192 = vrot.slane %v9191, 1
      %v9193 = vadd.f32 %v9191, %v9192
      %v9202 = vsel %vm994, %v9139, %v9130
      %v9203 = vsel %vm996, %v9148, %v9202
      %v9204 = vsel %vm998, %v9157, %v9203
      %v9205 = vsel %vm1000, %v9166, %v9204
      %v9206 = vsel %vm1002, %v9175, %v9205
      %v9207 = vsel %vm1004, %v9184, %v9206
      %v9208 = vsel %vm1006, %v9193, %v9207
      %s9210 = scalar_lea.vmem %s296, 104
      %9211 = vst.msk [vmem:[%s9210] sm:$0xff] %vm913, %v9208
      %v9212 = vadd.f32 %v7933, %v1627
      %v9213 = vsub.f32 %v1629, %v9212
      %v9214 = vmul.f32 %v9213, 1.032258
      %v9215 = vadd.f32 %v9214, -0.5
      %v9216 = vfloor.f32 %v9215
      %v9217 = vsub.f32 %v9215, %v9216
      %v9219 = vrot.slane %v9216, 1
      %v9220 = vrot.slane %v9216, 2
      %v9221 = vrot.slane %v9216, 3
      %v9222 = vrot.slane %v9216, 4
      %v9223 = vrot.slane %v9216, 5
      %v9224 = vrot.slane %v9216, 6
      %v9225 = vrot.slane %v9216, 7
      %v9234 = vrot.slane %v9217, 1
      %v9235 = vrot.slane %v9217, 2
      %v9236 = vrot.slane %v9217, 3
      %v9237 = vrot.slane %v9217, 4
      %v9238 = vrot.slane %v9217, 5
      %v9239 = vrot.slane %v9217, 6
      %v9240 = vrot.slane %v9217, 7
      %v9248 = vperm.slane %v9216, 0
      %v9249 = vperm.slane %v9219, 0
      %v9250 = vperm.slane %v9220, 0
      %v9251 = vperm.slane %v9221, 0
      %v9252 = vperm.slane %v9222, 0
      %v9253 = vperm.slane %v9223, 0
      %v9254 = vperm.slane %v9224, 0
      %v9255 = vperm.slane %v9225, 0
      %vm9264 = vcmp.eq.f32.partialorder %v316, %v9248
      %vm9265 = vcmp.eq.f32.partialorder %v317, %v9248
      %vm9266 = vcmp.eq.f32.partialorder %v318, %v9248
      %vm9267 = vcmp.eq.f32.partialorder %v319, %v9248
      %vm9268 = vcmp.eq.f32.partialorder %v316, %v9249
      %vm9269 = vcmp.eq.f32.partialorder %v317, %v9249
      %vm9270 = vcmp.eq.f32.partialorder %v318, %v9249
      %vm9271 = vcmp.eq.f32.partialorder %v319, %v9249
      %vm9272 = vcmp.eq.f32.partialorder %v316, %v9250
      %vm9273 = vcmp.eq.f32.partialorder %v317, %v9250
      %vm9274 = vcmp.eq.f32.partialorder %v318, %v9250
      %vm9275 = vcmp.eq.f32.partialorder %v319, %v9250
      %vm9276 = vcmp.eq.f32.partialorder %v316, %v9251
      %vm9277 = vcmp.eq.f32.partialorder %v317, %v9251
      %vm9278 = vcmp.eq.f32.partialorder %v318, %v9251
      %vm9279 = vcmp.eq.f32.partialorder %v319, %v9251
      %vm9280 = vcmp.eq.f32.partialorder %v316, %v9252
      %vm9281 = vcmp.eq.f32.partialorder %v317, %v9252
      %vm9282 = vcmp.eq.f32.partialorder %v318, %v9252
      %vm9283 = vcmp.eq.f32.partialorder %v319, %v9252
      %vm9284 = vcmp.eq.f32.partialorder %v316, %v9253
      %vm9285 = vcmp.eq.f32.partialorder %v317, %v9253
      %vm9286 = vcmp.eq.f32.partialorder %v318, %v9253
      %vm9287 = vcmp.eq.f32.partialorder %v319, %v9253
      %vm9288 = vcmp.eq.f32.partialorder %v316, %v9254
      %vm9289 = vcmp.eq.f32.partialorder %v317, %v9254
      %vm9290 = vcmp.eq.f32.partialorder %v318, %v9254
      %vm9291 = vcmp.eq.f32.partialorder %v319, %v9254
      %vm9292 = vcmp.eq.f32.partialorder %v316, %v9255
      %vm9293 = vcmp.eq.f32.partialorder %v317, %v9255
      %vm9294 = vcmp.eq.f32.partialorder %v318, %v9255
      %vm9295 = vcmp.eq.f32.partialorder %v319, %v9255
      %v9296 = vsub.f32 1.0, %v9217
      %v9297 = vsub.f32 1.0, %v9234
      %v9298 = vsub.f32 1.0, %v9235
      %v9299 = vsub.f32 1.0, %v9236
      %v9300 = vsub.f32 1.0, %v9237
      %v9301 = vsub.f32 1.0, %v9238
      %v9302 = vsub.f32 1.0, %v9239
      %v9303 = vsub.f32 1.0, %v9240
      %v9312 = vperm.slane %v9296, 0
      %v9313 = vperm.slane %v9297, 0
      %v9314 = vperm.slane %v9298, 0
      %v9315 = vperm.slane %v9299, 0
      %v9316 = vperm.slane %v9300, 0
      %v9317 = vperm.slane %v9301, 0
      %v9318 = vperm.slane %v9302, 0
      %v9319 = vperm.slane %v9303, 0
      %v9328 = vsel %vm9264, %v9312, 0.0
      %v9329 = vsel %vm9265, %v9312, 0.0
      %v9330 = vsel %vm9266, %v9312, 0.0
      %v9331 = vsel %vm9267, %v9312, 0.0
      %v9332 = vsel %vm9268, %v9313, 0.0
      %v9333 = vsel %vm9269, %v9313, 0.0
      %v9334 = vsel %vm9270, %v9313, 0.0
      %v9335 = vsel %vm9271, %v9313, 0.0
      %v9336 = vsel %vm9272, %v9314, 0.0
      %v9337 = vsel %vm9273, %v9314, 0.0
      %v9338 = vsel %vm9274, %v9314, 0.0
      %v9339 = vsel %vm9275, %v9314, 0.0
      %v9340 = vsel %vm9276, %v9315, 0.0
      %v9341 = vsel %vm9277, %v9315, 0.0
      %v9342 = vsel %vm9278, %v9315, 0.0
      %v9343 = vsel %vm9279, %v9315, 0.0
      %v9344 = vsel %vm9280, %v9316, 0.0
      %v9345 = vsel %vm9281, %v9316, 0.0
      %v9346 = vsel %vm9282, %v9316, 0.0
      %v9347 = vsel %vm9283, %v9316, 0.0
      %v9348 = vsel %vm9284, %v9317, 0.0
      %v9349 = vsel %vm9285, %v9317, 0.0
      %v9350 = vsel %vm9286, %v9317, 0.0
      %v9351 = vsel %vm9287, %v9317, 0.0
      %v9352 = vsel %vm9288, %v9318, 0.0
      %v9353 = vsel %vm9289, %v9318, 0.0
      %v9354 = vsel %vm9290, %v9318, 0.0
      %v9355 = vsel %vm9291, %v9318, 0.0
      %v9356 = vsel %vm9292, %v9319, 0.0
      %v9357 = vsel %vm9293, %v9319, 0.0
      %v9358 = vsel %vm9294, %v9319, 0.0
      %v9359 = vsel %vm9295, %v9319, 0.0
      %v9360 = vadd.f32 %v9216, 1.0
      %v9361 = vadd.f32 %v9219, 1.0
      %v9362 = vadd.f32 %v9220, 1.0
      %v9363 = vadd.f32 %v9221, 1.0
      %v9364 = vadd.f32 %v9222, 1.0
      %v9365 = vadd.f32 %v9223, 1.0
      %v9366 = vadd.f32 %v9224, 1.0
      %v9367 = vadd.f32 %v9225, 1.0
      %v9376 = vperm.slane %v9360, 0
      %v9377 = vperm.slane %v9361, 0
      %v9378 = vperm.slane %v9362, 0
      %v9379 = vperm.slane %v9363, 0
      %v9380 = vperm.slane %v9364, 0
      %v9381 = vperm.slane %v9365, 0
      %v9382 = vperm.slane %v9366, 0
      %v9383 = vperm.slane %v9367, 0
      %vm9392 = vcmp.eq.f32.partialorder %v316, %v9376
      %vm9393 = vcmp.eq.f32.partialorder %v317, %v9376
      %vm9394 = vcmp.eq.f32.partialorder %v318, %v9376
      %vm9395 = vcmp.eq.f32.partialorder %v319, %v9376
      %vm9396 = vcmp.eq.f32.partialorder %v316, %v9377
      %vm9397 = vcmp.eq.f32.partialorder %v317, %v9377
      %vm9398 = vcmp.eq.f32.partialorder %v318, %v9377
      %vm9399 = vcmp.eq.f32.partialorder %v319, %v9377
      %vm9400 = vcmp.eq.f32.partialorder %v316, %v9378
      %vm9401 = vcmp.eq.f32.partialorder %v317, %v9378
      %vm9402 = vcmp.eq.f32.partialorder %v318, %v9378
      %vm9403 = vcmp.eq.f32.partialorder %v319, %v9378
      %vm9404 = vcmp.eq.f32.partialorder %v316, %v9379
      %vm9405 = vcmp.eq.f32.partialorder %v317, %v9379
      %vm9406 = vcmp.eq.f32.partialorder %v318, %v9379
      %vm9407 = vcmp.eq.f32.partialorder %v319, %v9379
      %vm9408 = vcmp.eq.f32.partialorder %v316, %v9380
      %vm9409 = vcmp.eq.f32.partialorder %v317, %v9380
      %vm9410 = vcmp.eq.f32.partialorder %v318, %v9380
      %vm9411 = vcmp.eq.f32.partialorder %v319, %v9380
      %vm9412 = vcmp.eq.f32.partialorder %v316, %v9381
      %vm9413 = vcmp.eq.f32.partialorder %v317, %v9381
      %vm9414 = vcmp.eq.f32.partialorder %v318, %v9381
      %vm9415 = vcmp.eq.f32.partialorder %v319, %v9381
      %vm9416 = vcmp.eq.f32.partialorder %v316, %v9382
      %vm9417 = vcmp.eq.f32.partialorder %v317, %v9382
      %vm9418 = vcmp.eq.f32.partialorder %v318, %v9382
      %vm9419 = vcmp.eq.f32.partialorder %v319, %v9382
      %vm9420 = vcmp.eq.f32.partialorder %v316, %v9383
      %vm9421 = vcmp.eq.f32.partialorder %v317, %v9383
      %vm9422 = vcmp.eq.f32.partialorder %v318, %v9383
      %vm9423 = vcmp.eq.f32.partialorder %v319, %v9383
      %v9424 = vperm.slane %v9217, 0
      %v9425 = vperm.slane %v9234, 0
      %v9426 = vperm.slane %v9235, 0
      %v9427 = vperm.slane %v9236, 0
      %v9428 = vperm.slane %v9237, 0
      %v9429 = vperm.slane %v9238, 0
      %v9430 = vperm.slane %v9239, 0
      %v9431 = vperm.slane %v9240, 0
      %v9440 = vsel %vm9392, %v9424, 0.0
      %v9441 = vsel %vm9393, %v9424, 0.0
      %v9442 = vsel %vm9394, %v9424, 0.0
      %v9443 = vsel %vm9395, %v9424, 0.0
      %v9444 = vsel %vm9396, %v9425, 0.0
      %v9445 = vsel %vm9397, %v9425, 0.0
      %v9446 = vsel %vm9398, %v9425, 0.0
      %v9447 = vsel %vm9399, %v9425, 0.0
      %v9448 = vsel %vm9400, %v9426, 0.0
      %v9449 = vsel %vm9401, %v9426, 0.0
      %v9450 = vsel %vm9402, %v9426, 0.0
      %v9451 = vsel %vm9403, %v9426, 0.0
      %v9452 = vsel %vm9404, %v9427, 0.0
      %v9453 = vsel %vm9405, %v9427, 0.0
      %v9454 = vsel %vm9406, %v9427, 0.0
      %v9455 = vsel %vm9407, %v9427, 0.0
      %v9456 = vsel %vm9408, %v9428, 0.0
      %v9457 = vsel %vm9409, %v9428, 0.0
      %v9458 = vsel %vm9410, %v9428, 0.0
      %v9459 = vsel %vm9411, %v9428, 0.0
      %v9460 = vsel %vm9412, %v9429, 0.0
      %v9461 = vsel %vm9413, %v9429, 0.0
      %v9462 = vsel %vm9414, %v9429, 0.0
      %v9463 = vsel %vm9415, %v9429, 0.0
      %v9464 = vsel %vm9416, %v9430, 0.0
      %v9465 = vsel %vm9417, %v9430, 0.0
      %v9466 = vsel %vm9418, %v9430, 0.0
      %v9467 = vsel %vm9419, %v9430, 0.0
      %v9468 = vsel %vm9420, %v9431, 0.0
      %v9469 = vsel %vm9421, %v9431, 0.0
      %v9470 = vsel %vm9422, %v9431, 0.0
      %v9471 = vsel %vm9423, %v9431, 0.0
      %v9472 = vadd.f32 %v9328, %v9440
      %v9473 = vadd.f32 %v9329, %v9441
      %v9474 = vadd.f32 %v9330, %v9442
      %v9475 = vadd.f32 %v9331, %v9443
      %v9476 = vadd.f32 %v9332, %v9444
      %v9477 = vadd.f32 %v9333, %v9445
      %v9478 = vadd.f32 %v9334, %v9446
      %v9479 = vadd.f32 %v9335, %v9447
      %v9480 = vadd.f32 %v9336, %v9448
      %v9481 = vadd.f32 %v9337, %v9449
      %v9482 = vadd.f32 %v9338, %v9450
      %v9483 = vadd.f32 %v9339, %v9451
      %v9484 = vadd.f32 %v9340, %v9452
      %v9485 = vadd.f32 %v9341, %v9453
      %v9486 = vadd.f32 %v9342, %v9454
      %v9487 = vadd.f32 %v9343, %v9455
      %v9488 = vadd.f32 %v9344, %v9456
      %v9489 = vadd.f32 %v9345, %v9457
      %v9490 = vadd.f32 %v9346, %v9458
      %v9491 = vadd.f32 %v9347, %v9459
      %v9492 = vadd.f32 %v9348, %v9460
      %v9493 = vadd.f32 %v9349, %v9461
      %v9494 = vadd.f32 %v9350, %v9462
      %v9495 = vadd.f32 %v9351, %v9463
      %v9496 = vadd.f32 %v9352, %v9464
      %v9497 = vadd.f32 %v9353, %v9465
      %v9498 = vadd.f32 %v9354, %v9466
      %v9499 = vadd.f32 %v9355, %v9467
      %v9500 = vadd.f32 %v9356, %v9468
      %v9501 = vadd.f32 %v9357, %v9469
      %v9502 = vadd.f32 %v9358, %v9470
      %v9503 = vadd.f32 %v9359, %v9471
      %9504 = vmatpush.msra.mxu0 0.0
      %9505 = vmatpush.msra.mxu0 0.0
      %9506 = vmatpush.msra.mxu0 0.0
      %9507 = vmatpush.msra.mxu0 0.0
      %9508 = vmatpush.msra.mxu0 0.0
      %9509 = vmatpush.msra.mxu0 0.0
      %9510 = vmatpush.msra.mxu0 0.0
      %9511 = vmatpush.msra.mxu0 0.0
      %9512 = vmatpush.msra.mxu0 0.0
      %9513 = vmatpush.msra.mxu0 0.0
      %9514 = vmatpush.msra.mxu0 0.0
      %9515 = vmatpush.msra.mxu0 0.0
      %9516 = vmatpush.msra.mxu0 %v9475
      %9517 = vmatpush.msra.mxu0 %v9474
      %9518 = vmatpush.msra.mxu0 %v9473
      %9519 = vmatpush.msra.mxu0 %v9472
      %9520 = vmatmul.f32.gmra.mxu0 %v8227
      %v9521 = vpop.f32.mrf.mxu0
      %v9522 = vadd.f32 0.0, %v9521
      %9523 = vmatmul.f32.gmra.mxu0 %v8230
      %v9524 = vpop.f32.mrf.mxu0
      %v9525 = vadd.f32 0.0, %v9524
      %9526 = vdwg.mxu0
      %9527 = vmatpush.msra.mxu0 0.0
      %9528 = vmatpush.msra.mxu0 0.0
      %9529 = vmatpush.msra.mxu0 0.0
      %9530 = vmatpush.msra.mxu0 0.0
      %9531 = vmatpush.msra.mxu0 0.0
      %9532 = vmatpush.msra.mxu0 0.0
      %9533 = vmatpush.msra.mxu0 0.0
      %9534 = vmatpush.msra.mxu0 0.0
      %9535 = vmatpush.msra.mxu0 0.0
      %9536 = vmatpush.msra.mxu0 0.0
      %9537 = vmatpush.msra.mxu0 0.0
      %9538 = vmatpush.msra.mxu0 0.0
      %9539 = vmatpush.msra.mxu0 %v9479
      %9540 = vmatpush.msra.mxu0 %v9478
      %9541 = vmatpush.msra.mxu0 %v9477
      %9542 = vmatpush.msra.mxu0 %v9476
      %9543 = vmatmul.f32.gmra.mxu0 %v8256
      %v9544 = vpop.f32.mrf.mxu0
      %v9545 = vadd.f32 0.0, %v9544
      %9546 = vmatmul.f32.gmra.mxu0 %v8259
      %v9547 = vpop.f32.mrf.mxu0
      %v9548 = vadd.f32 0.0, %v9547
      %9549 = vdwg.mxu0
      %9550 = vmatpush.msra.mxu0 0.0
      %9551 = vmatpush.msra.mxu0 0.0
      %9552 = vmatpush.msra.mxu0 0.0
      %9553 = vmatpush.msra.mxu0 0.0
      %9554 = vmatpush.msra.mxu0 0.0
      %9555 = vmatpush.msra.mxu0 0.0
      %9556 = vmatpush.msra.mxu0 0.0
      %9557 = vmatpush.msra.mxu0 0.0
      %9558 = vmatpush.msra.mxu0 0.0
      %9559 = vmatpush.msra.mxu0 0.0
      %9560 = vmatpush.msra.mxu0 0.0
      %9561 = vmatpush.msra.mxu0 0.0
      %9562 = vmatpush.msra.mxu0 %v9483
      %9563 = vmatpush.msra.mxu0 %v9482
      %9564 = vmatpush.msra.mxu0 %v9481
      %9565 = vmatpush.msra.mxu0 %v9480
      %9566 = vmatmul.f32.gmra.mxu0 %v8285
      %v9567 = vpop.f32.mrf.mxu0
      %v9568 = vadd.f32 0.0, %v9567
      %9569 = vmatmul.f32.gmra.mxu0 %v8288
      %v9570 = vpop.f32.mrf.mxu0
      %v9571 = vadd.f32 0.0, %v9570
      %9572 = vdwg.mxu0
      %9573 = vmatpush.msra.mxu0 0.0
      %9574 = vmatpush.msra.mxu0 0.0
      %9575 = vmatpush.msra.mxu0 0.0
      %9576 = vmatpush.msra.mxu0 0.0
      %9577 = vmatpush.msra.mxu0 0.0
      %9578 = vmatpush.msra.mxu0 0.0
      %9579 = vmatpush.msra.mxu0 0.0
      %9580 = vmatpush.msra.mxu0 0.0
      %9581 = vmatpush.msra.mxu0 0.0
      %9582 = vmatpush.msra.mxu0 0.0
      %9583 = vmatpush.msra.mxu0 0.0
      %9584 = vmatpush.msra.mxu0 0.0
      %9585 = vmatpush.msra.mxu0 %v9487
      %9586 = vmatpush.msra.mxu0 %v9486
      %9587 = vmatpush.msra.mxu0 %v9485
      %9588 = vmatpush.msra.mxu0 %v9484
      %9589 = vmatmul.f32.gmra.mxu0 %v8314
      %v9590 = vpop.f32.mrf.mxu0
      %v9591 = vadd.f32 0.0, %v9590
      %9592 = vmatmul.f32.gmra.mxu0 %v8317
      %v9593 = vpop.f32.mrf.mxu0
      %v9594 = vadd.f32 0.0, %v9593
      %9595 = vdwg.mxu0
      %9596 = vmatpush.msra.mxu0 0.0
      %9597 = vmatpush.msra.mxu0 0.0
      %9598 = vmatpush.msra.mxu0 0.0
      %9599 = vmatpush.msra.mxu0 0.0
      %9600 = vmatpush.msra.mxu0 0.0
      %9601 = vmatpush.msra.mxu0 0.0
      %9602 = vmatpush.msra.mxu0 0.0
      %9603 = vmatpush.msra.mxu0 0.0
      %9604 = vmatpush.msra.mxu0 0.0
      %9605 = vmatpush.msra.mxu0 0.0
      %9606 = vmatpush.msra.mxu0 0.0
      %9607 = vmatpush.msra.mxu0 0.0
      %9608 = vmatpush.msra.mxu0 %v9491
      %9609 = vmatpush.msra.mxu0 %v9490
      %9610 = vmatpush.msra.mxu0 %v9489
      %9611 = vmatpush.msra.mxu0 %v9488
      %9612 = vmatmul.f32.gmra.mxu0 %v8343
      %v9613 = vpop.f32.mrf.mxu0
      %v9614 = vadd.f32 0.0, %v9613
      %9615 = vmatmul.f32.gmra.mxu0 %v8346
      %v9616 = vpop.f32.mrf.mxu0
      %v9617 = vadd.f32 0.0, %v9616
      %9618 = vdwg.mxu0
      %9619 = vmatpush.msra.mxu0 0.0
      %9620 = vmatpush.msra.mxu0 0.0
      %9621 = vmatpush.msra.mxu0 0.0
      %9622 = vmatpush.msra.mxu0 0.0
      %9623 = vmatpush.msra.mxu0 0.0
      %9624 = vmatpush.msra.mxu0 0.0
      %9625 = vmatpush.msra.mxu0 0.0
      %9626 = vmatpush.msra.mxu0 0.0
      %9627 = vmatpush.msra.mxu0 0.0
      %9628 = vmatpush.msra.mxu0 0.0
      %9629 = vmatpush.msra.mxu0 0.0
      %9630 = vmatpush.msra.mxu0 0.0
      %9631 = vmatpush.msra.mxu0 %v9495
      %9632 = vmatpush.msra.mxu0 %v9494
      %9633 = vmatpush.msra.mxu0 %v9493
      %9634 = vmatpush.msra.mxu0 %v9492
      %9635 = vmatmul.f32.gmra.mxu0 %v8372
      %v9636 = vpop.f32.mrf.mxu0
      %v9637 = vadd.f32 0.0, %v9636
      %9638 = vmatmul.f32.gmra.mxu0 %v8375
      %v9639 = vpop.f32.mrf.mxu0
      %v9640 = vadd.f32 0.0, %v9639
      %9641 = vdwg.mxu0
      %9642 = vmatpush.msra.mxu0 0.0
      %9643 = vmatpush.msra.mxu0 0.0
      %9644 = vmatpush.msra.mxu0 0.0
      %9645 = vmatpush.msra.mxu0 0.0
      %9646 = vmatpush.msra.mxu0 0.0
      %9647 = vmatpush.msra.mxu0 0.0
      %9648 = vmatpush.msra.mxu0 0.0
      %9649 = vmatpush.msra.mxu0 0.0
      %9650 = vmatpush.msra.mxu0 0.0
      %9651 = vmatpush.msra.mxu0 0.0
      %9652 = vmatpush.msra.mxu0 0.0
      %9653 = vmatpush.msra.mxu0 0.0
      %9654 = vmatpush.msra.mxu0 %v9499
      %9655 = vmatpush.msra.mxu0 %v9498
      %9656 = vmatpush.msra.mxu0 %v9497
      %9657 = vmatpush.msra.mxu0 %v9496
      %9658 = vmatmul.f32.gmra.mxu0 %v8401
      %v9659 = vpop.f32.mrf.mxu0
      %v9660 = vadd.f32 0.0, %v9659
      %9661 = vmatmul.f32.gmra.mxu0 %v8404
      %v9662 = vpop.f32.mrf.mxu0
      %v9663 = vadd.f32 0.0, %v9662
      %9664 = vdwg.mxu0
      %9665 = vmatpush.msra.mxu0 0.0
      %9666 = vmatpush.msra.mxu0 0.0
      %9667 = vmatpush.msra.mxu0 0.0
      %9668 = vmatpush.msra.mxu0 0.0
      %9669 = vmatpush.msra.mxu0 0.0
      %9670 = vmatpush.msra.mxu0 0.0
      %9671 = vmatpush.msra.mxu0 0.0
      %9672 = vmatpush.msra.mxu0 0.0
      %9673 = vmatpush.msra.mxu0 0.0
      %9674 = vmatpush.msra.mxu0 0.0
      %9675 = vmatpush.msra.mxu0 0.0
      %9676 = vmatpush.msra.mxu0 0.0
      %9677 = vmatpush.msra.mxu0 %v9503
      %9678 = vmatpush.msra.mxu0 %v9502
      %9679 = vmatpush.msra.mxu0 %v9501
      %9680 = vmatpush.msra.mxu0 %v9500
      %9681 = vmatmul.f32.gmra.mxu0 %v8430
      %v9682 = vpop.f32.mrf.mxu0
      %v9683 = vadd.f32 0.0, %v9682
      %9684 = vmatmul.f32.gmra.mxu0 %v8433
      %v9685 = vpop.f32.mrf.mxu0
      %v9686 = vadd.f32 0.0, %v9685
      %9687 = vdwg.mxu0
      %s9688 = scalar_lea.vmem %s272, 1792
      %v9689 = vld [vmem:[%s9688] sm:$0xff]
      %v9690 = vld [vmem:[%s9688 + $0x8] sm:$0xff]
      %v9691 = vld [vmem:[%s9688 + $0x10] sm:$0xff]
      %v9692 = vld [vmem:[%s9688 + $0x18] sm:$0xff]
      %v9693 = vld [vmem:[%s9688 + $0x20] sm:$0xff]
      %v9694 = vld [vmem:[%s9688 + $0x28] sm:$0xff]
      %v9695 = vld [vmem:[%s9688 + $0x30] sm:$0xff]
      %v9696 = vld [vmem:[%s9688 + $0x38] sm:$0xff]
      %v9697 = vld [vmem:[%s9688 + $0x40] sm:$0xff]
      %v9698 = vld [vmem:[%s9688 + $0x48] sm:$0xff]
      %v9699 = vld [vmem:[%s9688 + $0x50] sm:$0xff]
      %v9700 = vld [vmem:[%s9688 + $0x58] sm:$0xff]
      %v9701 = vld [vmem:[%s9688 + $0x60] sm:$0xff]
      %v9702 = vld [vmem:[%s9688 + $0x68] sm:$0xff]
      %v9703 = vld [vmem:[%s9688 + $0x70] sm:$0xff]
      %v9704 = vld [vmem:[%s9688 + $0x78] sm:$0xff]
      %v9705 = vsub.f32 %v9689, %v9522
      %v9706 = vsub.f32 %v9690, %v9525
      %v9707 = vsub.f32 %v9691, %v9545
      %v9708 = vsub.f32 %v9692, %v9548
      %v9709 = vsub.f32 %v9693, %v9568
      %v9710 = vsub.f32 %v9694, %v9571
      %v9711 = vsub.f32 %v9695, %v9591
      %v9712 = vsub.f32 %v9696, %v9594
      %v9713 = vsub.f32 %v9697, %v9614
      %v9714 = vsub.f32 %v9698, %v9617
      %v9715 = vsub.f32 %v9699, %v9637
      %v9716 = vsub.f32 %v9700, %v9640
      %v9717 = vsub.f32 %v9701, %v9660
      %v9718 = vsub.f32 %v9702, %v9663
      %v9719 = vsub.f32 %v9703, %v9683
      %v9720 = vsub.f32 %v9704, %v9686
      %v9721 = vand.u32 2147483647, %v9705
      %v9722 = vand.u32 2147483647, %v9706
      %v9723 = vand.u32 2147483647, %v9707
      %v9724 = vand.u32 2147483647, %v9708
      %v9725 = vand.u32 2147483647, %v9709
      %v9726 = vand.u32 2147483647, %v9710
      %v9727 = vand.u32 2147483647, %v9711
      %v9728 = vand.u32 2147483647, %v9712
      %v9729 = vand.u32 2147483647, %v9713
      %v9730 = vand.u32 2147483647, %v9714
      %v9731 = vand.u32 2147483647, %v9715
      %v9732 = vand.u32 2147483647, %v9716
      %v9733 = vand.u32 2147483647, %v9717
      %v9734 = vand.u32 2147483647, %v9718
      %v9735 = vand.u32 2147483647, %v9719
      %v9736 = vand.u32 2147483647, %v9720
      %v9737 = vsel %vm913, %v9721, 0.0
      %v9738 = vsel %vm913, %v9722, 0.0
      %v9739 = vadd.f32 %v9737, %v9738
      %v9740 = vrot.slane %v9739, 4
      %v9741 = vadd.f32 %v9739, %v9740
      %v9742 = vrot.slane %v9741, 2
      %v9743 = vadd.f32 %v9741, %v9742
      %v9744 = vrot.slane %v9743, 1
      %v9745 = vadd.f32 %v9743, %v9744
      %v9746 = vsel %vm913, %v9723, 0.0
      %v9747 = vsel %vm913, %v9724, 0.0
      %v9748 = vadd.f32 %v9746, %v9747
      %v9749 = vrot.slane %v9748, 4
      %v9750 = vadd.f32 %v9748, %v9749
      %v9751 = vrot.slane %v9750, 2
      %v9752 = vadd.f32 %v9750, %v9751
      %v9753 = vrot.slane %v9752, 1
      %v9754 = vadd.f32 %v9752, %v9753
      %v9755 = vsel %vm913, %v9725, 0.0
      %v9756 = vsel %vm913, %v9726, 0.0
      %v9757 = vadd.f32 %v9755, %v9756
      %v9758 = vrot.slane %v9757, 4
      %v9759 = vadd.f32 %v9757, %v9758
      %v9760 = vrot.slane %v9759, 2
      %v9761 = vadd.f32 %v9759, %v9760
      %v9762 = vrot.slane %v9761, 1
      %v9763 = vadd.f32 %v9761, %v9762
      %v9764 = vsel %vm913, %v9727, 0.0
      %v9765 = vsel %vm913, %v9728, 0.0
      %v9766 = vadd.f32 %v9764, %v9765
      %v9767 = vrot.slane %v9766, 4
      %v9768 = vadd.f32 %v9766, %v9767
      %v9769 = vrot.slane %v9768, 2
      %v9770 = vadd.f32 %v9768, %v9769
      %v9771 = vrot.slane %v9770, 1
      %v9772 = vadd.f32 %v9770, %v9771
      %v9773 = vsel %vm913, %v9729, 0.0
      %v9774 = vsel %vm913, %v9730, 0.0
      %v9775 = vadd.f32 %v9773, %v9774
      %v9776 = vrot.slane %v9775, 4
      %v9777 = vadd.f32 %v9775, %v9776
      %v9778 = vrot.slane %v9777, 2
      %v9779 = vadd.f32 %v9777, %v9778
      %v9780 = vrot.slane %v9779, 1
      %v9781 = vadd.f32 %v9779, %v9780
      %v9782 = vsel %vm913, %v9731, 0.0
      %v9783 = vsel %vm913, %v9732, 0.0
      %v9784 = vadd.f32 %v9782, %v9783
      %v9785 = vrot.slane %v9784, 4
      %v9786 = vadd.f32 %v9784, %v9785
      %v9787 = vrot.slane %v9786, 2
      %v9788 = vadd.f32 %v9786, %v9787
      %v9789 = vrot.slane %v9788, 1
      %v9790 = vadd.f32 %v9788, %v9789
      %v9791 = vsel %vm913, %v9733, 0.0
      %v9792 = vsel %vm913, %v9734, 0.0
      %v9793 = vadd.f32 %v9791, %v9792
      %v9794 = vrot.slane %v9793, 4
      %v9795 = vadd.f32 %v9793, %v9794
      %v9796 = vrot.slane %v9795, 2
      %v9797 = vadd.f32 %v9795, %v9796
      %v9798 = vrot.slane %v9797, 1
      %v9799 = vadd.f32 %v9797, %v9798
      %v9800 = vsel %vm913, %v9735, 0.0
      %v9801 = vsel %vm913, %v9736, 0.0
      %v9802 = vadd.f32 %v9800, %v9801
      %v9803 = vrot.slane %v9802, 4
      %v9804 = vadd.f32 %v9802, %v9803
      %v9805 = vrot.slane %v9804, 2
      %v9806 = vadd.f32 %v9804, %v9805
      %v9807 = vrot.slane %v9806, 1
      %v9808 = vadd.f32 %v9806, %v9807
      %v9817 = vsel %vm994, %v9754, %v9745
      %v9818 = vsel %vm996, %v9763, %v9817
      %v9819 = vsel %vm998, %v9772, %v9818
      %v9820 = vsel %vm1000, %v9781, %v9819
      %v9821 = vsel %vm1002, %v9790, %v9820
      %v9822 = vsel %vm1004, %v9799, %v9821
      %v9823 = vsel %vm1006, %v9808, %v9822
      %s9825 = scalar_lea.vmem %s296, 112
      %9826 = vst.msk [vmem:[%s9825] sm:$0xff] %vm913, %v9823
      %v9827 = vadd.f32 %v7933, %v2244
      %v9828 = vsub.f32 %v2246, %v9827
      %v9829 = vmul.f32 %v9828, 1.032258
      %v9830 = vadd.f32 %v9829, -0.5
      %v9831 = vfloor.f32 %v9830
      %v9832 = vsub.f32 %v9830, %v9831
      %v9834 = vrot.slane %v9831, 1
      %v9835 = vrot.slane %v9831, 2
      %v9836 = vrot.slane %v9831, 3
      %v9837 = vrot.slane %v9831, 4
      %v9838 = vrot.slane %v9831, 5
      %v9839 = vrot.slane %v9831, 6
      %v9840 = vrot.slane %v9831, 7
      %v9849 = vrot.slane %v9832, 1
      %v9850 = vrot.slane %v9832, 2
      %v9851 = vrot.slane %v9832, 3
      %v9852 = vrot.slane %v9832, 4
      %v9853 = vrot.slane %v9832, 5
      %v9854 = vrot.slane %v9832, 6
      %v9855 = vrot.slane %v9832, 7
      %v9863 = vperm.slane %v9831, 0
      %v9864 = vperm.slane %v9834, 0
      %v9865 = vperm.slane %v9835, 0
      %v9866 = vperm.slane %v9836, 0
      %v9867 = vperm.slane %v9837, 0
      %v9868 = vperm.slane %v9838, 0
      %v9869 = vperm.slane %v9839, 0
      %v9870 = vperm.slane %v9840, 0
      %vm9879 = vcmp.eq.f32.partialorder %v316, %v9863
      %vm9880 = vcmp.eq.f32.partialorder %v317, %v9863
      %vm9881 = vcmp.eq.f32.partialorder %v318, %v9863
      %vm9882 = vcmp.eq.f32.partialorder %v319, %v9863
      %vm9883 = vcmp.eq.f32.partialorder %v316, %v9864
      %vm9884 = vcmp.eq.f32.partialorder %v317, %v9864
      %vm9885 = vcmp.eq.f32.partialorder %v318, %v9864
      %vm9886 = vcmp.eq.f32.partialorder %v319, %v9864
      %vm9887 = vcmp.eq.f32.partialorder %v316, %v9865
      %vm9888 = vcmp.eq.f32.partialorder %v317, %v9865
      %vm9889 = vcmp.eq.f32.partialorder %v318, %v9865
      %vm9890 = vcmp.eq.f32.partialorder %v319, %v9865
      %vm9891 = vcmp.eq.f32.partialorder %v316, %v9866
      %vm9892 = vcmp.eq.f32.partialorder %v317, %v9866
      %vm9893 = vcmp.eq.f32.partialorder %v318, %v9866
      %vm9894 = vcmp.eq.f32.partialorder %v319, %v9866
      %vm9895 = vcmp.eq.f32.partialorder %v316, %v9867
      %vm9896 = vcmp.eq.f32.partialorder %v317, %v9867
      %vm9897 = vcmp.eq.f32.partialorder %v318, %v9867
      %vm9898 = vcmp.eq.f32.partialorder %v319, %v9867
      %vm9899 = vcmp.eq.f32.partialorder %v316, %v9868
      %vm9900 = vcmp.eq.f32.partialorder %v317, %v9868
      %vm9901 = vcmp.eq.f32.partialorder %v318, %v9868
      %vm9902 = vcmp.eq.f32.partialorder %v319, %v9868
      %vm9903 = vcmp.eq.f32.partialorder %v316, %v9869
      %vm9904 = vcmp.eq.f32.partialorder %v317, %v9869
      %vm9905 = vcmp.eq.f32.partialorder %v318, %v9869
      %vm9906 = vcmp.eq.f32.partialorder %v319, %v9869
      %vm9907 = vcmp.eq.f32.partialorder %v316, %v9870
      %vm9908 = vcmp.eq.f32.partialorder %v317, %v9870
      %vm9909 = vcmp.eq.f32.partialorder %v318, %v9870
      %vm9910 = vcmp.eq.f32.partialorder %v319, %v9870
      %v9911 = vsub.f32 1.0, %v9832
      %v9912 = vsub.f32 1.0, %v9849
      %v9913 = vsub.f32 1.0, %v9850
      %v9914 = vsub.f32 1.0, %v9851
      %v9915 = vsub.f32 1.0, %v9852
      %v9916 = vsub.f32 1.0, %v9853
      %v9917 = vsub.f32 1.0, %v9854
      %v9918 = vsub.f32 1.0, %v9855
      %v9927 = vperm.slane %v9911, 0
      %v9928 = vperm.slane %v9912, 0
      %v9929 = vperm.slane %v9913, 0
      %v9930 = vperm.slane %v9914, 0
      %v9931 = vperm.slane %v9915, 0
      %v9932 = vperm.slane %v9916, 0
      %v9933 = vperm.slane %v9917, 0
      %v9934 = vperm.slane %v9918, 0
      %v9943 = vsel %vm9879, %v9927, 0.0
      %v9944 = vsel %vm9880, %v9927, 0.0
      %v9945 = vsel %vm9881, %v9927, 0.0
      %v9946 = vsel %vm9882, %v9927, 0.0
      %v9947 = vsel %vm9883, %v9928, 0.0
      %v9948 = vsel %vm9884, %v9928, 0.0
      %v9949 = vsel %vm9885, %v9928, 0.0
      %v9950 = vsel %vm9886, %v9928, 0.0
      %v9951 = vsel %vm9887, %v9929, 0.0
      %v9952 = vsel %vm9888, %v9929, 0.0
      %v9953 = vsel %vm9889, %v9929, 0.0
      %v9954 = vsel %vm9890, %v9929, 0.0
      %v9955 = vsel %vm9891, %v9930, 0.0
      %v9956 = vsel %vm9892, %v9930, 0.0
      %v9957 = vsel %vm9893, %v9930, 0.0
      %v9958 = vsel %vm9894, %v9930, 0.0
      %v9959 = vsel %vm9895, %v9931, 0.0
      %v9960 = vsel %vm9896, %v9931, 0.0
      %v9961 = vsel %vm9897, %v9931, 0.0
      %v9962 = vsel %vm9898, %v9931, 0.0
      %v9963 = vsel %vm9899, %v9932, 0.0
      %v9964 = vsel %vm9900, %v9932, 0.0
      %v9965 = vsel %vm9901, %v9932, 0.0
      %v9966 = vsel %vm9902, %v9932, 0.0
      %v9967 = vsel %vm9903, %v9933, 0.0
      %v9968 = vsel %vm9904, %v9933, 0.0
      %v9969 = vsel %vm9905, %v9933, 0.0
      %v9970 = vsel %vm9906, %v9933, 0.0
      %v9971 = vsel %vm9907, %v9934, 0.0
      %v9972 = vsel %vm9908, %v9934, 0.0
      %v9973 = vsel %vm9909, %v9934, 0.0
      %v9974 = vsel %vm9910, %v9934, 0.0
      %v9975 = vadd.f32 %v9831, 1.0
      %v9976 = vadd.f32 %v9834, 1.0
      %v9977 = vadd.f32 %v9835, 1.0
      %v9978 = vadd.f32 %v9836, 1.0
      %v9979 = vadd.f32 %v9837, 1.0
      %v9980 = vadd.f32 %v9838, 1.0
      %v9981 = vadd.f32 %v9839, 1.0
      %v9982 = vadd.f32 %v9840, 1.0
      %v9991 = vperm.slane %v9975, 0
      %v9992 = vperm.slane %v9976, 0
      %v9993 = vperm.slane %v9977, 0
      %v9994 = vperm.slane %v9978, 0
      %v9995 = vperm.slane %v9979, 0
      %v9996 = vperm.slane %v9980, 0
      %v9997 = vperm.slane %v9981, 0
      %v9998 = vperm.slane %v9982, 0
      %vm10007 = vcmp.eq.f32.partialorder %v316, %v9991
      %vm10008 = vcmp.eq.f32.partialorder %v317, %v9991
      %vm10009 = vcmp.eq.f32.partialorder %v318, %v9991
      %vm10010 = vcmp.eq.f32.partialorder %v319, %v9991
      %vm10011 = vcmp.eq.f32.partialorder %v316, %v9992
      %vm10012 = vcmp.eq.f32.partialorder %v317, %v9992
      %vm10013 = vcmp.eq.f32.partialorder %v318, %v9992
      %vm10014 = vcmp.eq.f32.partialorder %v319, %v9992
      %vm10015 = vcmp.eq.f32.partialorder %v316, %v9993
      %vm10016 = vcmp.eq.f32.partialorder %v317, %v9993
      %vm10017 = vcmp.eq.f32.partialorder %v318, %v9993
      %vm10018 = vcmp.eq.f32.partialorder %v319, %v9993
      %vm10019 = vcmp.eq.f32.partialorder %v316, %v9994
      %vm10020 = vcmp.eq.f32.partialorder %v317, %v9994
      %vm10021 = vcmp.eq.f32.partialorder %v318, %v9994
      %vm10022 = vcmp.eq.f32.partialorder %v319, %v9994
      %vm10023 = vcmp.eq.f32.partialorder %v316, %v9995
      %vm10024 = vcmp.eq.f32.partialorder %v317, %v9995
      %vm10025 = vcmp.eq.f32.partialorder %v318, %v9995
      %vm10026 = vcmp.eq.f32.partialorder %v319, %v9995
      %vm10027 = vcmp.eq.f32.partialorder %v316, %v9996
      %vm10028 = vcmp.eq.f32.partialorder %v317, %v9996
      %vm10029 = vcmp.eq.f32.partialorder %v318, %v9996
      %vm10030 = vcmp.eq.f32.partialorder %v319, %v9996
      %vm10031 = vcmp.eq.f32.partialorder %v316, %v9997
      %vm10032 = vcmp.eq.f32.partialorder %v317, %v9997
      %vm10033 = vcmp.eq.f32.partialorder %v318, %v9997
      %vm10034 = vcmp.eq.f32.partialorder %v319, %v9997
      %vm10035 = vcmp.eq.f32.partialorder %v316, %v9998
      %vm10036 = vcmp.eq.f32.partialorder %v317, %v9998
      %vm10037 = vcmp.eq.f32.partialorder %v318, %v9998
      %vm10038 = vcmp.eq.f32.partialorder %v319, %v9998
      %v10039 = vperm.slane %v9832, 0
      %v10040 = vperm.slane %v9849, 0
      %v10041 = vperm.slane %v9850, 0
      %v10042 = vperm.slane %v9851, 0
      %v10043 = vperm.slane %v9852, 0
      %v10044 = vperm.slane %v9853, 0
      %v10045 = vperm.slane %v9854, 0
      %v10046 = vperm.slane %v9855, 0
      %v10055 = vsel %vm10007, %v10039, 0.0
      %v10056 = vsel %vm10008, %v10039, 0.0
      %v10057 = vsel %vm10009, %v10039, 0.0
      %v10058 = vsel %vm10010, %v10039, 0.0
      %v10059 = vsel %vm10011, %v10040, 0.0
      %v10060 = vsel %vm10012, %v10040, 0.0
      %v10061 = vsel %vm10013, %v10040, 0.0
      %v10062 = vsel %vm10014, %v10040, 0.0
      %v10063 = vsel %vm10015, %v10041, 0.0
      %v10064 = vsel %vm10016, %v10041, 0.0
      %v10065 = vsel %vm10017, %v10041, 0.0
      %v10066 = vsel %vm10018, %v10041, 0.0
      %v10067 = vsel %vm10019, %v10042, 0.0
      %v10068 = vsel %vm10020, %v10042, 0.0
      %v10069 = vsel %vm10021, %v10042, 0.0
      %v10070 = vsel %vm10022, %v10042, 0.0
      %v10071 = vsel %vm10023, %v10043, 0.0
      %v10072 = vsel %vm10024, %v10043, 0.0
      %v10073 = vsel %vm10025, %v10043, 0.0
      %v10074 = vsel %vm10026, %v10043, 0.0
      %v10075 = vsel %vm10027, %v10044, 0.0
      %v10076 = vsel %vm10028, %v10044, 0.0
      %v10077 = vsel %vm10029, %v10044, 0.0
      %v10078 = vsel %vm10030, %v10044, 0.0
      %v10079 = vsel %vm10031, %v10045, 0.0
      %v10080 = vsel %vm10032, %v10045, 0.0
      %v10081 = vsel %vm10033, %v10045, 0.0
      %v10082 = vsel %vm10034, %v10045, 0.0
      %v10083 = vsel %vm10035, %v10046, 0.0
      %v10084 = vsel %vm10036, %v10046, 0.0
      %v10085 = vsel %vm10037, %v10046, 0.0
      %v10086 = vsel %vm10038, %v10046, 0.0
      %v10087 = vadd.f32 %v9943, %v10055
      %v10088 = vadd.f32 %v9944, %v10056
      %v10089 = vadd.f32 %v9945, %v10057
      %v10090 = vadd.f32 %v9946, %v10058
      %v10091 = vadd.f32 %v9947, %v10059
      %v10092 = vadd.f32 %v9948, %v10060
      %v10093 = vadd.f32 %v9949, %v10061
      %v10094 = vadd.f32 %v9950, %v10062
      %v10095 = vadd.f32 %v9951, %v10063
      %v10096 = vadd.f32 %v9952, %v10064
      %v10097 = vadd.f32 %v9953, %v10065
      %v10098 = vadd.f32 %v9954, %v10066
      %v10099 = vadd.f32 %v9955, %v10067
      %v10100 = vadd.f32 %v9956, %v10068
      %v10101 = vadd.f32 %v9957, %v10069
      %v10102 = vadd.f32 %v9958, %v10070
      %v10103 = vadd.f32 %v9959, %v10071
      %v10104 = vadd.f32 %v9960, %v10072
      %v10105 = vadd.f32 %v9961, %v10073
      %v10106 = vadd.f32 %v9962, %v10074
      %v10107 = vadd.f32 %v9963, %v10075
      %v10108 = vadd.f32 %v9964, %v10076
      %v10109 = vadd.f32 %v9965, %v10077
      %v10110 = vadd.f32 %v9966, %v10078
      %v10111 = vadd.f32 %v9967, %v10079
      %v10112 = vadd.f32 %v9968, %v10080
      %v10113 = vadd.f32 %v9969, %v10081
      %v10114 = vadd.f32 %v9970, %v10082
      %v10115 = vadd.f32 %v9971, %v10083
      %v10116 = vadd.f32 %v9972, %v10084
      %v10117 = vadd.f32 %v9973, %v10085
      %v10118 = vadd.f32 %v9974, %v10086
      %10119 = vmatpush.msra.mxu0 0.0
      %10120 = vmatpush.msra.mxu0 0.0
      %10121 = vmatpush.msra.mxu0 0.0
      %10122 = vmatpush.msra.mxu0 0.0
      %10123 = vmatpush.msra.mxu0 0.0
      %10124 = vmatpush.msra.mxu0 0.0
      %10125 = vmatpush.msra.mxu0 0.0
      %10126 = vmatpush.msra.mxu0 0.0
      %10127 = vmatpush.msra.mxu0 0.0
      %10128 = vmatpush.msra.mxu0 0.0
      %10129 = vmatpush.msra.mxu0 0.0
      %10130 = vmatpush.msra.mxu0 0.0
      %10131 = vmatpush.msra.mxu0 %v10090
      %10132 = vmatpush.msra.mxu0 %v10089
      %10133 = vmatpush.msra.mxu0 %v10088
      %10134 = vmatpush.msra.mxu0 %v10087
      %10135 = vmatmul.f32.gmra.mxu0 %v8227
      %v10136 = vpop.f32.mrf.mxu0
      %v10137 = vadd.f32 0.0, %v10136
      %10138 = vmatmul.f32.gmra.mxu0 %v8230
      %v10139 = vpop.f32.mrf.mxu0
      %v10140 = vadd.f32 0.0, %v10139
      %10141 = vdwg.mxu0
      %10142 = vmatpush.msra.mxu0 0.0
      %10143 = vmatpush.msra.mxu0 0.0
      %10144 = vmatpush.msra.mxu0 0.0
      %10145 = vmatpush.msra.mxu0 0.0
      %10146 = vmatpush.msra.mxu0 0.0
      %10147 = vmatpush.msra.mxu0 0.0
      %10148 = vmatpush.msra.mxu0 0.0
      %10149 = vmatpush.msra.mxu0 0.0
      %10150 = vmatpush.msra.mxu0 0.0
      %10151 = vmatpush.msra.mxu0 0.0
      %10152 = vmatpush.msra.mxu0 0.0
      %10153 = vmatpush.msra.mxu0 0.0
      %10154 = vmatpush.msra.mxu0 %v10094
      %10155 = vmatpush.msra.mxu0 %v10093
      %10156 = vmatpush.msra.mxu0 %v10092
      %10157 = vmatpush.msra.mxu0 %v10091
      %10158 = vmatmul.f32.gmra.mxu0 %v8256
      %v10159 = vpop.f32.mrf.mxu0
      %v10160 = vadd.f32 0.0, %v10159
      %10161 = vmatmul.f32.gmra.mxu0 %v8259
      %v10162 = vpop.f32.mrf.mxu0
      %v10163 = vadd.f32 0.0, %v10162
      %10164 = vdwg.mxu0
      %10165 = vmatpush.msra.mxu0 0.0
      %10166 = vmatpush.msra.mxu0 0.0
      %10167 = vmatpush.msra.mxu0 0.0
      %10168 = vmatpush.msra.mxu0 0.0
      %10169 = vmatpush.msra.mxu0 0.0
      %10170 = vmatpush.msra.mxu0 0.0
      %10171 = vmatpush.msra.mxu0 0.0
      %10172 = vmatpush.msra.mxu0 0.0
      %10173 = vmatpush.msra.mxu0 0.0
      %10174 = vmatpush.msra.mxu0 0.0
      %10175 = vmatpush.msra.mxu0 0.0
      %10176 = vmatpush.msra.mxu0 0.0
      %10177 = vmatpush.msra.mxu0 %v10098
      %10178 = vmatpush.msra.mxu0 %v10097
      %10179 = vmatpush.msra.mxu0 %v10096
      %10180 = vmatpush.msra.mxu0 %v10095
      %10181 = vmatmul.f32.gmra.mxu0 %v8285
      %v10182 = vpop.f32.mrf.mxu0
      %v10183 = vadd.f32 0.0, %v10182
      %10184 = vmatmul.f32.gmra.mxu0 %v8288
      %v10185 = vpop.f32.mrf.mxu0
      %v10186 = vadd.f32 0.0, %v10185
      %10187 = vdwg.mxu0
      %10188 = vmatpush.msra.mxu0 0.0
      %10189 = vmatpush.msra.mxu0 0.0
      %10190 = vmatpush.msra.mxu0 0.0
      %10191 = vmatpush.msra.mxu0 0.0
      %10192 = vmatpush.msra.mxu0 0.0
      %10193 = vmatpush.msra.mxu0 0.0
      %10194 = vmatpush.msra.mxu0 0.0
      %10195 = vmatpush.msra.mxu0 0.0
      %10196 = vmatpush.msra.mxu0 0.0
      %10197 = vmatpush.msra.mxu0 0.0
      %10198 = vmatpush.msra.mxu0 0.0
      %10199 = vmatpush.msra.mxu0 0.0
      %10200 = vmatpush.msra.mxu0 %v10102
      %10201 = vmatpush.msra.mxu0 %v10101
      %10202 = vmatpush.msra.mxu0 %v10100
      %10203 = vmatpush.msra.mxu0 %v10099
      %10204 = vmatmul.f32.gmra.mxu0 %v8314
      %v10205 = vpop.f32.mrf.mxu0
      %v10206 = vadd.f32 0.0, %v10205
      %10207 = vmatmul.f32.gmra.mxu0 %v8317
      %v10208 = vpop.f32.mrf.mxu0
      %v10209 = vadd.f32 0.0, %v10208
      %10210 = vdwg.mxu0
      %10211 = vmatpush.msra.mxu0 0.0
      %10212 = vmatpush.msra.mxu0 0.0
      %10213 = vmatpush.msra.mxu0 0.0
      %10214 = vmatpush.msra.mxu0 0.0
      %10215 = vmatpush.msra.mxu0 0.0
      %10216 = vmatpush.msra.mxu0 0.0
      %10217 = vmatpush.msra.mxu0 0.0
      %10218 = vmatpush.msra.mxu0 0.0
      %10219 = vmatpush.msra.mxu0 0.0
      %10220 = vmatpush.msra.mxu0 0.0
      %10221 = vmatpush.msra.mxu0 0.0
      %10222 = vmatpush.msra.mxu0 0.0
      %10223 = vmatpush.msra.mxu0 %v10106
      %10224 = vmatpush.msra.mxu0 %v10105
      %10225 = vmatpush.msra.mxu0 %v10104
      %10226 = vmatpush.msra.mxu0 %v10103
      %10227 = vmatmul.f32.gmra.mxu0 %v8343
      %v10228 = vpop.f32.mrf.mxu0
      %v10229 = vadd.f32 0.0, %v10228
      %10230 = vmatmul.f32.gmra.mxu0 %v8346
      %v10231 = vpop.f32.mrf.mxu0
      %v10232 = vadd.f32 0.0, %v10231
      %10233 = vdwg.mxu0
      %10234 = vmatpush.msra.mxu0 0.0
      %10235 = vmatpush.msra.mxu0 0.0
      %10236 = vmatpush.msra.mxu0 0.0
      %10237 = vmatpush.msra.mxu0 0.0
      %10238 = vmatpush.msra.mxu0 0.0
      %10239 = vmatpush.msra.mxu0 0.0
      %10240 = vmatpush.msra.mxu0 0.0
      %10241 = vmatpush.msra.mxu0 0.0
      %10242 = vmatpush.msra.mxu0 0.0
      %10243 = vmatpush.msra.mxu0 0.0
      %10244 = vmatpush.msra.mxu0 0.0
      %10245 = vmatpush.msra.mxu0 0.0
      %10246 = vmatpush.msra.mxu0 %v10110
      %10247 = vmatpush.msra.mxu0 %v10109
      %10248 = vmatpush.msra.mxu0 %v10108
      %10249 = vmatpush.msra.mxu0 %v10107
      %10250 = vmatmul.f32.gmra.mxu0 %v8372
      %v10251 = vpop.f32.mrf.mxu0
      %v10252 = vadd.f32 0.0, %v10251
      %10253 = vmatmul.f32.gmra.mxu0 %v8375
      %v10254 = vpop.f32.mrf.mxu0
      %v10255 = vadd.f32 0.0, %v10254
      %10256 = vdwg.mxu0
      %10257 = vmatpush.msra.mxu0 0.0
      %10258 = vmatpush.msra.mxu0 0.0
      %10259 = vmatpush.msra.mxu0 0.0
      %10260 = vmatpush.msra.mxu0 0.0
      %10261 = vmatpush.msra.mxu0 0.0
      %10262 = vmatpush.msra.mxu0 0.0
      %10263 = vmatpush.msra.mxu0 0.0
      %10264 = vmatpush.msra.mxu0 0.0
      %10265 = vmatpush.msra.mxu0 0.0
      %10266 = vmatpush.msra.mxu0 0.0
      %10267 = vmatpush.msra.mxu0 0.0
      %10268 = vmatpush.msra.mxu0 0.0
      %10269 = vmatpush.msra.mxu0 %v10114
      %10270 = vmatpush.msra.mxu0 %v10113
      %10271 = vmatpush.msra.mxu0 %v10112
      %10272 = vmatpush.msra.mxu0 %v10111
      %10273 = vmatmul.f32.gmra.mxu0 %v8401
      %v10274 = vpop.f32.mrf.mxu0
      %v10275 = vadd.f32 0.0, %v10274
      %10276 = vmatmul.f32.gmra.mxu0 %v8404
      %v10277 = vpop.f32.mrf.mxu0
      %v10278 = vadd.f32 0.0, %v10277
      %10279 = vdwg.mxu0
      %10280 = vmatpush.msra.mxu0 0.0
      %10281 = vmatpush.msra.mxu0 0.0
      %10282 = vmatpush.msra.mxu0 0.0
      %10283 = vmatpush.msra.mxu0 0.0
      %10284 = vmatpush.msra.mxu0 0.0
      %10285 = vmatpush.msra.mxu0 0.0
      %10286 = vmatpush.msra.mxu0 0.0
      %10287 = vmatpush.msra.mxu0 0.0
      %10288 = vmatpush.msra.mxu0 0.0
      %10289 = vmatpush.msra.mxu0 0.0
      %10290 = vmatpush.msra.mxu0 0.0
      %10291 = vmatpush.msra.mxu0 0.0
      %10292 = vmatpush.msra.mxu0 %v10118
      %10293 = vmatpush.msra.mxu0 %v10117
      %10294 = vmatpush.msra.mxu0 %v10116
      %10295 = vmatpush.msra.mxu0 %v10115
      %10296 = vmatmul.f32.gmra.mxu0 %v8430
      %v10297 = vpop.f32.mrf.mxu0
      %v10298 = vadd.f32 0.0, %v10297
      %10299 = vmatmul.f32.gmra.mxu0 %v8433
      %v10300 = vpop.f32.mrf.mxu0
      %v10301 = vadd.f32 0.0, %v10300
      %10302 = vdwg.mxu0
      %s10303 = scalar_lea.vmem %s272, 1920
      %v10304 = vld [vmem:[%s10303] sm:$0xff]
      %v10305 = vld [vmem:[%s10303 + $0x8] sm:$0xff]
      %v10306 = vld [vmem:[%s10303 + $0x10] sm:$0xff]
      %v10307 = vld [vmem:[%s10303 + $0x18] sm:$0xff]
      %v10308 = vld [vmem:[%s10303 + $0x20] sm:$0xff]
      %v10309 = vld [vmem:[%s10303 + $0x28] sm:$0xff]
      %v10310 = vld [vmem:[%s10303 + $0x30] sm:$0xff]
      %v10311 = vld [vmem:[%s10303 + $0x38] sm:$0xff]
      %v10312 = vld [vmem:[%s10303 + $0x40] sm:$0xff]
      %v10313 = vld [vmem:[%s10303 + $0x48] sm:$0xff]
      %v10314 = vld [vmem:[%s10303 + $0x50] sm:$0xff]
      %v10315 = vld [vmem:[%s10303 + $0x58] sm:$0xff]
      %v10316 = vld [vmem:[%s10303 + $0x60] sm:$0xff]
      %v10317 = vld [vmem:[%s10303 + $0x68] sm:$0xff]
      %v10318 = vld [vmem:[%s10303 + $0x70] sm:$0xff]
      %v10319 = vld [vmem:[%s10303 + $0x78] sm:$0xff]
      %v10320 = vsub.f32 %v10304, %v10137
      %v10321 = vsub.f32 %v10305, %v10140
      %v10322 = vsub.f32 %v10306, %v10160
      %v10323 = vsub.f32 %v10307, %v10163
      %v10324 = vsub.f32 %v10308, %v10183
      %v10325 = vsub.f32 %v10309, %v10186
      %v10326 = vsub.f32 %v10310, %v10206
      %v10327 = vsub.f32 %v10311, %v10209
      %v10328 = vsub.f32 %v10312, %v10229
      %v10329 = vsub.f32 %v10313, %v10232
      %v10330 = vsub.f32 %v10314, %v10252
      %v10331 = vsub.f32 %v10315, %v10255
      %v10332 = vsub.f32 %v10316, %v10275
      %v10333 = vsub.f32 %v10317, %v10278
      %v10334 = vsub.f32 %v10318, %v10298
      %v10335 = vsub.f32 %v10319, %v10301
      %v10336 = vand.u32 2147483647, %v10320
      %v10337 = vand.u32 2147483647, %v10321
      %v10338 = vand.u32 2147483647, %v10322
      %v10339 = vand.u32 2147483647, %v10323
      %v10340 = vand.u32 2147483647, %v10324
      %v10341 = vand.u32 2147483647, %v10325
      %v10342 = vand.u32 2147483647, %v10326
      %v10343 = vand.u32 2147483647, %v10327
      %v10344 = vand.u32 2147483647, %v10328
      %v10345 = vand.u32 2147483647, %v10329
      %v10346 = vand.u32 2147483647, %v10330
      %v10347 = vand.u32 2147483647, %v10331
      %v10348 = vand.u32 2147483647, %v10332
      %v10349 = vand.u32 2147483647, %v10333
      %v10350 = vand.u32 2147483647, %v10334
      %v10351 = vand.u32 2147483647, %v10335
      %v10352 = vsel %vm913, %v10336, 0.0
      %v10353 = vsel %vm913, %v10337, 0.0
      %v10354 = vadd.f32 %v10352, %v10353
      %v10355 = vrot.slane %v10354, 4
      %v10356 = vadd.f32 %v10354, %v10355
      %v10357 = vrot.slane %v10356, 2
      %v10358 = vadd.f32 %v10356, %v10357
      %v10359 = vrot.slane %v10358, 1
      %v10360 = vadd.f32 %v10358, %v10359
      %v10361 = vsel %vm913, %v10338, 0.0
      %v10362 = vsel %vm913, %v10339, 0.0
      %v10363 = vadd.f32 %v10361, %v10362
      %v10364 = vrot.slane %v10363, 4
      %v10365 = vadd.f32 %v10363, %v10364
      %v10366 = vrot.slane %v10365, 2
      %v10367 = vadd.f32 %v10365, %v10366
      %v10368 = vrot.slane %v10367, 1
      %v10369 = vadd.f32 %v10367, %v10368
      %v10370 = vsel %vm913, %v10340, 0.0
      %v10371 = vsel %vm913, %v10341, 0.0
      %v10372 = vadd.f32 %v10370, %v10371
      %v10373 = vrot.slane %v10372, 4
      %v10374 = vadd.f32 %v10372, %v10373
      %v10375 = vrot.slane %v10374, 2
      %v10376 = vadd.f32 %v10374, %v10375
      %v10377 = vrot.slane %v10376, 1
      %v10378 = vadd.f32 %v10376, %v10377
      %v10379 = vsel %vm913, %v10342, 0.0
      %v10380 = vsel %vm913, %v10343, 0.0
      %v10381 = vadd.f32 %v10379, %v10380
      %v10382 = vrot.slane %v10381, 4
      %v10383 = vadd.f32 %v10381, %v10382
      %v10384 = vrot.slane %v10383, 2
      %v10385 = vadd.f32 %v10383, %v10384
      %v10386 = vrot.slane %v10385, 1
      %v10387 = vadd.f32 %v10385, %v10386
      %v10388 = vsel %vm913, %v10344, 0.0
      %v10389 = vsel %vm913, %v10345, 0.0
      %v10390 = vadd.f32 %v10388, %v10389
      %v10391 = vrot.slane %v10390, 4
      %v10392 = vadd.f32 %v10390, %v10391
      %v10393 = vrot.slane %v10392, 2
      %v10394 = vadd.f32 %v10392, %v10393
      %v10395 = vrot.slane %v10394, 1
      %v10396 = vadd.f32 %v10394, %v10395
      %v10397 = vsel %vm913, %v10346, 0.0
      %v10398 = vsel %vm913, %v10347, 0.0
      %v10399 = vadd.f32 %v10397, %v10398
      %v10400 = vrot.slane %v10399, 4
      %v10401 = vadd.f32 %v10399, %v10400
      %v10402 = vrot.slane %v10401, 2
      %v10403 = vadd.f32 %v10401, %v10402
      %v10404 = vrot.slane %v10403, 1
      %v10405 = vadd.f32 %v10403, %v10404
      %v10406 = vsel %vm913, %v10348, 0.0
      %v10407 = vsel %vm913, %v10349, 0.0
      %v10408 = vadd.f32 %v10406, %v10407
      %v10409 = vrot.slane %v10408, 4
      %v10410 = vadd.f32 %v10408, %v10409
      %v10411 = vrot.slane %v10410, 2
      %v10412 = vadd.f32 %v10410, %v10411
      %v10413 = vrot.slane %v10412, 1
      %v10414 = vadd.f32 %v10412, %v10413
      %v10415 = vsel %vm913, %v10350, 0.0
      %v10416 = vsel %vm913, %v10351, 0.0
      %v10417 = vadd.f32 %v10415, %v10416
      %v10418 = vrot.slane %v10417, 4
      %v10419 = vadd.f32 %v10417, %v10418
      %v10420 = vrot.slane %v10419, 2
      %v10421 = vadd.f32 %v10419, %v10420
      %v10422 = vrot.slane %v10421, 1
      %v10423 = vadd.f32 %v10421, %v10422
      %v10432 = vsel %vm994, %v10369, %v10360
      %v10433 = vsel %vm996, %v10378, %v10432
      %v10434 = vsel %vm998, %v10387, %v10433
      %v10435 = vsel %vm1000, %v10396, %v10434
      %v10436 = vsel %vm1002, %v10405, %v10435
      %v10437 = vsel %vm1004, %v10414, %v10436
      %v10438 = vsel %vm1006, %v10423, %v10437
      %s10440 = scalar_lea.vmem %s296, 120
      %10441 = vst.msk [vmem:[%s10440] sm:$0xff] %vm913, %v10438
      %s10442 = smul.u32 16, %s21
      %p10443 = scmp.lt.s32.totalorder %s19, 1
      %s10444 = scalar_select %p10443, %s19, 1
      %p10445 = scmp.lt.s32.totalorder %s10442, 47
      %s10446 = scalar_select %p10445, %s10442, 47
      %p10447 = scmp.lt.s32.totalorder %s20, 0
      %s10448 = scalar_select %p10447, %s20, 0
      %s10449 = sadd.s32 %s10448, %s10446
      %s10450 = smul.addr %s10444, 48
      %s10451 = sadd.s32 %s10449, %s10450
      %s10452 = smul.addr %s10451, 8
      %s10453 = scalar_lea.vmem %s3, %s10452
      // Predicated region
      $region33: #{tile_warping1.1} parent=31 // pred_check
        %p10454 = pneg %p139
      $region34: #{tile_warping1.1} parent=31 // pred_check_branch
        %10456 = sbr.rel (%p10454) target = $region36
      $region35: #{tile_warping1.1} parent=31 // pred_region
        %s10457 = smul.u32 16, %s21
      $region36: #{tile_warping1.1} parent=31 // pred_fallthru
        _
    $region32: #{tile_warping1.1} parent=5 // pred_fallthru
      _
    %p10458 = scmp.le.s32.totalorder 2, %s9
    // Predicated region
    $region37: #{tile_warping1.1} parent=5 // pred_check
      %p10459 = pneg %p10458
    $region38: #{tile_warping1.1} parent=5 // pred_check_branch
      %10461 = sbr.rel (%p10459) target = $region40
    $region39: #{tile_warping1.1} parent=5 // pred_region
      %s10462 = ssub.s32 %s9, 2
      // Predicated region
      $region41: #{tile_warping1.1} parent=39 // pred_check
        %p10463 = pneg %p145
      $region42: #{tile_warping1.1} parent=39 // pred_check_branch
        %10465 = sbr.rel (%p10463) target = $region44
      $region43: #{tile_warping1.1} parent=39 // pred_region
        %s10466 = smul.u32 16, %s24
        %p10467 = scmp.lt.s32.totalorder %s22, 1
        %s10468 = scalar_select %p10467, %s22, 1
        %p10469 = scmp.lt.s32.totalorder %s10466, 47
        %s10470 = scalar_select %p10469, %s10466, 47
        %p10471 = scmp.lt.s32.totalorder %s23, 0
        %s10472 = scalar_select %p10471, %s23, 0
        %s10473 = sadd.s32 %s10472, %s10470
        %s10474 = smul.addr %s10468, 48
        %s10475 = sadd.s32 %s10473, %s10474
        %s10476 = smul.addr %s10475, 8
        %s10477 = scalar_lea.vmem %s3, %s10476
      $region44: #{tile_warping1.1} parent=39 // pred_fallthru
        _
    $region40: #{tile_warping1.1} parent=5 // pred_fallthru
      _
  $region6: #{tile_warping1.1} parent=0 // loop_footer
    %s13 = sadd.s32 1, %s9
  $region7: #{tile_warping1.1} parent=0 // loop_footer_branch
    %8 = sbr.rel target = $region3
  $region8: #{tile_warping1.1} parent=0 // loop_exit
    _

</llo_original>
